<compile_context>
chip_gen: v6e
topology: v6e:2x2x1
jax: 0.10.0
libtpu: 0.0.40
codegen_flags: <defaults>
</compile_context>

<pallas_src>
import functools

import jax
import jax.numpy as jnp
import numpy as np
from jax.experimental import pallas as pl
from jax.experimental.pallas import tpu as pltpu

BN_EPS = 1e-5        # torch.nn.BatchNorm2d default
LANES = 128          # lane-dense channel padding

# Layer geometry implied by the module (28x28 input, mlp1 in_features = 2*2*64):
# (h_in, w_in, h_out, w_out, kh, kw, stride, pad, c_in, c_out)
_CONV_CFG = (
    (28, 28, 14, 14, 3, 3, 2, 1, 1, 16),
    (14, 14, 7, 7, 3, 3, 2, 1, 16, 32),
    (7, 7, 4, 4, 3, 3, 2, 1, 32, 64),
    (4, 4, 2, 2, 2, 2, 2, 0, 64, 64),
)


# ---------------------------------------------------------------------------
# Constant 0/1 per-tap gather matrices (conv padding/stride folded in).
# ---------------------------------------------------------------------------
@functools.lru_cache(maxsize=None)
def _tap_gather(h_in, w_in, h_out, w_out, kh, kw, stride, pad):
    """G[t, p_out, p_in] = 1 iff output pixel p_out reads input pixel p_in at tap t.
    An all-zero row reproduces the conv's zero padding exactly."""
    g = np.zeros((kh * kw, h_out * w_out, h_in * w_in), np.float32)
    for ki in range(kh):
        for kj in range(kw):
            t = ki * kw + kj
            for oh in range(h_out):
                ih = oh * stride - pad + ki
                if not 0 <= ih < h_in:
                    continue
                for ow in range(w_out):
                    iw = ow * stride - pad + kj
                    if 0 <= iw < w_in:
                        g[t, oh * w_out + ow, ih * w_in + iw] = 1.0
    return jnp.asarray(g, jnp.bfloat16)


# ---------------------------------------------------------------------------
# The fused Pallas kernel (whole network, one invocation, everything in VMEM)
# ---------------------------------------------------------------------------
def cnn_fused_kernel(p1_ref, w1_ref,
                     g2_ref, w2_ref,
                     g3_ref, w3_ref,
                     g4_ref, w4_ref,
                     gamma_ref, beta_ref,
                     gsel_ref, wm1_ref, b1_ref,
                     wm2_ref, b2_ref,
                     o_ref):
    """Fused CNNnet forward.

    p1_ref    : (B, 196, 128) bf16  conv1 im2col patches (taps padded 9 -> 128)
    w1_ref    : (128, 128)    bf16  conv1 weight, rows = taps, cols = cout (padded)
    g{l}_ref  : (T_l, P_out, P_in) bf16  0/1 per-tap spatial gather matrices (conv2..4)
    w{l}_ref  : (T_l, 128, 128)    bf16  per-tap (cin, cout) weights, zero-padded
    gamma_ref : (4, 1, 128)   f32   BN weights per conv layer (padded lanes = 0)
    beta_ref  : (4, 1, 128)   f32   BN biases  per conv layer (padded lanes = 0)
    gsel_ref  : (4, 1, 4)     bf16  one-hot row selectors (NCHW flatten fold for mlp1)
    wm1_ref   : (4, 128, 128) bf16  mlp1 weight with the flatten permutation folded in
    b1_ref    : (1, 128)      f32   mlp1 bias (padded)
    wm2_ref   : (128, 128)    bf16  mlp2 weight (padded)
    b2_ref    : (1, 128)      f32   mlp2 bias (padded)
    o_ref     : (B, 128)      f32   lane-dense logits (real logits in lanes 0..9)
    """
    batch = p1_ref.shape[0]

    def tap_matmul(act_bf16, g_ref, w_ref):
        # sum_t (G_t @ act) @ W_t : im2col + conv as MXU matmuls, f32 accumulation.
        acc = None
        for t in range(g_ref.shape[0]):
            sel = jnp.dot(g_ref[t], act_bf16, preferred_element_type=jnp.float32)
            part = jnp.dot(sel.astype(jnp.bfloat16), w_ref[t],
                           preferred_element_type=jnp.float32)
            acc = part if acc is None else acc + part
        return acc

    def bn_relu(ys, layer):
        # Training-mode BatchNorm over all B * P_out rows per channel (lane):
        # one-pass sum / sum-of-squares, f32 epilogue, var clamped at 0, then ReLU.
        n_rows = float(len(ys) * ys[0].shape[0])
        s = ys[0].sum(axis=0, keepdims=True)
        ss = (ys[0] * ys[0]).sum(axis=0, keepdims=True)
        for y in ys[1:]:
            s = s + y.sum(axis=0, keepdims=True)
            ss = ss + (y * y).sum(axis=0, keepdims=True)
        mean = s * (1.0 / n_rows)
        var = jnp.maximum(ss * (1.0 / n_rows) - mean * mean, 0.0)
        scale = gamma_ref[layer] * jax.lax.rsqrt(var + BN_EPS)
        shift = beta_ref[layer] - mean * scale
        return [jnp.maximum(y * scale + shift, 0.0).astype(jnp.bfloat16) for y in ys]

    # conv1: pre-computed im2col patches -> one matmul per image (conv bias cancels
    # against the batch-stat BN that immediately follows, so it is omitted).
    ys = [jnp.dot(p1_ref[b], w1_ref[...], preferred_element_type=jnp.float32)
          for b in range(batch)]
    act = bn_relu(ys, 0)                                              # B x (196, 128)

    # conv2..conv4: in-kernel im2col via per-tap 0/1 gather matmuls.
    act = bn_relu([tap_matmul(a, g2_ref, w2_ref) for a in act], 1)    # B x (49, 128)
    act = bn_relu([tap_matmul(a, g3_ref, w3_ref) for a in act], 2)    # B x (16, 128)
    act = bn_relu([tap_matmul(a, g4_ref, w4_ref) for a in act], 3)    # B x (4, 128)

    # flatten (PyTorch NCHW order folded into wm1) + mlp1 + mlp2 (no activation).
    logits = []
    for a in act:
        h1 = tap_matmul(a, gsel_ref, wm1_ref) + b1_ref[...]           # (1, 128)
        h2 = jnp.dot(h1.astype(jnp.bfloat16), wm2_ref[...],
                     preferred_element_type=jnp.float32) + b2_ref[...]
        logits.append(h2)
    o_ref[...] = jnp.concatenate(logits, axis=0)                      # (B, 128)


# ---------------------------------------------------------------------------
# XLA-side glue: conv1 im2col (input only) and parameter packing / padding
# ---------------------------------------------------------------------------
def _conv1_patches(x):
    # x: (B, 1, 28, 28) f32 -> (B, 196, 128) bf16 im2col patches (taps padded 9->128).
    b = x.shape[0]
    xp = jnp.pad(x, ((0, 0), (0, 0), (1, 1), (1, 1)))
    cols = [xp[:, 0, ki:ki + 28:2, kj:kj + 28:2]
            for ki in range(3) for kj in range(3)]
    p = jnp.stack(cols, axis=-1).reshape(b, 14 * 14, 9)
    return jnp.pad(p, ((0, 0), (0, 0), (0, LANES - 9))).astype(jnp.bfloat16)


def _pack_conv1_weight(w):
    # (16, 1, 3, 3) -> (128, 128): rows = taps (ki*3+kj, padded), cols = cout (padded).
    cout = w.shape[0]
    wt = jnp.transpose(w[:, 0], (1, 2, 0)).reshape(9, cout)
    return jnp.pad(wt, ((0, LANES - 9), (0, LANES - cout))).astype(jnp.bfloat16)


def _pack_conv_weight(w):
    # (cout, cin, kh, kw) -> (kh*kw, 128, 128): [t=ki*kw+kj, cin, cout], zero-padded.
    cout, cin, kh, kw = w.shape
    wt = jnp.transpose(w, (2, 3, 1, 0)).reshape(kh * kw, cin, cout)
    return jnp.pad(wt, ((0, 0), (0, LANES - cin), (0, LANES - cout))).astype(jnp.bfloat16)


def _pack_mlp1_weight(w):
    # (100, 256) with torch flatten index f = c*4 + p  ->  (4, 128, 128): [p, c, j].
    fout = w.shape[0]
    wt = jnp.transpose(w.reshape(fout, 64, 4), (2, 1, 0))     # [p, c, j]
    return jnp.pad(wt, ((0, 0), (0, LANES - 64), (0, LANES - fout))).astype(jnp.bfloat16)


def _pack_mlp2_weight(w):
    # (10, 100) -> (128, 128): [i, j] = w[j, i], zero-padded.
    fout, fin = w.shape
    return jnp.pad(w.T, ((0, LANES - fin), (0, LANES - fout))).astype(jnp.bfloat16)


def _pad_vec(v):
    return jnp.pad(v, (0, LANES - v.shape[0])).reshape(1, LANES).astype(jnp.float32)


def cnnnet_forward(x, params):
    """CNNnet forward; x: (B, 1, 28, 28) f32 -> (B, 10) f32 logits."""
    batch = x.shape[0]

    patches1 = _conv1_patches(x)
    w1 = _pack_conv1_weight(params["conv1"][0])
    w2 = _pack_conv_weight(params["conv2"][0])
    w3 = _pack_conv_weight(params["conv3"][0])
    w4 = _pack_conv_weight(params["conv4"][0])
    gamma = jnp.stack([_pad_vec(params[f"conv{l}"][2]) for l in range(1, 5)])
    beta = jnp.stack([_pad_vec(params[f"conv{l}"][3]) for l in range(1, 5)])

    g2 = _tap_gather(*_CONV_CFG[1][:8])
    g3 = _tap_gather(*_CONV_CFG[2][:8])
    g4 = _tap_gather(*_CONV_CFG[3][:8])
    gsel = jnp.eye(4, dtype=jnp.bfloat16).reshape(4, 1, 4)

    wm1 = _pack_mlp1_weight(params["mlp1"][0])
    b1 = _pad_vec(params["mlp1"][1])
    wm2 = _pack_mlp2_weight(params["mlp2"][0])
    b2 = _pad_vec(params["mlp2"][1])

    # NOTE: conv biases (params["conv*"][1]) are intentionally not passed to the
    # kernel: a per-channel constant added right before training-mode BatchNorm
    # cancels exactly (the batch mean absorbs it).

    inputs = (patches1, w1, g2, w2, g3, w3, g4, w4, gamma, beta,
              gsel, wm1, b1, wm2, b2)
    out = pl.pallas_call(
        cnn_fused_kernel,
        out_shape=jax.ShapeDtypeStruct((batch, LANES), jnp.float32),
        in_specs=[pl.BlockSpec(memory_space=pltpu.MemorySpace.VMEM)] * len(inputs),
        out_specs=pl.BlockSpec(memory_space=pltpu.MemorySpace.VMEM),
        compiler_params=pltpu.CompilerParams(vmem_limit_bytes=32 * 1024 * 1024),
    )(*inputs)
    return out[:, :10]


# ---------------------------------------------------------------------------
# Pure-JAX f32 reference (mirrors the PyTorch module, training-mode BN)
# ---------------------------------------------------------------------------
def cnnnet_reference(x, params):
    def conv_bn_relu(h, p, stride, pad):
        w, b, gamma, beta = p
        h = jax.lax.conv_general_dilated(
            h, w, window_strides=(stride, stride),
            padding=((pad, pad), (pad, pad)),
            dimension_numbers=("NCHW", "OIHW", "NCHW"))
        h = h + b.reshape(1, -1, 1, 1)
        mean = jnp.mean(h, axis=(0, 2, 3), keepdims=True)
        var = jnp.var(h, axis=(0, 2, 3), keepdims=True)
        h = (h - mean) * jax.lax.rsqrt(var + BN_EPS)
        h = h * gamma.reshape(1, -1, 1, 1) + beta.reshape(1, -1, 1, 1)
        return jnp.maximum(h, 0.0)

    h = conv_bn_relu(x, params["conv1"], 2, 1)
    h = conv_bn_relu(h, params["conv2"], 2, 1)
    h = conv_bn_relu(h, params["conv3"], 2, 1)
    h = conv_bn_relu(h, params["conv4"], 2, 0)
    h = h.reshape(h.shape[0], -1)
    w1, b1 = params["mlp1"]
    h = h @ w1.T + b1
    w2, b2 = params["mlp2"]
    return h @ w2.T + b2


# ---------------------------------------------------------------------------
# Deterministic, PyTorch-default-like synthetic parameters
# ---------------------------------------------------------------------------
def init_params():
    key = jax.random.PRNGKey(42)
    keys = jax.random.split(key, 12)

    def conv_params(kh, kw, cin, cout, k_w, k_b):
        bound = 1.0 / float(np.sqrt(cin * kh * kw))
        w = jax.random.uniform(k_w, (cout, cin, kh, kw), jnp.float32, -bound, bound)
        b = jax.random.uniform(k_b, (cout,), jnp.float32, -bound, bound)
        return (w, b, jnp.ones((cout,), jnp.float32), jnp.zeros((cout,), jnp.float32))

    def linear_params(fin, fout, k_w, k_b):
        bound = 1.0 / float(np.sqrt(fin))
        w = jax.random.uniform(k_w, (fout, fin), jnp.float32, -bound, bound)
        b = jax.random.uniform(k_b, (fout,), jnp.float32, -bound, bound)
        return (w, b)

    return {
        "conv1": conv_params(3, 3, 1, 16, keys[0], keys[1]),
        "conv2": conv_params(3, 3, 16, 32, keys[2], keys[3]),
        "conv3": conv_params(3, 3, 32, 64, keys[4], keys[5]),
        "conv4": conv_params(2, 2, 64, 64, keys[6], keys[7]),
        "mlp1": linear_params(2 * 2 * 64, 100, keys[8], keys[9]),
        "mlp2": linear_params(100, 10, keys[10], keys[11]),
    }


if __name__ == "__main__":
    params = init_params()
    # (B, 1, 28, 28): 28x28 input is required by mlp1's 2*2*64 in_features.
    x = jax.random.normal(jax.random.PRNGKey(0), (2, 1, 28, 28), dtype=jnp.float32)

    out = jax.jit(cnnnet_forward)(x, params)
    out = jax.block_until_ready(out)
    assert out.shape == (2, 10) and out.dtype == jnp.float32
    assert bool(jnp.all(jnp.isfinite(out)))

    # Sanity check vs. pure-JAX f32 reference (kernel uses bf16 MXU inputs -> loose tol).
    ref = cnnnet_reference(x, params)
    err = float(jnp.max(jnp.abs(out - ref)))
    assert err < 5e-2, f"kernel/reference mismatch: max abs err = {err}"
    print("KERNEL_OK")
</pallas_src>

<mosaic_0001>
module attributes {stable_mosaic.version = 11 : i64} {
  func.func @cnn_fused_kernel(%arg0: memref<2x196x128xbf16, #tpu.memory_space<vmem>>, %arg1: memref<128x128xbf16, #tpu.memory_space<vmem>>, %arg2: memref<9x49x196xbf16, #tpu.memory_space<vmem>>, %arg3: memref<9x128x128xbf16, #tpu.memory_space<vmem>>, %arg4: memref<9x16x49xbf16, #tpu.memory_space<vmem>>, %arg5: memref<9x128x128xbf16, #tpu.memory_space<vmem>>, %arg6: memref<4x4x16xbf16, #tpu.memory_space<vmem>>, %arg7: memref<4x128x128xbf16, #tpu.memory_space<vmem>>, %arg8: memref<4x1x128xf32, #tpu.memory_space<vmem>>, %arg9: memref<4x1x128xf32, #tpu.memory_space<vmem>>, %arg10: memref<4x1x4xbf16, #tpu.memory_space<vmem>>, %arg11: memref<4x128x128xbf16, #tpu.memory_space<vmem>>, %arg12: memref<1x128xf32, #tpu.memory_space<vmem>>, %arg13: memref<128x128xbf16, #tpu.memory_space<vmem>>, %arg14: memref<1x128xf32, #tpu.memory_space<vmem>>, %arg15: memref<2x128xf32, #tpu.memory_space<vmem>>) attributes {dimension_semantics = [], scalar_prefetch = 0 : i64, scratch_operands = 0 : i64, tpu.core_type = #tpu.core_type<tc>} {
    %c0 = arith.constant 0 : index
    %c0_0 = arith.constant 0 : index
    %c0_1 = arith.constant 0 : index
    %0 = vector.load %arg0[%c0, %c0_0, %c0_1] : memref<2x196x128xbf16, #tpu.memory_space<vmem>>, vector<1x196x128xbf16>
    %1 = vector.shape_cast %0 : vector<1x196x128xbf16> to vector<196x128xbf16>
    %c0_2 = arith.constant 0 : index
    %c0_3 = arith.constant 0 : index
    %2 = vector.load %arg1[%c0_2, %c0_3] : memref<128x128xbf16, #tpu.memory_space<vmem>>, vector<128x128xbf16>
    %cst = arith.constant dense<0.000000e+00> : vector<196x128xf32>
    %3 = tpu.matmul %1, %2, %cst {dimension_numbers = #tpu.dot_dimension_numbers<[1], [0], [0], [1], [0, 0, 1, 1], [], []>} : vector<196x128xbf16>, vector<128x128xbf16>, vector<196x128xf32> -> vector<196x128xf32>
    %c1 = arith.constant 1 : index
    %c0_4 = arith.constant 0 : index
    %c0_5 = arith.constant 0 : index
    %4 = vector.load %arg0[%c1, %c0_4, %c0_5] : memref<2x196x128xbf16, #tpu.memory_space<vmem>>, vector<1x196x128xbf16>
    %5 = vector.shape_cast %4 : vector<1x196x128xbf16> to vector<196x128xbf16>
    %c0_6 = arith.constant 0 : index
    %c0_7 = arith.constant 0 : index
    %6 = vector.load %arg1[%c0_6, %c0_7] : memref<128x128xbf16, #tpu.memory_space<vmem>>, vector<128x128xbf16>
    %cst_8 = arith.constant dense<0.000000e+00> : vector<196x128xf32>
    %7 = tpu.matmul %5, %6, %cst_8 {dimension_numbers = #tpu.dot_dimension_numbers<[1], [0], [0], [1], [0, 0, 1, 1], [], []>} : vector<196x128xbf16>, vector<128x128xbf16>, vector<196x128xf32> -> vector<196x128xf32>
    %cst_9 = arith.constant dense<0.000000e+00> : vector<128xf32>
    %8 = vector.multi_reduction <add>, %3, %cst_9 [0] : vector<196x128xf32> to vector<128xf32>
    %9 = vector.shape_cast %8 : vector<128xf32> to vector<1x128xf32>
    %10 = arith.mulf %3, %3 : vector<196x128xf32>
    %cst_10 = arith.constant dense<0.000000e+00> : vector<128xf32>
    %11 = vector.multi_reduction <add>, %10, %cst_10 [0] : vector<196x128xf32> to vector<128xf32>
    %12 = vector.shape_cast %11 : vector<128xf32> to vector<1x128xf32>
    %cst_11 = arith.constant dense<0.000000e+00> : vector<128xf32>
    %13 = vector.multi_reduction <add>, %7, %cst_11 [0] : vector<196x128xf32> to vector<128xf32>
    %14 = vector.shape_cast %13 : vector<128xf32> to vector<1x128xf32>
    %15 = arith.addf %9, %14 : vector<1x128xf32>
    %16 = arith.mulf %7, %7 : vector<196x128xf32>
    %cst_12 = arith.constant dense<0.000000e+00> : vector<128xf32>
    %17 = vector.multi_reduction <add>, %16, %cst_12 [0] : vector<196x128xf32> to vector<128xf32>
    %18 = vector.shape_cast %17 : vector<128xf32> to vector<1x128xf32>
    %19 = arith.addf %12, %18 : vector<1x128xf32>
    %cst_13 = arith.constant 0.00255102036 : f32
    %20 = vector.broadcast %cst_13 : f32 to vector<1x128xf32>
    %21 = arith.mulf %15, %20 : vector<1x128xf32>
    %cst_14 = arith.constant 0.00255102036 : f32
    %22 = vector.broadcast %cst_14 : f32 to vector<1x128xf32>
    %23 = arith.mulf %19, %22 : vector<1x128xf32>
    %24 = arith.mulf %21, %21 : vector<1x128xf32>
    %25 = arith.subf %23, %24 : vector<1x128xf32>
    %cst_15 = arith.constant 0.000000e+00 : f32
    %26 = vector.broadcast %cst_15 : f32 to vector<1x128xf32>
    %27 = arith.maximumf %25, %26 : vector<1x128xf32>
    %c0_16 = arith.constant 0 : index
    %c0_17 = arith.constant 0 : index
    %c0_18 = arith.constant 0 : index
    %28 = vector.load %arg8[%c0_16, %c0_17, %c0_18] : memref<4x1x128xf32, #tpu.memory_space<vmem>>, vector<1x1x128xf32>
    %29 = vector.shape_cast %28 : vector<1x1x128xf32> to vector<1x128xf32>
    %cst_19 = arith.constant 9.99999974E-6 : f32
    %30 = vector.broadcast %cst_19 : f32 to vector<1x128xf32>
    %31 = arith.addf %27, %30 : vector<1x128xf32>
    %32 = math.rsqrt %31 : vector<1x128xf32>
    %33 = arith.mulf %29, %32 : vector<1x128xf32>
    %c0_20 = arith.constant 0 : index
    %c0_21 = arith.constant 0 : index
    %c0_22 = arith.constant 0 : index
    %34 = vector.load %arg9[%c0_20, %c0_21, %c0_22] : memref<4x1x128xf32, #tpu.memory_space<vmem>>, vector<1x1x128xf32>
    %35 = vector.shape_cast %34 : vector<1x1x128xf32> to vector<1x128xf32>
    %36 = arith.mulf %21, %33 : vector<1x128xf32>
    %37 = arith.subf %35, %36 : vector<1x128xf32>
    %38 = vector.broadcast %33 : vector<1x128xf32> to vector<196x128xf32>
    %39 = arith.mulf %3, %38 : vector<196x128xf32>
    %40 = vector.broadcast %37 : vector<1x128xf32> to vector<196x128xf32>
    %41 = arith.addf %39, %40 : vector<196x128xf32>
    %cst_23 = arith.constant 0.000000e+00 : f32
    %42 = vector.broadcast %cst_23 : f32 to vector<196x128xf32>
    %43 = arith.maximumf %41, %42 : vector<196x128xf32>
    %44 = arith.truncf %43 : vector<196x128xf32> to vector<196x128xbf16>
    %45 = vector.broadcast %33 : vector<1x128xf32> to vector<196x128xf32>
    %46 = arith.mulf %7, %45 : vector<196x128xf32>
    %47 = vector.broadcast %37 : vector<1x128xf32> to vector<196x128xf32>
    %48 = arith.addf %46, %47 : vector<196x128xf32>
    %cst_24 = arith.constant 0.000000e+00 : f32
    %49 = vector.broadcast %cst_24 : f32 to vector<196x128xf32>
    %50 = arith.maximumf %48, %49 : vector<196x128xf32>
    %51 = arith.truncf %50 : vector<196x128xf32> to vector<196x128xbf16>
    %c0_25 = arith.constant 0 : index
    %c0_26 = arith.constant 0 : index
    %c0_27 = arith.constant 0 : index
    %52 = vector.load %arg2[%c0_25, %c0_26, %c0_27] : memref<9x49x196xbf16, #tpu.memory_space<vmem>>, vector<1x49x196xbf16>
    %53 = vector.shape_cast %52 : vector<1x49x196xbf16> to vector<49x196xbf16>
    %cst_28 = arith.constant dense<0.000000e+00> : vector<49x128xf32>
    %54 = tpu.matmul %53, %44, %cst_28 {dimension_numbers = #tpu.dot_dimension_numbers<[1], [0], [0], [1], [0, 0, 1, 1], [], []>} : vector<49x196xbf16>, vector<196x128xbf16>, vector<49x128xf32> -> vector<49x128xf32>
    %55 = arith.truncf %54 : vector<49x128xf32> to vector<49x128xbf16>
    %c0_29 = arith.constant 0 : index
    %c0_30 = arith.constant 0 : index
    %c0_31 = arith.constant 0 : index
    %56 = vector.load %arg3[%c0_29, %c0_30, %c0_31] : memref<9x128x128xbf16, #tpu.memory_space<vmem>>, vector<1x128x128xbf16>
    %57 = vector.shape_cast %56 : vector<1x128x128xbf16> to vector<128x128xbf16>
    %cst_32 = arith.constant dense<0.000000e+00> : vector<49x128xf32>
    %58 = tpu.matmul %55, %57, %cst_32 {dimension_numbers = #tpu.dot_dimension_numbers<[1], [0], [0], [1], [0, 0, 1, 1], [], []>} : vector<49x128xbf16>, vector<128x128xbf16>, vector<49x128xf32> -> vector<49x128xf32>
    %c1_33 = arith.constant 1 : index
    %c0_34 = arith.constant 0 : index
    %c0_35 = arith.constant 0 : index
    %59 = vector.load %arg2[%c1_33, %c0_34, %c0_35] : memref<9x49x196xbf16, #tpu.memory_space<vmem>>, vector<1x49x196xbf16>
    %60 = vector.shape_cast %59 : vector<1x49x196xbf16> to vector<49x196xbf16>
    %cst_36 = arith.constant dense<0.000000e+00> : vector<49x128xf32>
    %61 = tpu.matmul %60, %44, %cst_36 {dimension_numbers = #tpu.dot_dimension_numbers<[1], [0], [0], [1], [0, 0, 1, 1], [], []>} : vector<49x196xbf16>, vector<196x128xbf16>, vector<49x128xf32> -> vector<49x128xf32>
    %62 = arith.truncf %61 : vector<49x128xf32> to vector<49x128xbf16>
    %c1_37 = arith.constant 1 : index
    %c0_38 = arith.constant 0 : index
    %c0_39 = arith.constant 0 : index
    %63 = vector.load %arg3[%c1_37, %c0_38, %c0_39] : memref<9x128x128xbf16, #tpu.memory_space<vmem>>, vector<1x128x128xbf16>
    %64 = vector.shape_cast %63 : vector<1x128x128xbf16> to vector<128x128xbf16>
    %cst_40 = arith.constant dense<0.000000e+00> : vector<49x128xf32>
    %65 = tpu.matmul %62, %64, %cst_40 {dimension_numbers = #tpu.dot_dimension_numbers<[1], [0], [0], [1], [0, 0, 1, 1], [], []>} : vector<49x128xbf16>, vector<128x128xbf16>, vector<49x128xf32> -> vector<49x128xf32>
    %66 = arith.addf %58, %65 : vector<49x128xf32>
    %c2 = arith.constant 2 : index
    %c0_41 = arith.constant 0 : index
    %c0_42 = arith.constant 0 : index
    %67 = vector.load %arg2[%c2, %c0_41, %c0_42] : memref<9x49x196xbf16, #tpu.memory_space<vmem>>, vector<1x49x196xbf16>
    %68 = vector.shape_cast %67 : vector<1x49x196xbf16> to vector<49x196xbf16>
    %cst_43 = arith.constant dense<0.000000e+00> : vector<49x128xf32>
    %69 = tpu.matmul %68, %44, %cst_43 {dimension_numbers = #tpu.dot_dimension_numbers<[1], [0], [0], [1], [0, 0, 1, 1], [], []>} : vector<49x196xbf16>, vector<196x128xbf16>, vector<49x128xf32> -> vector<49x128xf32>
    %70 = arith.truncf %69 : vector<49x128xf32> to vector<49x128xbf16>
    %c2_44 = arith.constant 2 : index
    %c0_45 = arith.constant 0 : index
    %c0_46 = arith.constant 0 : index
    %71 = vector.load %arg3[%c2_44, %c0_45, %c0_46] : memref<9x128x128xbf16, #tpu.memory_space<vmem>>, vector<1x128x128xbf16>
    %72 = vector.shape_cast %71 : vector<1x128x128xbf16> to vector<128x128xbf16>
    %cst_47 = arith.constant dense<0.000000e+00> : vector<49x128xf32>
    %73 = tpu.matmul %70, %72, %cst_47 {dimension_numbers = #tpu.dot_dimension_numbers<[1], [0], [0], [1], [0, 0, 1, 1], [], []>} : vector<49x128xbf16>, vector<128x128xbf16>, vector<49x128xf32> -> vector<49x128xf32>
    %74 = arith.addf %66, %73 : vector<49x128xf32>
    %c3 = arith.constant 3 : index
    %c0_48 = arith.constant 0 : index
    %c0_49 = arith.constant 0 : index
    %75 = vector.load %arg2[%c3, %c0_48, %c0_49] : memref<9x49x196xbf16, #tpu.memory_space<vmem>>, vector<1x49x196xbf16>
    %76 = vector.shape_cast %75 : vector<1x49x196xbf16> to vector<49x196xbf16>
    %cst_50 = arith.constant dense<0.000000e+00> : vector<49x128xf32>
    %77 = tpu.matmul %76, %44, %cst_50 {dimension_numbers = #tpu.dot_dimension_numbers<[1], [0], [0], [1], [0, 0, 1, 1], [], []>} : vector<49x196xbf16>, vector<196x128xbf16>, vector<49x128xf32> -> vector<49x128xf32>
    %78 = arith.truncf %77 : vector<49x128xf32> to vector<49x128xbf16>
    %c3_51 = arith.constant 3 : index
    %c0_52 = arith.constant 0 : index
    %c0_53 = arith.constant 0 : index
    %79 = vector.load %arg3[%c3_51, %c0_52, %c0_53] : memref<9x128x128xbf16, #tpu.memory_space<vmem>>, vector<1x128x128xbf16>
    %80 = vector.shape_cast %79 : vector<1x128x128xbf16> to vector<128x128xbf16>
    %cst_54 = arith.constant dense<0.000000e+00> : vector<49x128xf32>
    %81 = tpu.matmul %78, %80, %cst_54 {dimension_numbers = #tpu.dot_dimension_numbers<[1], [0], [0], [1], [0, 0, 1, 1], [], []>} : vector<49x128xbf16>, vector<128x128xbf16>, vector<49x128xf32> -> vector<49x128xf32>
    %82 = arith.addf %74, %81 : vector<49x128xf32>
    %c4 = arith.constant 4 : index
    %c0_55 = arith.constant 0 : index
    %c0_56 = arith.constant 0 : index
    %83 = vector.load %arg2[%c4, %c0_55, %c0_56] : memref<9x49x196xbf16, #tpu.memory_space<vmem>>, vector<1x49x196xbf16>
    %84 = vector.shape_cast %83 : vector<1x49x196xbf16> to vector<49x196xbf16>
    %cst_57 = arith.constant dense<0.000000e+00> : vector<49x128xf32>
    %85 = tpu.matmul %84, %44, %cst_57 {dimension_numbers = #tpu.dot_dimension_numbers<[1], [0], [0], [1], [0, 0, 1, 1], [], []>} : vector<49x196xbf16>, vector<196x128xbf16>, vector<49x128xf32> -> vector<49x128xf32>
    %86 = arith.truncf %85 : vector<49x128xf32> to vector<49x128xbf16>
    %c4_58 = arith.constant 4 : index
    %c0_59 = arith.constant 0 : index
    %c0_60 = arith.constant 0 : index
    %87 = vector.load %arg3[%c4_58, %c0_59, %c0_60] : memref<9x128x128xbf16, #tpu.memory_space<vmem>>, vector<1x128x128xbf16>
    %88 = vector.shape_cast %87 : vector<1x128x128xbf16> to vector<128x128xbf16>
    %cst_61 = arith.constant dense<0.000000e+00> : vector<49x128xf32>
    %89 = tpu.matmul %86, %88, %cst_61 {dimension_numbers = #tpu.dot_dimension_numbers<[1], [0], [0], [1], [0, 0, 1, 1], [], []>} : vector<49x128xbf16>, vector<128x128xbf16>, vector<49x128xf32> -> vector<49x128xf32>
    %90 = arith.addf %82, %89 : vector<49x128xf32>
    %c5 = arith.constant 5 : index
    %c0_62 = arith.constant 0 : index
    %c0_63 = arith.constant 0 : index
    %91 = vector.load %arg2[%c5, %c0_62, %c0_63] : memref<9x49x196xbf16, #tpu.memory_space<vmem>>, vector<1x49x196xbf16>
    %92 = vector.shape_cast %91 : vector<1x49x196xbf16> to vector<49x196xbf16>
    %cst_64 = arith.constant dense<0.000000e+00> : vector<49x128xf32>
    %93 = tpu.matmul %92, %44, %cst_64 {dimension_numbers = #tpu.dot_dimension_numbers<[1], [0], [0], [1], [0, 0, 1, 1], [], []>} : vector<49x196xbf16>, vector<196x128xbf16>, vector<49x128xf32> -> vector<49x128xf32>
    %94 = arith.truncf %93 : vector<49x128xf32> to vector<49x128xbf16>
    %c5_65 = arith.constant 5 : index
    %c0_66 = arith.constant 0 : index
    %c0_67 = arith.constant 0 : index
    %95 = vector.load %arg3[%c5_65, %c0_66, %c0_67] : memref<9x128x128xbf16, #tpu.memory_space<vmem>>, vector<1x128x128xbf16>
    %96 = vector.shape_cast %95 : vector<1x128x128xbf16> to vector<128x128xbf16>
    %cst_68 = arith.constant dense<0.000000e+00> : vector<49x128xf32>
    %97 = tpu.matmul %94, %96, %cst_68 {dimension_numbers = #tpu.dot_dimension_numbers<[1], [0], [0], [1], [0, 0, 1, 1], [], []>} : vector<49x128xbf16>, vector<128x128xbf16>, vector<49x128xf32> -> vector<49x128xf32>
    %98 = arith.addf %90, %97 : vector<49x128xf32>
    %c6 = arith.constant 6 : index
    %c0_69 = arith.constant 0 : index
    %c0_70 = arith.constant 0 : index
    %99 = vector.load %arg2[%c6, %c0_69, %c0_70] : memref<9x49x196xbf16, #tpu.memory_space<vmem>>, vector<1x49x196xbf16>
    %100 = vector.shape_cast %99 : vector<1x49x196xbf16> to vector<49x196xbf16>
    %cst_71 = arith.constant dense<0.000000e+00> : vector<49x128xf32>
    %101 = tpu.matmul %100, %44, %cst_71 {dimension_numbers = #tpu.dot_dimension_numbers<[1], [0], [0], [1], [0, 0, 1, 1], [], []>} : vector<49x196xbf16>, vector<196x128xbf16>, vector<49x128xf32> -> vector<49x128xf32>
    %102 = arith.truncf %101 : vector<49x128xf32> to vector<49x128xbf16>
    %c6_72 = arith.constant 6 : index
    %c0_73 = arith.constant 0 : index
    %c0_74 = arith.constant 0 : index
    %103 = vector.load %arg3[%c6_72, %c0_73, %c0_74] : memref<9x128x128xbf16, #tpu.memory_space<vmem>>, vector<1x128x128xbf16>
    %104 = vector.shape_cast %103 : vector<1x128x128xbf16> to vector<128x128xbf16>
    %cst_75 = arith.constant dense<0.000000e+00> : vector<49x128xf32>
    %105 = tpu.matmul %102, %104, %cst_75 {dimension_numbers = #tpu.dot_dimension_numbers<[1], [0], [0], [1], [0, 0, 1, 1], [], []>} : vector<49x128xbf16>, vector<128x128xbf16>, vector<49x128xf32> -> vector<49x128xf32>
    %106 = arith.addf %98, %105 : vector<49x128xf32>
    %c7 = arith.constant 7 : index
    %c0_76 = arith.constant 0 : index
    %c0_77 = arith.constant 0 : index
    %107 = vector.load %arg2[%c7, %c0_76, %c0_77] : memref<9x49x196xbf16, #tpu.memory_space<vmem>>, vector<1x49x196xbf16>
    %108 = vector.shape_cast %107 : vector<1x49x196xbf16> to vector<49x196xbf16>
    %cst_78 = arith.constant dense<0.000000e+00> : vector<49x128xf32>
    %109 = tpu.matmul %108, %44, %cst_78 {dimension_numbers = #tpu.dot_dimension_numbers<[1], [0], [0], [1], [0, 0, 1, 1], [], []>} : vector<49x196xbf16>, vector<196x128xbf16>, vector<49x128xf32> -> vector<49x128xf32>
    %110 = arith.truncf %109 : vector<49x128xf32> to vector<49x128xbf16>
    %c7_79 = arith.constant 7 : index
    %c0_80 = arith.constant 0 : index
    %c0_81 = arith.constant 0 : index
    %111 = vector.load %arg3[%c7_79, %c0_80, %c0_81] : memref<9x128x128xbf16, #tpu.memory_space<vmem>>, vector<1x128x128xbf16>
    %112 = vector.shape_cast %111 : vector<1x128x128xbf16> to vector<128x128xbf16>
    %cst_82 = arith.constant dense<0.000000e+00> : vector<49x128xf32>
    %113 = tpu.matmul %110, %112, %cst_82 {dimension_numbers = #tpu.dot_dimension_numbers<[1], [0], [0], [1], [0, 0, 1, 1], [], []>} : vector<49x128xbf16>, vector<128x128xbf16>, vector<49x128xf32> -> vector<49x128xf32>
    %114 = arith.addf %106, %113 : vector<49x128xf32>
    %c8 = arith.constant 8 : index
    %c0_83 = arith.constant 0 : index
    %c0_84 = arith.constant 0 : index
    %115 = vector.load %arg2[%c8, %c0_83, %c0_84] : memref<9x49x196xbf16, #tpu.memory_space<vmem>>, vector<1x49x196xbf16>
    %116 = vector.shape_cast %115 : vector<1x49x196xbf16> to vector<49x196xbf16>
    %cst_85 = arith.constant dense<0.000000e+00> : vector<49x128xf32>
    %117 = tpu.matmul %116, %44, %cst_85 {dimension_numbers = #tpu.dot_dimension_numbers<[1], [0], [0], [1], [0, 0, 1, 1], [], []>} : vector<49x196xbf16>, vector<196x128xbf16>, vector<49x128xf32> -> vector<49x128xf32>
    %118 = arith.truncf %117 : vector<49x128xf32> to vector<49x128xbf16>
    %c8_86 = arith.constant 8 : index
    %c0_87 = arith.constant 0 : index
    %c0_88 = arith.constant 0 : index
    %119 = vector.load %arg3[%c8_86, %c0_87, %c0_88] : memref<9x128x128xbf16, #tpu.memory_space<vmem>>, vector<1x128x128xbf16>
    %120 = vector.shape_cast %119 : vector<1x128x128xbf16> to vector<128x128xbf16>
    %cst_89 = arith.constant dense<0.000000e+00> : vector<49x128xf32>
    %121 = tpu.matmul %118, %120, %cst_89 {dimension_numbers = #tpu.dot_dimension_numbers<[1], [0], [0], [1], [0, 0, 1, 1], [], []>} : vector<49x128xbf16>, vector<128x128xbf16>, vector<49x128xf32> -> vector<49x128xf32>
    %122 = arith.addf %114, %121 : vector<49x128xf32>
    %c0_90 = arith.constant 0 : index
    %c0_91 = arith.constant 0 : index
    %c0_92 = arith.constant 0 : index
    %123 = vector.load %arg2[%c0_90, %c0_91, %c0_92] : memref<9x49x196xbf16, #tpu.memory_space<vmem>>, vector<1x49x196xbf16>
    %124 = vector.shape_cast %123 : vector<1x49x196xbf16> to vector<49x196xbf16>
    %cst_93 = arith.constant dense<0.000000e+00> : vector<49x128xf32>
    %125 = tpu.matmul %124, %51, %cst_93 {dimension_numbers = #tpu.dot_dimension_numbers<[1], [0], [0], [1], [0, 0, 1, 1], [], []>} : vector<49x196xbf16>, vector<196x128xbf16>, vector<49x128xf32> -> vector<49x128xf32>
    %126 = arith.truncf %125 : vector<49x128xf32> to vector<49x128xbf16>
    %c0_94 = arith.constant 0 : index
    %c0_95 = arith.constant 0 : index
    %c0_96 = arith.constant 0 : index
    %127 = vector.load %arg3[%c0_94, %c0_95, %c0_96] : memref<9x128x128xbf16, #tpu.memory_space<vmem>>, vector<1x128x128xbf16>
    %128 = vector.shape_cast %127 : vector<1x128x128xbf16> to vector<128x128xbf16>
    %cst_97 = arith.constant dense<0.000000e+00> : vector<49x128xf32>
    %129 = tpu.matmul %126, %128, %cst_97 {dimension_numbers = #tpu.dot_dimension_numbers<[1], [0], [0], [1], [0, 0, 1, 1], [], []>} : vector<49x128xbf16>, vector<128x128xbf16>, vector<49x128xf32> -> vector<49x128xf32>
    %c1_98 = arith.constant 1 : index
    %c0_99 = arith.constant 0 : index
    %c0_100 = arith.constant 0 : index
    %130 = vector.load %arg2[%c1_98, %c0_99, %c0_100] : memref<9x49x196xbf16, #tpu.memory_space<vmem>>, vector<1x49x196xbf16>
    %131 = vector.shape_cast %130 : vector<1x49x196xbf16> to vector<49x196xbf16>
    %cst_101 = arith.constant dense<0.000000e+00> : vector<49x128xf32>
    %132 = tpu.matmul %131, %51, %cst_101 {dimension_numbers = #tpu.dot_dimension_numbers<[1], [0], [0], [1], [0, 0, 1, 1], [], []>} : vector<49x196xbf16>, vector<196x128xbf16>, vector<49x128xf32> -> vector<49x128xf32>
    %133 = arith.truncf %132 : vector<49x128xf32> to vector<49x128xbf16>
    %c1_102 = arith.constant 1 : index
    %c0_103 = arith.constant 0 : index
    %c0_104 = arith.constant 0 : index
    %134 = vector.load %arg3[%c1_102, %c0_103, %c0_104] : memref<9x128x128xbf16, #tpu.memory_space<vmem>>, vector<1x128x128xbf16>
    %135 = vector.shape_cast %134 : vector<1x128x128xbf16> to vector<128x128xbf16>
    %cst_105 = arith.constant dense<0.000000e+00> : vector<49x128xf32>
    %136 = tpu.matmul %133, %135, %cst_105 {dimension_numbers = #tpu.dot_dimension_numbers<[1], [0], [0], [1], [0, 0, 1, 1], [], []>} : vector<49x128xbf16>, vector<128x128xbf16>, vector<49x128xf32> -> vector<49x128xf32>
    %137 = arith.addf %129, %136 : vector<49x128xf32>
    %c2_106 = arith.constant 2 : index
    %c0_107 = arith.constant 0 : index
    %c0_108 = arith.constant 0 : index
    %138 = vector.load %arg2[%c2_106, %c0_107, %c0_108] : memref<9x49x196xbf16, #tpu.memory_space<vmem>>, vector<1x49x196xbf16>
    %139 = vector.shape_cast %138 : vector<1x49x196xbf16> to vector<49x196xbf16>
    %cst_109 = arith.constant dense<0.000000e+00> : vector<49x128xf32>
    %140 = tpu.matmul %139, %51, %cst_109 {dimension_numbers = #tpu.dot_dimension_numbers<[1], [0], [0], [1], [0, 0, 1, 1], [], []>} : vector<49x196xbf16>, vector<196x128xbf16>, vector<49x128xf32> -> vector<49x128xf32>
    %141 = arith.truncf %140 : vector<49x128xf32> to vector<49x128xbf16>
    %c2_110 = arith.constant 2 : index
    %c0_111 = arith.constant 0 : index
    %c0_112 = arith.constant 0 : index
    %142 = vector.load %arg3[%c2_110, %c0_111, %c0_112] : memref<9x128x128xbf16, #tpu.memory_space<vmem>>, vector<1x128x128xbf16>
    %143 = vector.shape_cast %142 : vector<1x128x128xbf16> to vector<128x128xbf16>
    %cst_113 = arith.constant dense<0.000000e+00> : vector<49x128xf32>
    %144 = tpu.matmul %141, %143, %cst_113 {dimension_numbers = #tpu.dot_dimension_numbers<[1], [0], [0], [1], [0, 0, 1, 1], [], []>} : vector<49x128xbf16>, vector<128x128xbf16>, vector<49x128xf32> -> vector<49x128xf32>
    %145 = arith.addf %137, %144 : vector<49x128xf32>
    %c3_114 = arith.constant 3 : index
    %c0_115 = arith.constant 0 : index
    %c0_116 = arith.constant 0 : index
    %146 = vector.load %arg2[%c3_114, %c0_115, %c0_116] : memref<9x49x196xbf16, #tpu.memory_space<vmem>>, vector<1x49x196xbf16>
    %147 = vector.shape_cast %146 : vector<1x49x196xbf16> to vector<49x196xbf16>
    %cst_117 = arith.constant dense<0.000000e+00> : vector<49x128xf32>
    %148 = tpu.matmul %147, %51, %cst_117 {dimension_numbers = #tpu.dot_dimension_numbers<[1], [0], [0], [1], [0, 0, 1, 1], [], []>} : vector<49x196xbf16>, vector<196x128xbf16>, vector<49x128xf32> -> vector<49x128xf32>
    %149 = arith.truncf %148 : vector<49x128xf32> to vector<49x128xbf16>
    %c3_118 = arith.constant 3 : index
    %c0_119 = arith.constant 0 : index
    %c0_120 = arith.constant 0 : index
    %150 = vector.load %arg3[%c3_118, %c0_119, %c0_120] : memref<9x128x128xbf16, #tpu.memory_space<vmem>>, vector<1x128x128xbf16>
    %151 = vector.shape_cast %150 : vector<1x128x128xbf16> to vector<128x128xbf16>
    %cst_121 = arith.constant dense<0.000000e+00> : vector<49x128xf32>
    %152 = tpu.matmul %149, %151, %cst_121 {dimension_numbers = #tpu.dot_dimension_numbers<[1], [0], [0], [1], [0, 0, 1, 1], [], []>} : vector<49x128xbf16>, vector<128x128xbf16>, vector<49x128xf32> -> vector<49x128xf32>
    %153 = arith.addf %145, %152 : vector<49x128xf32>
    %c4_122 = arith.constant 4 : index
    %c0_123 = arith.constant 0 : index
    %c0_124 = arith.constant 0 : index
    %154 = vector.load %arg2[%c4_122, %c0_123, %c0_124] : memref<9x49x196xbf16, #tpu.memory_space<vmem>>, vector<1x49x196xbf16>
    %155 = vector.shape_cast %154 : vector<1x49x196xbf16> to vector<49x196xbf16>
    %cst_125 = arith.constant dense<0.000000e+00> : vector<49x128xf32>
    %156 = tpu.matmul %155, %51, %cst_125 {dimension_numbers = #tpu.dot_dimension_numbers<[1], [0], [0], [1], [0, 0, 1, 1], [], []>} : vector<49x196xbf16>, vector<196x128xbf16>, vector<49x128xf32> -> vector<49x128xf32>
    %157 = arith.truncf %156 : vector<49x128xf32> to vector<49x128xbf16>
    %c4_126 = arith.constant 4 : index
    %c0_127 = arith.constant 0 : index
    %c0_128 = arith.constant 0 : index
    %158 = vector.load %arg3[%c4_126, %c0_127, %c0_128] : memref<9x128x128xbf16, #tpu.memory_space<vmem>>, vector<1x128x128xbf16>
    %159 = vector.shape_cast %158 : vector<1x128x128xbf16> to vector<128x128xbf16>
    %cst_129 = arith.constant dense<0.000000e+00> : vector<49x128xf32>
    %160 = tpu.matmul %157, %159, %cst_129 {dimension_numbers = #tpu.dot_dimension_numbers<[1], [0], [0], [1], [0, 0, 1, 1], [], []>} : vector<49x128xbf16>, vector<128x128xbf16>, vector<49x128xf32> -> vector<49x128xf32>
    %161 = arith.addf %153, %160 : vector<49x128xf32>
    %c5_130 = arith.constant 5 : index
    %c0_131 = arith.constant 0 : index
    %c0_132 = arith.constant 0 : index
    %162 = vector.load %arg2[%c5_130, %c0_131, %c0_132] : memref<9x49x196xbf16, #tpu.memory_space<vmem>>, vector<1x49x196xbf16>
    %163 = vector.shape_cast %162 : vector<1x49x196xbf16> to vector<49x196xbf16>
    %cst_133 = arith.constant dense<0.000000e+00> : vector<49x128xf32>
    %164 = tpu.matmul %163, %51, %cst_133 {dimension_numbers = #tpu.dot_dimension_numbers<[1], [0], [0], [1], [0, 0, 1, 1], [], []>} : vector<49x196xbf16>, vector<196x128xbf16>, vector<49x128xf32> -> vector<49x128xf32>
    %165 = arith.truncf %164 : vector<49x128xf32> to vector<49x128xbf16>
    %c5_134 = arith.constant 5 : index
    %c0_135 = arith.constant 0 : index
    %c0_136 = arith.constant 0 : index
    %166 = vector.load %arg3[%c5_134, %c0_135, %c0_136] : memref<9x128x128xbf16, #tpu.memory_space<vmem>>, vector<1x128x128xbf16>
    %167 = vector.shape_cast %166 : vector<1x128x128xbf16> to vector<128x128xbf16>
    %cst_137 = arith.constant dense<0.000000e+00> : vector<49x128xf32>
    %168 = tpu.matmul %165, %167, %cst_137 {dimension_numbers = #tpu.dot_dimension_numbers<[1], [0], [0], [1], [0, 0, 1, 1], [], []>} : vector<49x128xbf16>, vector<128x128xbf16>, vector<49x128xf32> -> vector<49x128xf32>
    %169 = arith.addf %161, %168 : vector<49x128xf32>
    %c6_138 = arith.constant 6 : index
    %c0_139 = arith.constant 0 : index
    %c0_140 = arith.constant 0 : index
    %170 = vector.load %arg2[%c6_138, %c0_139, %c0_140] : memref<9x49x196xbf16, #tpu.memory_space<vmem>>, vector<1x49x196xbf16>
    %171 = vector.shape_cast %170 : vector<1x49x196xbf16> to vector<49x196xbf16>
    %cst_141 = arith.constant dense<0.000000e+00> : vector<49x128xf32>
    %172 = tpu.matmul %171, %51, %cst_141 {dimension_numbers = #tpu.dot_dimension_numbers<[1], [0], [0], [1], [0, 0, 1, 1], [], []>} : vector<49x196xbf16>, vector<196x128xbf16>, vector<49x128xf32> -> vector<49x128xf32>
    %173 = arith.truncf %172 : vector<49x128xf32> to vector<49x128xbf16>
    %c6_142 = arith.constant 6 : index
    %c0_143 = arith.constant 0 : index
    %c0_144 = arith.constant 0 : index
    %174 = vector.load %arg3[%c6_142, %c0_143, %c0_144] : memref<9x128x128xbf16, #tpu.memory_space<vmem>>, vector<1x128x128xbf16>
    %175 = vector.shape_cast %174 : vector<1x128x128xbf16> to vector<128x128xbf16>
    %cst_145 = arith.constant dense<0.000000e+00> : vector<49x128xf32>
    %176 = tpu.matmul %173, %175, %cst_145 {dimension_numbers = #tpu.dot_dimension_numbers<[1], [0], [0], [1], [0, 0, 1, 1], [], []>} : vector<49x128xbf16>, vector<128x128xbf16>, vector<49x128xf32> -> vector<49x128xf32>
    %177 = arith.addf %169, %176 : vector<49x128xf32>
    %c7_146 = arith.constant 7 : index
    %c0_147 = arith.constant 0 : index
    %c0_148 = arith.constant 0 : index
    %178 = vector.load %arg2[%c7_146, %c0_147, %c0_148] : memref<9x49x196xbf16, #tpu.memory_space<vmem>>, vector<1x49x196xbf16>
    %179 = vector.shape_cast %178 : vector<1x49x196xbf16> to vector<49x196xbf16>
    %cst_149 = arith.constant dense<0.000000e+00> : vector<49x128xf32>
    %180 = tpu.matmul %179, %51, %cst_149 {dimension_numbers = #tpu.dot_dimension_numbers<[1], [0], [0], [1], [0, 0, 1, 1], [], []>} : vector<49x196xbf16>, vector<196x128xbf16>, vector<49x128xf32> -> vector<49x128xf32>
    %181 = arith.truncf %180 : vector<49x128xf32> to vector<49x128xbf16>
    %c7_150 = arith.constant 7 : index
    %c0_151 = arith.constant 0 : index
    %c0_152 = arith.constant 0 : index
    %182 = vector.load %arg3[%c7_150, %c0_151, %c0_152] : memref<9x128x128xbf16, #tpu.memory_space<vmem>>, vector<1x128x128xbf16>
    %183 = vector.shape_cast %182 : vector<1x128x128xbf16> to vector<128x128xbf16>
    %cst_153 = arith.constant dense<0.000000e+00> : vector<49x128xf32>
    %184 = tpu.matmul %181, %183, %cst_153 {dimension_numbers = #tpu.dot_dimension_numbers<[1], [0], [0], [1], [0, 0, 1, 1], [], []>} : vector<49x128xbf16>, vector<128x128xbf16>, vector<49x128xf32> -> vector<49x128xf32>
    %185 = arith.addf %177, %184 : vector<49x128xf32>
    %c8_154 = arith.constant 8 : index
    %c0_155 = arith.constant 0 : index
    %c0_156 = arith.constant 0 : index
    %186 = vector.load %arg2[%c8_154, %c0_155, %c0_156] : memref<9x49x196xbf16, #tpu.memory_space<vmem>>, vector<1x49x196xbf16>
    %187 = vector.shape_cast %186 : vector<1x49x196xbf16> to vector<49x196xbf16>
    %cst_157 = arith.constant dense<0.000000e+00> : vector<49x128xf32>
    %188 = tpu.matmul %187, %51, %cst_157 {dimension_numbers = #tpu.dot_dimension_numbers<[1], [0], [0], [1], [0, 0, 1, 1], [], []>} : vector<49x196xbf16>, vector<196x128xbf16>, vector<49x128xf32> -> vector<49x128xf32>
    %189 = arith.truncf %188 : vector<49x128xf32> to vector<49x128xbf16>
    %c8_158 = arith.constant 8 : index
    %c0_159 = arith.constant 0 : index
    %c0_160 = arith.constant 0 : index
    %190 = vector.load %arg3[%c8_158, %c0_159, %c0_160] : memref<9x128x128xbf16, #tpu.memory_space<vmem>>, vector<1x128x128xbf16>
    %191 = vector.shape_cast %190 : vector<1x128x128xbf16> to vector<128x128xbf16>
    %cst_161 = arith.constant dense<0.000000e+00> : vector<49x128xf32>
    %192 = tpu.matmul %189, %191, %cst_161 {dimension_numbers = #tpu.dot_dimension_numbers<[1], [0], [0], [1], [0, 0, 1, 1], [], []>} : vector<49x128xbf16>, vector<128x128xbf16>, vector<49x128xf32> -> vector<49x128xf32>
    %193 = arith.addf %185, %192 : vector<49x128xf32>
    %cst_162 = arith.constant dense<0.000000e+00> : vector<128xf32>
    %194 = vector.multi_reduction <add>, %122, %cst_162 [0] : vector<49x128xf32> to vector<128xf32>
    %195 = vector.shape_cast %194 : vector<128xf32> to vector<1x128xf32>
    %196 = arith.mulf %122, %122 : vector<49x128xf32>
    %cst_163 = arith.constant dense<0.000000e+00> : vector<128xf32>
    %197 = vector.multi_reduction <add>, %196, %cst_163 [0] : vector<49x128xf32> to vector<128xf32>
    %198 = vector.shape_cast %197 : vector<128xf32> to vector<1x128xf32>
    %cst_164 = arith.constant dense<0.000000e+00> : vector<128xf32>
    %199 = vector.multi_reduction <add>, %193, %cst_164 [0] : vector<49x128xf32> to vector<128xf32>
    %200 = vector.shape_cast %199 : vector<128xf32> to vector<1x128xf32>
    %201 = arith.addf %195, %200 : vector<1x128xf32>
    %202 = arith.mulf %193, %193 : vector<49x128xf32>
    %cst_165 = arith.constant dense<0.000000e+00> : vector<128xf32>
    %203 = vector.multi_reduction <add>, %202, %cst_165 [0] : vector<49x128xf32> to vector<128xf32>
    %204 = vector.shape_cast %203 : vector<128xf32> to vector<1x128xf32>
    %205 = arith.addf %198, %204 : vector<1x128xf32>
    %cst_166 = arith.constant 0.0102040814 : f32
    %206 = vector.broadcast %cst_166 : f32 to vector<1x128xf32>
    %207 = arith.mulf %201, %206 : vector<1x128xf32>
    %cst_167 = arith.constant 0.0102040814 : f32
    %208 = vector.broadcast %cst_167 : f32 to vector<1x128xf32>
    %209 = arith.mulf %205, %208 : vector<1x128xf32>
    %210 = arith.mulf %207, %207 : vector<1x128xf32>
    %211 = arith.subf %209, %210 : vector<1x128xf32>
    %cst_168 = arith.constant 0.000000e+00 : f32
    %212 = vector.broadcast %cst_168 : f32 to vector<1x128xf32>
    %213 = arith.maximumf %211, %212 : vector<1x128xf32>
    %c1_169 = arith.constant 1 : index
    %c0_170 = arith.constant 0 : index
    %c0_171 = arith.constant 0 : index
    %214 = vector.load %arg8[%c1_169, %c0_170, %c0_171] : memref<4x1x128xf32, #tpu.memory_space<vmem>>, vector<1x1x128xf32>
    %215 = vector.shape_cast %214 : vector<1x1x128xf32> to vector<1x128xf32>
    %cst_172 = arith.constant 9.99999974E-6 : f32
    %216 = vector.broadcast %cst_172 : f32 to vector<1x128xf32>
    %217 = arith.addf %213, %216 : vector<1x128xf32>
    %218 = math.rsqrt %217 : vector<1x128xf32>
    %219 = arith.mulf %215, %218 : vector<1x128xf32>
    %c1_173 = arith.constant 1 : index
    %c0_174 = arith.constant 0 : index
    %c0_175 = arith.constant 0 : index
    %220 = vector.load %arg9[%c1_173, %c0_174, %c0_175] : memref<4x1x128xf32, #tpu.memory_space<vmem>>, vector<1x1x128xf32>
    %221 = vector.shape_cast %220 : vector<1x1x128xf32> to vector<1x128xf32>
    %222 = arith.mulf %207, %219 : vector<1x128xf32>
    %223 = arith.subf %221, %222 : vector<1x128xf32>
    %224 = vector.broadcast %219 : vector<1x128xf32> to vector<49x128xf32>
    %225 = arith.mulf %122, %224 : vector<49x128xf32>
    %226 = vector.broadcast %223 : vector<1x128xf32> to vector<49x128xf32>
    %227 = arith.addf %225, %226 : vector<49x128xf32>
    %cst_176 = arith.constant 0.000000e+00 : f32
    %228 = vector.broadcast %cst_176 : f32 to vector<49x128xf32>
    %229 = arith.maximumf %227, %228 : vector<49x128xf32>
    %230 = arith.truncf %229 : vector<49x128xf32> to vector<49x128xbf16>
    %231 = vector.broadcast %219 : vector<1x128xf32> to vector<49x128xf32>
    %232 = arith.mulf %193, %231 : vector<49x128xf32>
    %233 = vector.broadcast %223 : vector<1x128xf32> to vector<49x128xf32>
    %234 = arith.addf %232, %233 : vector<49x128xf32>
    %cst_177 = arith.constant 0.000000e+00 : f32
    %235 = vector.broadcast %cst_177 : f32 to vector<49x128xf32>
    %236 = arith.maximumf %234, %235 : vector<49x128xf32>
    %237 = arith.truncf %236 : vector<49x128xf32> to vector<49x128xbf16>
    %c0_178 = arith.constant 0 : index
    %c0_179 = arith.constant 0 : index
    %c0_180 = arith.constant 0 : index
    %238 = vector.load %arg4[%c0_178, %c0_179, %c0_180] : memref<9x16x49xbf16, #tpu.memory_space<vmem>>, vector<1x16x49xbf16>
    %239 = vector.shape_cast %238 : vector<1x16x49xbf16> to vector<16x49xbf16>
    %cst_181 = arith.constant dense<0.000000e+00> : vector<16x128xf32>
    %240 = tpu.matmul %239, %230, %cst_181 {dimension_numbers = #tpu.dot_dimension_numbers<[1], [0], [0], [1], [0, 0, 1, 1], [], []>} : vector<16x49xbf16>, vector<49x128xbf16>, vector<16x128xf32> -> vector<16x128xf32>
    %241 = arith.truncf %240 : vector<16x128xf32> to vector<16x128xbf16>
    %c0_182 = arith.constant 0 : index
    %c0_183 = arith.constant 0 : index
    %c0_184 = arith.constant 0 : index
    %242 = vector.load %arg5[%c0_182, %c0_183, %c0_184] : memref<9x128x128xbf16, #tpu.memory_space<vmem>>, vector<1x128x128xbf16>
    %243 = vector.shape_cast %242 : vector<1x128x128xbf16> to vector<128x128xbf16>
    %cst_185 = arith.constant dense<0.000000e+00> : vector<16x128xf32>
    %244 = tpu.matmul %241, %243, %cst_185 {dimension_numbers = #tpu.dot_dimension_numbers<[1], [0], [0], [1], [0, 0, 1, 1], [], []>} : vector<16x128xbf16>, vector<128x128xbf16>, vector<16x128xf32> -> vector<16x128xf32>
    %c1_186 = arith.constant 1 : index
    %c0_187 = arith.constant 0 : index
    %c0_188 = arith.constant 0 : index
    %245 = vector.load %arg4[%c1_186, %c0_187, %c0_188] : memref<9x16x49xbf16, #tpu.memory_space<vmem>>, vector<1x16x49xbf16>
    %246 = vector.shape_cast %245 : vector<1x16x49xbf16> to vector<16x49xbf16>
    %cst_189 = arith.constant dense<0.000000e+00> : vector<16x128xf32>
    %247 = tpu.matmul %246, %230, %cst_189 {dimension_numbers = #tpu.dot_dimension_numbers<[1], [0], [0], [1], [0, 0, 1, 1], [], []>} : vector<16x49xbf16>, vector<49x128xbf16>, vector<16x128xf32> -> vector<16x128xf32>
    %248 = arith.truncf %247 : vector<16x128xf32> to vector<16x128xbf16>
    %c1_190 = arith.constant 1 : index
    %c0_191 = arith.constant 0 : index
    %c0_192 = arith.constant 0 : index
    %249 = vector.load %arg5[%c1_190, %c0_191, %c0_192] : memref<9x128x128xbf16, #tpu.memory_space<vmem>>, vector<1x128x128xbf16>
    %250 = vector.shape_cast %249 : vector<1x128x128xbf16> to vector<128x128xbf16>
    %cst_193 = arith.constant dense<0.000000e+00> : vector<16x128xf32>
    %251 = tpu.matmul %248, %250, %cst_193 {dimension_numbers = #tpu.dot_dimension_numbers<[1], [0], [0], [1], [0, 0, 1, 1], [], []>} : vector<16x128xbf16>, vector<128x128xbf16>, vector<16x128xf32> -> vector<16x128xf32>
    %252 = arith.addf %244, %251 : vector<16x128xf32>
    %c2_194 = arith.constant 2 : index
    %c0_195 = arith.constant 0 : index
    %c0_196 = arith.constant 0 : index
    %253 = vector.load %arg4[%c2_194, %c0_195, %c0_196] : memref<9x16x49xbf16, #tpu.memory_space<vmem>>, vector<1x16x49xbf16>
    %254 = vector.shape_cast %253 : vector<1x16x49xbf16> to vector<16x49xbf16>
    %cst_197 = arith.constant dense<0.000000e+00> : vector<16x128xf32>
    %255 = tpu.matmul %254, %230, %cst_197 {dimension_numbers = #tpu.dot_dimension_numbers<[1], [0], [0], [1], [0, 0, 1, 1], [], []>} : vector<16x49xbf16>, vector<49x128xbf16>, vector<16x128xf32> -> vector<16x128xf32>
    %256 = arith.truncf %255 : vector<16x128xf32> to vector<16x128xbf16>
    %c2_198 = arith.constant 2 : index
    %c0_199 = arith.constant 0 : index
    %c0_200 = arith.constant 0 : index
    %257 = vector.load %arg5[%c2_198, %c0_199, %c0_200] : memref<9x128x128xbf16, #tpu.memory_space<vmem>>, vector<1x128x128xbf16>
    %258 = vector.shape_cast %257 : vector<1x128x128xbf16> to vector<128x128xbf16>
    %cst_201 = arith.constant dense<0.000000e+00> : vector<16x128xf32>
    %259 = tpu.matmul %256, %258, %cst_201 {dimension_numbers = #tpu.dot_dimension_numbers<[1], [0], [0], [1], [0, 0, 1, 1], [], []>} : vector<16x128xbf16>, vector<128x128xbf16>, vector<16x128xf32> -> vector<16x128xf32>
    %260 = arith.addf %252, %259 : vector<16x128xf32>
    %c3_202 = arith.constant 3 : index
    %c0_203 = arith.constant 0 : index
    %c0_204 = arith.constant 0 : index
    %261 = vector.load %arg4[%c3_202, %c0_203, %c0_204] : memref<9x16x49xbf16, #tpu.memory_space<vmem>>, vector<1x16x49xbf16>
    %262 = vector.shape_cast %261 : vector<1x16x49xbf16> to vector<16x49xbf16>
    %cst_205 = arith.constant dense<0.000000e+00> : vector<16x128xf32>
    %263 = tpu.matmul %262, %230, %cst_205 {dimension_numbers = #tpu.dot_dimension_numbers<[1], [0], [0], [1], [0, 0, 1, 1], [], []>} : vector<16x49xbf16>, vector<49x128xbf16>, vector<16x128xf32> -> vector<16x128xf32>
    %264 = arith.truncf %263 : vector<16x128xf32> to vector<16x128xbf16>
    %c3_206 = arith.constant 3 : index
    %c0_207 = arith.constant 0 : index
    %c0_208 = arith.constant 0 : index
    %265 = vector.load %arg5[%c3_206, %c0_207, %c0_208] : memref<9x128x128xbf16, #tpu.memory_space<vmem>>, vector<1x128x128xbf16>
    %266 = vector.shape_cast %265 : vector<1x128x128xbf16> to vector<128x128xbf16>
    %cst_209 = arith.constant dense<0.000000e+00> : vector<16x128xf32>
    %267 = tpu.matmul %264, %266, %cst_209 {dimension_numbers = #tpu.dot_dimension_numbers<[1], [0], [0], [1], [0, 0, 1, 1], [], []>} : vector<16x128xbf16>, vector<128x128xbf16>, vector<16x128xf32> -> vector<16x128xf32>
    %268 = arith.addf %260, %267 : vector<16x128xf32>
    %c4_210 = arith.constant 4 : index
    %c0_211 = arith.constant 0 : index
    %c0_212 = arith.constant 0 : index
    %269 = vector.load %arg4[%c4_210, %c0_211, %c0_212] : memref<9x16x49xbf16, #tpu.memory_space<vmem>>, vector<1x16x49xbf16>
    %270 = vector.shape_cast %269 : vector<1x16x49xbf16> to vector<16x49xbf16>
    %cst_213 = arith.constant dense<0.000000e+00> : vector<16x128xf32>
    %271 = tpu.matmul %270, %230, %cst_213 {dimension_numbers = #tpu.dot_dimension_numbers<[1], [0], [0], [1], [0, 0, 1, 1], [], []>} : vector<16x49xbf16>, vector<49x128xbf16>, vector<16x128xf32> -> vector<16x128xf32>
    %272 = arith.truncf %271 : vector<16x128xf32> to vector<16x128xbf16>
    %c4_214 = arith.constant 4 : index
    %c0_215 = arith.constant 0 : index
    %c0_216 = arith.constant 0 : index
    %273 = vector.load %arg5[%c4_214, %c0_215, %c0_216] : memref<9x128x128xbf16, #tpu.memory_space<vmem>>, vector<1x128x128xbf16>
    %274 = vector.shape_cast %273 : vector<1x128x128xbf16> to vector<128x128xbf16>
    %cst_217 = arith.constant dense<0.000000e+00> : vector<16x128xf32>
    %275 = tpu.matmul %272, %274, %cst_217 {dimension_numbers = #tpu.dot_dimension_numbers<[1], [0], [0], [1], [0, 0, 1, 1], [], []>} : vector<16x128xbf16>, vector<128x128xbf16>, vector<16x128xf32> -> vector<16x128xf32>
    %276 = arith.addf %268, %275 : vector<16x128xf32>
    %c5_218 = arith.constant 5 : index
    %c0_219 = arith.constant 0 : index
    %c0_220 = arith.constant 0 : index
    %277 = vector.load %arg4[%c5_218, %c0_219, %c0_220] : memref<9x16x49xbf16, #tpu.memory_space<vmem>>, vector<1x16x49xbf16>
    %278 = vector.shape_cast %277 : vector<1x16x49xbf16> to vector<16x49xbf16>
    %cst_221 = arith.constant dense<0.000000e+00> : vector<16x128xf32>
    %279 = tpu.matmul %278, %230, %cst_221 {dimension_numbers = #tpu.dot_dimension_numbers<[1], [0], [0], [1], [0, 0, 1, 1], [], []>} : vector<16x49xbf16>, vector<49x128xbf16>, vector<16x128xf32> -> vector<16x128xf32>
    %280 = arith.truncf %279 : vector<16x128xf32> to vector<16x128xbf16>
    %c5_222 = arith.constant 5 : index
    %c0_223 = arith.constant 0 : index
    %c0_224 = arith.constant 0 : index
    %281 = vector.load %arg5[%c5_222, %c0_223, %c0_224] : memref<9x128x128xbf16, #tpu.memory_space<vmem>>, vector<1x128x128xbf16>
    %282 = vector.shape_cast %281 : vector<1x128x128xbf16> to vector<128x128xbf16>
    %cst_225 = arith.constant dense<0.000000e+00> : vector<16x128xf32>
    %283 = tpu.matmul %280, %282, %cst_225 {dimension_numbers = #tpu.dot_dimension_numbers<[1], [0], [0], [1], [0, 0, 1, 1], [], []>} : vector<16x128xbf16>, vector<128x128xbf16>, vector<16x128xf32> -> vector<16x128xf32>
    %284 = arith.addf %276, %283 : vector<16x128xf32>
    %c6_226 = arith.constant 6 : index
    %c0_227 = arith.constant 0 : index
    %c0_228 = arith.constant 0 : index
    %285 = vector.load %arg4[%c6_226, %c0_227, %c0_228] : memref<9x16x49xbf16, #tpu.memory_space<vmem>>, vector<1x16x49xbf16>
    %286 = vector.shape_cast %285 : vector<1x16x49xbf16> to vector<16x49xbf16>
    %cst_229 = arith.constant dense<0.000000e+00> : vector<16x128xf32>
    %287 = tpu.matmul %286, %230, %cst_229 {dimension_numbers = #tpu.dot_dimension_numbers<[1], [0], [0], [1], [0, 0, 1, 1], [], []>} : vector<16x49xbf16>, vector<49x128xbf16>, vector<16x128xf32> -> vector<16x128xf32>
    %288 = arith.truncf %287 : vector<16x128xf32> to vector<16x128xbf16>
    %c6_230 = arith.constant 6 : index
    %c0_231 = arith.constant 0 : index
    %c0_232 = arith.constant 0 : index
    %289 = vector.load %arg5[%c6_230, %c0_231, %c0_232] : memref<9x128x128xbf16, #tpu.memory_space<vmem>>, vector<1x128x128xbf16>
    %290 = vector.shape_cast %289 : vector<1x128x128xbf16> to vector<128x128xbf16>
    %cst_233 = arith.constant dense<0.000000e+00> : vector<16x128xf32>
    %291 = tpu.matmul %288, %290, %cst_233 {dimension_numbers = #tpu.dot_dimension_numbers<[1], [0], [0], [1], [0, 0, 1, 1], [], []>} : vector<16x128xbf16>, vector<128x128xbf16>, vector<16x128xf32> -> vector<16x128xf32>
    %292 = arith.addf %284, %291 : vector<16x128xf32>
    %c7_234 = arith.constant 7 : index
    %c0_235 = arith.constant 0 : index
    %c0_236 = arith.constant 0 : index
    %293 = vector.load %arg4[%c7_234, %c0_235, %c0_236] : memref<9x16x49xbf16, #tpu.memory_space<vmem>>, vector<1x16x49xbf16>
    %294 = vector.shape_cast %293 : vector<1x16x49xbf16> to vector<16x49xbf16>
    %cst_237 = arith.constant dense<0.000000e+00> : vector<16x128xf32>
    %295 = tpu.matmul %294, %230, %cst_237 {dimension_numbers = #tpu.dot_dimension_numbers<[1], [0], [0], [1], [0, 0, 1, 1], [], []>} : vector<16x49xbf16>, vector<49x128xbf16>, vector<16x128xf32> -> vector<16x128xf32>
    %296 = arith.truncf %295 : vector<16x128xf32> to vector<16x128xbf16>
    %c7_238 = arith.constant 7 : index
    %c0_239 = arith.constant 0 : index
    %c0_240 = arith.constant 0 : index
    %297 = vector.load %arg5[%c7_238, %c0_239, %c0_240] : memref<9x128x128xbf16, #tpu.memory_space<vmem>>, vector<1x128x128xbf16>
    %298 = vector.shape_cast %297 : vector<1x128x128xbf16> to vector<128x128xbf16>
    %cst_241 = arith.constant dense<0.000000e+00> : vector<16x128xf32>
    %299 = tpu.matmul %296, %298, %cst_241 {dimension_numbers = #tpu.dot_dimension_numbers<[1], [0], [0], [1], [0, 0, 1, 1], [], []>} : vector<16x128xbf16>, vector<128x128xbf16>, vector<16x128xf32> -> vector<16x128xf32>
    %300 = arith.addf %292, %299 : vector<16x128xf32>
    %c8_242 = arith.constant 8 : index
    %c0_243 = arith.constant 0 : index
    %c0_244 = arith.constant 0 : index
    %301 = vector.load %arg4[%c8_242, %c0_243, %c0_244] : memref<9x16x49xbf16, #tpu.memory_space<vmem>>, vector<1x16x49xbf16>
    %302 = vector.shape_cast %301 : vector<1x16x49xbf16> to vector<16x49xbf16>
    %cst_245 = arith.constant dense<0.000000e+00> : vector<16x128xf32>
    %303 = tpu.matmul %302, %230, %cst_245 {dimension_numbers = #tpu.dot_dimension_numbers<[1], [0], [0], [1], [0, 0, 1, 1], [], []>} : vector<16x49xbf16>, vector<49x128xbf16>, vector<16x128xf32> -> vector<16x128xf32>
    %304 = arith.truncf %303 : vector<16x128xf32> to vector<16x128xbf16>
    %c8_246 = arith.constant 8 : index
    %c0_247 = arith.constant 0 : index
    %c0_248 = arith.constant 0 : index
    %305 = vector.load %arg5[%c8_246, %c0_247, %c0_248] : memref<9x128x128xbf16, #tpu.memory_space<vmem>>, vector<1x128x128xbf16>
    %306 = vector.shape_cast %305 : vector<1x128x128xbf16> to vector<128x128xbf16>
    %cst_249 = arith.constant dense<0.000000e+00> : vector<16x128xf32>
    %307 = tpu.matmul %304, %306, %cst_249 {dimension_numbers = #tpu.dot_dimension_numbers<[1], [0], [0], [1], [0, 0, 1, 1], [], []>} : vector<16x128xbf16>, vector<128x128xbf16>, vector<16x128xf32> -> vector<16x128xf32>
    %308 = arith.addf %300, %307 : vector<16x128xf32>
    %c0_250 = arith.constant 0 : index
    %c0_251 = arith.constant 0 : index
    %c0_252 = arith.constant 0 : index
    %309 = vector.load %arg4[%c0_250, %c0_251, %c0_252] : memref<9x16x49xbf16, #tpu.memory_space<vmem>>, vector<1x16x49xbf16>
    %310 = vector.shape_cast %309 : vector<1x16x49xbf16> to vector<16x49xbf16>
    %cst_253 = arith.constant dense<0.000000e+00> : vector<16x128xf32>
    %311 = tpu.matmul %310, %237, %cst_253 {dimension_numbers = #tpu.dot_dimension_numbers<[1], [0], [0], [1], [0, 0, 1, 1], [], []>} : vector<16x49xbf16>, vector<49x128xbf16>, vector<16x128xf32> -> vector<16x128xf32>
    %312 = arith.truncf %311 : vector<16x128xf32> to vector<16x128xbf16>
    %c0_254 = arith.constant 0 : index
    %c0_255 = arith.constant 0 : index
    %c0_256 = arith.constant 0 : index
    %313 = vector.load %arg5[%c0_254, %c0_255, %c0_256] : memref<9x128x128xbf16, #tpu.memory_space<vmem>>, vector<1x128x128xbf16>
    %314 = vector.shape_cast %313 : vector<1x128x128xbf16> to vector<128x128xbf16>
    %cst_257 = arith.constant dense<0.000000e+00> : vector<16x128xf32>
    %315 = tpu.matmul %312, %314, %cst_257 {dimension_numbers = #tpu.dot_dimension_numbers<[1], [0], [0], [1], [0, 0, 1, 1], [], []>} : vector<16x128xbf16>, vector<128x128xbf16>, vector<16x128xf32> -> vector<16x128xf32>
    %c1_258 = arith.constant 1 : index
    %c0_259 = arith.constant 0 : index
    %c0_260 = arith.constant 0 : index
    %316 = vector.load %arg4[%c1_258, %c0_259, %c0_260] : memref<9x16x49xbf16, #tpu.memory_space<vmem>>, vector<1x16x49xbf16>
    %317 = vector.shape_cast %316 : vector<1x16x49xbf16> to vector<16x49xbf16>
    %cst_261 = arith.constant dense<0.000000e+00> : vector<16x128xf32>
    %318 = tpu.matmul %317, %237, %cst_261 {dimension_numbers = #tpu.dot_dimension_numbers<[1], [0], [0], [1], [0, 0, 1, 1], [], []>} : vector<16x49xbf16>, vector<49x128xbf16>, vector<16x128xf32> -> vector<16x128xf32>
    %319 = arith.truncf %318 : vector<16x128xf32> to vector<16x128xbf16>
    %c1_262 = arith.constant 1 : index
    %c0_263 = arith.constant 0 : index
    %c0_264 = arith.constant 0 : index
    %320 = vector.load %arg5[%c1_262, %c0_263, %c0_264] : memref<9x128x128xbf16, #tpu.memory_space<vmem>>, vector<1x128x128xbf16>
    %321 = vector.shape_cast %320 : vector<1x128x128xbf16> to vector<128x128xbf16>
    %cst_265 = arith.constant dense<0.000000e+00> : vector<16x128xf32>
    %322 = tpu.matmul %319, %321, %cst_265 {dimension_numbers = #tpu.dot_dimension_numbers<[1], [0], [0], [1], [0, 0, 1, 1], [], []>} : vector<16x128xbf16>, vector<128x128xbf16>, vector<16x128xf32> -> vector<16x128xf32>
    %323 = arith.addf %315, %322 : vector<16x128xf32>
    %c2_266 = arith.constant 2 : index
    %c0_267 = arith.constant 0 : index
    %c0_268 = arith.constant 0 : index
    %324 = vector.load %arg4[%c2_266, %c0_267, %c0_268] : memref<9x16x49xbf16, #tpu.memory_space<vmem>>, vector<1x16x49xbf16>
    %325 = vector.shape_cast %324 : vector<1x16x49xbf16> to vector<16x49xbf16>
    %cst_269 = arith.constant dense<0.000000e+00> : vector<16x128xf32>
    %326 = tpu.matmul %325, %237, %cst_269 {dimension_numbers = #tpu.dot_dimension_numbers<[1], [0], [0], [1], [0, 0, 1, 1], [], []>} : vector<16x49xbf16>, vector<49x128xbf16>, vector<16x128xf32> -> vector<16x128xf32>
    %327 = arith.truncf %326 : vector<16x128xf32> to vector<16x128xbf16>
    %c2_270 = arith.constant 2 : index
    %c0_271 = arith.constant 0 : index
    %c0_272 = arith.constant 0 : index
    %328 = vector.load %arg5[%c2_270, %c0_271, %c0_272] : memref<9x128x128xbf16, #tpu.memory_space<vmem>>, vector<1x128x128xbf16>
    %329 = vector.shape_cast %328 : vector<1x128x128xbf16> to vector<128x128xbf16>
    %cst_273 = arith.constant dense<0.000000e+00> : vector<16x128xf32>
    %330 = tpu.matmul %327, %329, %cst_273 {dimension_numbers = #tpu.dot_dimension_numbers<[1], [0], [0], [1], [0, 0, 1, 1], [], []>} : vector<16x128xbf16>, vector<128x128xbf16>, vector<16x128xf32> -> vector<16x128xf32>
    %331 = arith.addf %323, %330 : vector<16x128xf32>
    %c3_274 = arith.constant 3 : index
    %c0_275 = arith.constant 0 : index
    %c0_276 = arith.constant 0 : index
    %332 = vector.load %arg4[%c3_274, %c0_275, %c0_276] : memref<9x16x49xbf16, #tpu.memory_space<vmem>>, vector<1x16x49xbf16>
    %333 = vector.shape_cast %332 : vector<1x16x49xbf16> to vector<16x49xbf16>
    %cst_277 = arith.constant dense<0.000000e+00> : vector<16x128xf32>
    %334 = tpu.matmul %333, %237, %cst_277 {dimension_numbers = #tpu.dot_dimension_numbers<[1], [0], [0], [1], [0, 0, 1, 1], [], []>} : vector<16x49xbf16>, vector<49x128xbf16>, vector<16x128xf32> -> vector<16x128xf32>
    %335 = arith.truncf %334 : vector<16x128xf32> to vector<16x128xbf16>
    %c3_278 = arith.constant 3 : index
    %c0_279 = arith.constant 0 : index
    %c0_280 = arith.constant 0 : index
    %336 = vector.load %arg5[%c3_278, %c0_279, %c0_280] : memref<9x128x128xbf16, #tpu.memory_space<vmem>>, vector<1x128x128xbf16>
    %337 = vector.shape_cast %336 : vector<1x128x128xbf16> to vector<128x128xbf16>
    %cst_281 = arith.constant dense<0.000000e+00> : vector<16x128xf32>
    %338 = tpu.matmul %335, %337, %cst_281 {dimension_numbers = #tpu.dot_dimension_numbers<[1], [0], [0], [1], [0, 0, 1, 1], [], []>} : vector<16x128xbf16>, vector<128x128xbf16>, vector<16x128xf32> -> vector<16x128xf32>
    %339 = arith.addf %331, %338 : vector<16x128xf32>
    %c4_282 = arith.constant 4 : index
    %c0_283 = arith.constant 0 : index
    %c0_284 = arith.constant 0 : index
    %340 = vector.load %arg4[%c4_282, %c0_283, %c0_284] : memref<9x16x49xbf16, #tpu.memory_space<vmem>>, vector<1x16x49xbf16>
    %341 = vector.shape_cast %340 : vector<1x16x49xbf16> to vector<16x49xbf16>
    %cst_285 = arith.constant dense<0.000000e+00> : vector<16x128xf32>
    %342 = tpu.matmul %341, %237, %cst_285 {dimension_numbers = #tpu.dot_dimension_numbers<[1], [0], [0], [1], [0, 0, 1, 1], [], []>} : vector<16x49xbf16>, vector<49x128xbf16>, vector<16x128xf32> -> vector<16x128xf32>
    %343 = arith.truncf %342 : vector<16x128xf32> to vector<16x128xbf16>
    %c4_286 = arith.constant 4 : index
    %c0_287 = arith.constant 0 : index
    %c0_288 = arith.constant 0 : index
    %344 = vector.load %arg5[%c4_286, %c0_287, %c0_288] : memref<9x128x128xbf16, #tpu.memory_space<vmem>>, vector<1x128x128xbf16>
    %345 = vector.shape_cast %344 : vector<1x128x128xbf16> to vector<128x128xbf16>
    %cst_289 = arith.constant dense<0.000000e+00> : vector<16x128xf32>
    %346 = tpu.matmul %343, %345, %cst_289 {dimension_numbers = #tpu.dot_dimension_numbers<[1], [0], [0], [1], [0, 0, 1, 1], [], []>} : vector<16x128xbf16>, vector<128x128xbf16>, vector<16x128xf32> -> vector<16x128xf32>
    %347 = arith.addf %339, %346 : vector<16x128xf32>
    %c5_290 = arith.constant 5 : index
    %c0_291 = arith.constant 0 : index
    %c0_292 = arith.constant 0 : index
    %348 = vector.load %arg4[%c5_290, %c0_291, %c0_292] : memref<9x16x49xbf16, #tpu.memory_space<vmem>>, vector<1x16x49xbf16>
    %349 = vector.shape_cast %348 : vector<1x16x49xbf16> to vector<16x49xbf16>
    %cst_293 = arith.constant dense<0.000000e+00> : vector<16x128xf32>
    %350 = tpu.matmul %349, %237, %cst_293 {dimension_numbers = #tpu.dot_dimension_numbers<[1], [0], [0], [1], [0, 0, 1, 1], [], []>} : vector<16x49xbf16>, vector<49x128xbf16>, vector<16x128xf32> -> vector<16x128xf32>
    %351 = arith.truncf %350 : vector<16x128xf32> to vector<16x128xbf16>
    %c5_294 = arith.constant 5 : index
    %c0_295 = arith.constant 0 : index
    %c0_296 = arith.constant 0 : index
    %352 = vector.load %arg5[%c5_294, %c0_295, %c0_296] : memref<9x128x128xbf16, #tpu.memory_space<vmem>>, vector<1x128x128xbf16>
    %353 = vector.shape_cast %352 : vector<1x128x128xbf16> to vector<128x128xbf16>
    %cst_297 = arith.constant dense<0.000000e+00> : vector<16x128xf32>
    %354 = tpu.matmul %351, %353, %cst_297 {dimension_numbers = #tpu.dot_dimension_numbers<[1], [0], [0], [1], [0, 0, 1, 1], [], []>} : vector<16x128xbf16>, vector<128x128xbf16>, vector<16x128xf32> -> vector<16x128xf32>
    %355 = arith.addf %347, %354 : vector<16x128xf32>
    %c6_298 = arith.constant 6 : index
    %c0_299 = arith.constant 0 : index
    %c0_300 = arith.constant 0 : index
    %356 = vector.load %arg4[%c6_298, %c0_299, %c0_300] : memref<9x16x49xbf16, #tpu.memory_space<vmem>>, vector<1x16x49xbf16>
    %357 = vector.shape_cast %356 : vector<1x16x49xbf16> to vector<16x49xbf16>
    %cst_301 = arith.constant dense<0.000000e+00> : vector<16x128xf32>
    %358 = tpu.matmul %357, %237, %cst_301 {dimension_numbers = #tpu.dot_dimension_numbers<[1], [0], [0], [1], [0, 0, 1, 1], [], []>} : vector<16x49xbf16>, vector<49x128xbf16>, vector<16x128xf32> -> vector<16x128xf32>
    %359 = arith.truncf %358 : vector<16x128xf32> to vector<16x128xbf16>
    %c6_302 = arith.constant 6 : index
    %c0_303 = arith.constant 0 : index
    %c0_304 = arith.constant 0 : index
    %360 = vector.load %arg5[%c6_302, %c0_303, %c0_304] : memref<9x128x128xbf16, #tpu.memory_space<vmem>>, vector<1x128x128xbf16>
    %361 = vector.shape_cast %360 : vector<1x128x128xbf16> to vector<128x128xbf16>
    %cst_305 = arith.constant dense<0.000000e+00> : vector<16x128xf32>
    %362 = tpu.matmul %359, %361, %cst_305 {dimension_numbers = #tpu.dot_dimension_numbers<[1], [0], [0], [1], [0, 0, 1, 1], [], []>} : vector<16x128xbf16>, vector<128x128xbf16>, vector<16x128xf32> -> vector<16x128xf32>
    %363 = arith.addf %355, %362 : vector<16x128xf32>
    %c7_306 = arith.constant 7 : index
    %c0_307 = arith.constant 0 : index
    %c0_308 = arith.constant 0 : index
    %364 = vector.load %arg4[%c7_306, %c0_307, %c0_308] : memref<9x16x49xbf16, #tpu.memory_space<vmem>>, vector<1x16x49xbf16>
    %365 = vector.shape_cast %364 : vector<1x16x49xbf16> to vector<16x49xbf16>
    %cst_309 = arith.constant dense<0.000000e+00> : vector<16x128xf32>
    %366 = tpu.matmul %365, %237, %cst_309 {dimension_numbers = #tpu.dot_dimension_numbers<[1], [0], [0], [1], [0, 0, 1, 1], [], []>} : vector<16x49xbf16>, vector<49x128xbf16>, vector<16x128xf32> -> vector<16x128xf32>
    %367 = arith.truncf %366 : vector<16x128xf32> to vector<16x128xbf16>
    %c7_310 = arith.constant 7 : index
    %c0_311 = arith.constant 0 : index
    %c0_312 = arith.constant 0 : index
    %368 = vector.load %arg5[%c7_310, %c0_311, %c0_312] : memref<9x128x128xbf16, #tpu.memory_space<vmem>>, vector<1x128x128xbf16>
    %369 = vector.shape_cast %368 : vector<1x128x128xbf16> to vector<128x128xbf16>
    %cst_313 = arith.constant dense<0.000000e+00> : vector<16x128xf32>
    %370 = tpu.matmul %367, %369, %cst_313 {dimension_numbers = #tpu.dot_dimension_numbers<[1], [0], [0], [1], [0, 0, 1, 1], [], []>} : vector<16x128xbf16>, vector<128x128xbf16>, vector<16x128xf32> -> vector<16x128xf32>
    %371 = arith.addf %363, %370 : vector<16x128xf32>
    %c8_314 = arith.constant 8 : index
    %c0_315 = arith.constant 0 : index
    %c0_316 = arith.constant 0 : index
    %372 = vector.load %arg4[%c8_314, %c0_315, %c0_316] : memref<9x16x49xbf16, #tpu.memory_space<vmem>>, vector<1x16x49xbf16>
    %373 = vector.shape_cast %372 : vector<1x16x49xbf16> to vector<16x49xbf16>
    %cst_317 = arith.constant dense<0.000000e+00> : vector<16x128xf32>
    %374 = tpu.matmul %373, %237, %cst_317 {dimension_numbers = #tpu.dot_dimension_numbers<[1], [0], [0], [1], [0, 0, 1, 1], [], []>} : vector<16x49xbf16>, vector<49x128xbf16>, vector<16x128xf32> -> vector<16x128xf32>
    %375 = arith.truncf %374 : vector<16x128xf32> to vector<16x128xbf16>
    %c8_318 = arith.constant 8 : index
    %c0_319 = arith.constant 0 : index
    %c0_320 = arith.constant 0 : index
    %376 = vector.load %arg5[%c8_318, %c0_319, %c0_320] : memref<9x128x128xbf16, #tpu.memory_space<vmem>>, vector<1x128x128xbf16>
    %377 = vector.shape_cast %376 : vector<1x128x128xbf16> to vector<128x128xbf16>
    %cst_321 = arith.constant dense<0.000000e+00> : vector<16x128xf32>
    %378 = tpu.matmul %375, %377, %cst_321 {dimension_numbers = #tpu.dot_dimension_numbers<[1], [0], [0], [1], [0, 0, 1, 1], [], []>} : vector<16x128xbf16>, vector<128x128xbf16>, vector<16x128xf32> -> vector<16x128xf32>
    %379 = arith.addf %371, %378 : vector<16x128xf32>
    %cst_322 = arith.constant dense<0.000000e+00> : vector<128xf32>
    %380 = vector.multi_reduction <add>, %308, %cst_322 [0] : vector<16x128xf32> to vector<128xf32>
    %381 = vector.shape_cast %380 : vector<128xf32> to vector<1x128xf32>
    %382 = arith.mulf %308, %308 : vector<16x128xf32>
    %cst_323 = arith.constant dense<0.000000e+00> : vector<128xf32>
    %383 = vector.multi_reduction <add>, %382, %cst_323 [0] : vector<16x128xf32> to vector<128xf32>
    %384 = vector.shape_cast %383 : vector<128xf32> to vector<1x128xf32>
    %cst_324 = arith.constant dense<0.000000e+00> : vector<128xf32>
    %385 = vector.multi_reduction <add>, %379, %cst_324 [0] : vector<16x128xf32> to vector<128xf32>
    %386 = vector.shape_cast %385 : vector<128xf32> to vector<1x128xf32>
    %387 = arith.addf %381, %386 : vector<1x128xf32>
    %388 = arith.mulf %379, %379 : vector<16x128xf32>
    %cst_325 = arith.constant dense<0.000000e+00> : vector<128xf32>
    %389 = vector.multi_reduction <add>, %388, %cst_325 [0] : vector<16x128xf32> to vector<128xf32>
    %390 = vector.shape_cast %389 : vector<128xf32> to vector<1x128xf32>
    %391 = arith.addf %384, %390 : vector<1x128xf32>
    %cst_326 = arith.constant 3.125000e-02 : f32
    %392 = vector.broadcast %cst_326 : f32 to vector<1x128xf32>
    %393 = arith.mulf %387, %392 : vector<1x128xf32>
    %cst_327 = arith.constant 3.125000e-02 : f32
    %394 = vector.broadcast %cst_327 : f32 to vector<1x128xf32>
    %395 = arith.mulf %391, %394 : vector<1x128xf32>
    %396 = arith.mulf %393, %393 : vector<1x128xf32>
    %397 = arith.subf %395, %396 : vector<1x128xf32>
    %cst_328 = arith.constant 0.000000e+00 : f32
    %398 = vector.broadcast %cst_328 : f32 to vector<1x128xf32>
    %399 = arith.maximumf %397, %398 : vector<1x128xf32>
    %c2_329 = arith.constant 2 : index
    %c0_330 = arith.constant 0 : index
    %c0_331 = arith.constant 0 : index
    %400 = vector.load %arg8[%c2_329, %c0_330, %c0_331] : memref<4x1x128xf32, #tpu.memory_space<vmem>>, vector<1x1x128xf32>
    %401 = vector.shape_cast %400 : vector<1x1x128xf32> to vector<1x128xf32>
    %cst_332 = arith.constant 9.99999974E-6 : f32
    %402 = vector.broadcast %cst_332 : f32 to vector<1x128xf32>
    %403 = arith.addf %399, %402 : vector<1x128xf32>
    %404 = math.rsqrt %403 : vector<1x128xf32>
    %405 = arith.mulf %401, %404 : vector<1x128xf32>
    %c2_333 = arith.constant 2 : index
    %c0_334 = arith.constant 0 : index
    %c0_335 = arith.constant 0 : index
    %406 = vector.load %arg9[%c2_333, %c0_334, %c0_335] : memref<4x1x128xf32, #tpu.memory_space<vmem>>, vector<1x1x128xf32>
    %407 = vector.shape_cast %406 : vector<1x1x128xf32> to vector<1x128xf32>
    %408 = arith.mulf %393, %405 : vector<1x128xf32>
    %409 = arith.subf %407, %408 : vector<1x128xf32>
    %410 = vector.broadcast %405 : vector<1x128xf32> to vector<16x128xf32>
    %411 = arith.mulf %308, %410 : vector<16x128xf32>
    %412 = vector.broadcast %409 : vector<1x128xf32> to vector<16x128xf32>
    %413 = arith.addf %411, %412 : vector<16x128xf32>
    %cst_336 = arith.constant 0.000000e+00 : f32
    %414 = vector.broadcast %cst_336 : f32 to vector<16x128xf32>
    %415 = arith.maximumf %413, %414 : vector<16x128xf32>
    %416 = arith.truncf %415 : vector<16x128xf32> to vector<16x128xbf16>
    %417 = vector.broadcast %405 : vector<1x128xf32> to vector<16x128xf32>
    %418 = arith.mulf %379, %417 : vector<16x128xf32>
    %419 = vector.broadcast %409 : vector<1x128xf32> to vector<16x128xf32>
    %420 = arith.addf %418, %419 : vector<16x128xf32>
    %cst_337 = arith.constant 0.000000e+00 : f32
    %421 = vector.broadcast %cst_337 : f32 to vector<16x128xf32>
    %422 = arith.maximumf %420, %421 : vector<16x128xf32>
    %423 = arith.truncf %422 : vector<16x128xf32> to vector<16x128xbf16>
    %c0_338 = arith.constant 0 : index
    %c0_339 = arith.constant 0 : index
    %c0_340 = arith.constant 0 : index
    %424 = vector.load %arg6[%c0_338, %c0_339, %c0_340] : memref<4x4x16xbf16, #tpu.memory_space<vmem>>, vector<1x4x16xbf16>
    %425 = vector.shape_cast %424 : vector<1x4x16xbf16> to vector<4x16xbf16>
    %cst_341 = arith.constant dense<0.000000e+00> : vector<4x128xf32>
    %426 = tpu.matmul %425, %416, %cst_341 {dimension_numbers = #tpu.dot_dimension_numbers<[1], [0], [0], [1], [0, 0, 1, 1], [], []>} : vector<4x16xbf16>, vector<16x128xbf16>, vector<4x128xf32> -> vector<4x128xf32>
    %427 = arith.truncf %426 : vector<4x128xf32> to vector<4x128xbf16>
    %c0_342 = arith.constant 0 : index
    %c0_343 = arith.constant 0 : index
    %c0_344 = arith.constant 0 : index
    %428 = vector.load %arg7[%c0_342, %c0_343, %c0_344] : memref<4x128x128xbf16, #tpu.memory_space<vmem>>, vector<1x128x128xbf16>
    %429 = vector.shape_cast %428 : vector<1x128x128xbf16> to vector<128x128xbf16>
    %cst_345 = arith.constant dense<0.000000e+00> : vector<4x128xf32>
    %430 = tpu.matmul %427, %429, %cst_345 {dimension_numbers = #tpu.dot_dimension_numbers<[1], [0], [0], [1], [0, 0, 1, 1], [], []>} : vector<4x128xbf16>, vector<128x128xbf16>, vector<4x128xf32> -> vector<4x128xf32>
    %c1_346 = arith.constant 1 : index
    %c0_347 = arith.constant 0 : index
    %c0_348 = arith.constant 0 : index
    %431 = vector.load %arg6[%c1_346, %c0_347, %c0_348] : memref<4x4x16xbf16, #tpu.memory_space<vmem>>, vector<1x4x16xbf16>
    %432 = vector.shape_cast %431 : vector<1x4x16xbf16> to vector<4x16xbf16>
    %cst_349 = arith.constant dense<0.000000e+00> : vector<4x128xf32>
    %433 = tpu.matmul %432, %416, %cst_349 {dimension_numbers = #tpu.dot_dimension_numbers<[1], [0], [0], [1], [0, 0, 1, 1], [], []>} : vector<4x16xbf16>, vector<16x128xbf16>, vector<4x128xf32> -> vector<4x128xf32>
    %434 = arith.truncf %433 : vector<4x128xf32> to vector<4x128xbf16>
    %c1_350 = arith.constant 1 : index
    %c0_351 = arith.constant 0 : index
    %c0_352 = arith.constant 0 : index
    %435 = vector.load %arg7[%c1_350, %c0_351, %c0_352] : memref<4x128x128xbf16, #tpu.memory_space<vmem>>, vector<1x128x128xbf16>
    %436 = vector.shape_cast %435 : vector<1x128x128xbf16> to vector<128x128xbf16>
    %cst_353 = arith.constant dense<0.000000e+00> : vector<4x128xf32>
    %437 = tpu.matmul %434, %436, %cst_353 {dimension_numbers = #tpu.dot_dimension_numbers<[1], [0], [0], [1], [0, 0, 1, 1], [], []>} : vector<4x128xbf16>, vector<128x128xbf16>, vector<4x128xf32> -> vector<4x128xf32>
    %438 = arith.addf %430, %437 : vector<4x128xf32>
    %c2_354 = arith.constant 2 : index
    %c0_355 = arith.constant 0 : index
    %c0_356 = arith.constant 0 : index
    %439 = vector.load %arg6[%c2_354, %c0_355, %c0_356] : memref<4x4x16xbf16, #tpu.memory_space<vmem>>, vector<1x4x16xbf16>
    %440 = vector.shape_cast %439 : vector<1x4x16xbf16> to vector<4x16xbf16>
    %cst_357 = arith.constant dense<0.000000e+00> : vector<4x128xf32>
    %441 = tpu.matmul %440, %416, %cst_357 {dimension_numbers = #tpu.dot_dimension_numbers<[1], [0], [0], [1], [0, 0, 1, 1], [], []>} : vector<4x16xbf16>, vector<16x128xbf16>, vector<4x128xf32> -> vector<4x128xf32>
    %442 = arith.truncf %441 : vector<4x128xf32> to vector<4x128xbf16>
    %c2_358 = arith.constant 2 : index
    %c0_359 = arith.constant 0 : index
    %c0_360 = arith.constant 0 : index
    %443 = vector.load %arg7[%c2_358, %c0_359, %c0_360] : memref<4x128x128xbf16, #tpu.memory_space<vmem>>, vector<1x128x128xbf16>
    %444 = vector.shape_cast %443 : vector<1x128x128xbf16> to vector<128x128xbf16>
    %cst_361 = arith.constant dense<0.000000e+00> : vector<4x128xf32>
    %445 = tpu.matmul %442, %444, %cst_361 {dimension_numbers = #tpu.dot_dimension_numbers<[1], [0], [0], [1], [0, 0, 1, 1], [], []>} : vector<4x128xbf16>, vector<128x128xbf16>, vector<4x128xf32> -> vector<4x128xf32>
    %446 = arith.addf %438, %445 : vector<4x128xf32>
    %c3_362 = arith.constant 3 : index
    %c0_363 = arith.constant 0 : index
    %c0_364 = arith.constant 0 : index
    %447 = vector.load %arg6[%c3_362, %c0_363, %c0_364] : memref<4x4x16xbf16, #tpu.memory_space<vmem>>, vector<1x4x16xbf16>
    %448 = vector.shape_cast %447 : vector<1x4x16xbf16> to vector<4x16xbf16>
    %cst_365 = arith.constant dense<0.000000e+00> : vector<4x128xf32>
    %449 = tpu.matmul %448, %416, %cst_365 {dimension_numbers = #tpu.dot_dimension_numbers<[1], [0], [0], [1], [0, 0, 1, 1], [], []>} : vector<4x16xbf16>, vector<16x128xbf16>, vector<4x128xf32> -> vector<4x128xf32>
    %450 = arith.truncf %449 : vector<4x128xf32> to vector<4x128xbf16>
    %c3_366 = arith.constant 3 : index
    %c0_367 = arith.constant 0 : index
    %c0_368 = arith.constant 0 : index
    %451 = vector.load %arg7[%c3_366, %c0_367, %c0_368] : memref<4x128x128xbf16, #tpu.memory_space<vmem>>, vector<1x128x128xbf16>
    %452 = vector.shape_cast %451 : vector<1x128x128xbf16> to vector<128x128xbf16>
    %cst_369 = arith.constant dense<0.000000e+00> : vector<4x128xf32>
    %453 = tpu.matmul %450, %452, %cst_369 {dimension_numbers = #tpu.dot_dimension_numbers<[1], [0], [0], [1], [0, 0, 1, 1], [], []>} : vector<4x128xbf16>, vector<128x128xbf16>, vector<4x128xf32> -> vector<4x128xf32>
    %454 = arith.addf %446, %453 : vector<4x128xf32>
    %c0_370 = arith.constant 0 : index
    %c0_371 = arith.constant 0 : index
    %c0_372 = arith.constant 0 : index
    %455 = vector.load %arg6[%c0_370, %c0_371, %c0_372] : memref<4x4x16xbf16, #tpu.memory_space<vmem>>, vector<1x4x16xbf16>
    %456 = vector.shape_cast %455 : vector<1x4x16xbf16> to vector<4x16xbf16>
    %cst_373 = arith.constant dense<0.000000e+00> : vector<4x128xf32>
    %457 = tpu.matmul %456, %423, %cst_373 {dimension_numbers = #tpu.dot_dimension_numbers<[1], [0], [0], [1], [0, 0, 1, 1], [], []>} : vector<4x16xbf16>, vector<16x128xbf16>, vector<4x128xf32> -> vector<4x128xf32>
    %458 = arith.truncf %457 : vector<4x128xf32> to vector<4x128xbf16>
    %c0_374 = arith.constant 0 : index
    %c0_375 = arith.constant 0 : index
    %c0_376 = arith.constant 0 : index
    %459 = vector.load %arg7[%c0_374, %c0_375, %c0_376] : memref<4x128x128xbf16, #tpu.memory_space<vmem>>, vector<1x128x128xbf16>
    %460 = vector.shape_cast %459 : vector<1x128x128xbf16> to vector<128x128xbf16>
    %cst_377 = arith.constant dense<0.000000e+00> : vector<4x128xf32>
    %461 = tpu.matmul %458, %460, %cst_377 {dimension_numbers = #tpu.dot_dimension_numbers<[1], [0], [0], [1], [0, 0, 1, 1], [], []>} : vector<4x128xbf16>, vector<128x128xbf16>, vector<4x128xf32> -> vector<4x128xf32>
    %c1_378 = arith.constant 1 : index
    %c0_379 = arith.constant 0 : index
    %c0_380 = arith.constant 0 : index
    %462 = vector.load %arg6[%c1_378, %c0_379, %c0_380] : memref<4x4x16xbf16, #tpu.memory_space<vmem>>, vector<1x4x16xbf16>
    %463 = vector.shape_cast %462 : vector<1x4x16xbf16> to vector<4x16xbf16>
    %cst_381 = arith.constant dense<0.000000e+00> : vector<4x128xf32>
    %464 = tpu.matmul %463, %423, %cst_381 {dimension_numbers = #tpu.dot_dimension_numbers<[1], [0], [0], [1], [0, 0, 1, 1], [], []>} : vector<4x16xbf16>, vector<16x128xbf16>, vector<4x128xf32> -> vector<4x128xf32>
    %465 = arith.truncf %464 : vector<4x128xf32> to vector<4x128xbf16>
    %c1_382 = arith.constant 1 : index
    %c0_383 = arith.constant 0 : index
    %c0_384 = arith.constant 0 : index
    %466 = vector.load %arg7[%c1_382, %c0_383, %c0_384] : memref<4x128x128xbf16, #tpu.memory_space<vmem>>, vector<1x128x128xbf16>
    %467 = vector.shape_cast %466 : vector<1x128x128xbf16> to vector<128x128xbf16>
    %cst_385 = arith.constant dense<0.000000e+00> : vector<4x128xf32>
    %468 = tpu.matmul %465, %467, %cst_385 {dimension_numbers = #tpu.dot_dimension_numbers<[1], [0], [0], [1], [0, 0, 1, 1], [], []>} : vector<4x128xbf16>, vector<128x128xbf16>, vector<4x128xf32> -> vector<4x128xf32>
    %469 = arith.addf %461, %468 : vector<4x128xf32>
    %c2_386 = arith.constant 2 : index
    %c0_387 = arith.constant 0 : index
    %c0_388 = arith.constant 0 : index
    %470 = vector.load %arg6[%c2_386, %c0_387, %c0_388] : memref<4x4x16xbf16, #tpu.memory_space<vmem>>, vector<1x4x16xbf16>
    %471 = vector.shape_cast %470 : vector<1x4x16xbf16> to vector<4x16xbf16>
    %cst_389 = arith.constant dense<0.000000e+00> : vector<4x128xf32>
    %472 = tpu.matmul %471, %423, %cst_389 {dimension_numbers = #tpu.dot_dimension_numbers<[1], [0], [0], [1], [0, 0, 1, 1], [], []>} : vector<4x16xbf16>, vector<16x128xbf16>, vector<4x128xf32> -> vector<4x128xf32>
    %473 = arith.truncf %472 : vector<4x128xf32> to vector<4x128xbf16>
    %c2_390 = arith.constant 2 : index
    %c0_391 = arith.constant 0 : index
    %c0_392 = arith.constant 0 : index
    %474 = vector.load %arg7[%c2_390, %c0_391, %c0_392] : memref<4x128x128xbf16, #tpu.memory_space<vmem>>, vector<1x128x128xbf16>
    %475 = vector.shape_cast %474 : vector<1x128x128xbf16> to vector<128x128xbf16>
    %cst_393 = arith.constant dense<0.000000e+00> : vector<4x128xf32>
    %476 = tpu.matmul %473, %475, %cst_393 {dimension_numbers = #tpu.dot_dimension_numbers<[1], [0], [0], [1], [0, 0, 1, 1], [], []>} : vector<4x128xbf16>, vector<128x128xbf16>, vector<4x128xf32> -> vector<4x128xf32>
    %477 = arith.addf %469, %476 : vector<4x128xf32>
    %c3_394 = arith.constant 3 : index
    %c0_395 = arith.constant 0 : index
    %c0_396 = arith.constant 0 : index
    %478 = vector.load %arg6[%c3_394, %c0_395, %c0_396] : memref<4x4x16xbf16, #tpu.memory_space<vmem>>, vector<1x4x16xbf16>
    %479 = vector.shape_cast %478 : vector<1x4x16xbf16> to vector<4x16xbf16>
    %cst_397 = arith.constant dense<0.000000e+00> : vector<4x128xf32>
    %480 = tpu.matmul %479, %423, %cst_397 {dimension_numbers = #tpu.dot_dimension_numbers<[1], [0], [0], [1], [0, 0, 1, 1], [], []>} : vector<4x16xbf16>, vector<16x128xbf16>, vector<4x128xf32> -> vector<4x128xf32>
    %481 = arith.truncf %480 : vector<4x128xf32> to vector<4x128xbf16>
    %c3_398 = arith.constant 3 : index
    %c0_399 = arith.constant 0 : index
    %c0_400 = arith.constant 0 : index
    %482 = vector.load %arg7[%c3_398, %c0_399, %c0_400] : memref<4x128x128xbf16, #tpu.memory_space<vmem>>, vector<1x128x128xbf16>
    %483 = vector.shape_cast %482 : vector<1x128x128xbf16> to vector<128x128xbf16>
    %cst_401 = arith.constant dense<0.000000e+00> : vector<4x128xf32>
    %484 = tpu.matmul %481, %483, %cst_401 {dimension_numbers = #tpu.dot_dimension_numbers<[1], [0], [0], [1], [0, 0, 1, 1], [], []>} : vector<4x128xbf16>, vector<128x128xbf16>, vector<4x128xf32> -> vector<4x128xf32>
    %485 = arith.addf %477, %484 : vector<4x128xf32>
    %cst_402 = arith.constant dense<0.000000e+00> : vector<128xf32>
    %486 = vector.multi_reduction <add>, %454, %cst_402 [0] : vector<4x128xf32> to vector<128xf32>
    %487 = vector.shape_cast %486 : vector<128xf32> to vector<1x128xf32>
    %488 = arith.mulf %454, %454 : vector<4x128xf32>
    %cst_403 = arith.constant dense<0.000000e+00> : vector<128xf32>
    %489 = vector.multi_reduction <add>, %488, %cst_403 [0] : vector<4x128xf32> to vector<128xf32>
    %490 = vector.shape_cast %489 : vector<128xf32> to vector<1x128xf32>
    %cst_404 = arith.constant dense<0.000000e+00> : vector<128xf32>
    %491 = vector.multi_reduction <add>, %485, %cst_404 [0] : vector<4x128xf32> to vector<128xf32>
    %492 = vector.shape_cast %491 : vector<128xf32> to vector<1x128xf32>
    %493 = arith.addf %487, %492 : vector<1x128xf32>
    %494 = arith.mulf %485, %485 : vector<4x128xf32>
    %cst_405 = arith.constant dense<0.000000e+00> : vector<128xf32>
    %495 = vector.multi_reduction <add>, %494, %cst_405 [0] : vector<4x128xf32> to vector<128xf32>
    %496 = vector.shape_cast %495 : vector<128xf32> to vector<1x128xf32>
    %497 = arith.addf %490, %496 : vector<1x128xf32>
    %cst_406 = arith.constant 1.250000e-01 : f32
    %498 = vector.broadcast %cst_406 : f32 to vector<1x128xf32>
    %499 = arith.mulf %493, %498 : vector<1x128xf32>
    %cst_407 = arith.constant 1.250000e-01 : f32
    %500 = vector.broadcast %cst_407 : f32 to vector<1x128xf32>
    %501 = arith.mulf %497, %500 : vector<1x128xf32>
    %502 = arith.mulf %499, %499 : vector<1x128xf32>
    %503 = arith.subf %501, %502 : vector<1x128xf32>
    %cst_408 = arith.constant 0.000000e+00 : f32
    %504 = vector.broadcast %cst_408 : f32 to vector<1x128xf32>
    %505 = arith.maximumf %503, %504 : vector<1x128xf32>
    %c3_409 = arith.constant 3 : index
    %c0_410 = arith.constant 0 : index
    %c0_411 = arith.constant 0 : index
    %506 = vector.load %arg8[%c3_409, %c0_410, %c0_411] : memref<4x1x128xf32, #tpu.memory_space<vmem>>, vector<1x1x128xf32>
    %507 = vector.shape_cast %506 : vector<1x1x128xf32> to vector<1x128xf32>
    %cst_412 = arith.constant 9.99999974E-6 : f32
    %508 = vector.broadcast %cst_412 : f32 to vector<1x128xf32>
    %509 = arith.addf %505, %508 : vector<1x128xf32>
    %510 = math.rsqrt %509 : vector<1x128xf32>
    %511 = arith.mulf %507, %510 : vector<1x128xf32>
    %c3_413 = arith.constant 3 : index
    %c0_414 = arith.constant 0 : index
    %c0_415 = arith.constant 0 : index
    %512 = vector.load %arg9[%c3_413, %c0_414, %c0_415] : memref<4x1x128xf32, #tpu.memory_space<vmem>>, vector<1x1x128xf32>
    %513 = vector.shape_cast %512 : vector<1x1x128xf32> to vector<1x128xf32>
    %514 = arith.mulf %499, %511 : vector<1x128xf32>
    %515 = arith.subf %513, %514 : vector<1x128xf32>
    %516 = vector.broadcast %511 : vector<1x128xf32> to vector<4x128xf32>
    %517 = arith.mulf %454, %516 : vector<4x128xf32>
    %518 = vector.broadcast %515 : vector<1x128xf32> to vector<4x128xf32>
    %519 = arith.addf %517, %518 : vector<4x128xf32>
    %cst_416 = arith.constant 0.000000e+00 : f32
    %520 = vector.broadcast %cst_416 : f32 to vector<4x128xf32>
    %521 = arith.maximumf %519, %520 : vector<4x128xf32>
    %522 = arith.truncf %521 : vector<4x128xf32> to vector<4x128xbf16>
    %523 = vector.broadcast %511 : vector<1x128xf32> to vector<4x128xf32>
    %524 = arith.mulf %485, %523 : vector<4x128xf32>
    %525 = vector.broadcast %515 : vector<1x128xf32> to vector<4x128xf32>
    %526 = arith.addf %524, %525 : vector<4x128xf32>
    %cst_417 = arith.constant 0.000000e+00 : f32
    %527 = vector.broadcast %cst_417 : f32 to vector<4x128xf32>
    %528 = arith.maximumf %526, %527 : vector<4x128xf32>
    %529 = arith.truncf %528 : vector<4x128xf32> to vector<4x128xbf16>
    %c0_418 = arith.constant 0 : index
    %c0_419 = arith.constant 0 : index
    %c0_420 = arith.constant 0 : index
    %530 = vector.load %arg10[%c0_418, %c0_419, %c0_420] : memref<4x1x4xbf16, #tpu.memory_space<vmem>>, vector<1x1x4xbf16>
    %531 = vector.shape_cast %530 : vector<1x1x4xbf16> to vector<1x4xbf16>
    %cst_421 = arith.constant dense<0.000000e+00> : vector<1x128xf32>
    %532 = tpu.matmul %531, %522, %cst_421 {dimension_numbers = #tpu.dot_dimension_numbers<[1], [0], [0], [1], [0, 0, 1, 1], [], []>} : vector<1x4xbf16>, vector<4x128xbf16>, vector<1x128xf32> -> vector<1x128xf32>
    %533 = arith.truncf %532 : vector<1x128xf32> to vector<1x128xbf16>
    %c0_422 = arith.constant 0 : index
    %c0_423 = arith.constant 0 : index
    %c0_424 = arith.constant 0 : index
    %534 = vector.load %arg11[%c0_422, %c0_423, %c0_424] : memref<4x128x128xbf16, #tpu.memory_space<vmem>>, vector<1x128x128xbf16>
    %535 = vector.shape_cast %534 : vector<1x128x128xbf16> to vector<128x128xbf16>
    %cst_425 = arith.constant dense<0.000000e+00> : vector<1x128xf32>
    %536 = tpu.matmul %533, %535, %cst_425 {dimension_numbers = #tpu.dot_dimension_numbers<[1], [0], [0], [1], [0, 0, 1, 1], [], []>} : vector<1x128xbf16>, vector<128x128xbf16>, vector<1x128xf32> -> vector<1x128xf32>
    %c1_426 = arith.constant 1 : index
    %c0_427 = arith.constant 0 : index
    %c0_428 = arith.constant 0 : index
    %537 = vector.load %arg10[%c1_426, %c0_427, %c0_428] : memref<4x1x4xbf16, #tpu.memory_space<vmem>>, vector<1x1x4xbf16>
    %538 = vector.shape_cast %537 : vector<1x1x4xbf16> to vector<1x4xbf16>
    %cst_429 = arith.constant dense<0.000000e+00> : vector<1x128xf32>
    %539 = tpu.matmul %538, %522, %cst_429 {dimension_numbers = #tpu.dot_dimension_numbers<[1], [0], [0], [1], [0, 0, 1, 1], [], []>} : vector<1x4xbf16>, vector<4x128xbf16>, vector<1x128xf32> -> vector<1x128xf32>
    %540 = arith.truncf %539 : vector<1x128xf32> to vector<1x128xbf16>
    %c1_430 = arith.constant 1 : index
    %c0_431 = arith.constant 0 : index
    %c0_432 = arith.constant 0 : index
    %541 = vector.load %arg11[%c1_430, %c0_431, %c0_432] : memref<4x128x128xbf16, #tpu.memory_space<vmem>>, vector<1x128x128xbf16>
    %542 = vector.shape_cast %541 : vector<1x128x128xbf16> to vector<128x128xbf16>
    %cst_433 = arith.constant dense<0.000000e+00> : vector<1x128xf32>
    %543 = tpu.matmul %540, %542, %cst_433 {dimension_numbers = #tpu.dot_dimension_numbers<[1], [0], [0], [1], [0, 0, 1, 1], [], []>} : vector<1x128xbf16>, vector<128x128xbf16>, vector<1x128xf32> -> vector<1x128xf32>
    %544 = arith.addf %536, %543 : vector<1x128xf32>
    %c2_434 = arith.constant 2 : index
    %c0_435 = arith.constant 0 : index
    %c0_436 = arith.constant 0 : index
    %545 = vector.load %arg10[%c2_434, %c0_435, %c0_436] : memref<4x1x4xbf16, #tpu.memory_space<vmem>>, vector<1x1x4xbf16>
    %546 = vector.shape_cast %545 : vector<1x1x4xbf16> to vector<1x4xbf16>
    %cst_437 = arith.constant dense<0.000000e+00> : vector<1x128xf32>
    %547 = tpu.matmul %546, %522, %cst_437 {dimension_numbers = #tpu.dot_dimension_numbers<[1], [0], [0], [1], [0, 0, 1, 1], [], []>} : vector<1x4xbf16>, vector<4x128xbf16>, vector<1x128xf32> -> vector<1x128xf32>
    %548 = arith.truncf %547 : vector<1x128xf32> to vector<1x128xbf16>
    %c2_438 = arith.constant 2 : index
    %c0_439 = arith.constant 0 : index
    %c0_440 = arith.constant 0 : index
    %549 = vector.load %arg11[%c2_438, %c0_439, %c0_440] : memref<4x128x128xbf16, #tpu.memory_space<vmem>>, vector<1x128x128xbf16>
    %550 = vector.shape_cast %549 : vector<1x128x128xbf16> to vector<128x128xbf16>
    %cst_441 = arith.constant dense<0.000000e+00> : vector<1x128xf32>
    %551 = tpu.matmul %548, %550, %cst_441 {dimension_numbers = #tpu.dot_dimension_numbers<[1], [0], [0], [1], [0, 0, 1, 1], [], []>} : vector<1x128xbf16>, vector<128x128xbf16>, vector<1x128xf32> -> vector<1x128xf32>
    %552 = arith.addf %544, %551 : vector<1x128xf32>
    %c3_442 = arith.constant 3 : index
    %c0_443 = arith.constant 0 : index
    %c0_444 = arith.constant 0 : index
    %553 = vector.load %arg10[%c3_442, %c0_443, %c0_444] : memref<4x1x4xbf16, #tpu.memory_space<vmem>>, vector<1x1x4xbf16>
    %554 = vector.shape_cast %553 : vector<1x1x4xbf16> to vector<1x4xbf16>
    %cst_445 = arith.constant dense<0.000000e+00> : vector<1x128xf32>
    %555 = tpu.matmul %554, %522, %cst_445 {dimension_numbers = #tpu.dot_dimension_numbers<[1], [0], [0], [1], [0, 0, 1, 1], [], []>} : vector<1x4xbf16>, vector<4x128xbf16>, vector<1x128xf32> -> vector<1x128xf32>
    %556 = arith.truncf %555 : vector<1x128xf32> to vector<1x128xbf16>
    %c3_446 = arith.constant 3 : index
    %c0_447 = arith.constant 0 : index
    %c0_448 = arith.constant 0 : index
    %557 = vector.load %arg11[%c3_446, %c0_447, %c0_448] : memref<4x128x128xbf16, #tpu.memory_space<vmem>>, vector<1x128x128xbf16>
    %558 = vector.shape_cast %557 : vector<1x128x128xbf16> to vector<128x128xbf16>
    %cst_449 = arith.constant dense<0.000000e+00> : vector<1x128xf32>
    %559 = tpu.matmul %556, %558, %cst_449 {dimension_numbers = #tpu.dot_dimension_numbers<[1], [0], [0], [1], [0, 0, 1, 1], [], []>} : vector<1x128xbf16>, vector<128x128xbf16>, vector<1x128xf32> -> vector<1x128xf32>
    %560 = arith.addf %552, %559 : vector<1x128xf32>
    %c0_450 = arith.constant 0 : index
    %c0_451 = arith.constant 0 : index
    %561 = vector.load %arg12[%c0_450, %c0_451] : memref<1x128xf32, #tpu.memory_space<vmem>>, vector<1x128xf32>
    %562 = arith.addf %560, %561 : vector<1x128xf32>
    %563 = arith.truncf %562 : vector<1x128xf32> to vector<1x128xbf16>
    %c0_452 = arith.constant 0 : index
    %c0_453 = arith.constant 0 : index
    %564 = vector.load %arg13[%c0_452, %c0_453] : memref<128x128xbf16, #tpu.memory_space<vmem>>, vector<128x128xbf16>
    %cst_454 = arith.constant dense<0.000000e+00> : vector<1x128xf32>
    %565 = tpu.matmul %563, %564, %cst_454 {dimension_numbers = #tpu.dot_dimension_numbers<[1], [0], [0], [1], [0, 0, 1, 1], [], []>} : vector<1x128xbf16>, vector<128x128xbf16>, vector<1x128xf32> -> vector<1x128xf32>
    %c0_455 = arith.constant 0 : index
    %c0_456 = arith.constant 0 : index
    %566 = vector.load %arg14[%c0_455, %c0_456] : memref<1x128xf32, #tpu.memory_space<vmem>>, vector<1x128xf32>
    %567 = arith.addf %565, %566 : vector<1x128xf32>
    %c0_457 = arith.constant 0 : index
    %c0_458 = arith.constant 0 : index
    %c0_459 = arith.constant 0 : index
    %568 = vector.load %arg10[%c0_457, %c0_458, %c0_459] : memref<4x1x4xbf16, #tpu.memory_space<vmem>>, vector<1x1x4xbf16>
    %569 = vector.shape_cast %568 : vector<1x1x4xbf16> to vector<1x4xbf16>
    %cst_460 = arith.constant dense<0.000000e+00> : vector<1x128xf32>
    %570 = tpu.matmul %569, %529, %cst_460 {dimension_numbers = #tpu.dot_dimension_numbers<[1], [0], [0], [1], [0, 0, 1, 1], [], []>} : vector<1x4xbf16>, vector<4x128xbf16>, vector<1x128xf32> -> vector<1x128xf32>
    %571 = arith.truncf %570 : vector<1x128xf32> to vector<1x128xbf16>
    %c0_461 = arith.constant 0 : index
    %c0_462 = arith.constant 0 : index
    %c0_463 = arith.constant 0 : index
    %572 = vector.load %arg11[%c0_461, %c0_462, %c0_463] : memref<4x128x128xbf16, #tpu.memory_space<vmem>>, vector<1x128x128xbf16>
    %573 = vector.shape_cast %572 : vector<1x128x128xbf16> to vector<128x128xbf16>
    %cst_464 = arith.constant dense<0.000000e+00> : vector<1x128xf32>
    %574 = tpu.matmul %571, %573, %cst_464 {dimension_numbers = #tpu.dot_dimension_numbers<[1], [0], [0], [1], [0, 0, 1, 1], [], []>} : vector<1x128xbf16>, vector<128x128xbf16>, vector<1x128xf32> -> vector<1x128xf32>
    %c1_465 = arith.constant 1 : index
    %c0_466 = arith.constant 0 : index
    %c0_467 = arith.constant 0 : index
    %575 = vector.load %arg10[%c1_465, %c0_466, %c0_467] : memref<4x1x4xbf16, #tpu.memory_space<vmem>>, vector<1x1x4xbf16>
    %576 = vector.shape_cast %575 : vector<1x1x4xbf16> to vector<1x4xbf16>
    %cst_468 = arith.constant dense<0.000000e+00> : vector<1x128xf32>
    %577 = tpu.matmul %576, %529, %cst_468 {dimension_numbers = #tpu.dot_dimension_numbers<[1], [0], [0], [1], [0, 0, 1, 1], [], []>} : vector<1x4xbf16>, vector<4x128xbf16>, vector<1x128xf32> -> vector<1x128xf32>
    %578 = arith.truncf %577 : vector<1x128xf32> to vector<1x128xbf16>
    %c1_469 = arith.constant 1 : index
    %c0_470 = arith.constant 0 : index
    %c0_471 = arith.constant 0 : index
    %579 = vector.load %arg11[%c1_469, %c0_470, %c0_471] : memref<4x128x128xbf16, #tpu.memory_space<vmem>>, vector<1x128x128xbf16>
    %580 = vector.shape_cast %579 : vector<1x128x128xbf16> to vector<128x128xbf16>
    %cst_472 = arith.constant dense<0.000000e+00> : vector<1x128xf32>
    %581 = tpu.matmul %578, %580, %cst_472 {dimension_numbers = #tpu.dot_dimension_numbers<[1], [0], [0], [1], [0, 0, 1, 1], [], []>} : vector<1x128xbf16>, vector<128x128xbf16>, vector<1x128xf32> -> vector<1x128xf32>
    %582 = arith.addf %574, %581 : vector<1x128xf32>
    %c2_473 = arith.constant 2 : index
    %c0_474 = arith.constant 0 : index
    %c0_475 = arith.constant 0 : index
    %583 = vector.load %arg10[%c2_473, %c0_474, %c0_475] : memref<4x1x4xbf16, #tpu.memory_space<vmem>>, vector<1x1x4xbf16>
    %584 = vector.shape_cast %583 : vector<1x1x4xbf16> to vector<1x4xbf16>
    %cst_476 = arith.constant dense<0.000000e+00> : vector<1x128xf32>
    %585 = tpu.matmul %584, %529, %cst_476 {dimension_numbers = #tpu.dot_dimension_numbers<[1], [0], [0], [1], [0, 0, 1, 1], [], []>} : vector<1x4xbf16>, vector<4x128xbf16>, vector<1x128xf32> -> vector<1x128xf32>
    %586 = arith.truncf %585 : vector<1x128xf32> to vector<1x128xbf16>
    %c2_477 = arith.constant 2 : index
    %c0_478 = arith.constant 0 : index
    %c0_479 = arith.constant 0 : index
    %587 = vector.load %arg11[%c2_477, %c0_478, %c0_479] : memref<4x128x128xbf16, #tpu.memory_space<vmem>>, vector<1x128x128xbf16>
    %588 = vector.shape_cast %587 : vector<1x128x128xbf16> to vector<128x128xbf16>
    %cst_480 = arith.constant dense<0.000000e+00> : vector<1x128xf32>
    %589 = tpu.matmul %586, %588, %cst_480 {dimension_numbers = #tpu.dot_dimension_numbers<[1], [0], [0], [1], [0, 0, 1, 1], [], []>} : vector<1x128xbf16>, vector<128x128xbf16>, vector<1x128xf32> -> vector<1x128xf32>
    %590 = arith.addf %582, %589 : vector<1x128xf32>
    %c3_481 = arith.constant 3 : index
    %c0_482 = arith.constant 0 : index
    %c0_483 = arith.constant 0 : index
    %591 = vector.load %arg10[%c3_481, %c0_482, %c0_483] : memref<4x1x4xbf16, #tpu.memory_space<vmem>>, vector<1x1x4xbf16>
    %592 = vector.shape_cast %591 : vector<1x1x4xbf16> to vector<1x4xbf16>
    %cst_484 = arith.constant dense<0.000000e+00> : vector<1x128xf32>
    %593 = tpu.matmul %592, %529, %cst_484 {dimension_numbers = #tpu.dot_dimension_numbers<[1], [0], [0], [1], [0, 0, 1, 1], [], []>} : vector<1x4xbf16>, vector<4x128xbf16>, vector<1x128xf32> -> vector<1x128xf32>
    %594 = arith.truncf %593 : vector<1x128xf32> to vector<1x128xbf16>
    %c3_485 = arith.constant 3 : index
    %c0_486 = arith.constant 0 : index
    %c0_487 = arith.constant 0 : index
    %595 = vector.load %arg11[%c3_485, %c0_486, %c0_487] : memref<4x128x128xbf16, #tpu.memory_space<vmem>>, vector<1x128x128xbf16>
    %596 = vector.shape_cast %595 : vector<1x128x128xbf16> to vector<128x128xbf16>
    %cst_488 = arith.constant dense<0.000000e+00> : vector<1x128xf32>
    %597 = tpu.matmul %594, %596, %cst_488 {dimension_numbers = #tpu.dot_dimension_numbers<[1], [0], [0], [1], [0, 0, 1, 1], [], []>} : vector<1x128xbf16>, vector<128x128xbf16>, vector<1x128xf32> -> vector<1x128xf32>
    %598 = arith.addf %590, %597 : vector<1x128xf32>
    %c0_489 = arith.constant 0 : index
    %c0_490 = arith.constant 0 : index
    %599 = vector.load %arg12[%c0_489, %c0_490] : memref<1x128xf32, #tpu.memory_space<vmem>>, vector<1x128xf32>
    %600 = arith.addf %598, %599 : vector<1x128xf32>
    %601 = arith.truncf %600 : vector<1x128xf32> to vector<1x128xbf16>
    %c0_491 = arith.constant 0 : index
    %c0_492 = arith.constant 0 : index
    %602 = vector.load %arg13[%c0_491, %c0_492] : memref<128x128xbf16, #tpu.memory_space<vmem>>, vector<128x128xbf16>
    %cst_493 = arith.constant dense<0.000000e+00> : vector<1x128xf32>
    %603 = tpu.matmul %601, %602, %cst_493 {dimension_numbers = #tpu.dot_dimension_numbers<[1], [0], [0], [1], [0, 0, 1, 1], [], []>} : vector<1x128xbf16>, vector<128x128xbf16>, vector<1x128xf32> -> vector<1x128xf32>
    %c0_494 = arith.constant 0 : index
    %c0_495 = arith.constant 0 : index
    %604 = vector.load %arg14[%c0_494, %c0_495] : memref<1x128xf32, #tpu.memory_space<vmem>>, vector<1x128xf32>
    %605 = arith.addf %603, %604 : vector<1x128xf32>
    %606 = tpu.concatenate %567, %605 in 0 : vector<1x128xf32>, vector<1x128xf32> -> vector<2x128xf32>
    %c0_496 = arith.constant 0 : index
    %c0_497 = arith.constant 0 : index
    %607 = vector.load %arg15[%c0_496, %c0_497] : memref<2x128xf32, #tpu.memory_space<vmem>>, vector<2x128xf32>
    tpu.vector_store %arg15[%c0_496, %c0_497], %606 {strides = array<i32>} : memref<2x128xf32, #tpu.memory_space<vmem>>, vector<2x128xf32>,
    return
  }
}

</mosaic_0001>

<llo_original>
// kernel: cnnnet_forward.1
$region0: #{cnnnet_forward.1}
  #allocation0 [shape = 'u32[]', space=smem, size = 0x4, offset = 0x4, fixed_abs, tag = 'smem constant byte address 0x4 - core index']
  #allocation1 [shape = 'u32[144,128]{1,0:T(1,128)}', space=vmem, size = 0x12000, scoped, tag = 'internal scratch']
  %s0 = inlined_call_operand.vmem [shape: bf16[2,196,128], index: 0, kind: input, shape index: {}]
  %s1 = inlined_call_operand.vmem [shape: bf16[128,128], index: 1, kind: input, shape index: {}]
  %s2 = inlined_call_operand.vmem [shape: bf16[9,49,196], index: 2, kind: input, shape index: {}]
  %s3 = inlined_call_operand.vmem [shape: bf16[9,128,128], index: 3, kind: input, shape index: {}]
  %s4 = inlined_call_operand.vmem [shape: bf16[9,16,49], index: 4, kind: input, shape index: {}]
  %s5 = inlined_call_operand.vmem [shape: bf16[9,128,128], index: 5, kind: input, shape index: {}]
  %s6 = inlined_call_operand.vmem [shape: bf16[4,4,16], index: 6, kind: input, shape index: {}]
  %s7 = inlined_call_operand.vmem [shape: bf16[4,128,128], index: 7, kind: input, shape index: {}]
  %s8 = inlined_call_operand.vmem [shape: f32[4,1,128], index: 8, kind: input, shape index: {}]
  %s9 = inlined_call_operand.vmem [shape: f32[4,1,128], index: 9, kind: input, shape index: {}]
  %s10 = inlined_call_operand.vmem [shape: bf16[4,1,4], index: 10, kind: input, shape index: {}]
  %s11 = inlined_call_operand.vmem [shape: bf16[4,128,128], index: 11, kind: input, shape index: {}]
  %s12 = inlined_call_operand.vmem [shape: f32[1,128], index: 12, kind: input, shape index: {}]
  %s13 = inlined_call_operand.vmem [shape: bf16[128,128], index: 13, kind: input, shape index: {}]
  %s14 = inlined_call_operand.vmem [shape: f32[1,128], index: 14, kind: input, shape index: {}]
  %s15 = inlined_call_operand.hbm [shape: f32[2,128], index: 15, kind: output, shape index: {}]
  %s16 = sld [smem:[#allocation0]]
  $region70: #{cnnnet_forward.1} parent=0
    _
  %s18 = ssub.s32 1, %s16
  %s19 = scalar_select 0, %s18, %s16
  $region1: #{cnnnet_forward.1} parent=0
    #allocation2 [shape = 'u8[1024]{0}', space=vmem, size = 0x400, scoped, tag = 'output window, operand 0, single buffered']
    #allocation3 [shape = 's32[1]{0}', space=sflag, size = 0x4, scoped, tag = 'scoped memory for cnnnet_forward.1']
    %20 = vsyncpa [#allocation3], 0
    // Predicated region
    $region2: #{cnnnet_forward.1} parent=1 // pred_check
      _
    $region3: #{cnnnet_forward.1} parent=1 // pred_check_branch
      %22 = sbr.rel (0) target = $region5
    $region4: #{cnnnet_forward.1} parent=1 // pred_region
      _
    $region5: #{cnnnet_forward.1} parent=1 // pred_fallthru
      _
    // Predicated region
    $region6: #{cnnnet_forward.1} parent=1 // pred_check
      _
    $region7: #{cnnnet_forward.1} parent=1 // pred_check_branch
      %24 = sbr.rel (0) target = $region9
    $region8: #{cnnnet_forward.1} parent=1 // pred_region
      _
    $region9: #{cnnnet_forward.1} parent=1 // pred_fallthru
      _
    // Predicated region
    $region10: #{cnnnet_forward.1} parent=1 // pred_check
      _
    $region11: #{cnnnet_forward.1} parent=1 // pred_check_branch
      %26 = sbr.rel (0) target = $region13
    $region12: #{cnnnet_forward.1} parent=1 // pred_region
      _
    $region13: #{cnnnet_forward.1} parent=1 // pred_fallthru
      _
    // Predicated region
    $region14: #{cnnnet_forward.1} parent=1 // pred_check
      _
    $region15: #{cnnnet_forward.1} parent=1 // pred_check_branch
      %28 = sbr.rel (0) target = $region17
    $region16: #{cnnnet_forward.1} parent=1 // pred_region
      _
    $region17: #{cnnnet_forward.1} parent=1 // pred_fallthru
      _
    // Predicated region
    $region18: #{cnnnet_forward.1} parent=1 // pred_check
      _
    $region19: #{cnnnet_forward.1} parent=1 // pred_check_branch
      %30 = sbr.rel (0) target = $region21
    $region20: #{cnnnet_forward.1} parent=1 // pred_region
      _
    $region21: #{cnnnet_forward.1} parent=1 // pred_fallthru
      _
    // Predicated region
    $region22: #{cnnnet_forward.1} parent=1 // pred_check
      _
    $region23: #{cnnnet_forward.1} parent=1 // pred_check_branch
      %32 = sbr.rel (0) target = $region25
    $region24: #{cnnnet_forward.1} parent=1 // pred_region
      _
    $region25: #{cnnnet_forward.1} parent=1 // pred_fallthru
      _
    // Predicated region
    $region26: #{cnnnet_forward.1} parent=1 // pred_check
      _
    $region27: #{cnnnet_forward.1} parent=1 // pred_check_branch
      %34 = sbr.rel (0) target = $region29
    $region28: #{cnnnet_forward.1} parent=1 // pred_region
      _
    $region29: #{cnnnet_forward.1} parent=1 // pred_fallthru
      _
    // Predicated region
    $region30: #{cnnnet_forward.1} parent=1 // pred_check
      _
    $region31: #{cnnnet_forward.1} parent=1 // pred_check_branch
      %36 = sbr.rel (0) target = $region33
    $region32: #{cnnnet_forward.1} parent=1 // pred_region
      _
    $region33: #{cnnnet_forward.1} parent=1 // pred_fallthru
      _
    // Predicated region
    $region34: #{cnnnet_forward.1} parent=1 // pred_check
      _
    $region35: #{cnnnet_forward.1} parent=1 // pred_check_branch
      %38 = sbr.rel (0) target = $region37
    $region36: #{cnnnet_forward.1} parent=1 // pred_region
      _
    $region37: #{cnnnet_forward.1} parent=1 // pred_fallthru
      _
    // Predicated region
    $region38: #{cnnnet_forward.1} parent=1 // pred_check
      _
    $region39: #{cnnnet_forward.1} parent=1 // pred_check_branch
      %40 = sbr.rel (0) target = $region41
    $region40: #{cnnnet_forward.1} parent=1 // pred_region
      _
    $region41: #{cnnnet_forward.1} parent=1 // pred_fallthru
      _
    // Predicated region
    $region42: #{cnnnet_forward.1} parent=1 // pred_check
      _
    $region43: #{cnnnet_forward.1} parent=1 // pred_check_branch
      %42 = sbr.rel (0) target = $region45
    $region44: #{cnnnet_forward.1} parent=1 // pred_region
      _
    $region45: #{cnnnet_forward.1} parent=1 // pred_fallthru
      _
    // Predicated region
    $region46: #{cnnnet_forward.1} parent=1 // pred_check
      _
    $region47: #{cnnnet_forward.1} parent=1 // pred_check_branch
      %44 = sbr.rel (0) target = $region49
    $region48: #{cnnnet_forward.1} parent=1 // pred_region
      _
    $region49: #{cnnnet_forward.1} parent=1 // pred_fallthru
      _
    // Predicated region
    $region50: #{cnnnet_forward.1} parent=1 // pred_check
      _
    $region51: #{cnnnet_forward.1} parent=1 // pred_check_branch
      %46 = sbr.rel (0) target = $region53
    $region52: #{cnnnet_forward.1} parent=1 // pred_region
      _
    $region53: #{cnnnet_forward.1} parent=1 // pred_fallthru
      _
    // Predicated region
    $region54: #{cnnnet_forward.1} parent=1 // pred_check
      _
    $region55: #{cnnnet_forward.1} parent=1 // pred_check_branch
      %48 = sbr.rel (0) target = $region57
    $region56: #{cnnnet_forward.1} parent=1 // pred_region
      _
    $region57: #{cnnnet_forward.1} parent=1 // pred_fallthru
      _
    // Predicated region
    $region58: #{cnnnet_forward.1} parent=1 // pred_check
      _
    $region59: #{cnnnet_forward.1} parent=1 // pred_check_branch
      %50 = sbr.rel (0) target = $region61
    $region60: #{cnnnet_forward.1} parent=1 // pred_region
      _
    $region61: #{cnnnet_forward.1} parent=1 // pred_fallthru
      _
    %v52 = vld [vmem:[%s0] sm:$0xf]
    %v53 = vld [vmem:[%s0 + $0x4] sm:$0xf]
    %v54 = vld [vmem:[%s0 + $0x8] sm:$0xf]
    %v55 = vld [vmem:[%s0 + $0xc] sm:$0xf]
    %v56 = vld [vmem:[%s0 + $0x10] sm:$0xf]
    %v57 = vld [vmem:[%s0 + $0x14] sm:$0xf]
    %v58 = vld [vmem:[%s0 + $0x18] sm:$0xf]
    %v59 = vld [vmem:[%s0 + $0x1c] sm:$0xf]
    %v60 = vld [vmem:[%s0 + $0x20] sm:$0xf]
    %v61 = vld [vmem:[%s0 + $0x24] sm:$0xf]
    %v62 = vld [vmem:[%s0 + $0x28] sm:$0xf]
    %v63 = vld [vmem:[%s0 + $0x2c] sm:$0xf]
    %v64 = vld [vmem:[%s0 + $0x30] sm:$0xf]
    %v65 = vld [vmem:[%s0 + $0x34] sm:$0xf]
    %v66 = vld [vmem:[%s0 + $0x38] sm:$0xf]
    %v67 = vld [vmem:[%s0 + $0x3c] sm:$0xf]
    %v68 = vld [vmem:[%s0 + $0x40] sm:$0xf]
    %v69 = vld [vmem:[%s0 + $0x44] sm:$0xf]
    %v70 = vld [vmem:[%s0 + $0x48] sm:$0xf]
    %v71 = vld [vmem:[%s0 + $0x4c] sm:$0xf]
    %v72 = vld [vmem:[%s0 + $0x50] sm:$0xf]
    %v73 = vld [vmem:[%s0 + $0x54] sm:$0xf]
    %v74 = vld [vmem:[%s0 + $0x58] sm:$0xf]
    %v75 = vld [vmem:[%s0 + $0x5c] sm:$0xf]
    %v76 = vld [vmem:[%s0 + $0x60] sm:$0x3]
    %v77 = vld [vmem:[%s1] sm:$0xf]
    %v78 = vld [vmem:[%s1 + $0x4] sm:$0xf]
    %v79 = vld [vmem:[%s1 + $0x8] sm:$0xf]
    %v80 = vld [vmem:[%s1 + $0xc] sm:$0xf]
    %v81 = vld [vmem:[%s1 + $0x10] sm:$0xf]
    %v82 = vld [vmem:[%s1 + $0x14] sm:$0xf]
    %v83 = vld [vmem:[%s1 + $0x18] sm:$0xf]
    %v84 = vld [vmem:[%s1 + $0x1c] sm:$0xf]
    %v85 = vld [vmem:[%s1 + $0x20] sm:$0xf]
    %v86 = vld [vmem:[%s1 + $0x24] sm:$0xf]
    %v87 = vld [vmem:[%s1 + $0x28] sm:$0xf]
    %v88 = vld [vmem:[%s1 + $0x2c] sm:$0xf]
    %v89 = vld [vmem:[%s1 + $0x30] sm:$0xf]
    %v90 = vld [vmem:[%s1 + $0x34] sm:$0xf]
    %v91 = vld [vmem:[%s1 + $0x38] sm:$0xf]
    %v92 = vld [vmem:[%s1 + $0x3c] sm:$0xf]
    %v118 = vunpack.c.l.b16 %v52
    %v119 = vunpack.c.l.b16 %v53
    %v120 = vunpack.c.l.b16 %v54
    %v121 = vunpack.c.l.b16 %v55
    %v122 = vunpack.c.l.b16 %v56
    %v123 = vunpack.c.l.b16 %v57
    %v124 = vunpack.c.l.b16 %v58
    %v125 = vunpack.c.l.b16 %v59
    %v126 = vunpack.c.l.b16 %v60
    %v127 = vunpack.c.l.b16 %v61
    %v128 = vunpack.c.l.b16 %v62
    %v129 = vunpack.c.l.b16 %v63
    %v130 = vunpack.c.l.b16 %v64
    %v131 = vunpack.c.l.b16 %v65
    %v132 = vunpack.c.l.b16 %v66
    %v133 = vunpack.c.l.b16 %v67
    %v134 = vunpack.c.l.b16 %v68
    %v135 = vunpack.c.l.b16 %v69
    %v136 = vunpack.c.l.b16 %v70
    %v137 = vunpack.c.l.b16 %v71
    %v138 = vunpack.c.l.b16 %v72
    %v139 = vunpack.c.l.b16 %v73
    %v140 = vunpack.c.l.b16 %v74
    %v141 = vunpack.c.l.b16 %v75
    %v142 = vunpack.c.l.b16 %v76
    %v143 = vpack.c.b16 %v119, %v118
    %v144 = vpack.c.b16 %v121, %v120
    %v145 = vpack.c.b16 %v123, %v122
    %v146 = vpack.c.b16 %v125, %v124
    %v147 = vpack.c.b16 %v127, %v126
    %v148 = vpack.c.b16 %v129, %v128
    %v149 = vpack.c.b16 %v131, %v130
    %v150 = vpack.c.b16 %v133, %v132
    %v151 = vpack.c.b16 %v135, %v134
    %v152 = vpack.c.b16 %v137, %v136
    %v153 = vpack.c.b16 %v139, %v138
    %v154 = vpack.c.b16 %v141, %v140
    %v155 = vpack.c.b16 %v142, %v142
    %v185 = vunpack.c.l.b16 %v77
    %v186 = vunpack.c.l.b16 %v78
    %v187 = vunpack.c.l.b16 %v79
    %v188 = vunpack.c.l.b16 %v80
    %v189 = vunpack.c.l.b16 %v81
    %v190 = vunpack.c.l.b16 %v82
    %v191 = vunpack.c.l.b16 %v83
    %v192 = vunpack.c.l.b16 %v84
    %v193 = vunpack.c.l.b16 %v85
    %v194 = vunpack.c.l.b16 %v86
    %v195 = vunpack.c.l.b16 %v87
    %v196 = vunpack.c.l.b16 %v88
    %v197 = vunpack.c.l.b16 %v89
    %v198 = vunpack.c.l.b16 %v90
    %v199 = vunpack.c.l.b16 %v91
    %v200 = vunpack.c.l.b16 %v92
    %v201 = vpack.c.b16 %v186, %v185
    %v202 = vpack.c.b16 %v188, %v187
    %v203 = vpack.c.b16 %v190, %v189
    %v204 = vpack.c.b16 %v192, %v191
    %v205 = vpack.c.b16 %v194, %v193
    %v206 = vpack.c.b16 %v196, %v195
    %v207 = vpack.c.b16 %v198, %v197
    %v208 = vpack.c.b16 %v200, %v199
    %217 = vmatprep.subr.bf16.mxu0 0
    %218 = vmatpush1.bf16.msra.mxu0 %v208
    %219 = vmatprep.subr.bf16.mxu0 0
    %220 = vmatpush1.bf16.msra.mxu0 %v207
    %221 = vmatprep.subr.bf16.mxu0 0
    %222 = vmatpush1.bf16.msra.mxu0 %v206
    %223 = vmatprep.subr.bf16.mxu0 0
    %224 = vmatpush1.bf16.msra.mxu0 %v205
    %225 = vmatprep.subr.bf16.mxu0 0
    %226 = vmatpush1.bf16.msra.mxu0 %v204
    %227 = vmatprep.subr.bf16.mxu0 0
    %228 = vmatpush1.bf16.msra.mxu0 %v203
    %229 = vmatprep.subr.bf16.mxu0 0
    %230 = vmatpush1.bf16.msra.mxu0 %v202
    %231 = vmatprep.subr.bf16.mxu0 0
    %232 = vmatpush1.bf16.msra.mxu0 %v201
    %233 = vmatprep.subr.bf16.mxu0 0
    %234 = vmatpush2.bf16.msra.mxu0 0
    %235 = vmatprep.subr.bf16.mxu0 0
    %236 = vmatpush2.bf16.msra.mxu0 0
    %237 = vmatprep.subr.bf16.mxu0 0
    %238 = vmatpush2.bf16.msra.mxu0 0
    %239 = vmatprep.subr.bf16.mxu0 0
    %240 = vmatpush2.bf16.msra.mxu0 0
    %241 = vmatprep.subr.bf16.mxu0 0
    %242 = vmatpush2.bf16.msra.mxu0 0
    %243 = vmatprep.subr.bf16.mxu0 0
    %244 = vmatpush2.bf16.msra.mxu0 0
    %245 = vmatprep.subr.bf16.mxu0 0
    %246 = vmatpush2.bf16.msra.mxu0 0
    %247 = vmatprep.subr.bf16.mxu0 0
    %248 = vmatpush2.bf16.msra.mxu0 0
    %249 = vmatprep.mubr.bf16.mxu0 0
    %250 = vmatmul.mubr.bf16.gmra.mxu0 %v143
    %v251 = vpop.f32.mrf.mxu0
    %v252 = vadd.f32 0.0, %v251
    %v253 = vpop.f32.mrf.mxu0
    %v254 = vpop.f32.mrf.mxu0
    %v255 = vadd.f32 0.0, %v254
    %v256 = vpop.f32.mrf.mxu0
    %257 = vmatprep.mubr.bf16.mxu0 0
    %258 = vmatmul.mubr.bf16.gmra.mxu0 %v144
    %v259 = vpop.f32.mrf.mxu0
    %v260 = vadd.f32 0.0, %v259
    %v261 = vpop.f32.mrf.mxu0
    %v262 = vpop.f32.mrf.mxu0
    %v263 = vadd.f32 0.0, %v262
    %v264 = vpop.f32.mrf.mxu0
    %265 = vmatprep.mubr.bf16.mxu0 0
    %266 = vmatmul.mubr.bf16.gmra.mxu0 %v145
    %v267 = vpop.f32.mrf.mxu0
    %v268 = vadd.f32 0.0, %v267
    %v269 = vpop.f32.mrf.mxu0
    %v270 = vpop.f32.mrf.mxu0
    %v271 = vadd.f32 0.0, %v270
    %v272 = vpop.f32.mrf.mxu0
    %273 = vmatprep.mubr.bf16.mxu0 0
    %274 = vmatmul.mubr.bf16.gmra.mxu0 %v146
    %v275 = vpop.f32.mrf.mxu0
    %v276 = vadd.f32 0.0, %v275
    %v277 = vpop.f32.mrf.mxu0
    %v278 = vpop.f32.mrf.mxu0
    %v279 = vadd.f32 0.0, %v278
    %v280 = vpop.f32.mrf.mxu0
    %281 = vmatprep.mubr.bf16.mxu0 0
    %282 = vmatmul.mubr.bf16.gmra.mxu0 %v147
    %v283 = vpop.f32.mrf.mxu0
    %v284 = vadd.f32 0.0, %v283
    %v285 = vpop.f32.mrf.mxu0
    %v286 = vpop.f32.mrf.mxu0
    %v287 = vadd.f32 0.0, %v286
    %v288 = vpop.f32.mrf.mxu0
    %289 = vmatprep.mubr.bf16.mxu0 0
    %290 = vmatmul.mubr.bf16.gmra.mxu0 %v148
    %v291 = vpop.f32.mrf.mxu0
    %v292 = vadd.f32 0.0, %v291
    %v293 = vpop.f32.mrf.mxu0
    %v294 = vpop.f32.mrf.mxu0
    %v295 = vadd.f32 0.0, %v294
    %v296 = vpop.f32.mrf.mxu0
    %297 = vmatprep.mubr.bf16.mxu0 0
    %298 = vmatmul.mubr.bf16.gmra.mxu0 %v149
    %v299 = vpop.f32.mrf.mxu0
    %v300 = vadd.f32 0.0, %v299
    %v301 = vpop.f32.mrf.mxu0
    %v302 = vpop.f32.mrf.mxu0
    %v303 = vadd.f32 0.0, %v302
    %v304 = vpop.f32.mrf.mxu0
    %305 = vmatprep.mubr.bf16.mxu0 0
    %306 = vmatmul.mubr.bf16.gmra.mxu0 %v150
    %v307 = vpop.f32.mrf.mxu0
    %v308 = vadd.f32 0.0, %v307
    %v309 = vpop.f32.mrf.mxu0
    %v310 = vpop.f32.mrf.mxu0
    %v311 = vadd.f32 0.0, %v310
    %v312 = vpop.f32.mrf.mxu0
    %313 = vmatprep.mubr.bf16.mxu0 0
    %314 = vmatmul.mubr.bf16.gmra.mxu0 %v151
    %v315 = vpop.f32.mrf.mxu0
    %v316 = vadd.f32 0.0, %v315
    %v317 = vpop.f32.mrf.mxu0
    %v318 = vpop.f32.mrf.mxu0
    %v319 = vadd.f32 0.0, %v318
    %v320 = vpop.f32.mrf.mxu0
    %321 = vmatprep.mubr.bf16.mxu0 0
    %322 = vmatmul.mubr.bf16.gmra.mxu0 %v152
    %v323 = vpop.f32.mrf.mxu0
    %v324 = vadd.f32 0.0, %v323
    %v325 = vpop.f32.mrf.mxu0
    %v326 = vpop.f32.mrf.mxu0
    %v327 = vadd.f32 0.0, %v326
    %v328 = vpop.f32.mrf.mxu0
    %329 = vmatprep.mubr.bf16.mxu0 0
    %330 = vmatmul.mubr.bf16.gmra.mxu0 %v153
    %v331 = vpop.f32.mrf.mxu0
    %v332 = vadd.f32 0.0, %v331
    %v333 = vpop.f32.mrf.mxu0
    %v334 = vpop.f32.mrf.mxu0
    %v335 = vadd.f32 0.0, %v334
    %v336 = vpop.f32.mrf.mxu0
    %337 = vmatprep.mubr.bf16.mxu0 0
    %338 = vmatmul.mubr.bf16.gmra.mxu0 %v154
    %v339 = vpop.f32.mrf.mxu0
    %v340 = vadd.f32 0.0, %v339
    %v341 = vpop.f32.mrf.mxu0
    %v342 = vpop.f32.mrf.mxu0
    %v343 = vadd.f32 0.0, %v342
    %v344 = vpop.f32.mrf.mxu0
    %345 = vmatprep.mubr.bf16.mxu0 0
    %346 = vmatmul.mubr.bf16.gmra.mxu0 %v155
    %v347 = vpop.f32.mrf.mxu0
    %v348 = vadd.f32 0.0, %v347
    %v349 = vpop.f32.mrf.mxu0
    %v350 = vpop.f32.mrf.mxu0
    %v351 = vpop.f32.mrf.mxu0
    %352 = vdwg.mxu0
    %s353 = scalar_lea.vmem %s0, 100
    %v354 = vld [vmem:[%s353] sm:$0xf]
    %v355 = vld [vmem:[%s353 + $0x4] sm:$0xf]
    %v356 = vld [vmem:[%s353 + $0x8] sm:$0xf]
    %v357 = vld [vmem:[%s353 + $0xc] sm:$0xf]
    %v358 = vld [vmem:[%s353 + $0x10] sm:$0xf]
    %v359 = vld [vmem:[%s353 + $0x14] sm:$0xf]
    %v360 = vld [vmem:[%s353 + $0x18] sm:$0xf]
    %v361 = vld [vmem:[%s353 + $0x1c] sm:$0xf]
    %v362 = vld [vmem:[%s353 + $0x20] sm:$0xf]
    %v363 = vld [vmem:[%s353 + $0x24] sm:$0xf]
    %v364 = vld [vmem:[%s353 + $0x28] sm:$0xf]
    %v365 = vld [vmem:[%s353 + $0x2c] sm:$0xf]
    %v366 = vld [vmem:[%s353 + $0x30] sm:$0xf]
    %v367 = vld [vmem:[%s353 + $0x34] sm:$0xf]
    %v368 = vld [vmem:[%s353 + $0x38] sm:$0xf]
    %v369 = vld [vmem:[%s353 + $0x3c] sm:$0xf]
    %v370 = vld [vmem:[%s353 + $0x40] sm:$0xf]
    %v371 = vld [vmem:[%s353 + $0x44] sm:$0xf]
    %v372 = vld [vmem:[%s353 + $0x48] sm:$0xf]
    %v373 = vld [vmem:[%s353 + $0x4c] sm:$0xf]
    %v374 = vld [vmem:[%s353 + $0x50] sm:$0xf]
    %v375 = vld [vmem:[%s353 + $0x54] sm:$0xf]
    %v376 = vld [vmem:[%s353 + $0x58] sm:$0xf]
    %v377 = vld [vmem:[%s353 + $0x5c] sm:$0xf]
    %v378 = vld [vmem:[%s353 + $0x60] sm:$0x3]
    %v404 = vunpack.c.l.b16 %v354
    %v405 = vunpack.c.l.b16 %v355
    %v406 = vunpack.c.l.b16 %v356
    %v407 = vunpack.c.l.b16 %v357
    %v408 = vunpack.c.l.b16 %v358
    %v409 = vunpack.c.l.b16 %v359
    %v410 = vunpack.c.l.b16 %v360
    %v411 = vunpack.c.l.b16 %v361
    %v412 = vunpack.c.l.b16 %v362
    %v413 = vunpack.c.l.b16 %v363
    %v414 = vunpack.c.l.b16 %v364
    %v415 = vunpack.c.l.b16 %v365
    %v416 = vunpack.c.l.b16 %v366
    %v417 = vunpack.c.l.b16 %v367
    %v418 = vunpack.c.l.b16 %v368
    %v419 = vunpack.c.l.b16 %v369
    %v420 = vunpack.c.l.b16 %v370
    %v421 = vunpack.c.l.b16 %v371
    %v422 = vunpack.c.l.b16 %v372
    %v423 = vunpack.c.l.b16 %v373
    %v424 = vunpack.c.l.b16 %v374
    %v425 = vunpack.c.l.b16 %v375
    %v426 = vunpack.c.l.b16 %v376
    %v427 = vunpack.c.l.b16 %v377
    %v428 = vunpack.c.l.b16 %v378
    %v429 = vpack.c.b16 %v405, %v404
    %v430 = vpack.c.b16 %v407, %v406
    %v431 = vpack.c.b16 %v409, %v408
    %v432 = vpack.c.b16 %v411, %v410
    %v433 = vpack.c.b16 %v413, %v412
    %v434 = vpack.c.b16 %v415, %v414
    %v435 = vpack.c.b16 %v417, %v416
    %v436 = vpack.c.b16 %v419, %v418
    %v437 = vpack.c.b16 %v421, %v420
    %v438 = vpack.c.b16 %v423, %v422
    %v439 = vpack.c.b16 %v425, %v424
    %v440 = vpack.c.b16 %v427, %v426
    %v441 = vpack.c.b16 %v428, %v428
    %455 = vmatprep.subr.bf16.mxu0 0
    %456 = vmatpush1.bf16.msra.mxu0 %v208
    %457 = vmatprep.subr.bf16.mxu0 0
    %458 = vmatpush1.bf16.msra.mxu0 %v207
    %459 = vmatprep.subr.bf16.mxu0 0
    %460 = vmatpush1.bf16.msra.mxu0 %v206
    %461 = vmatprep.subr.bf16.mxu0 0
    %462 = vmatpush1.bf16.msra.mxu0 %v205
    %463 = vmatprep.subr.bf16.mxu0 0
    %464 = vmatpush1.bf16.msra.mxu0 %v204
    %465 = vmatprep.subr.bf16.mxu0 0
    %466 = vmatpush1.bf16.msra.mxu0 %v203
    %467 = vmatprep.subr.bf16.mxu0 0
    %468 = vmatpush1.bf16.msra.mxu0 %v202
    %469 = vmatprep.subr.bf16.mxu0 0
    %470 = vmatpush1.bf16.msra.mxu0 %v201
    %471 = vmatprep.subr.bf16.mxu0 0
    %472 = vmatpush2.bf16.msra.mxu0 0
    %473 = vmatprep.subr.bf16.mxu0 0
    %474 = vmatpush2.bf16.msra.mxu0 0
    %475 = vmatprep.subr.bf16.mxu0 0
    %476 = vmatpush2.bf16.msra.mxu0 0
    %477 = vmatprep.subr.bf16.mxu0 0
    %478 = vmatpush2.bf16.msra.mxu0 0
    %479 = vmatprep.subr.bf16.mxu0 0
    %480 = vmatpush2.bf16.msra.mxu0 0
    %481 = vmatprep.subr.bf16.mxu0 0
    %482 = vmatpush2.bf16.msra.mxu0 0
    %483 = vmatprep.subr.bf16.mxu0 0
    %484 = vmatpush2.bf16.msra.mxu0 0
    %485 = vmatprep.subr.bf16.mxu0 0
    %486 = vmatpush2.bf16.msra.mxu0 0
    %487 = vmatprep.mubr.bf16.mxu0 0
    %488 = vmatmul.mubr.bf16.gmra.mxu0 %v429
    %v489 = vpop.f32.mrf.mxu0
    %v490 = vadd.f32 0.0, %v489
    %v491 = vpop.f32.mrf.mxu0
    %v492 = vpop.f32.mrf.mxu0
    %v493 = vadd.f32 0.0, %v492
    %v494 = vpop.f32.mrf.mxu0
    %495 = vmatprep.mubr.bf16.mxu0 0
    %496 = vmatmul.mubr.bf16.gmra.mxu0 %v430
    %v497 = vpop.f32.mrf.mxu0
    %v498 = vadd.f32 0.0, %v497
    %v499 = vpop.f32.mrf.mxu0
    %v500 = vpop.f32.mrf.mxu0
    %v501 = vadd.f32 0.0, %v500
    %v502 = vpop.f32.mrf.mxu0
    %503 = vmatprep.mubr.bf16.mxu0 0
    %504 = vmatmul.mubr.bf16.gmra.mxu0 %v431
    %v505 = vpop.f32.mrf.mxu0
    %v506 = vadd.f32 0.0, %v505
    %v507 = vpop.f32.mrf.mxu0
    %v508 = vpop.f32.mrf.mxu0
    %v509 = vadd.f32 0.0, %v508
    %v510 = vpop.f32.mrf.mxu0
    %511 = vmatprep.mubr.bf16.mxu0 0
    %512 = vmatmul.mubr.bf16.gmra.mxu0 %v432
    %v513 = vpop.f32.mrf.mxu0
    %v514 = vadd.f32 0.0, %v513
    %v515 = vpop.f32.mrf.mxu0
    %v516 = vpop.f32.mrf.mxu0
    %v517 = vadd.f32 0.0, %v516
    %v518 = vpop.f32.mrf.mxu0
    %519 = vmatprep.mubr.bf16.mxu0 0
    %520 = vmatmul.mubr.bf16.gmra.mxu0 %v433
    %v521 = vpop.f32.mrf.mxu0
    %v522 = vadd.f32 0.0, %v521
    %v523 = vpop.f32.mrf.mxu0
    %v524 = vpop.f32.mrf.mxu0
    %v525 = vadd.f32 0.0, %v524
    %v526 = vpop.f32.mrf.mxu0
    %527 = vmatprep.mubr.bf16.mxu0 0
    %528 = vmatmul.mubr.bf16.gmra.mxu0 %v434
    %v529 = vpop.f32.mrf.mxu0
    %v530 = vadd.f32 0.0, %v529
    %v531 = vpop.f32.mrf.mxu0
    %v532 = vpop.f32.mrf.mxu0
    %v533 = vadd.f32 0.0, %v532
    %v534 = vpop.f32.mrf.mxu0
    %535 = vmatprep.mubr.bf16.mxu0 0
    %536 = vmatmul.mubr.bf16.gmra.mxu0 %v435
    %v537 = vpop.f32.mrf.mxu0
    %v538 = vadd.f32 0.0, %v537
    %v539 = vpop.f32.mrf.mxu0
    %v540 = vpop.f32.mrf.mxu0
    %v541 = vadd.f32 0.0, %v540
    %v542 = vpop.f32.mrf.mxu0
    %543 = vmatprep.mubr.bf16.mxu0 0
    %544 = vmatmul.mubr.bf16.gmra.mxu0 %v436
    %v545 = vpop.f32.mrf.mxu0
    %v546 = vadd.f32 0.0, %v545
    %v547 = vpop.f32.mrf.mxu0
    %v548 = vpop.f32.mrf.mxu0
    %v549 = vadd.f32 0.0, %v548
    %v550 = vpop.f32.mrf.mxu0
    %551 = vmatprep.mubr.bf16.mxu0 0
    %552 = vmatmul.mubr.bf16.gmra.mxu0 %v437
    %v553 = vpop.f32.mrf.mxu0
    %v554 = vadd.f32 0.0, %v553
    %v555 = vpop.f32.mrf.mxu0
    %v556 = vpop.f32.mrf.mxu0
    %v557 = vadd.f32 0.0, %v556
    %v558 = vpop.f32.mrf.mxu0
    %559 = vmatprep.mubr.bf16.mxu0 0
    %560 = vmatmul.mubr.bf16.gmra.mxu0 %v438
    %v561 = vpop.f32.mrf.mxu0
    %v562 = vadd.f32 0.0, %v561
    %v563 = vpop.f32.mrf.mxu0
    %v564 = vpop.f32.mrf.mxu0
    %v565 = vadd.f32 0.0, %v564
    %v566 = vpop.f32.mrf.mxu0
    %567 = vmatprep.mubr.bf16.mxu0 0
    %568 = vmatmul.mubr.bf16.gmra.mxu0 %v439
    %v569 = vpop.f32.mrf.mxu0
    %v570 = vadd.f32 0.0, %v569
    %v571 = vpop.f32.mrf.mxu0
    %v572 = vpop.f32.mrf.mxu0
    %v573 = vadd.f32 0.0, %v572
    %v574 = vpop.f32.mrf.mxu0
    %575 = vmatprep.mubr.bf16.mxu0 0
    %576 = vmatmul.mubr.bf16.gmra.mxu0 %v440
    %v577 = vpop.f32.mrf.mxu0
    %v578 = vadd.f32 0.0, %v577
    %v579 = vpop.f32.mrf.mxu0
    %v580 = vpop.f32.mrf.mxu0
    %v581 = vadd.f32 0.0, %v580
    %v582 = vpop.f32.mrf.mxu0
    %583 = vmatprep.mubr.bf16.mxu0 0
    %584 = vmatmul.mubr.bf16.gmra.mxu0 %v441
    %v585 = vpop.f32.mrf.mxu0
    %v586 = vadd.f32 0.0, %v585
    %v587 = vpop.f32.mrf.mxu0
    %v588 = vpop.f32.mrf.mxu0
    %v589 = vpop.f32.mrf.mxu0
    %590 = vdwg.mxu0
    %v591 = vadd.f32 %v252, %v255
    %v592 = vadd.f32 %v591, %v260
    %v593 = vadd.f32 %v592, %v263
    %v594 = vadd.f32 %v593, %v268
    %v595 = vadd.f32 %v594, %v271
    %v596 = vadd.f32 %v595, %v276
    %v597 = vadd.f32 %v596, %v279
    %v598 = vadd.f32 %v597, %v284
    %v599 = vadd.f32 %v598, %v287
    %v600 = vadd.f32 %v599, %v292
    %v601 = vadd.f32 %v600, %v295
    %v602 = vadd.f32 %v601, %v300
    %v603 = vadd.f32 %v602, %v303
    %v604 = vadd.f32 %v603, %v308
    %v605 = vadd.f32 %v604, %v311
    %v606 = vadd.f32 %v605, %v316
    %v607 = vadd.f32 %v606, %v319
    %v608 = vadd.f32 %v607, %v324
    %v609 = vadd.f32 %v608, %v327
    %v610 = vadd.f32 %v609, %v332
    %v611 = vadd.f32 %v610, %v335
    %v612 = vadd.f32 %v611, %v340
    %v613 = vadd.f32 %v612, %v343
    %vm614 = vcmask 1043456
    %v615 = vsel %vm614, %v348, 0.0
    %v616 = vadd.f32 %v613, %v615
    %v617 = vrot.slane %v616, 4
    %v618 = vadd.f32 %v616, %v617
    %v619 = vrot.slane %v618, 2
    %v620 = vadd.f32 %v618, %v619
    %v621 = vrot.slane %v620, 1
    %v622 = vadd.f32 %v620, %v621
    %v623 = vmul.f32 %v252, %v252
    %v624 = vmul.f32 %v255, %v255
    %v625 = vmul.f32 %v260, %v260
    %v626 = vmul.f32 %v263, %v263
    %v627 = vmul.f32 %v268, %v268
    %v628 = vmul.f32 %v271, %v271
    %v629 = vmul.f32 %v276, %v276
    %v630 = vmul.f32 %v279, %v279
    %v631 = vmul.f32 %v284, %v284
    %v632 = vmul.f32 %v287, %v287
    %v633 = vmul.f32 %v292, %v292
    %v634 = vmul.f32 %v295, %v295
    %v635 = vmul.f32 %v300, %v300
    %v636 = vmul.f32 %v303, %v303
    %v637 = vmul.f32 %v308, %v308
    %v638 = vmul.f32 %v311, %v311
    %v639 = vmul.f32 %v316, %v316
    %v640 = vmul.f32 %v319, %v319
    %v641 = vmul.f32 %v324, %v324
    %v642 = vmul.f32 %v327, %v327
    %v643 = vmul.f32 %v332, %v332
    %v644 = vmul.f32 %v335, %v335
    %v645 = vmul.f32 %v340, %v340
    %v646 = vmul.f32 %v343, %v343
    %v647 = vmul.f32 %v348, %v348
    %v648 = vadd.f32 %v623, %v624
    %v649 = vadd.f32 %v648, %v625
    %v650 = vadd.f32 %v649, %v626
    %v651 = vadd.f32 %v650, %v627
    %v652 = vadd.f32 %v651, %v628
    %v653 = vadd.f32 %v652, %v629
    %v654 = vadd.f32 %v653, %v630
    %v655 = vadd.f32 %v654, %v631
    %v656 = vadd.f32 %v655, %v632
    %v657 = vadd.f32 %v656, %v633
    %v658 = vadd.f32 %v657, %v634
    %v659 = vadd.f32 %v658, %v635
    %v660 = vadd.f32 %v659, %v636
    %v661 = vadd.f32 %v660, %v637
    %v662 = vadd.f32 %v661, %v638
    %v663 = vadd.f32 %v662, %v639
    %v664 = vadd.f32 %v663, %v640
    %v665 = vadd.f32 %v664, %v641
    %v666 = vadd.f32 %v665, %v642
    %v667 = vadd.f32 %v666, %v643
    %v668 = vadd.f32 %v667, %v644
    %v669 = vadd.f32 %v668, %v645
    %v670 = vadd.f32 %v669, %v646
    %v671 = vsel %vm614, %v647, 0.0
    %v672 = vadd.f32 %v670, %v671
    %v673 = vrot.slane %v672, 4
    %v674 = vadd.f32 %v672, %v673
    %v675 = vrot.slane %v674, 2
    %v676 = vadd.f32 %v674, %v675
    %v677 = vrot.slane %v676, 1
    %v678 = vadd.f32 %v676, %v677
    %v679 = vadd.f32 %v490, %v493
    %v680 = vadd.f32 %v679, %v498
    %v681 = vadd.f32 %v680, %v501
    %v682 = vadd.f32 %v681, %v506
    %v683 = vadd.f32 %v682, %v509
    %v684 = vadd.f32 %v683, %v514
    %v685 = vadd.f32 %v684, %v517
    %v686 = vadd.f32 %v685, %v522
    %v687 = vadd.f32 %v686, %v525
    %v688 = vadd.f32 %v687, %v530
    %v689 = vadd.f32 %v688, %v533
    %v690 = vadd.f32 %v689, %v538
    %v691 = vadd.f32 %v690, %v541
    %v692 = vadd.f32 %v691, %v546
    %v693 = vadd.f32 %v692, %v549
    %v694 = vadd.f32 %v693, %v554
    %v695 = vadd.f32 %v694, %v557
    %v696 = vadd.f32 %v695, %v562
    %v697 = vadd.f32 %v696, %v565
    %v698 = vadd.f32 %v697, %v570
    %v699 = vadd.f32 %v698, %v573
    %v700 = vadd.f32 %v699, %v578
    %v701 = vadd.f32 %v700, %v581
    %v702 = vsel %vm614, %v586, 0.0
    %v703 = vadd.f32 %v701, %v702
    %v704 = vrot.slane %v703, 4
    %v705 = vadd.f32 %v703, %v704
    %v706 = vrot.slane %v705, 2
    %v707 = vadd.f32 %v705, %v706
    %v708 = vrot.slane %v707, 1
    %v709 = vadd.f32 %v707, %v708
    %v710 = vadd.f32 %v622, %v709
    %v711 = vmul.f32 %v490, %v490
    %v712 = vmul.f32 %v493, %v493
    %v713 = vmul.f32 %v498, %v498
    %v714 = vmul.f32 %v501, %v501
    %v715 = vmul.f32 %v506, %v506
    %v716 = vmul.f32 %v509, %v509
    %v717 = vmul.f32 %v514, %v514
    %v718 = vmul.f32 %v517, %v517
    %v719 = vmul.f32 %v522, %v522
    %v720 = vmul.f32 %v525, %v525
    %v721 = vmul.f32 %v530, %v530
    %v722 = vmul.f32 %v533, %v533
    %v723 = vmul.f32 %v538, %v538
    %v724 = vmul.f32 %v541, %v541
    %v725 = vmul.f32 %v546, %v546
    %v726 = vmul.f32 %v549, %v549
    %v727 = vmul.f32 %v554, %v554
    %v728 = vmul.f32 %v557, %v557
    %v729 = vmul.f32 %v562, %v562
    %v730 = vmul.f32 %v565, %v565
    %v731 = vmul.f32 %v570, %v570
    %v732 = vmul.f32 %v573, %v573
    %v733 = vmul.f32 %v578, %v578
    %v734 = vmul.f32 %v581, %v581
    %v735 = vmul.f32 %v586, %v586
    %v736 = vadd.f32 %v711, %v712
    %v737 = vadd.f32 %v736, %v713
    %v738 = vadd.f32 %v737, %v714
    %v739 = vadd.f32 %v738, %v715
    %v740 = vadd.f32 %v739, %v716
    %v741 = vadd.f32 %v740, %v717
    %v742 = vadd.f32 %v741, %v718
    %v743 = vadd.f32 %v742, %v719
    %v744 = vadd.f32 %v743, %v720
    %v745 = vadd.f32 %v744, %v721
    %v746 = vadd.f32 %v745, %v722
    %v747 = vadd.f32 %v746, %v723
    %v748 = vadd.f32 %v747, %v724
    %v749 = vadd.f32 %v748, %v725
    %v750 = vadd.f32 %v749, %v726
    %v751 = vadd.f32 %v750, %v727
    %v752 = vadd.f32 %v751, %v728
    %v753 = vadd.f32 %v752, %v729
    %v754 = vadd.f32 %v753, %v730
    %v755 = vadd.f32 %v754, %v731
    %v756 = vadd.f32 %v755, %v732
    %v757 = vadd.f32 %v756, %v733
    %v758 = vadd.f32 %v757, %v734
    %v759 = vsel %vm614, %v735, 0.0
    %v760 = vadd.f32 %v758, %v759
    %v761 = vrot.slane %v760, 4
    %v762 = vadd.f32 %v760, %v761
    %v763 = vrot.slane %v762, 2
    %v764 = vadd.f32 %v762, %v763
    %v765 = vrot.slane %v764, 1
    %v766 = vadd.f32 %v764, %v765
    %v767 = vadd.f32 %v678, %v766
    %v768 = vmul.f32 %v710, 0.0025510204
    %v769 = vmul.f32 %v767, 0.0025510204
    %v770 = vmul.f32 %v768, %v768
    %v771 = vsub.f32 %v769, %v770
    %v772 = vmax.f32 %v771, 0.0
    %v773 = vld [vmem:[%s8] sm:$0x1]
    %v774 = vadd.f32 %v772, 1e-05
    %v775 = vrsqrt.pop %v774
    %v776 = vmul.f32 %v773, %v775
    %v777 = vld [vmem:[%s9] sm:$0x1]
    %v778 = vmul.f32 %v768, %v776
    %v779 = vsub.f32 %v777, %v778
    %v781 = vlaneseq
    %v782 = vshrl.u32 %v781, 7
    %v783 = vsub.s32 0, %v782
    %v784 = vrot.slane %v776, %v783
    %v786 = vmul.f32 %v252, %v784
    %v787 = vmul.f32 %v255, %v784
    %v788 = vmul.f32 %v260, %v784
    %v789 = vmul.f32 %v263, %v784
    %v790 = vmul.f32 %v268, %v784
    %v791 = vmul.f32 %v271, %v784
    %v792 = vmul.f32 %v276, %v784
    %v793 = vmul.f32 %v279, %v784
    %v794 = vmul.f32 %v284, %v784
    %v795 = vmul.f32 %v287, %v784
    %v796 = vmul.f32 %v292, %v784
    %v797 = vmul.f32 %v295, %v784
    %v798 = vmul.f32 %v300, %v784
    %v799 = vmul.f32 %v303, %v784
    %v800 = vmul.f32 %v308, %v784
    %v801 = vmul.f32 %v311, %v784
    %v802 = vmul.f32 %v316, %v784
    %v803 = vmul.f32 %v319, %v784
    %v804 = vmul.f32 %v324, %v784
    %v805 = vmul.f32 %v327, %v784
    %v806 = vmul.f32 %v332, %v784
    %v807 = vmul.f32 %v335, %v784
    %v808 = vmul.f32 %v340, %v784
    %v809 = vmul.f32 %v343, %v784
    %v810 = vmul.f32 %v348, %v784
    %v812 = vlaneseq
    %v813 = vshrl.u32 %v812, 7
    %v814 = vsub.s32 0, %v813
    %v815 = vrot.slane %v779, %v814
    %v817 = vadd.f32 %v786, %v815
    %v818 = vadd.f32 %v787, %v815
    %v819 = vadd.f32 %v788, %v815
    %v820 = vadd.f32 %v789, %v815
    %v821 = vadd.f32 %v790, %v815
    %v822 = vadd.f32 %v791, %v815
    %v823 = vadd.f32 %v792, %v815
    %v824 = vadd.f32 %v793, %v815
    %v825 = vadd.f32 %v794, %v815
    %v826 = vadd.f32 %v795, %v815
    %v827 = vadd.f32 %v796, %v815
    %v828 = vadd.f32 %v797, %v815
    %v829 = vadd.f32 %v798, %v815
    %v830 = vadd.f32 %v799, %v815
    %v831 = vadd.f32 %v800, %v815
    %v832 = vadd.f32 %v801, %v815
    %v833 = vadd.f32 %v802, %v815
    %v834 = vadd.f32 %v803, %v815
    %v835 = vadd.f32 %v804, %v815
    %v836 = vadd.f32 %v805, %v815
    %v837 = vadd.f32 %v806, %v815
    %v838 = vadd.f32 %v807, %v815
    %v839 = vadd.f32 %v808, %v815
    %v840 = vadd.f32 %v809, %v815
    %v841 = vadd.f32 %v810, %v815
    %v842 = vmax.f32 %v817, 0.0
    %v843 = vmax.f32 %v818, 0.0
    %v844 = vmax.f32 %v819, 0.0
    %v845 = vmax.f32 %v820, 0.0
    %v846 = vmax.f32 %v821, 0.0
    %v847 = vmax.f32 %v822, 0.0
    %v848 = vmax.f32 %v823, 0.0
    %v849 = vmax.f32 %v824, 0.0
    %v850 = vmax.f32 %v825, 0.0
    %v851 = vmax.f32 %v826, 0.0
    %v852 = vmax.f32 %v827, 0.0
    %v853 = vmax.f32 %v828, 0.0
    %v854 = vmax.f32 %v829, 0.0
    %v855 = vmax.f32 %v830, 0.0
    %v856 = vmax.f32 %v831, 0.0
    %v857 = vmax.f32 %v832, 0.0
    %v858 = vmax.f32 %v833, 0.0
    %v859 = vmax.f32 %v834, 0.0
    %v860 = vmax.f32 %v835, 0.0
    %v861 = vmax.f32 %v836, 0.0
    %v862 = vmax.f32 %v837, 0.0
    %v863 = vmax.f32 %v838, 0.0
    %v864 = vmax.f32 %v839, 0.0
    %v865 = vmax.f32 %v840, 0.0
    %v866 = vmax.f32 %v841, 0.0
    %v867 = vpack.c.bf16 %v843, %v842
    %v868 = vpack.c.bf16 %v845, %v844
    %v869 = vpack.c.bf16 %v847, %v846
    %v870 = vpack.c.bf16 %v849, %v848
    %v871 = vpack.c.bf16 %v851, %v850
    %v872 = vpack.c.bf16 %v853, %v852
    %v873 = vpack.c.bf16 %v855, %v854
    %v874 = vpack.c.bf16 %v857, %v856
    %v875 = vpack.c.bf16 %v859, %v858
    %v876 = vpack.c.bf16 %v861, %v860
    %v877 = vpack.c.bf16 %v863, %v862
    %v878 = vpack.c.bf16 %v865, %v864
    %v879 = vpack.c.bf16 %v866, %v866
    %v880 = vmul.f32 %v490, %v784
    %v881 = vmul.f32 %v493, %v784
    %v882 = vmul.f32 %v498, %v784
    %v883 = vmul.f32 %v501, %v784
    %v884 = vmul.f32 %v506, %v784
    %v885 = vmul.f32 %v509, %v784
    %v886 = vmul.f32 %v514, %v784
    %v887 = vmul.f32 %v517, %v784
    %v888 = vmul.f32 %v522, %v784
    %v889 = vmul.f32 %v525, %v784
    %v890 = vmul.f32 %v530, %v784
    %v891 = vmul.f32 %v533, %v784
    %v892 = vmul.f32 %v538, %v784
    %v893 = vmul.f32 %v541, %v784
    %v894 = vmul.f32 %v546, %v784
    %v895 = vmul.f32 %v549, %v784
    %v896 = vmul.f32 %v554, %v784
    %v897 = vmul.f32 %v557, %v784
    %v898 = vmul.f32 %v562, %v784
    %v899 = vmul.f32 %v565, %v784
    %v900 = vmul.f32 %v570, %v784
    %v901 = vmul.f32 %v573, %v784
    %v902 = vmul.f32 %v578, %v784
    %v903 = vmul.f32 %v581, %v784
    %v904 = vmul.f32 %v586, %v784
    %v905 = vadd.f32 %v880, %v815
    %v906 = vadd.f32 %v881, %v815
    %v907 = vadd.f32 %v882, %v815
    %v908 = vadd.f32 %v883, %v815
    %v909 = vadd.f32 %v884, %v815
    %v910 = vadd.f32 %v885, %v815
    %v911 = vadd.f32 %v886, %v815
    %v912 = vadd.f32 %v887, %v815
    %v913 = vadd.f32 %v888, %v815
    %v914 = vadd.f32 %v889, %v815
    %v915 = vadd.f32 %v890, %v815
    %v916 = vadd.f32 %v891, %v815
    %v917 = vadd.f32 %v892, %v815
    %v918 = vadd.f32 %v893, %v815
    %v919 = vadd.f32 %v894, %v815
    %v920 = vadd.f32 %v895, %v815
    %v921 = vadd.f32 %v896, %v815
    %v922 = vadd.f32 %v897, %v815
    %v923 = vadd.f32 %v898, %v815
    %v924 = vadd.f32 %v899, %v815
    %v925 = vadd.f32 %v900, %v815
    %v926 = vadd.f32 %v901, %v815
    %v927 = vadd.f32 %v902, %v815
    %v928 = vadd.f32 %v903, %v815
    %v929 = vadd.f32 %v904, %v815
    %v930 = vmax.f32 %v905, 0.0
    %v931 = vmax.f32 %v906, 0.0
    %v932 = vmax.f32 %v907, 0.0
    %v933 = vmax.f32 %v908, 0.0
    %v934 = vmax.f32 %v909, 0.0
    %v935 = vmax.f32 %v910, 0.0
    %v936 = vmax.f32 %v911, 0.0
    %v937 = vmax.f32 %v912, 0.0
    %v938 = vmax.f32 %v913, 0.0
    %v939 = vmax.f32 %v914, 0.0
    %v940 = vmax.f32 %v915, 0.0
    %v941 = vmax.f32 %v916, 0.0
    %v942 = vmax.f32 %v917, 0.0
    %v943 = vmax.f32 %v918, 0.0
    %v944 = vmax.f32 %v919, 0.0
    %v945 = vmax.f32 %v920, 0.0
    %v946 = vmax.f32 %v921, 0.0
    %v947 = vmax.f32 %v922, 0.0
    %v948 = vmax.f32 %v923, 0.0
    %v949 = vmax.f32 %v924, 0.0
    %v950 = vmax.f32 %v925, 0.0
    %v951 = vmax.f32 %v926, 0.0
    %v952 = vmax.f32 %v927, 0.0
    %v953 = vmax.f32 %v928, 0.0
    %v954 = vmax.f32 %v929, 0.0
    %v955 = vpack.c.bf16 %v931, %v930
    %v956 = vpack.c.bf16 %v933, %v932
    %v957 = vpack.c.bf16 %v935, %v934
    %v958 = vpack.c.bf16 %v937, %v936
    %v959 = vpack.c.bf16 %v939, %v938
    %v960 = vpack.c.bf16 %v941, %v940
    %v961 = vpack.c.bf16 %v943, %v942
    %v962 = vpack.c.bf16 %v945, %v944
    %v963 = vpack.c.bf16 %v947, %v946
    %v964 = vpack.c.bf16 %v949, %v948
    %v965 = vpack.c.bf16 %v951, %v950
    %v966 = vpack.c.bf16 %v953, %v952
    %v967 = vpack.c.bf16 %v954, %v954
    %v968 = vld [vmem:[%s2] sm:$0xff]
    %v969 = vld [vmem:[%s2 + $0x8] sm:$0xff]
    %v970 = vld [vmem:[%s2 + $0x10] sm:$0xff]
    %v971 = vld [vmem:[%s2 + $0x18] sm:$0xff]
    %v972 = vld [vmem:[%s2 + $0x20] sm:$0xff]
    %v973 = vld [vmem:[%s2 + $0x28] sm:$0xff]
    %v974 = vld [vmem:[%s2 + $0x30] sm:$0x11]
    %v982 = vunpack.c.l.b16 %v968
    %v983 = vunpack.c.h.b16 %v968
    %v984 = vunpack.c.l.b16 %v969
    %v985 = vunpack.c.h.b16 %v969
    %v986 = vunpack.c.l.b16 %v970
    %v987 = vunpack.c.h.b16 %v970
    %v988 = vunpack.c.l.b16 %v971
    %v989 = vunpack.c.h.b16 %v971
    %v990 = vunpack.c.l.b16 %v972
    %v991 = vunpack.c.h.b16 %v972
    %v992 = vunpack.c.l.b16 %v973
    %v993 = vunpack.c.h.b16 %v973
    %v994 = vunpack.c.l.b16 %v974
    %v995 = vunpack.c.h.b16 %v974
    %v996 = vpack.c.b16 %v984, %v982
    %v997 = vpack.c.b16 %v985, %v983
    %v998 = vpack.c.b16 %v988, %v986
    %v999 = vpack.c.b16 %v989, %v987
    %v1000 = vpack.c.b16 %v992, %v990
    %v1001 = vpack.c.b16 %v993, %v991
    %v1002 = vpack.c.b16 %v994, %v994
    %v1003 = vpack.c.b16 %v995, %v995
    %vm1008 = vcmask 556032
    %v1010 = vsel %vm1008, %v997, 0
    %v1013 = vsel %vm1008, %v999, 0
    %v1016 = vsel %vm1008, %v1001, 0
    %v1019 = vsel %vm1008, %v1003, 0
    %vm1021 = vcmask 1041408
    %v1023 = vsel %vm1021, %v879, 0
    %1025 = vmatprep.subr.bf16.mxu0 0
    %1026 = vmatpush1.bf16.msra.mxu0 %v874
    %1027 = vmatprep.subr.bf16.mxu0 0
    %1028 = vmatpush1.bf16.msra.mxu0 %v873
    %1029 = vmatprep.subr.bf16.mxu0 0
    %1030 = vmatpush1.bf16.msra.mxu0 %v872
    %1031 = vmatprep.subr.bf16.mxu0 0
    %1032 = vmatpush1.bf16.msra.mxu0 %v871
    %1033 = vmatprep.subr.bf16.mxu0 0
    %1034 = vmatpush1.bf16.msra.mxu0 %v870
    %1035 = vmatprep.subr.bf16.mxu0 0
    %1036 = vmatpush1.bf16.msra.mxu0 %v869
    %1037 = vmatprep.subr.bf16.mxu0 0
    %1038 = vmatpush1.bf16.msra.mxu0 %v868
    %1039 = vmatprep.subr.bf16.mxu0 0
    %1040 = vmatpush1.bf16.msra.mxu0 %v867
    %1041 = vmatprep.subr.bf16.mxu0 0
    %1042 = vmatpush2.bf16.msra.mxu0 0
    %1043 = vmatprep.subr.bf16.mxu0 0
    %1044 = vmatpush2.bf16.msra.mxu0 0
    %1045 = vmatprep.subr.bf16.mxu0 0
    %1046 = vmatpush2.bf16.msra.mxu0 0
    %1047 = vmatprep.subr.bf16.mxu0 0
    %1048 = vmatpush2.bf16.msra.mxu0 %v1023
    %1049 = vmatprep.subr.bf16.mxu0 0
    %1050 = vmatpush2.bf16.msra.mxu0 %v878
    %1051 = vmatprep.subr.bf16.mxu0 0
    %1052 = vmatpush2.bf16.msra.mxu0 %v877
    %1053 = vmatprep.subr.bf16.mxu0 0
    %1054 = vmatpush2.bf16.msra.mxu0 %v876
    %1055 = vmatprep.subr.bf16.mxu0 0
    %1056 = vmatpush2.bf16.msra.mxu0 %v875
    %1057 = vmatprep.mubr.bf16.mxu0 %v1010
    %1058 = vmatmul.mubr.bf16.gmra.mxu0 %v996
    %v1059 = vpop.f32.mrf.mxu0
    %v1060 = vadd.f32 0.0, %v1059
    %v1061 = vpop.f32.mrf.mxu0
    %v1062 = vpop.f32.mrf.mxu0
    %v1063 = vadd.f32 0.0, %v1062
    %v1064 = vpop.f32.mrf.mxu0
    %1065 = vmatprep.mubr.bf16.mxu0 %v1013
    %1066 = vmatmul.mubr.bf16.gmra.mxu0 %v998
    %v1067 = vpop.f32.mrf.mxu0
    %v1068 = vadd.f32 0.0, %v1067
    %v1069 = vpop.f32.mrf.mxu0
    %v1070 = vpop.f32.mrf.mxu0
    %v1071 = vadd.f32 0.0, %v1070
    %v1072 = vpop.f32.mrf.mxu0
    %1073 = vmatprep.mubr.bf16.mxu0 %v1016
    %1074 = vmatmul.mubr.bf16.gmra.mxu0 %v1000
    %v1075 = vpop.f32.mrf.mxu0
    %v1076 = vadd.f32 0.0, %v1075
    %v1077 = vpop.f32.mrf.mxu0
    %v1078 = vpop.f32.mrf.mxu0
    %v1079 = vadd.f32 0.0, %v1078
    %v1080 = vpop.f32.mrf.mxu0
    %1081 = vmatprep.mubr.bf16.mxu0 %v1019
    %1082 = vmatmul.mubr.bf16.gmra.mxu0 %v1002
    %v1083 = vpop.f32.mrf.mxu0
    %v1084 = vadd.f32 0.0, %v1083
    %v1085 = vpop.f32.mrf.mxu0
    %v1086 = vpop.f32.mrf.mxu0
    %v1087 = vpop.f32.mrf.mxu0
    %1088 = vdwg.mxu0
    %v1089 = vpack.c.bf16 %v1063, %v1060
    %v1090 = vpack.c.bf16 %v1071, %v1068
    %v1091 = vpack.c.bf16 %v1079, %v1076
    %v1092 = vpack.c.bf16 %v1084, %v1084
    %v1093 = vld [vmem:[%s3] sm:$0xf]
    %v1094 = vld [vmem:[%s3 + $0x4] sm:$0xf]
    %v1095 = vld [vmem:[%s3 + $0x8] sm:$0xf]
    %v1096 = vld [vmem:[%s3 + $0xc] sm:$0xf]
    %v1097 = vld [vmem:[%s3 + $0x10] sm:$0xf]
    %v1098 = vld [vmem:[%s3 + $0x14] sm:$0xf]
    %v1099 = vld [vmem:[%s3 + $0x18] sm:$0xf]
    %v1100 = vld [vmem:[%s3 + $0x1c] sm:$0xf]
    %v1101 = vld [vmem:[%s3 + $0x20] sm:$0xf]
    %v1102 = vld [vmem:[%s3 + $0x24] sm:$0xf]
    %v1103 = vld [vmem:[%s3 + $0x28] sm:$0xf]
    %v1104 = vld [vmem:[%s3 + $0x2c] sm:$0xf]
    %v1105 = vld [vmem:[%s3 + $0x30] sm:$0xf]
    %v1106 = vld [vmem:[%s3 + $0x34] sm:$0xf]
    %v1107 = vld [vmem:[%s3 + $0x38] sm:$0xf]
    %v1108 = vld [vmem:[%s3 + $0x3c] sm:$0xf]
    %s1109 = scalar_lea.vmem %s2, 56
    %v1110 = vld [vmem:[%s1109] sm:$0xff]
    %v1111 = vld [vmem:[%s1109 + $0x8] sm:$0xff]
    %v1112 = vld [vmem:[%s1109 + $0x10] sm:$0xff]
    %v1113 = vld [vmem:[%s1109 + $0x18] sm:$0xff]
    %v1114 = vld [vmem:[%s1109 + $0x20] sm:$0xff]
    %v1115 = vld [vmem:[%s1109 + $0x28] sm:$0xff]
    %v1116 = vld [vmem:[%s1109 + $0x30] sm:$0x11]
    %v1124 = vunpack.c.l.b16 %v1110
    %v1125 = vunpack.c.h.b16 %v1110
    %v1126 = vunpack.c.l.b16 %v1111
    %v1127 = vunpack.c.h.b16 %v1111
    %v1128 = vunpack.c.l.b16 %v1112
    %v1129 = vunpack.c.h.b16 %v1112
    %v1130 = vunpack.c.l.b16 %v1113
    %v1131 = vunpack.c.h.b16 %v1113
    %v1132 = vunpack.c.l.b16 %v1114
    %v1133 = vunpack.c.h.b16 %v1114
    %v1134 = vunpack.c.l.b16 %v1115
    %v1135 = vunpack.c.h.b16 %v1115
    %v1136 = vunpack.c.l.b16 %v1116
    %v1137 = vunpack.c.h.b16 %v1116
    %v1138 = vpack.c.b16 %v1126, %v1124
    %v1139 = vpack.c.b16 %v1127, %v1125
    %v1140 = vpack.c.b16 %v1130, %v1128
    %v1141 = vpack.c.b16 %v1131, %v1129
    %v1142 = vpack.c.b16 %v1134, %v1132
    %v1143 = vpack.c.b16 %v1135, %v1133
    %v1144 = vpack.c.b16 %v1136, %v1136
    %v1145 = vpack.c.b16 %v1137, %v1137
    %v1151 = vsel %vm1008, %v1139, 0
    %v1154 = vsel %vm1008, %v1141, 0
    %v1157 = vsel %vm1008, %v1143, 0
    %v1160 = vsel %vm1008, %v1145, 0
    %1162 = vmatprep.subr.bf16.mxu0 0
    %1163 = vmatpush1.bf16.msra.mxu0 %v874
    %1164 = vmatprep.subr.bf16.mxu0 0
    %1165 = vmatpush1.bf16.msra.mxu0 %v873
    %1166 = vmatprep.subr.bf16.mxu0 0
    %1167 = vmatpush1.bf16.msra.mxu0 %v872
    %1168 = vmatprep.subr.bf16.mxu0 0
    %1169 = vmatpush1.bf16.msra.mxu0 %v871
    %1170 = vmatprep.subr.bf16.mxu0 0
    %1171 = vmatpush1.bf16.msra.mxu0 %v870
    %1172 = vmatprep.subr.bf16.mxu0 0
    %1173 = vmatpush1.bf16.msra.mxu0 %v869
    %1174 = vmatprep.subr.bf16.mxu0 0
    %1175 = vmatpush1.bf16.msra.mxu0 %v868
    %1176 = vmatprep.subr.bf16.mxu0 0
    %1177 = vmatpush1.bf16.msra.mxu0 %v867
    %1178 = vmatprep.subr.bf16.mxu0 0
    %1179 = vmatpush2.bf16.msra.mxu0 0
    %1180 = vmatprep.subr.bf16.mxu0 0
    %1181 = vmatpush2.bf16.msra.mxu0 0
    %1182 = vmatprep.subr.bf16.mxu0 0
    %1183 = vmatpush2.bf16.msra.mxu0 0
    %1184 = vmatprep.subr.bf16.mxu0 0
    %1185 = vmatpush2.bf16.msra.mxu0 %v1023
    %1186 = vmatprep.subr.bf16.mxu0 0
    %1187 = vmatpush2.bf16.msra.mxu0 %v878
    %1188 = vmatprep.subr.bf16.mxu0 0
    %1189 = vmatpush2.bf16.msra.mxu0 %v877
    %1190 = vmatprep.subr.bf16.mxu0 0
    %1191 = vmatpush2.bf16.msra.mxu0 %v876
    %1192 = vmatprep.subr.bf16.mxu0 0
    %1193 = vmatpush2.bf16.msra.mxu0 %v875
    %1194 = vmatprep.mubr.bf16.mxu0 %v1151
    %1195 = vmatmul.mubr.bf16.gmra.mxu0 %v1138
    %v1196 = vpop.f32.mrf.mxu0
    %v1197 = vadd.f32 0.0, %v1196
    %v1198 = vpop.f32.mrf.mxu0
    %v1199 = vpop.f32.mrf.mxu0
    %v1200 = vadd.f32 0.0, %v1199
    %v1201 = vpop.f32.mrf.mxu0
    %1202 = vmatprep.mubr.bf16.mxu0 %v1154
    %1203 = vmatmul.mubr.bf16.gmra.mxu0 %v1140
    %v1204 = vpop.f32.mrf.mxu0
    %v1205 = vadd.f32 0.0, %v1204
    %v1206 = vpop.f32.mrf.mxu0
    %v1207 = vpop.f32.mrf.mxu0
    %v1208 = vadd.f32 0.0, %v1207
    %v1209 = vpop.f32.mrf.mxu0
    %1210 = vmatprep.mubr.bf16.mxu0 %v1157
    %1211 = vmatmul.mubr.bf16.gmra.mxu0 %v1142
    %v1212 = vpop.f32.mrf.mxu0
    %v1213 = vadd.f32 0.0, %v1212
    %v1214 = vpop.f32.mrf.mxu0
    %v1215 = vpop.f32.mrf.mxu0
    %v1216 = vadd.f32 0.0, %v1215
    %v1217 = vpop.f32.mrf.mxu0
    %1218 = vmatprep.mubr.bf16.mxu0 %v1160
    %1219 = vmatmul.mubr.bf16.gmra.mxu0 %v1144
    %v1220 = vpop.f32.mrf.mxu0
    %v1221 = vadd.f32 0.0, %v1220
    %v1222 = vpop.f32.mrf.mxu0
    %v1223 = vpop.f32.mrf.mxu0
    %v1224 = vpop.f32.mrf.mxu0
    %1225 = vdwg.mxu0
    %v1226 = vpack.c.bf16 %v1200, %v1197
    %v1227 = vpack.c.bf16 %v1208, %v1205
    %v1228 = vpack.c.bf16 %v1216, %v1213
    %v1229 = vpack.c.bf16 %v1221, %v1221
    %s1230 = scalar_lea.vmem %s3, 64
    %v1231 = vld [vmem:[%s1230] sm:$0xf]
    %v1232 = vld [vmem:[%s1230 + $0x4] sm:$0xf]
    %v1233 = vld [vmem:[%s1230 + $0x8] sm:$0xf]
    %v1234 = vld [vmem:[%s1230 + $0xc] sm:$0xf]
    %v1235 = vld [vmem:[%s1230 + $0x10] sm:$0xf]
    %v1236 = vld [vmem:[%s1230 + $0x14] sm:$0xf]
    %v1237 = vld [vmem:[%s1230 + $0x18] sm:$0xf]
    %v1238 = vld [vmem:[%s1230 + $0x1c] sm:$0xf]
    %v1239 = vld [vmem:[%s1230 + $0x20] sm:$0xf]
    %v1240 = vld [vmem:[%s1230 + $0x24] sm:$0xf]
    %v1241 = vld [vmem:[%s1230 + $0x28] sm:$0xf]
    %v1242 = vld [vmem:[%s1230 + $0x2c] sm:$0xf]
    %v1243 = vld [vmem:[%s1230 + $0x30] sm:$0xf]
    %v1244 = vld [vmem:[%s1230 + $0x34] sm:$0xf]
    %v1245 = vld [vmem:[%s1230 + $0x38] sm:$0xf]
    %v1246 = vld [vmem:[%s1230 + $0x3c] sm:$0xf]
    %v1263 = vunpack.c.l.b16 %v1231
    %v1264 = vunpack.c.l.b16 %v1232
    %v1265 = vunpack.c.l.b16 %v1233
    %v1266 = vunpack.c.l.b16 %v1234
    %v1267 = vunpack.c.l.b16 %v1235
    %v1268 = vunpack.c.l.b16 %v1236
    %v1269 = vunpack.c.l.b16 %v1237
    %v1270 = vunpack.c.l.b16 %v1238
    %v1271 = vunpack.c.l.b16 %v1239
    %v1272 = vunpack.c.l.b16 %v1240
    %v1273 = vunpack.c.l.b16 %v1241
    %v1274 = vunpack.c.l.b16 %v1242
    %v1275 = vunpack.c.l.b16 %v1243
    %v1276 = vunpack.c.l.b16 %v1244
    %v1277 = vunpack.c.l.b16 %v1245
    %v1278 = vunpack.c.l.b16 %v1246
    %v1279 = vpack.c.b16 %v1264, %v1263
    %v1280 = vpack.c.b16 %v1266, %v1265
    %v1281 = vpack.c.b16 %v1268, %v1267
    %v1282 = vpack.c.b16 %v1270, %v1269
    %v1283 = vpack.c.b16 %v1272, %v1271
    %v1284 = vpack.c.b16 %v1274, %v1273
    %v1285 = vpack.c.b16 %v1276, %v1275
    %v1286 = vpack.c.b16 %v1278, %v1277
    %1295 = vmatprep.subr.bf16.mxu0 0
    %1296 = vmatpush1.bf16.msra.mxu0 %v1286
    %1297 = vmatprep.subr.bf16.mxu0 0
    %1298 = vmatpush1.bf16.msra.mxu0 %v1285
    %1299 = vmatprep.subr.bf16.mxu0 0
    %1300 = vmatpush1.bf16.msra.mxu0 %v1284
    %1301 = vmatprep.subr.bf16.mxu0 0
    %1302 = vmatpush1.bf16.msra.mxu0 %v1283
    %1303 = vmatprep.subr.bf16.mxu0 0
    %1304 = vmatpush1.bf16.msra.mxu0 %v1282
    %1305 = vmatprep.subr.bf16.mxu0 0
    %1306 = vmatpush1.bf16.msra.mxu0 %v1281
    %1307 = vmatprep.subr.bf16.mxu0 0
    %1308 = vmatpush1.bf16.msra.mxu0 %v1280
    %1309 = vmatprep.subr.bf16.mxu0 0
    %1310 = vmatpush1.bf16.msra.mxu0 %v1279
    %1311 = vmatprep.subr.bf16.mxu0 0
    %1312 = vmatpush2.bf16.msra.mxu0 0
    %1313 = vmatprep.subr.bf16.mxu0 0
    %1314 = vmatpush2.bf16.msra.mxu0 0
    %1315 = vmatprep.subr.bf16.mxu0 0
    %1316 = vmatpush2.bf16.msra.mxu0 0
    %1317 = vmatprep.subr.bf16.mxu0 0
    %1318 = vmatpush2.bf16.msra.mxu0 0
    %1319 = vmatprep.subr.bf16.mxu0 0
    %1320 = vmatpush2.bf16.msra.mxu0 0
    %1321 = vmatprep.subr.bf16.mxu0 0
    %1322 = vmatpush2.bf16.msra.mxu0 0
    %1323 = vmatprep.subr.bf16.mxu0 0
    %1324 = vmatpush2.bf16.msra.mxu0 0
    %1325 = vmatprep.subr.bf16.mxu0 0
    %1326 = vmatpush2.bf16.msra.mxu0 0
    %1327 = vmatprep.mubr.bf16.mxu0 0
    %1328 = vmatmul.mubr.bf16.gmra.mxu0 %v1226
    %v1329 = vpop.f32.mrf.mxu0
    %v1330 = vadd.f32 0.0, %v1329
    %v1331 = vpop.f32.mrf.mxu0
    %v1332 = vpop.f32.mrf.mxu0
    %v1333 = vadd.f32 0.0, %v1332
    %v1334 = vpop.f32.mrf.mxu0
    %1335 = vmatprep.mubr.bf16.mxu0 0
    %1336 = vmatmul.mubr.bf16.gmra.mxu0 %v1227
    %v1337 = vpop.f32.mrf.mxu0
    %v1338 = vadd.f32 0.0, %v1337
    %v1339 = vpop.f32.mrf.mxu0
    %v1340 = vpop.f32.mrf.mxu0
    %v1341 = vadd.f32 0.0, %v1340
    %v1342 = vpop.f32.mrf.mxu0
    %1343 = vmatprep.mubr.bf16.mxu0 0
    %1344 = vmatmul.mubr.bf16.gmra.mxu0 %v1228
    %v1345 = vpop.f32.mrf.mxu0
    %v1346 = vadd.f32 0.0, %v1345
    %v1347 = vpop.f32.mrf.mxu0
    %v1348 = vpop.f32.mrf.mxu0
    %v1349 = vadd.f32 0.0, %v1348
    %v1350 = vpop.f32.mrf.mxu0
    %1351 = vmatprep.mubr.bf16.mxu0 0
    %1352 = vmatmul.mubr.bf16.gmra.mxu0 %v1229
    %v1353 = vpop.f32.mrf.mxu0
    %v1354 = vadd.f32 0.0, %v1353
    %v1355 = vpop.f32.mrf.mxu0
    %v1356 = vpop.f32.mrf.mxu0
    %v1357 = vpop.f32.mrf.mxu0
    %1358 = vdwg.mxu0
    %v1375 = vunpack.c.l.b16 %v1093
    %v1376 = vunpack.c.l.b16 %v1094
    %v1377 = vunpack.c.l.b16 %v1095
    %v1378 = vunpack.c.l.b16 %v1096
    %v1379 = vunpack.c.l.b16 %v1097
    %v1380 = vunpack.c.l.b16 %v1098
    %v1381 = vunpack.c.l.b16 %v1099
    %v1382 = vunpack.c.l.b16 %v1100
    %v1383 = vunpack.c.l.b16 %v1101
    %v1384 = vunpack.c.l.b16 %v1102
    %v1385 = vunpack.c.l.b16 %v1103
    %v1386 = vunpack.c.l.b16 %v1104
    %v1387 = vunpack.c.l.b16 %v1105
    %v1388 = vunpack.c.l.b16 %v1106
    %v1389 = vunpack.c.l.b16 %v1107
    %v1390 = vunpack.c.l.b16 %v1108
    %v1391 = vpack.c.b16 %v1376, %v1375
    %v1392 = vpack.c.b16 %v1378, %v1377
    %v1393 = vpack.c.b16 %v1380, %v1379
    %v1394 = vpack.c.b16 %v1382, %v1381
    %v1395 = vpack.c.b16 %v1384, %v1383
    %v1396 = vpack.c.b16 %v1386, %v1385
    %v1397 = vpack.c.b16 %v1388, %v1387
    %v1398 = vpack.c.b16 %v1390, %v1389
    %1407 = vmatprep.subr.bf16.mxu0 0
    %1408 = vmatpush1.bf16.msra.mxu0 %v1398
    %1409 = vmatprep.subr.bf16.mxu0 0
    %1410 = vmatpush1.bf16.msra.mxu0 %v1397
    %1411 = vmatprep.subr.bf16.mxu0 0
    %1412 = vmatpush1.bf16.msra.mxu0 %v1396
    %1413 = vmatprep.subr.bf16.mxu0 0
    %1414 = vmatpush1.bf16.msra.mxu0 %v1395
    %1415 = vmatprep.subr.bf16.mxu0 0
    %1416 = vmatpush1.bf16.msra.mxu0 %v1394
    %1417 = vmatprep.subr.bf16.mxu0 0
    %1418 = vmatpush1.bf16.msra.mxu0 %v1393
    %1419 = vmatprep.subr.bf16.mxu0 0
    %1420 = vmatpush1.bf16.msra.mxu0 %v1392
    %1421 = vmatprep.subr.bf16.mxu0 0
    %1422 = vmatpush1.bf16.msra.mxu0 %v1391
    %1423 = vmatprep.subr.bf16.mxu0 0
    %1424 = vmatpush2.bf16.msra.mxu0 0
    %1425 = vmatprep.subr.bf16.mxu0 0
    %1426 = vmatpush2.bf16.msra.mxu0 0
    %1427 = vmatprep.subr.bf16.mxu0 0
    %1428 = vmatpush2.bf16.msra.mxu0 0
    %1429 = vmatprep.subr.bf16.mxu0 0
    %1430 = vmatpush2.bf16.msra.mxu0 0
    %1431 = vmatprep.subr.bf16.mxu0 0
    %1432 = vmatpush2.bf16.msra.mxu0 0
    %1433 = vmatprep.subr.bf16.mxu0 0
    %1434 = vmatpush2.bf16.msra.mxu0 0
    %1435 = vmatprep.subr.bf16.mxu0 0
    %1436 = vmatpush2.bf16.msra.mxu0 0
    %1437 = vmatprep.subr.bf16.mxu0 0
    %1438 = vmatpush2.bf16.msra.mxu0 0
    %1439 = vmatprep.mubr.bf16.mxu0 0
    %1440 = vmatmul.mubr.bf16.gmra.mxu0 %v1089
    %v1441 = vpop.f32.mrf.mxu0
    %v1442 = vadd.f32 %v1330, %v1441
    %v1443 = vpop.f32.mrf.mxu0
    %v1444 = vpop.f32.mrf.mxu0
    %v1445 = vadd.f32 %v1333, %v1444
    %v1446 = vpop.f32.mrf.mxu0
    %1447 = vmatprep.mubr.bf16.mxu0 0
    %1448 = vmatmul.mubr.bf16.gmra.mxu0 %v1090
    %v1449 = vpop.f32.mrf.mxu0
    %v1450 = vadd.f32 %v1338, %v1449
    %v1451 = vpop.f32.mrf.mxu0
    %v1452 = vpop.f32.mrf.mxu0
    %v1453 = vadd.f32 %v1341, %v1452
    %v1454 = vpop.f32.mrf.mxu0
    %1455 = vmatprep.mubr.bf16.mxu0 0
    %1456 = vmatmul.mubr.bf16.gmra.mxu0 %v1091
    %v1457 = vpop.f32.mrf.mxu0
    %v1458 = vadd.f32 %v1346, %v1457
    %v1459 = vpop.f32.mrf.mxu0
    %v1460 = vpop.f32.mrf.mxu0
    %v1461 = vadd.f32 %v1349, %v1460
    %v1462 = vpop.f32.mrf.mxu0
    %1463 = vmatprep.mubr.bf16.mxu0 0
    %1464 = vmatmul.mubr.bf16.gmra.mxu0 %v1092
    %v1465 = vpop.f32.mrf.mxu0
    %v1466 = vadd.f32 %v1354, %v1465
    %v1467 = vpop.f32.mrf.mxu0
    %v1468 = vpop.f32.mrf.mxu0
    %v1469 = vpop.f32.mrf.mxu0
    %1470 = vdwg.mxu0
    %s1471 = scalar_lea.vmem %s2, 112
    %v1472 = vld [vmem:[%s1471] sm:$0xff]
    %v1473 = vld [vmem:[%s1471 + $0x8] sm:$0xff]
    %v1474 = vld [vmem:[%s1471 + $0x10] sm:$0xff]
    %v1475 = vld [vmem:[%s1471 + $0x18] sm:$0xff]
    %v1476 = vld [vmem:[%s1471 + $0x20] sm:$0xff]
    %v1477 = vld [vmem:[%s1471 + $0x28] sm:$0xff]
    %v1478 = vld [vmem:[%s1471 + $0x30] sm:$0x11]
    %v1486 = vunpack.c.l.b16 %v1472
    %v1487 = vunpack.c.h.b16 %v1472
    %v1488 = vunpack.c.l.b16 %v1473
    %v1489 = vunpack.c.h.b16 %v1473
    %v1490 = vunpack.c.l.b16 %v1474
    %v1491 = vunpack.c.h.b16 %v1474
    %v1492 = vunpack.c.l.b16 %v1475
    %v1493 = vunpack.c.h.b16 %v1475
    %v1494 = vunpack.c.l.b16 %v1476
    %v1495 = vunpack.c.h.b16 %v1476
    %v1496 = vunpack.c.l.b16 %v1477
    %v1497 = vunpack.c.h.b16 %v1477
    %v1498 = vunpack.c.l.b16 %v1478
    %v1499 = vunpack.c.h.b16 %v1478
    %v1500 = vpack.c.b16 %v1488, %v1486
    %v1501 = vpack.c.b16 %v1489, %v1487
    %v1502 = vpack.c.b16 %v1492, %v1490
    %v1503 = vpack.c.b16 %v1493, %v1491
    %v1504 = vpack.c.b16 %v1496, %v1494
    %v1505 = vpack.c.b16 %v1497, %v1495
    %v1506 = vpack.c.b16 %v1498, %v1498
    %v1507 = vpack.c.b16 %v1499, %v1499
    %v1513 = vsel %vm1008, %v1501, 0
    %v1516 = vsel %vm1008, %v1503, 0
    %v1519 = vsel %vm1008, %v1505, 0
    %v1522 = vsel %vm1008, %v1507, 0
    %1524 = vmatprep.subr.bf16.mxu0 0
    %1525 = vmatpush1.bf16.msra.mxu0 %v874
    %1526 = vmatprep.subr.bf16.mxu0 0
    %1527 = vmatpush1.bf16.msra.mxu0 %v873
    %1528 = vmatprep.subr.bf16.mxu0 0
    %1529 = vmatpush1.bf16.msra.mxu0 %v872
    %1530 = vmatprep.subr.bf16.mxu0 0
    %1531 = vmatpush1.bf16.msra.mxu0 %v871
    %1532 = vmatprep.subr.bf16.mxu0 0
    %1533 = vmatpush1.bf16.msra.mxu0 %v870
    %1534 = vmatprep.subr.bf16.mxu0 0
    %1535 = vmatpush1.bf16.msra.mxu0 %v869
    %1536 = vmatprep.subr.bf16.mxu0 0
    %1537 = vmatpush1.bf16.msra.mxu0 %v868
    %1538 = vmatprep.subr.bf16.mxu0 0
    %1539 = vmatpush1.bf16.msra.mxu0 %v867
    %1540 = vmatprep.subr.bf16.mxu0 0
    %1541 = vmatpush2.bf16.msra.mxu0 0
    %1542 = vmatprep.subr.bf16.mxu0 0
    %1543 = vmatpush2.bf16.msra.mxu0 0
    %1544 = vmatprep.subr.bf16.mxu0 0
    %1545 = vmatpush2.bf16.msra.mxu0 0
    %1546 = vmatprep.subr.bf16.mxu0 0
    %1547 = vmatpush2.bf16.msra.mxu0 %v1023
    %1548 = vmatprep.subr.bf16.mxu0 0
    %1549 = vmatpush2.bf16.msra.mxu0 %v878
    %1550 = vmatprep.subr.bf16.mxu0 0
    %1551 = vmatpush2.bf16.msra.mxu0 %v877
    %1552 = vmatprep.subr.bf16.mxu0 0
    %1553 = vmatpush2.bf16.msra.mxu0 %v876
    %1554 = vmatprep.subr.bf16.mxu0 0
    %1555 = vmatpush2.bf16.msra.mxu0 %v875
    %1556 = vmatprep.mubr.bf16.mxu0 %v1513
    %1557 = vmatmul.mubr.bf16.gmra.mxu0 %v1500
    %v1558 = vpop.f32.mrf.mxu0
    %v1559 = vadd.f32 0.0, %v1558
    %v1560 = vpop.f32.mrf.mxu0
    %v1561 = vpop.f32.mrf.mxu0
    %v1562 = vadd.f32 0.0, %v1561
    %v1563 = vpop.f32.mrf.mxu0
    %1564 = vmatprep.mubr.bf16.mxu0 %v1516
    %1565 = vmatmul.mubr.bf16.gmra.mxu0 %v1502
    %v1566 = vpop.f32.mrf.mxu0
    %v1567 = vadd.f32 0.0, %v1566
    %v1568 = vpop.f32.mrf.mxu0
    %v1569 = vpop.f32.mrf.mxu0
    %v1570 = vadd.f32 0.0, %v1569
    %v1571 = vpop.f32.mrf.mxu0
    %1572 = vmatprep.mubr.bf16.mxu0 %v1519
    %1573 = vmatmul.mubr.bf16.gmra.mxu0 %v1504
    %v1574 = vpop.f32.mrf.mxu0
    %v1575 = vadd.f32 0.0, %v1574
    %v1576 = vpop.f32.mrf.mxu0
    %v1577 = vpop.f32.mrf.mxu0
    %v1578 = vadd.f32 0.0, %v1577
    %v1579 = vpop.f32.mrf.mxu0
    %1580 = vmatprep.mubr.bf16.mxu0 %v1522
    %1581 = vmatmul.mubr.bf16.gmra.mxu0 %v1506
    %v1582 = vpop.f32.mrf.mxu0
    %v1583 = vadd.f32 0.0, %v1582
    %v1584 = vpop.f32.mrf.mxu0
    %v1585 = vpop.f32.mrf.mxu0
    %v1586 = vpop.f32.mrf.mxu0
    %1587 = vdwg.mxu0
    %v1588 = vpack.c.bf16 %v1562, %v1559
    %v1589 = vpack.c.bf16 %v1570, %v1567
    %v1590 = vpack.c.bf16 %v1578, %v1575
    %v1591 = vpack.c.bf16 %v1583, %v1583
    %s1592 = scalar_lea.vmem %s3, 128
    %v1593 = vld [vmem:[%s1592] sm:$0xf]
    %v1594 = vld [vmem:[%s1592 + $0x4] sm:$0xf]
    %v1595 = vld [vmem:[%s1592 + $0x8] sm:$0xf]
    %v1596 = vld [vmem:[%s1592 + $0xc] sm:$0xf]
    %v1597 = vld [vmem:[%s1592 + $0x10] sm:$0xf]
    %v1598 = vld [vmem:[%s1592 + $0x14] sm:$0xf]
    %v1599 = vld [vmem:[%s1592 + $0x18] sm:$0xf]
    %v1600 = vld [vmem:[%s1592 + $0x1c] sm:$0xf]
    %v1601 = vld [vmem:[%s1592 + $0x20] sm:$0xf]
    %v1602 = vld [vmem:[%s1592 + $0x24] sm:$0xf]
    %v1603 = vld [vmem:[%s1592 + $0x28] sm:$0xf]
    %v1604 = vld [vmem:[%s1592 + $0x2c] sm:$0xf]
    %v1605 = vld [vmem:[%s1592 + $0x30] sm:$0xf]
    %v1606 = vld [vmem:[%s1592 + $0x34] sm:$0xf]
    %v1607 = vld [vmem:[%s1592 + $0x38] sm:$0xf]
    %v1608 = vld [vmem:[%s1592 + $0x3c] sm:$0xf]
    %v1625 = vunpack.c.l.b16 %v1593
    %v1626 = vunpack.c.l.b16 %v1594
    %v1627 = vunpack.c.l.b16 %v1595
    %v1628 = vunpack.c.l.b16 %v1596
    %v1629 = vunpack.c.l.b16 %v1597
    %v1630 = vunpack.c.l.b16 %v1598
    %v1631 = vunpack.c.l.b16 %v1599
    %v1632 = vunpack.c.l.b16 %v1600
    %v1633 = vunpack.c.l.b16 %v1601
    %v1634 = vunpack.c.l.b16 %v1602
    %v1635 = vunpack.c.l.b16 %v1603
    %v1636 = vunpack.c.l.b16 %v1604
    %v1637 = vunpack.c.l.b16 %v1605
    %v1638 = vunpack.c.l.b16 %v1606
    %v1639 = vunpack.c.l.b16 %v1607
    %v1640 = vunpack.c.l.b16 %v1608
    %v1641 = vpack.c.b16 %v1626, %v1625
    %v1642 = vpack.c.b16 %v1628, %v1627
    %v1643 = vpack.c.b16 %v1630, %v1629
    %v1644 = vpack.c.b16 %v1632, %v1631
    %v1645 = vpack.c.b16 %v1634, %v1633
    %v1646 = vpack.c.b16 %v1636, %v1635
    %v1647 = vpack.c.b16 %v1638, %v1637
    %v1648 = vpack.c.b16 %v1640, %v1639
    %1657 = vmatprep.subr.bf16.mxu0 0
    %1658 = vmatpush1.bf16.msra.mxu0 %v1648
    %1659 = vmatprep.subr.bf16.mxu0 0
    %1660 = vmatpush1.bf16.msra.mxu0 %v1647
    %1661 = vmatprep.subr.bf16.mxu0 0
    %1662 = vmatpush1.bf16.msra.mxu0 %v1646
    %1663 = vmatprep.subr.bf16.mxu0 0
    %1664 = vmatpush1.bf16.msra.mxu0 %v1645
    %1665 = vmatprep.subr.bf16.mxu0 0
    %1666 = vmatpush1.bf16.msra.mxu0 %v1644
    %1667 = vmatprep.subr.bf16.mxu0 0
    %1668 = vmatpush1.bf16.msra.mxu0 %v1643
    %1669 = vmatprep.subr.bf16.mxu0 0
    %1670 = vmatpush1.bf16.msra.mxu0 %v1642
    %1671 = vmatprep.subr.bf16.mxu0 0
    %1672 = vmatpush1.bf16.msra.mxu0 %v1641
    %1673 = vmatprep.subr.bf16.mxu0 0
    %1674 = vmatpush2.bf16.msra.mxu0 0
    %1675 = vmatprep.subr.bf16.mxu0 0
    %1676 = vmatpush2.bf16.msra.mxu0 0
    %1677 = vmatprep.subr.bf16.mxu0 0
    %1678 = vmatpush2.bf16.msra.mxu0 0
    %1679 = vmatprep.subr.bf16.mxu0 0
    %1680 = vmatpush2.bf16.msra.mxu0 0
    %1681 = vmatprep.subr.bf16.mxu0 0
    %1682 = vmatpush2.bf16.msra.mxu0 0
    %1683 = vmatprep.subr.bf16.mxu0 0
    %1684 = vmatpush2.bf16.msra.mxu0 0
    %1685 = vmatprep.subr.bf16.mxu0 0
    %1686 = vmatpush2.bf16.msra.mxu0 0
    %1687 = vmatprep.subr.bf16.mxu0 0
    %1688 = vmatpush2.bf16.msra.mxu0 0
    %1689 = vmatprep.mubr.bf16.mxu0 0
    %1690 = vmatmul.mubr.bf16.gmra.mxu0 %v1588
    %v1691 = vpop.f32.mrf.mxu0
    %v1692 = vadd.f32 0.0, %v1691
    %v1693 = vpop.f32.mrf.mxu0
    %v1694 = vpop.f32.mrf.mxu0
    %v1695 = vadd.f32 0.0, %v1694
    %v1696 = vpop.f32.mrf.mxu0
    %1697 = vmatprep.mubr.bf16.mxu0 0
    %1698 = vmatmul.mubr.bf16.gmra.mxu0 %v1589
    %v1699 = vpop.f32.mrf.mxu0
    %v1700 = vadd.f32 0.0, %v1699
    %v1701 = vpop.f32.mrf.mxu0
    %v1702 = vpop.f32.mrf.mxu0
    %v1703 = vadd.f32 0.0, %v1702
    %v1704 = vpop.f32.mrf.mxu0
    %1705 = vmatprep.mubr.bf16.mxu0 0
    %1706 = vmatmul.mubr.bf16.gmra.mxu0 %v1590
    %v1707 = vpop.f32.mrf.mxu0
    %v1708 = vadd.f32 0.0, %v1707
    %v1709 = vpop.f32.mrf.mxu0
    %v1710 = vpop.f32.mrf.mxu0
    %v1711 = vadd.f32 0.0, %v1710
    %v1712 = vpop.f32.mrf.mxu0
    %1713 = vmatprep.mubr.bf16.mxu0 0
    %1714 = vmatmul.mubr.bf16.gmra.mxu0 %v1591
    %v1715 = vpop.f32.mrf.mxu0
    %v1716 = vadd.f32 0.0, %v1715
    %v1717 = vpop.f32.mrf.mxu0
    %v1718 = vpop.f32.mrf.mxu0
    %v1719 = vpop.f32.mrf.mxu0
    %1720 = vdwg.mxu0
    %v1721 = vadd.f32 %v1442, %v1692
    %v1722 = vadd.f32 %v1445, %v1695
    %v1723 = vadd.f32 %v1450, %v1700
    %v1724 = vadd.f32 %v1453, %v1703
    %v1725 = vadd.f32 %v1458, %v1708
    %v1726 = vadd.f32 %v1461, %v1711
    %v1727 = vadd.f32 %v1466, %v1716
    %s1728 = scalar_lea.vmem %s2, 168
    %v1729 = vld [vmem:[%s1728] sm:$0xff]
    %v1730 = vld [vmem:[%s1728 + $0x8] sm:$0xff]
    %v1731 = vld [vmem:[%s1728 + $0x10] sm:$0xff]
    %v1732 = vld [vmem:[%s1728 + $0x18] sm:$0xff]
    %v1733 = vld [vmem:[%s1728 + $0x20] sm:$0xff]
    %v1734 = vld [vmem:[%s1728 + $0x28] sm:$0xff]
    %v1735 = vld [vmem:[%s1728 + $0x30] sm:$0x11]
    %v1743 = vunpack.c.l.b16 %v1729
    %v1744 = vunpack.c.h.b16 %v1729
    %v1745 = vunpack.c.l.b16 %v1730
    %v1746 = vunpack.c.h.b16 %v1730
    %v1747 = vunpack.c.l.b16 %v1731
    %v1748 = vunpack.c.h.b16 %v1731
    %v1749 = vunpack.c.l.b16 %v1732
    %v1750 = vunpack.c.h.b16 %v1732
    %v1751 = vunpack.c.l.b16 %v1733
    %v1752 = vunpack.c.h.b16 %v1733
    %v1753 = vunpack.c.l.b16 %v1734
    %v1754 = vunpack.c.h.b16 %v1734
    %v1755 = vunpack.c.l.b16 %v1735
    %v1756 = vunpack.c.h.b16 %v1735
    %v1757 = vpack.c.b16 %v1745, %v1743
    %v1758 = vpack.c.b16 %v1746, %v1744
    %v1759 = vpack.c.b16 %v1749, %v1747
    %v1760 = vpack.c.b16 %v1750, %v1748
    %v1761 = vpack.c.b16 %v1753, %v1751
    %v1762 = vpack.c.b16 %v1754, %v1752
    %v1763 = vpack.c.b16 %v1755, %v1755
    %v1764 = vpack.c.b16 %v1756, %v1756
    %v1770 = vsel %vm1008, %v1758, 0
    %v1773 = vsel %vm1008, %v1760, 0
    %v1776 = vsel %vm1008, %v1762, 0
    %v1779 = vsel %vm1008, %v1764, 0
    %1781 = vmatprep.subr.bf16.mxu0 0
    %1782 = vmatpush1.bf16.msra.mxu0 %v874
    %1783 = vmatprep.subr.bf16.mxu0 0
    %1784 = vmatpush1.bf16.msra.mxu0 %v873
    %1785 = vmatprep.subr.bf16.mxu0 0
    %1786 = vmatpush1.bf16.msra.mxu0 %v872
    %1787 = vmatprep.subr.bf16.mxu0 0
    %1788 = vmatpush1.bf16.msra.mxu0 %v871
    %1789 = vmatprep.subr.bf16.mxu0 0
    %1790 = vmatpush1.bf16.msra.mxu0 %v870
    %1791 = vmatprep.subr.bf16.mxu0 0
    %1792 = vmatpush1.bf16.msra.mxu0 %v869
    %1793 = vmatprep.subr.bf16.mxu0 0
    %1794 = vmatpush1.bf16.msra.mxu0 %v868
    %1795 = vmatprep.subr.bf16.mxu0 0
    %1796 = vmatpush1.bf16.msra.mxu0 %v867
    %1797 = vmatprep.subr.bf16.mxu0 0
    %1798 = vmatpush2.bf16.msra.mxu0 0
    %1799 = vmatprep.subr.bf16.mxu0 0
    %1800 = vmatpush2.bf16.msra.mxu0 0
    %1801 = vmatprep.subr.bf16.mxu0 0
    %1802 = vmatpush2.bf16.msra.mxu0 0
    %1803 = vmatprep.subr.bf16.mxu0 0
    %1804 = vmatpush2.bf16.msra.mxu0 %v1023
    %1805 = vmatprep.subr.bf16.mxu0 0
    %1806 = vmatpush2.bf16.msra.mxu0 %v878
    %1807 = vmatprep.subr.bf16.mxu0 0
    %1808 = vmatpush2.bf16.msra.mxu0 %v877
    %1809 = vmatprep.subr.bf16.mxu0 0
    %1810 = vmatpush2.bf16.msra.mxu0 %v876
    %1811 = vmatprep.subr.bf16.mxu0 0
    %1812 = vmatpush2.bf16.msra.mxu0 %v875
    %1813 = vmatprep.mubr.bf16.mxu0 %v1770
    %1814 = vmatmul.mubr.bf16.gmra.mxu0 %v1757
    %v1815 = vpop.f32.mrf.mxu0
    %v1816 = vadd.f32 0.0, %v1815
    %v1817 = vpop.f32.mrf.mxu0
    %v1818 = vpop.f32.mrf.mxu0
    %v1819 = vadd.f32 0.0, %v1818
    %v1820 = vpop.f32.mrf.mxu0
    %1821 = vmatprep.mubr.bf16.mxu0 %v1773
    %1822 = vmatmul.mubr.bf16.gmra.mxu0 %v1759
    %v1823 = vpop.f32.mrf.mxu0
    %v1824 = vadd.f32 0.0, %v1823
    %v1825 = vpop.f32.mrf.mxu0
    %v1826 = vpop.f32.mrf.mxu0
    %v1827 = vadd.f32 0.0, %v1826
    %v1828 = vpop.f32.mrf.mxu0
    %1829 = vmatprep.mubr.bf16.mxu0 %v1776
    %1830 = vmatmul.mubr.bf16.gmra.mxu0 %v1761
    %v1831 = vpop.f32.mrf.mxu0
    %v1832 = vadd.f32 0.0, %v1831
    %v1833 = vpop.f32.mrf.mxu0
    %v1834 = vpop.f32.mrf.mxu0
    %v1835 = vadd.f32 0.0, %v1834
    %v1836 = vpop.f32.mrf.mxu0
    %1837 = vmatprep.mubr.bf16.mxu0 %v1779
    %1838 = vmatmul.mubr.bf16.gmra.mxu0 %v1763
    %v1839 = vpop.f32.mrf.mxu0
    %v1840 = vadd.f32 0.0, %v1839
    %v1841 = vpop.f32.mrf.mxu0
    %v1842 = vpop.f32.mrf.mxu0
    %v1843 = vpop.f32.mrf.mxu0
    %1844 = vdwg.mxu0
    %v1845 = vpack.c.bf16 %v1819, %v1816
    %v1846 = vpack.c.bf16 %v1827, %v1824
    %v1847 = vpack.c.bf16 %v1835, %v1832
    %v1848 = vpack.c.bf16 %v1840, %v1840
    %s1849 = scalar_lea.vmem %s3, 192
    %v1850 = vld [vmem:[%s1849] sm:$0xf]
    %v1851 = vld [vmem:[%s1849 + $0x4] sm:$0xf]
    %v1852 = vld [vmem:[%s1849 + $0x8] sm:$0xf]
    %v1853 = vld [vmem:[%s1849 + $0xc] sm:$0xf]
    %v1854 = vld [vmem:[%s1849 + $0x10] sm:$0xf]
    %v1855 = vld [vmem:[%s1849 + $0x14] sm:$0xf]
    %v1856 = vld [vmem:[%s1849 + $0x18] sm:$0xf]
    %v1857 = vld [vmem:[%s1849 + $0x1c] sm:$0xf]
    %v1858 = vld [vmem:[%s1849 + $0x20] sm:$0xf]
    %v1859 = vld [vmem:[%s1849 + $0x24] sm:$0xf]
    %v1860 = vld [vmem:[%s1849 + $0x28] sm:$0xf]
    %v1861 = vld [vmem:[%s1849 + $0x2c] sm:$0xf]
    %v1862 = vld [vmem:[%s1849 + $0x30] sm:$0xf]
    %v1863 = vld [vmem:[%s1849 + $0x34] sm:$0xf]
    %v1864 = vld [vmem:[%s1849 + $0x38] sm:$0xf]
    %v1865 = vld [vmem:[%s1849 + $0x3c] sm:$0xf]
    %v1882 = vunpack.c.l.b16 %v1850
    %v1883 = vunpack.c.l.b16 %v1851
    %v1884 = vunpack.c.l.b16 %v1852
    %v1885 = vunpack.c.l.b16 %v1853
    %v1886 = vunpack.c.l.b16 %v1854
    %v1887 = vunpack.c.l.b16 %v1855
    %v1888 = vunpack.c.l.b16 %v1856
    %v1889 = vunpack.c.l.b16 %v1857
    %v1890 = vunpack.c.l.b16 %v1858
    %v1891 = vunpack.c.l.b16 %v1859
    %v1892 = vunpack.c.l.b16 %v1860
    %v1893 = vunpack.c.l.b16 %v1861
    %v1894 = vunpack.c.l.b16 %v1862
    %v1895 = vunpack.c.l.b16 %v1863
    %v1896 = vunpack.c.l.b16 %v1864
    %v1897 = vunpack.c.l.b16 %v1865
    %v1898 = vpack.c.b16 %v1883, %v1882
    %v1899 = vpack.c.b16 %v1885, %v1884
    %v1900 = vpack.c.b16 %v1887, %v1886
    %v1901 = vpack.c.b16 %v1889, %v1888
    %v1902 = vpack.c.b16 %v1891, %v1890
    %v1903 = vpack.c.b16 %v1893, %v1892
    %v1904 = vpack.c.b16 %v1895, %v1894
    %v1905 = vpack.c.b16 %v1897, %v1896
    %1914 = vmatprep.subr.bf16.mxu0 0
    %1915 = vmatpush1.bf16.msra.mxu0 %v1905
    %1916 = vmatprep.subr.bf16.mxu0 0
    %1917 = vmatpush1.bf16.msra.mxu0 %v1904
    %1918 = vmatprep.subr.bf16.mxu0 0
    %1919 = vmatpush1.bf16.msra.mxu0 %v1903
    %1920 = vmatprep.subr.bf16.mxu0 0
    %1921 = vmatpush1.bf16.msra.mxu0 %v1902
    %1922 = vmatprep.subr.bf16.mxu0 0
    %1923 = vmatpush1.bf16.msra.mxu0 %v1901
    %1924 = vmatprep.subr.bf16.mxu0 0
    %1925 = vmatpush1.bf16.msra.mxu0 %v1900
    %1926 = vmatprep.subr.bf16.mxu0 0
    %1927 = vmatpush1.bf16.msra.mxu0 %v1899
    %1928 = vmatprep.subr.bf16.mxu0 0
    %1929 = vmatpush1.bf16.msra.mxu0 %v1898
    %1930 = vmatprep.subr.bf16.mxu0 0
    %1931 = vmatpush2.bf16.msra.mxu0 0
    %1932 = vmatprep.subr.bf16.mxu0 0
    %1933 = vmatpush2.bf16.msra.mxu0 0
    %1934 = vmatprep.subr.bf16.mxu0 0
    %1935 = vmatpush2.bf16.msra.mxu0 0
    %1936 = vmatprep.subr.bf16.mxu0 0
    %1937 = vmatpush2.bf16.msra.mxu0 0
    %1938 = vmatprep.subr.bf16.mxu0 0
    %1939 = vmatpush2.bf16.msra.mxu0 0
    %1940 = vmatprep.subr.bf16.mxu0 0
    %1941 = vmatpush2.bf16.msra.mxu0 0
    %1942 = vmatprep.subr.bf16.mxu0 0
    %1943 = vmatpush2.bf16.msra.mxu0 0
    %1944 = vmatprep.subr.bf16.mxu0 0
    %1945 = vmatpush2.bf16.msra.mxu0 0
    %1946 = vmatprep.mubr.bf16.mxu0 0
    %1947 = vmatmul.mubr.bf16.gmra.mxu0 %v1845
    %v1948 = vpop.f32.mrf.mxu0
    %v1949 = vadd.f32 0.0, %v1948
    %v1950 = vpop.f32.mrf.mxu0
    %v1951 = vpop.f32.mrf.mxu0
    %v1952 = vadd.f32 0.0, %v1951
    %v1953 = vpop.f32.mrf.mxu0
    %1954 = vmatprep.mubr.bf16.mxu0 0
    %1955 = vmatmul.mubr.bf16.gmra.mxu0 %v1846
    %v1956 = vpop.f32.mrf.mxu0
    %v1957 = vadd.f32 0.0, %v1956
    %v1958 = vpop.f32.mrf.mxu0
    %v1959 = vpop.f32.mrf.mxu0
    %v1960 = vadd.f32 0.0, %v1959
    %v1961 = vpop.f32.mrf.mxu0
    %1962 = vmatprep.mubr.bf16.mxu0 0
    %1963 = vmatmul.mubr.bf16.gmra.mxu0 %v1847
    %v1964 = vpop.f32.mrf.mxu0
    %v1965 = vadd.f32 0.0, %v1964
    %v1966 = vpop.f32.mrf.mxu0
    %v1967 = vpop.f32.mrf.mxu0
    %v1968 = vadd.f32 0.0, %v1967
    %v1969 = vpop.f32.mrf.mxu0
    %1970 = vmatprep.mubr.bf16.mxu0 0
    %1971 = vmatmul.mubr.bf16.gmra.mxu0 %v1848
    %v1972 = vpop.f32.mrf.mxu0
    %v1973 = vadd.f32 0.0, %v1972
    %v1974 = vpop.f32.mrf.mxu0
    %v1975 = vpop.f32.mrf.mxu0
    %v1976 = vpop.f32.mrf.mxu0
    %1977 = vdwg.mxu0
    %v1978 = vadd.f32 %v1721, %v1949
    %v1979 = vadd.f32 %v1722, %v1952
    %v1980 = vadd.f32 %v1723, %v1957
    %v1981 = vadd.f32 %v1724, %v1960
    %v1982 = vadd.f32 %v1725, %v1965
    %v1983 = vadd.f32 %v1726, %v1968
    %v1984 = vadd.f32 %v1727, %v1973
    %s1985 = scalar_lea.vmem %s2, 224
    %v1986 = vld [vmem:[%s1985] sm:$0xff]
    %v1987 = vld [vmem:[%s1985 + $0x8] sm:$0xff]
    %v1988 = vld [vmem:[%s1985 + $0x10] sm:$0xff]
    %v1989 = vld [vmem:[%s1985 + $0x18] sm:$0xff]
    %v1990 = vld [vmem:[%s1985 + $0x20] sm:$0xff]
    %v1991 = vld [vmem:[%s1985 + $0x28] sm:$0xff]
    %v1992 = vld [vmem:[%s1985 + $0x30] sm:$0x11]
    %v2000 = vunpack.c.l.b16 %v1986
    %v2001 = vunpack.c.h.b16 %v1986
    %v2002 = vunpack.c.l.b16 %v1987
    %v2003 = vunpack.c.h.b16 %v1987
    %v2004 = vunpack.c.l.b16 %v1988
    %v2005 = vunpack.c.h.b16 %v1988
    %v2006 = vunpack.c.l.b16 %v1989
    %v2007 = vunpack.c.h.b16 %v1989
    %v2008 = vunpack.c.l.b16 %v1990
    %v2009 = vunpack.c.h.b16 %v1990
    %v2010 = vunpack.c.l.b16 %v1991
    %v2011 = vunpack.c.h.b16 %v1991
    %v2012 = vunpack.c.l.b16 %v1992
    %v2013 = vunpack.c.h.b16 %v1992
    %v2014 = vpack.c.b16 %v2002, %v2000
    %v2015 = vpack.c.b16 %v2003, %v2001
    %v2016 = vpack.c.b16 %v2006, %v2004
    %v2017 = vpack.c.b16 %v2007, %v2005
    %v2018 = vpack.c.b16 %v2010, %v2008
    %v2019 = vpack.c.b16 %v2011, %v2009
    %v2020 = vpack.c.b16 %v2012, %v2012
    %v2021 = vpack.c.b16 %v2013, %v2013
    %v2027 = vsel %vm1008, %v2015, 0
    %v2030 = vsel %vm1008, %v2017, 0
    %v2033 = vsel %vm1008, %v2019, 0
    %v2036 = vsel %vm1008, %v2021, 0
    %2038 = vmatprep.subr.bf16.mxu0 0
    %2039 = vmatpush1.bf16.msra.mxu0 %v874
    %2040 = vmatprep.subr.bf16.mxu0 0
    %2041 = vmatpush1.bf16.msra.mxu0 %v873
    %2042 = vmatprep.subr.bf16.mxu0 0
    %2043 = vmatpush1.bf16.msra.mxu0 %v872
    %2044 = vmatprep.subr.bf16.mxu0 0
    %2045 = vmatpush1.bf16.msra.mxu0 %v871
    %2046 = vmatprep.subr.bf16.mxu0 0
    %2047 = vmatpush1.bf16.msra.mxu0 %v870
    %2048 = vmatprep.subr.bf16.mxu0 0
    %2049 = vmatpush1.bf16.msra.mxu0 %v869
    %2050 = vmatprep.subr.bf16.mxu0 0
    %2051 = vmatpush1.bf16.msra.mxu0 %v868
    %2052 = vmatprep.subr.bf16.mxu0 0
    %2053 = vmatpush1.bf16.msra.mxu0 %v867
    %2054 = vmatprep.subr.bf16.mxu0 0
    %2055 = vmatpush2.bf16.msra.mxu0 0
    %2056 = vmatprep.subr.bf16.mxu0 0
    %2057 = vmatpush2.bf16.msra.mxu0 0
    %2058 = vmatprep.subr.bf16.mxu0 0
    %2059 = vmatpush2.bf16.msra.mxu0 0
    %2060 = vmatprep.subr.bf16.mxu0 0
    %2061 = vmatpush2.bf16.msra.mxu0 %v1023
    %2062 = vmatprep.subr.bf16.mxu0 0
    %2063 = vmatpush2.bf16.msra.mxu0 %v878
    %2064 = vmatprep.subr.bf16.mxu0 0
    %2065 = vmatpush2.bf16.msra.mxu0 %v877
    %2066 = vmatprep.subr.bf16.mxu0 0
    %2067 = vmatpush2.bf16.msra.mxu0 %v876
    %2068 = vmatprep.subr.bf16.mxu0 0
    %2069 = vmatpush2.bf16.msra.mxu0 %v875
    %2070 = vmatprep.mubr.bf16.mxu0 %v2027
    %2071 = vmatmul.mubr.bf16.gmra.mxu0 %v2014
    %v2072 = vpop.f32.mrf.mxu0
    %v2073 = vadd.f32 0.0, %v2072
    %v2074 = vpop.f32.mrf.mxu0
    %v2075 = vpop.f32.mrf.mxu0
    %v2076 = vadd.f32 0.0, %v2075
    %v2077 = vpop.f32.mrf.mxu0
    %2078 = vmatprep.mubr.bf16.mxu0 %v2030
    %2079 = vmatmul.mubr.bf16.gmra.mxu0 %v2016
    %v2080 = vpop.f32.mrf.mxu0
    %v2081 = vadd.f32 0.0, %v2080
    %v2082 = vpop.f32.mrf.mxu0
    %v2083 = vpop.f32.mrf.mxu0
    %v2084 = vadd.f32 0.0, %v2083
    %v2085 = vpop.f32.mrf.mxu0
    %2086 = vmatprep.mubr.bf16.mxu0 %v2033
    %2087 = vmatmul.mubr.bf16.gmra.mxu0 %v2018
    %v2088 = vpop.f32.mrf.mxu0
    %v2089 = vadd.f32 0.0, %v2088
    %v2090 = vpop.f32.mrf.mxu0
    %v2091 = vpop.f32.mrf.mxu0
    %v2092 = vadd.f32 0.0, %v2091
    %v2093 = vpop.f32.mrf.mxu0
    %2094 = vmatprep.mubr.bf16.mxu0 %v2036
    %2095 = vmatmul.mubr.bf16.gmra.mxu0 %v2020
    %v2096 = vpop.f32.mrf.mxu0
    %v2097 = vadd.f32 0.0, %v2096
    %v2098 = vpop.f32.mrf.mxu0
    %v2099 = vpop.f32.mrf.mxu0
    %v2100 = vpop.f32.mrf.mxu0
    %2101 = vdwg.mxu0
    %v2102 = vpack.c.bf16 %v2076, %v2073
    %v2103 = vpack.c.bf16 %v2084, %v2081
    %v2104 = vpack.c.bf16 %v2092, %v2089
    %v2105 = vpack.c.bf16 %v2097, %v2097
    %s2106 = scalar_lea.vmem %s3, 256
    %v2107 = vld [vmem:[%s2106] sm:$0xf]
    %v2108 = vld [vmem:[%s2106 + $0x4] sm:$0xf]
    %v2109 = vld [vmem:[%s2106 + $0x8] sm:$0xf]
    %v2110 = vld [vmem:[%s2106 + $0xc] sm:$0xf]
    %v2111 = vld [vmem:[%s2106 + $0x10] sm:$0xf]
    %v2112 = vld [vmem:[%s2106 + $0x14] sm:$0xf]
    %v2113 = vld [vmem:[%s2106 + $0x18] sm:$0xf]
    %v2114 = vld [vmem:[%s2106 + $0x1c] sm:$0xf]
    %v2115 = vld [vmem:[%s2106 + $0x20] sm:$0xf]
    %v2116 = vld [vmem:[%s2106 + $0x24] sm:$0xf]
    %v2117 = vld [vmem:[%s2106 + $0x28] sm:$0xf]
    %v2118 = vld [vmem:[%s2106 + $0x2c] sm:$0xf]
    %v2119 = vld [vmem:[%s2106 + $0x30] sm:$0xf]
    %v2120 = vld [vmem:[%s2106 + $0x34] sm:$0xf]
    %v2121 = vld [vmem:[%s2106 + $0x38] sm:$0xf]
    %v2122 = vld [vmem:[%s2106 + $0x3c] sm:$0xf]
    %v2139 = vunpack.c.l.b16 %v2107
    %v2140 = vunpack.c.l.b16 %v2108
    %v2141 = vunpack.c.l.b16 %v2109
    %v2142 = vunpack.c.l.b16 %v2110
    %v2143 = vunpack.c.l.b16 %v2111
    %v2144 = vunpack.c.l.b16 %v2112
    %v2145 = vunpack.c.l.b16 %v2113
    %v2146 = vunpack.c.l.b16 %v2114
    %v2147 = vunpack.c.l.b16 %v2115
    %v2148 = vunpack.c.l.b16 %v2116
    %v2149 = vunpack.c.l.b16 %v2117
    %v2150 = vunpack.c.l.b16 %v2118
    %v2151 = vunpack.c.l.b16 %v2119
    %v2152 = vunpack.c.l.b16 %v2120
    %v2153 = vunpack.c.l.b16 %v2121
    %v2154 = vunpack.c.l.b16 %v2122
    %v2155 = vpack.c.b16 %v2140, %v2139
    %v2156 = vpack.c.b16 %v2142, %v2141
    %v2157 = vpack.c.b16 %v2144, %v2143
    %v2158 = vpack.c.b16 %v2146, %v2145
    %v2159 = vpack.c.b16 %v2148, %v2147
    %v2160 = vpack.c.b16 %v2150, %v2149
    %v2161 = vpack.c.b16 %v2152, %v2151
    %v2162 = vpack.c.b16 %v2154, %v2153
    %2171 = vmatprep.subr.bf16.mxu0 0
    %2172 = vmatpush1.bf16.msra.mxu0 %v2162
    %2173 = vmatprep.subr.bf16.mxu0 0
    %2174 = vmatpush1.bf16.msra.mxu0 %v2161
    %2175 = vmatprep.subr.bf16.mxu0 0
    %2176 = vmatpush1.bf16.msra.mxu0 %v2160
    %2177 = vmatprep.subr.bf16.mxu0 0
    %2178 = vmatpush1.bf16.msra.mxu0 %v2159
    %2179 = vmatprep.subr.bf16.mxu0 0
    %2180 = vmatpush1.bf16.msra.mxu0 %v2158
    %2181 = vmatprep.subr.bf16.mxu0 0
    %2182 = vmatpush1.bf16.msra.mxu0 %v2157
    %2183 = vmatprep.subr.bf16.mxu0 0
    %2184 = vmatpush1.bf16.msra.mxu0 %v2156
    %2185 = vmatprep.subr.bf16.mxu0 0
    %2186 = vmatpush1.bf16.msra.mxu0 %v2155
    %2187 = vmatprep.subr.bf16.mxu0 0
    %2188 = vmatpush2.bf16.msra.mxu0 0
    %2189 = vmatprep.subr.bf16.mxu0 0
    %2190 = vmatpush2.bf16.msra.mxu0 0
    %2191 = vmatprep.subr.bf16.mxu0 0
    %2192 = vmatpush2.bf16.msra.mxu0 0
    %2193 = vmatprep.subr.bf16.mxu0 0
    %2194 = vmatpush2.bf16.msra.mxu0 0
    %2195 = vmatprep.subr.bf16.mxu0 0
    %2196 = vmatpush2.bf16.msra.mxu0 0
    %2197 = vmatprep.subr.bf16.mxu0 0
    %2198 = vmatpush2.bf16.msra.mxu0 0
    %2199 = vmatprep.subr.bf16.mxu0 0
    %2200 = vmatpush2.bf16.msra.mxu0 0
    %2201 = vmatprep.subr.bf16.mxu0 0
    %2202 = vmatpush2.bf16.msra.mxu0 0
    %2203 = vmatprep.mubr.bf16.mxu0 0
    %2204 = vmatmul.mubr.bf16.gmra.mxu0 %v2102
    %v2205 = vpop.f32.mrf.mxu0
    %v2206 = vadd.f32 0.0, %v2205
    %v2207 = vpop.f32.mrf.mxu0
    %v2208 = vpop.f32.mrf.mxu0
    %v2209 = vadd.f32 0.0, %v2208
    %v2210 = vpop.f32.mrf.mxu0
    %2211 = vmatprep.mubr.bf16.mxu0 0
    %2212 = vmatmul.mubr.bf16.gmra.mxu0 %v2103
    %v2213 = vpop.f32.mrf.mxu0
    %v2214 = vadd.f32 0.0, %v2213
    %v2215 = vpop.f32.mrf.mxu0
    %v2216 = vpop.f32.mrf.mxu0
    %v2217 = vadd.f32 0.0, %v2216
    %v2218 = vpop.f32.mrf.mxu0
    %2219 = vmatprep.mubr.bf16.mxu0 0
    %2220 = vmatmul.mubr.bf16.gmra.mxu0 %v2104
    %v2221 = vpop.f32.mrf.mxu0
    %v2222 = vadd.f32 0.0, %v2221
    %v2223 = vpop.f32.mrf.mxu0
    %v2224 = vpop.f32.mrf.mxu0
    %v2225 = vadd.f32 0.0, %v2224
    %v2226 = vpop.f32.mrf.mxu0
    %2227 = vmatprep.mubr.bf16.mxu0 0
    %2228 = vmatmul.mubr.bf16.gmra.mxu0 %v2105
    %v2229 = vpop.f32.mrf.mxu0
    %v2230 = vadd.f32 0.0, %v2229
    %v2231 = vpop.f32.mrf.mxu0
    %v2232 = vpop.f32.mrf.mxu0
    %v2233 = vpop.f32.mrf.mxu0
    %2234 = vdwg.mxu0
    %v2235 = vadd.f32 %v1978, %v2206
    %v2236 = vadd.f32 %v1979, %v2209
    %v2237 = vadd.f32 %v1980, %v2214
    %v2238 = vadd.f32 %v1981, %v2217
    %v2239 = vadd.f32 %v1982, %v2222
    %v2240 = vadd.f32 %v1983, %v2225
    %v2241 = vadd.f32 %v1984, %v2230
    %s2242 = scalar_lea.vmem %s2, 280
    %v2243 = vld [vmem:[%s2242] sm:$0xff]
    %v2244 = vld [vmem:[%s2242 + $0x8] sm:$0xff]
    %v2245 = vld [vmem:[%s2242 + $0x10] sm:$0xff]
    %v2246 = vld [vmem:[%s2242 + $0x18] sm:$0xff]
    %v2247 = vld [vmem:[%s2242 + $0x20] sm:$0xff]
    %v2248 = vld [vmem:[%s2242 + $0x28] sm:$0xff]
    %v2249 = vld [vmem:[%s2242 + $0x30] sm:$0x11]
    %v2257 = vunpack.c.l.b16 %v2243
    %v2258 = vunpack.c.h.b16 %v2243
    %v2259 = vunpack.c.l.b16 %v2244
    %v2260 = vunpack.c.h.b16 %v2244
    %v2261 = vunpack.c.l.b16 %v2245
    %v2262 = vunpack.c.h.b16 %v2245
    %v2263 = vunpack.c.l.b16 %v2246
    %v2264 = vunpack.c.h.b16 %v2246
    %v2265 = vunpack.c.l.b16 %v2247
    %v2266 = vunpack.c.h.b16 %v2247
    %v2267 = vunpack.c.l.b16 %v2248
    %v2268 = vunpack.c.h.b16 %v2248
    %v2269 = vunpack.c.l.b16 %v2249
    %v2270 = vunpack.c.h.b16 %v2249
    %v2271 = vpack.c.b16 %v2259, %v2257
    %v2272 = vpack.c.b16 %v2260, %v2258
    %v2273 = vpack.c.b16 %v2263, %v2261
    %v2274 = vpack.c.b16 %v2264, %v2262
    %v2275 = vpack.c.b16 %v2267, %v2265
    %v2276 = vpack.c.b16 %v2268, %v2266
    %v2277 = vpack.c.b16 %v2269, %v2269
    %v2278 = vpack.c.b16 %v2270, %v2270
    %v2284 = vsel %vm1008, %v2272, 0
    %v2287 = vsel %vm1008, %v2274, 0
    %v2290 = vsel %vm1008, %v2276, 0
    %v2293 = vsel %vm1008, %v2278, 0
    %2295 = vmatprep.subr.bf16.mxu0 0
    %2296 = vmatpush1.bf16.msra.mxu0 %v874
    %2297 = vmatprep.subr.bf16.mxu0 0
    %2298 = vmatpush1.bf16.msra.mxu0 %v873
    %2299 = vmatprep.subr.bf16.mxu0 0
    %2300 = vmatpush1.bf16.msra.mxu0 %v872
    %2301 = vmatprep.subr.bf16.mxu0 0
    %2302 = vmatpush1.bf16.msra.mxu0 %v871
    %2303 = vmatprep.subr.bf16.mxu0 0
    %2304 = vmatpush1.bf16.msra.mxu0 %v870
    %2305 = vmatprep.subr.bf16.mxu0 0
    %2306 = vmatpush1.bf16.msra.mxu0 %v869
    %2307 = vmatprep.subr.bf16.mxu0 0
    %2308 = vmatpush1.bf16.msra.mxu0 %v868
    %2309 = vmatprep.subr.bf16.mxu0 0
    %2310 = vmatpush1.bf16.msra.mxu0 %v867
    %2311 = vmatprep.subr.bf16.mxu0 0
    %2312 = vmatpush2.bf16.msra.mxu0 0
    %2313 = vmatprep.subr.bf16.mxu0 0
    %2314 = vmatpush2.bf16.msra.mxu0 0
    %2315 = vmatprep.subr.bf16.mxu0 0
    %2316 = vmatpush2.bf16.msra.mxu0 0
    %2317 = vmatprep.subr.bf16.mxu0 0
    %2318 = vmatpush2.bf16.msra.mxu0 %v1023
    %2319 = vmatprep.subr.bf16.mxu0 0
    %2320 = vmatpush2.bf16.msra.mxu0 %v878
    %2321 = vmatprep.subr.bf16.mxu0 0
    %2322 = vmatpush2.bf16.msra.mxu0 %v877
    %2323 = vmatprep.subr.bf16.mxu0 0
    %2324 = vmatpush2.bf16.msra.mxu0 %v876
    %2325 = vmatprep.subr.bf16.mxu0 0
    %2326 = vmatpush2.bf16.msra.mxu0 %v875
    %2327 = vmatprep.mubr.bf16.mxu0 %v2284
    %2328 = vmatmul.mubr.bf16.gmra.mxu0 %v2271
    %v2329 = vpop.f32.mrf.mxu0
    %v2330 = vadd.f32 0.0, %v2329
    %v2331 = vpop.f32.mrf.mxu0
    %v2332 = vpop.f32.mrf.mxu0
    %v2333 = vadd.f32 0.0, %v2332
    %v2334 = vpop.f32.mrf.mxu0
    %2335 = vmatprep.mubr.bf16.mxu0 %v2287
    %2336 = vmatmul.mubr.bf16.gmra.mxu0 %v2273
    %v2337 = vpop.f32.mrf.mxu0
    %v2338 = vadd.f32 0.0, %v2337
    %v2339 = vpop.f32.mrf.mxu0
    %v2340 = vpop.f32.mrf.mxu0
    %v2341 = vadd.f32 0.0, %v2340
    %v2342 = vpop.f32.mrf.mxu0
    %2343 = vmatprep.mubr.bf16.mxu0 %v2290
    %2344 = vmatmul.mubr.bf16.gmra.mxu0 %v2275
    %v2345 = vpop.f32.mrf.mxu0
    %v2346 = vadd.f32 0.0, %v2345
    %v2347 = vpop.f32.mrf.mxu0
    %v2348 = vpop.f32.mrf.mxu0
    %v2349 = vadd.f32 0.0, %v2348
    %v2350 = vpop.f32.mrf.mxu0
    %2351 = vmatprep.mubr.bf16.mxu0 %v2293
    %2352 = vmatmul.mubr.bf16.gmra.mxu0 %v2277
    %v2353 = vpop.f32.mrf.mxu0
    %v2354 = vadd.f32 0.0, %v2353
    %v2355 = vpop.f32.mrf.mxu0
    %v2356 = vpop.f32.mrf.mxu0
    %v2357 = vpop.f32.mrf.mxu0
    %2358 = vdwg.mxu0
    %v2359 = vpack.c.bf16 %v2333, %v2330
    %v2360 = vpack.c.bf16 %v2341, %v2338
    %v2361 = vpack.c.bf16 %v2349, %v2346
    %v2362 = vpack.c.bf16 %v2354, %v2354
    %s2363 = scalar_lea.vmem %s3, 320
    %v2364 = vld [vmem:[%s2363] sm:$0xf]
    %v2365 = vld [vmem:[%s2363 + $0x4] sm:$0xf]
    %v2366 = vld [vmem:[%s2363 + $0x8] sm:$0xf]
    %v2367 = vld [vmem:[%s2363 + $0xc] sm:$0xf]
    %v2368 = vld [vmem:[%s2363 + $0x10] sm:$0xf]
    %v2369 = vld [vmem:[%s2363 + $0x14] sm:$0xf]
    %v2370 = vld [vmem:[%s2363 + $0x18] sm:$0xf]
    %v2371 = vld [vmem:[%s2363 + $0x1c] sm:$0xf]
    %v2372 = vld [vmem:[%s2363 + $0x20] sm:$0xf]
    %v2373 = vld [vmem:[%s2363 + $0x24] sm:$0xf]
    %v2374 = vld [vmem:[%s2363 + $0x28] sm:$0xf]
    %v2375 = vld [vmem:[%s2363 + $0x2c] sm:$0xf]
    %v2376 = vld [vmem:[%s2363 + $0x30] sm:$0xf]
    %v2377 = vld [vmem:[%s2363 + $0x34] sm:$0xf]
    %v2378 = vld [vmem:[%s2363 + $0x38] sm:$0xf]
    %v2379 = vld [vmem:[%s2363 + $0x3c] sm:$0xf]
    %v2396 = vunpack.c.l.b16 %v2364
    %v2397 = vunpack.c.l.b16 %v2365
    %v2398 = vunpack.c.l.b16 %v2366
    %v2399 = vunpack.c.l.b16 %v2367
    %v2400 = vunpack.c.l.b16 %v2368
    %v2401 = vunpack.c.l.b16 %v2369
    %v2402 = vunpack.c.l.b16 %v2370
    %v2403 = vunpack.c.l.b16 %v2371
    %v2404 = vunpack.c.l.b16 %v2372
    %v2405 = vunpack.c.l.b16 %v2373
    %v2406 = vunpack.c.l.b16 %v2374
    %v2407 = vunpack.c.l.b16 %v2375
    %v2408 = vunpack.c.l.b16 %v2376
    %v2409 = vunpack.c.l.b16 %v2377
    %v2410 = vunpack.c.l.b16 %v2378
    %v2411 = vunpack.c.l.b16 %v2379
    %v2412 = vpack.c.b16 %v2397, %v2396
    %v2413 = vpack.c.b16 %v2399, %v2398
    %v2414 = vpack.c.b16 %v2401, %v2400
    %v2415 = vpack.c.b16 %v2403, %v2402
    %v2416 = vpack.c.b16 %v2405, %v2404
    %v2417 = vpack.c.b16 %v2407, %v2406
    %v2418 = vpack.c.b16 %v2409, %v2408
    %v2419 = vpack.c.b16 %v2411, %v2410
    %2428 = vmatprep.subr.bf16.mxu0 0
    %2429 = vmatpush1.bf16.msra.mxu0 %v2419
    %2430 = vmatprep.subr.bf16.mxu0 0
    %2431 = vmatpush1.bf16.msra.mxu0 %v2418
    %2432 = vmatprep.subr.bf16.mxu0 0
    %2433 = vmatpush1.bf16.msra.mxu0 %v2417
    %2434 = vmatprep.subr.bf16.mxu0 0
    %2435 = vmatpush1.bf16.msra.mxu0 %v2416
    %2436 = vmatprep.subr.bf16.mxu0 0
    %2437 = vmatpush1.bf16.msra.mxu0 %v2415
    %2438 = vmatprep.subr.bf16.mxu0 0
    %2439 = vmatpush1.bf16.msra.mxu0 %v2414
    %2440 = vmatprep.subr.bf16.mxu0 0
    %2441 = vmatpush1.bf16.msra.mxu0 %v2413
    %2442 = vmatprep.subr.bf16.mxu0 0
    %2443 = vmatpush1.bf16.msra.mxu0 %v2412
    %2444 = vmatprep.subr.bf16.mxu0 0
    %2445 = vmatpush2.bf16.msra.mxu0 0
    %2446 = vmatprep.subr.bf16.mxu0 0
    %2447 = vmatpush2.bf16.msra.mxu0 0
    %2448 = vmatprep.subr.bf16.mxu0 0
    %2449 = vmatpush2.bf16.msra.mxu0 0
    %2450 = vmatprep.subr.bf16.mxu0 0
    %2451 = vmatpush2.bf16.msra.mxu0 0
    %2452 = vmatprep.subr.bf16.mxu0 0
    %2453 = vmatpush2.bf16.msra.mxu0 0
    %2454 = vmatprep.subr.bf16.mxu0 0
    %2455 = vmatpush2.bf16.msra.mxu0 0
    %2456 = vmatprep.subr.bf16.mxu0 0
    %2457 = vmatpush2.bf16.msra.mxu0 0
    %2458 = vmatprep.subr.bf16.mxu0 0
    %2459 = vmatpush2.bf16.msra.mxu0 0
    %2460 = vmatprep.mubr.bf16.mxu0 0
    %2461 = vmatmul.mubr.bf16.gmra.mxu0 %v2359
    %v2462 = vpop.f32.mrf.mxu0
    %v2463 = vadd.f32 0.0, %v2462
    %v2464 = vpop.f32.mrf.mxu0
    %v2465 = vpop.f32.mrf.mxu0
    %v2466 = vadd.f32 0.0, %v2465
    %v2467 = vpop.f32.mrf.mxu0
    %2468 = vmatprep.mubr.bf16.mxu0 0
    %2469 = vmatmul.mubr.bf16.gmra.mxu0 %v2360
    %v2470 = vpop.f32.mrf.mxu0
    %v2471 = vadd.f32 0.0, %v2470
    %v2472 = vpop.f32.mrf.mxu0
    %v2473 = vpop.f32.mrf.mxu0
    %v2474 = vadd.f32 0.0, %v2473
    %v2475 = vpop.f32.mrf.mxu0
    %2476 = vmatprep.mubr.bf16.mxu0 0
    %2477 = vmatmul.mubr.bf16.gmra.mxu0 %v2361
    %v2478 = vpop.f32.mrf.mxu0
    %v2479 = vadd.f32 0.0, %v2478
    %v2480 = vpop.f32.mrf.mxu0
    %v2481 = vpop.f32.mrf.mxu0
    %v2482 = vadd.f32 0.0, %v2481
    %v2483 = vpop.f32.mrf.mxu0
    %2484 = vmatprep.mubr.bf16.mxu0 0
    %2485 = vmatmul.mubr.bf16.gmra.mxu0 %v2362
    %v2486 = vpop.f32.mrf.mxu0
    %v2487 = vadd.f32 0.0, %v2486
    %v2488 = vpop.f32.mrf.mxu0
    %v2489 = vpop.f32.mrf.mxu0
    %v2490 = vpop.f32.mrf.mxu0
    %2491 = vdwg.mxu0
    %v2492 = vadd.f32 %v2235, %v2463
    %v2493 = vadd.f32 %v2236, %v2466
    %v2494 = vadd.f32 %v2237, %v2471
    %v2495 = vadd.f32 %v2238, %v2474
    %v2496 = vadd.f32 %v2239, %v2479
    %v2497 = vadd.f32 %v2240, %v2482
    %v2498 = vadd.f32 %v2241, %v2487
    %s2499 = scalar_lea.vmem %s2, 336
    %v2500 = vld [vmem:[%s2499] sm:$0xff]
    %v2501 = vld [vmem:[%s2499 + $0x8] sm:$0xff]
    %v2502 = vld [vmem:[%s2499 + $0x10] sm:$0xff]
    %v2503 = vld [vmem:[%s2499 + $0x18] sm:$0xff]
    %v2504 = vld [vmem:[%s2499 + $0x20] sm:$0xff]
    %v2505 = vld [vmem:[%s2499 + $0x28] sm:$0xff]
    %v2506 = vld [vmem:[%s2499 + $0x30] sm:$0x11]
    %v2514 = vunpack.c.l.b16 %v2500
    %v2515 = vunpack.c.h.b16 %v2500
    %v2516 = vunpack.c.l.b16 %v2501
    %v2517 = vunpack.c.h.b16 %v2501
    %v2518 = vunpack.c.l.b16 %v2502
    %v2519 = vunpack.c.h.b16 %v2502
    %v2520 = vunpack.c.l.b16 %v2503
    %v2521 = vunpack.c.h.b16 %v2503
    %v2522 = vunpack.c.l.b16 %v2504
    %v2523 = vunpack.c.h.b16 %v2504
    %v2524 = vunpack.c.l.b16 %v2505
    %v2525 = vunpack.c.h.b16 %v2505
    %v2526 = vunpack.c.l.b16 %v2506
    %v2527 = vunpack.c.h.b16 %v2506
    %v2528 = vpack.c.b16 %v2516, %v2514
    %v2529 = vpack.c.b16 %v2517, %v2515
    %v2530 = vpack.c.b16 %v2520, %v2518
    %v2531 = vpack.c.b16 %v2521, %v2519
    %v2532 = vpack.c.b16 %v2524, %v2522
    %v2533 = vpack.c.b16 %v2525, %v2523
    %v2534 = vpack.c.b16 %v2526, %v2526
    %v2535 = vpack.c.b16 %v2527, %v2527
    %v2541 = vsel %vm1008, %v2529, 0
    %v2544 = vsel %vm1008, %v2531, 0
    %v2547 = vsel %vm1008, %v2533, 0
    %v2550 = vsel %vm1008, %v2535, 0
    %2552 = vmatprep.subr.bf16.mxu0 0
    %2553 = vmatpush1.bf16.msra.mxu0 %v874
    %2554 = vmatprep.subr.bf16.mxu0 0
    %2555 = vmatpush1.bf16.msra.mxu0 %v873
    %2556 = vmatprep.subr.bf16.mxu0 0
    %2557 = vmatpush1.bf16.msra.mxu0 %v872
    %2558 = vmatprep.subr.bf16.mxu0 0
    %2559 = vmatpush1.bf16.msra.mxu0 %v871
    %2560 = vmatprep.subr.bf16.mxu0 0
    %2561 = vmatpush1.bf16.msra.mxu0 %v870
    %2562 = vmatprep.subr.bf16.mxu0 0
    %2563 = vmatpush1.bf16.msra.mxu0 %v869
    %2564 = vmatprep.subr.bf16.mxu0 0
    %2565 = vmatpush1.bf16.msra.mxu0 %v868
    %2566 = vmatprep.subr.bf16.mxu0 0
    %2567 = vmatpush1.bf16.msra.mxu0 %v867
    %2568 = vmatprep.subr.bf16.mxu0 0
    %2569 = vmatpush2.bf16.msra.mxu0 0
    %2570 = vmatprep.subr.bf16.mxu0 0
    %2571 = vmatpush2.bf16.msra.mxu0 0
    %2572 = vmatprep.subr.bf16.mxu0 0
    %2573 = vmatpush2.bf16.msra.mxu0 0
    %2574 = vmatprep.subr.bf16.mxu0 0
    %2575 = vmatpush2.bf16.msra.mxu0 %v1023
    %2576 = vmatprep.subr.bf16.mxu0 0
    %2577 = vmatpush2.bf16.msra.mxu0 %v878
    %2578 = vmatprep.subr.bf16.mxu0 0
    %2579 = vmatpush2.bf16.msra.mxu0 %v877
    %2580 = vmatprep.subr.bf16.mxu0 0
    %2581 = vmatpush2.bf16.msra.mxu0 %v876
    %2582 = vmatprep.subr.bf16.mxu0 0
    %2583 = vmatpush2.bf16.msra.mxu0 %v875
    %2584 = vmatprep.mubr.bf16.mxu0 %v2541
    %2585 = vmatmul.mubr.bf16.gmra.mxu0 %v2528
    %v2586 = vpop.f32.mrf.mxu0
    %v2587 = vadd.f32 0.0, %v2586
    %v2588 = vpop.f32.mrf.mxu0
    %v2589 = vpop.f32.mrf.mxu0
    %v2590 = vadd.f32 0.0, %v2589
    %v2591 = vpop.f32.mrf.mxu0
    %2592 = vmatprep.mubr.bf16.mxu0 %v2544
    %2593 = vmatmul.mubr.bf16.gmra.mxu0 %v2530
    %v2594 = vpop.f32.mrf.mxu0
    %v2595 = vadd.f32 0.0, %v2594
    %v2596 = vpop.f32.mrf.mxu0
    %v2597 = vpop.f32.mrf.mxu0
    %v2598 = vadd.f32 0.0, %v2597
    %v2599 = vpop.f32.mrf.mxu0
    %2600 = vmatprep.mubr.bf16.mxu0 %v2547
    %2601 = vmatmul.mubr.bf16.gmra.mxu0 %v2532
    %v2602 = vpop.f32.mrf.mxu0
    %v2603 = vadd.f32 0.0, %v2602
    %v2604 = vpop.f32.mrf.mxu0
    %v2605 = vpop.f32.mrf.mxu0
    %v2606 = vadd.f32 0.0, %v2605
    %v2607 = vpop.f32.mrf.mxu0
    %2608 = vmatprep.mubr.bf16.mxu0 %v2550
    %2609 = vmatmul.mubr.bf16.gmra.mxu0 %v2534
    %v2610 = vpop.f32.mrf.mxu0
    %v2611 = vadd.f32 0.0, %v2610
    %v2612 = vpop.f32.mrf.mxu0
    %v2613 = vpop.f32.mrf.mxu0
    %v2614 = vpop.f32.mrf.mxu0
    %2615 = vdwg.mxu0
    %v2616 = vpack.c.bf16 %v2590, %v2587
    %v2617 = vpack.c.bf16 %v2598, %v2595
    %v2618 = vpack.c.bf16 %v2606, %v2603
    %v2619 = vpack.c.bf16 %v2611, %v2611
    %s2620 = scalar_lea.vmem %s3, 384
    %v2621 = vld [vmem:[%s2620] sm:$0xf]
    %v2622 = vld [vmem:[%s2620 + $0x4] sm:$0xf]
    %v2623 = vld [vmem:[%s2620 + $0x8] sm:$0xf]
    %v2624 = vld [vmem:[%s2620 + $0xc] sm:$0xf]
    %v2625 = vld [vmem:[%s2620 + $0x10] sm:$0xf]
    %v2626 = vld [vmem:[%s2620 + $0x14] sm:$0xf]
    %v2627 = vld [vmem:[%s2620 + $0x18] sm:$0xf]
    %v2628 = vld [vmem:[%s2620 + $0x1c] sm:$0xf]
    %v2629 = vld [vmem:[%s2620 + $0x20] sm:$0xf]
    %v2630 = vld [vmem:[%s2620 + $0x24] sm:$0xf]
    %v2631 = vld [vmem:[%s2620 + $0x28] sm:$0xf]
    %v2632 = vld [vmem:[%s2620 + $0x2c] sm:$0xf]
    %v2633 = vld [vmem:[%s2620 + $0x30] sm:$0xf]
    %v2634 = vld [vmem:[%s2620 + $0x34] sm:$0xf]
    %v2635 = vld [vmem:[%s2620 + $0x38] sm:$0xf]
    %v2636 = vld [vmem:[%s2620 + $0x3c] sm:$0xf]
    %v2653 = vunpack.c.l.b16 %v2621
    %v2654 = vunpack.c.l.b16 %v2622
    %v2655 = vunpack.c.l.b16 %v2623
    %v2656 = vunpack.c.l.b16 %v2624
    %v2657 = vunpack.c.l.b16 %v2625
    %v2658 = vunpack.c.l.b16 %v2626
    %v2659 = vunpack.c.l.b16 %v2627
    %v2660 = vunpack.c.l.b16 %v2628
    %v2661 = vunpack.c.l.b16 %v2629
    %v2662 = vunpack.c.l.b16 %v2630
    %v2663 = vunpack.c.l.b16 %v2631
    %v2664 = vunpack.c.l.b16 %v2632
    %v2665 = vunpack.c.l.b16 %v2633
    %v2666 = vunpack.c.l.b16 %v2634
    %v2667 = vunpack.c.l.b16 %v2635
    %v2668 = vunpack.c.l.b16 %v2636
    %v2669 = vpack.c.b16 %v2654, %v2653
    %v2670 = vpack.c.b16 %v2656, %v2655
    %v2671 = vpack.c.b16 %v2658, %v2657
    %v2672 = vpack.c.b16 %v2660, %v2659
    %v2673 = vpack.c.b16 %v2662, %v2661
    %v2674 = vpack.c.b16 %v2664, %v2663
    %v2675 = vpack.c.b16 %v2666, %v2665
    %v2676 = vpack.c.b16 %v2668, %v2667
    %2685 = vmatprep.subr.bf16.mxu0 0
    %2686 = vmatpush1.bf16.msra.mxu0 %v2676
    %2687 = vmatprep.subr.bf16.mxu0 0
    %2688 = vmatpush1.bf16.msra.mxu0 %v2675
    %2689 = vmatprep.subr.bf16.mxu0 0
    %2690 = vmatpush1.bf16.msra.mxu0 %v2674
    %2691 = vmatprep.subr.bf16.mxu0 0
    %2692 = vmatpush1.bf16.msra.mxu0 %v2673
    %2693 = vmatprep.subr.bf16.mxu0 0
    %2694 = vmatpush1.bf16.msra.mxu0 %v2672
    %2695 = vmatprep.subr.bf16.mxu0 0
    %2696 = vmatpush1.bf16.msra.mxu0 %v2671
    %2697 = vmatprep.subr.bf16.mxu0 0
    %2698 = vmatpush1.bf16.msra.mxu0 %v2670
    %2699 = vmatprep.subr.bf16.mxu0 0
    %2700 = vmatpush1.bf16.msra.mxu0 %v2669
    %2701 = vmatprep.subr.bf16.mxu0 0
    %2702 = vmatpush2.bf16.msra.mxu0 0
    %2703 = vmatprep.subr.bf16.mxu0 0
    %2704 = vmatpush2.bf16.msra.mxu0 0
    %2705 = vmatprep.subr.bf16.mxu0 0
    %2706 = vmatpush2.bf16.msra.mxu0 0
    %2707 = vmatprep.subr.bf16.mxu0 0
    %2708 = vmatpush2.bf16.msra.mxu0 0
    %2709 = vmatprep.subr.bf16.mxu0 0
    %2710 = vmatpush2.bf16.msra.mxu0 0
    %2711 = vmatprep.subr.bf16.mxu0 0
    %2712 = vmatpush2.bf16.msra.mxu0 0
    %2713 = vmatprep.subr.bf16.mxu0 0
    %2714 = vmatpush2.bf16.msra.mxu0 0
    %2715 = vmatprep.subr.bf16.mxu0 0
    %2716 = vmatpush2.bf16.msra.mxu0 0
    %2717 = vmatprep.mubr.bf16.mxu0 0
    %2718 = vmatmul.mubr.bf16.gmra.mxu0 %v2616
    %v2719 = vpop.f32.mrf.mxu0
    %v2720 = vadd.f32 0.0, %v2719
    %v2721 = vpop.f32.mrf.mxu0
    %v2722 = vpop.f32.mrf.mxu0
    %v2723 = vadd.f32 0.0, %v2722
    %v2724 = vpop.f32.mrf.mxu0
    %2725 = vmatprep.mubr.bf16.mxu0 0
    %2726 = vmatmul.mubr.bf16.gmra.mxu0 %v2617
    %v2727 = vpop.f32.mrf.mxu0
    %v2728 = vadd.f32 0.0, %v2727
    %v2729 = vpop.f32.mrf.mxu0
    %v2730 = vpop.f32.mrf.mxu0
    %v2731 = vadd.f32 0.0, %v2730
    %v2732 = vpop.f32.mrf.mxu0
    %2733 = vmatprep.mubr.bf16.mxu0 0
    %2734 = vmatmul.mubr.bf16.gmra.mxu0 %v2618
    %v2735 = vpop.f32.mrf.mxu0
    %v2736 = vadd.f32 0.0, %v2735
    %v2737 = vpop.f32.mrf.mxu0
    %v2738 = vpop.f32.mrf.mxu0
    %v2739 = vadd.f32 0.0, %v2738
    %v2740 = vpop.f32.mrf.mxu0
    %2741 = vmatprep.mubr.bf16.mxu0 0
    %2742 = vmatmul.mubr.bf16.gmra.mxu0 %v2619
    %v2743 = vpop.f32.mrf.mxu0
    %v2744 = vadd.f32 0.0, %v2743
    %v2745 = vpop.f32.mrf.mxu0
    %v2746 = vpop.f32.mrf.mxu0
    %v2747 = vpop.f32.mrf.mxu0
    %2748 = vdwg.mxu0
    %v2749 = vadd.f32 %v2492, %v2720
    %v2750 = vadd.f32 %v2493, %v2723
    %v2751 = vadd.f32 %v2494, %v2728
    %v2752 = vadd.f32 %v2495, %v2731
    %v2753 = vadd.f32 %v2496, %v2736
    %v2754 = vadd.f32 %v2497, %v2739
    %v2755 = vadd.f32 %v2498, %v2744
    %s2756 = scalar_lea.vmem %s2, 392
    %v2757 = vld [vmem:[%s2756] sm:$0xff]
    %v2758 = vld [vmem:[%s2756 + $0x8] sm:$0xff]
    %v2759 = vld [vmem:[%s2756 + $0x10] sm:$0xff]
    %v2760 = vld [vmem:[%s2756 + $0x18] sm:$0xff]
    %v2761 = vld [vmem:[%s2756 + $0x20] sm:$0xff]
    %v2762 = vld [vmem:[%s2756 + $0x28] sm:$0xff]
    %v2763 = vld [vmem:[%s2756 + $0x30] sm:$0x11]
    %v2771 = vunpack.c.l.b16 %v2757
    %v2772 = vunpack.c.h.b16 %v2757
    %v2773 = vunpack.c.l.b16 %v2758
    %v2774 = vunpack.c.h.b16 %v2758
    %v2775 = vunpack.c.l.b16 %v2759
    %v2776 = vunpack.c.h.b16 %v2759
    %v2777 = vunpack.c.l.b16 %v2760
    %v2778 = vunpack.c.h.b16 %v2760
    %v2779 = vunpack.c.l.b16 %v2761
    %v2780 = vunpack.c.h.b16 %v2761
    %v2781 = vunpack.c.l.b16 %v2762
    %v2782 = vunpack.c.h.b16 %v2762
    %v2783 = vunpack.c.l.b16 %v2763
    %v2784 = vunpack.c.h.b16 %v2763
    %v2785 = vpack.c.b16 %v2773, %v2771
    %v2786 = vpack.c.b16 %v2774, %v2772
    %v2787 = vpack.c.b16 %v2777, %v2775
    %v2788 = vpack.c.b16 %v2778, %v2776
    %v2789 = vpack.c.b16 %v2781, %v2779
    %v2790 = vpack.c.b16 %v2782, %v2780
    %v2791 = vpack.c.b16 %v2783, %v2783
    %v2792 = vpack.c.b16 %v2784, %v2784
    %v2798 = vsel %vm1008, %v2786, 0
    %v2801 = vsel %vm1008, %v2788, 0
    %v2804 = vsel %vm1008, %v2790, 0
    %v2807 = vsel %vm1008, %v2792, 0
    %2809 = vmatprep.subr.bf16.mxu0 0
    %2810 = vmatpush1.bf16.msra.mxu0 %v874
    %2811 = vmatprep.subr.bf16.mxu0 0
    %2812 = vmatpush1.bf16.msra.mxu0 %v873
    %2813 = vmatprep.subr.bf16.mxu0 0
    %2814 = vmatpush1.bf16.msra.mxu0 %v872
    %2815 = vmatprep.subr.bf16.mxu0 0
    %2816 = vmatpush1.bf16.msra.mxu0 %v871
    %2817 = vmatprep.subr.bf16.mxu0 0
    %2818 = vmatpush1.bf16.msra.mxu0 %v870
    %2819 = vmatprep.subr.bf16.mxu0 0
    %2820 = vmatpush1.bf16.msra.mxu0 %v869
    %2821 = vmatprep.subr.bf16.mxu0 0
    %2822 = vmatpush1.bf16.msra.mxu0 %v868
    %2823 = vmatprep.subr.bf16.mxu0 0
    %2824 = vmatpush1.bf16.msra.mxu0 %v867
    %2825 = vmatprep.subr.bf16.mxu0 0
    %2826 = vmatpush2.bf16.msra.mxu0 0
    %2827 = vmatprep.subr.bf16.mxu0 0
    %2828 = vmatpush2.bf16.msra.mxu0 0
    %2829 = vmatprep.subr.bf16.mxu0 0
    %2830 = vmatpush2.bf16.msra.mxu0 0
    %2831 = vmatprep.subr.bf16.mxu0 0
    %2832 = vmatpush2.bf16.msra.mxu0 %v1023
    %2833 = vmatprep.subr.bf16.mxu0 0
    %2834 = vmatpush2.bf16.msra.mxu0 %v878
    %2835 = vmatprep.subr.bf16.mxu0 0
    %2836 = vmatpush2.bf16.msra.mxu0 %v877
    %2837 = vmatprep.subr.bf16.mxu0 0
    %2838 = vmatpush2.bf16.msra.mxu0 %v876
    %2839 = vmatprep.subr.bf16.mxu0 0
    %2840 = vmatpush2.bf16.msra.mxu0 %v875
    %2841 = vmatprep.mubr.bf16.mxu0 %v2798
    %2842 = vmatmul.mubr.bf16.gmra.mxu0 %v2785
    %v2843 = vpop.f32.mrf.mxu0
    %v2844 = vadd.f32 0.0, %v2843
    %v2845 = vpop.f32.mrf.mxu0
    %v2846 = vpop.f32.mrf.mxu0
    %v2847 = vadd.f32 0.0, %v2846
    %v2848 = vpop.f32.mrf.mxu0
    %2849 = vmatprep.mubr.bf16.mxu0 %v2801
    %2850 = vmatmul.mubr.bf16.gmra.mxu0 %v2787
    %v2851 = vpop.f32.mrf.mxu0
    %v2852 = vadd.f32 0.0, %v2851
    %v2853 = vpop.f32.mrf.mxu0
    %v2854 = vpop.f32.mrf.mxu0
    %v2855 = vadd.f32 0.0, %v2854
    %v2856 = vpop.f32.mrf.mxu0
    %2857 = vmatprep.mubr.bf16.mxu0 %v2804
    %2858 = vmatmul.mubr.bf16.gmra.mxu0 %v2789
    %v2859 = vpop.f32.mrf.mxu0
    %v2860 = vadd.f32 0.0, %v2859
    %v2861 = vpop.f32.mrf.mxu0
    %v2862 = vpop.f32.mrf.mxu0
    %v2863 = vadd.f32 0.0, %v2862
    %v2864 = vpop.f32.mrf.mxu0
    %2865 = vmatprep.mubr.bf16.mxu0 %v2807
    %2866 = vmatmul.mubr.bf16.gmra.mxu0 %v2791
    %v2867 = vpop.f32.mrf.mxu0
    %v2868 = vadd.f32 0.0, %v2867
    %v2869 = vpop.f32.mrf.mxu0
    %v2870 = vpop.f32.mrf.mxu0
    %v2871 = vpop.f32.mrf.mxu0
    %2872 = vdwg.mxu0
    %v2873 = vpack.c.bf16 %v2847, %v2844
    %v2874 = vpack.c.bf16 %v2855, %v2852
    %v2875 = vpack.c.bf16 %v2863, %v2860
    %v2876 = vpack.c.bf16 %v2868, %v2868
    %s2877 = scalar_lea.vmem %s3, 448
    %v2878 = vld [vmem:[%s2877] sm:$0xf]
    %v2879 = vld [vmem:[%s2877 + $0x4] sm:$0xf]
    %v2880 = vld [vmem:[%s2877 + $0x8] sm:$0xf]
    %v2881 = vld [vmem:[%s2877 + $0xc] sm:$0xf]
    %v2882 = vld [vmem:[%s2877 + $0x10] sm:$0xf]
    %v2883 = vld [vmem:[%s2877 + $0x14] sm:$0xf]
    %v2884 = vld [vmem:[%s2877 + $0x18] sm:$0xf]
    %v2885 = vld [vmem:[%s2877 + $0x1c] sm:$0xf]
    %v2886 = vld [vmem:[%s2877 + $0x20] sm:$0xf]
    %v2887 = vld [vmem:[%s2877 + $0x24] sm:$0xf]
    %v2888 = vld [vmem:[%s2877 + $0x28] sm:$0xf]
    %v2889 = vld [vmem:[%s2877 + $0x2c] sm:$0xf]
    %v2890 = vld [vmem:[%s2877 + $0x30] sm:$0xf]
    %v2891 = vld [vmem:[%s2877 + $0x34] sm:$0xf]
    %v2892 = vld [vmem:[%s2877 + $0x38] sm:$0xf]
    %v2893 = vld [vmem:[%s2877 + $0x3c] sm:$0xf]
    %v2910 = vunpack.c.l.b16 %v2878
    %v2911 = vunpack.c.l.b16 %v2879
    %v2912 = vunpack.c.l.b16 %v2880
    %v2913 = vunpack.c.l.b16 %v2881
    %v2914 = vunpack.c.l.b16 %v2882
    %v2915 = vunpack.c.l.b16 %v2883
    %v2916 = vunpack.c.l.b16 %v2884
    %v2917 = vunpack.c.l.b16 %v2885
    %v2918 = vunpack.c.l.b16 %v2886
    %v2919 = vunpack.c.l.b16 %v2887
    %v2920 = vunpack.c.l.b16 %v2888
    %v2921 = vunpack.c.l.b16 %v2889
    %v2922 = vunpack.c.l.b16 %v2890
    %v2923 = vunpack.c.l.b16 %v2891
    %v2924 = vunpack.c.l.b16 %v2892
    %v2925 = vunpack.c.l.b16 %v2893
    %v2926 = vpack.c.b16 %v2911, %v2910
    %v2927 = vpack.c.b16 %v2913, %v2912
    %v2928 = vpack.c.b16 %v2915, %v2914
    %v2929 = vpack.c.b16 %v2917, %v2916
    %v2930 = vpack.c.b16 %v2919, %v2918
    %v2931 = vpack.c.b16 %v2921, %v2920
    %v2932 = vpack.c.b16 %v2923, %v2922
    %v2933 = vpack.c.b16 %v2925, %v2924
    %2942 = vmatprep.subr.bf16.mxu0 0
    %2943 = vmatpush1.bf16.msra.mxu0 %v2933
    %2944 = vmatprep.subr.bf16.mxu0 0
    %2945 = vmatpush1.bf16.msra.mxu0 %v2932
    %2946 = vmatprep.subr.bf16.mxu0 0
    %2947 = vmatpush1.bf16.msra.mxu0 %v2931
    %2948 = vmatprep.subr.bf16.mxu0 0
    %2949 = vmatpush1.bf16.msra.mxu0 %v2930
    %2950 = vmatprep.subr.bf16.mxu0 0
    %2951 = vmatpush1.bf16.msra.mxu0 %v2929
    %2952 = vmatprep.subr.bf16.mxu0 0
    %2953 = vmatpush1.bf16.msra.mxu0 %v2928
    %2954 = vmatprep.subr.bf16.mxu0 0
    %2955 = vmatpush1.bf16.msra.mxu0 %v2927
    %2956 = vmatprep.subr.bf16.mxu0 0
    %2957 = vmatpush1.bf16.msra.mxu0 %v2926
    %2958 = vmatprep.subr.bf16.mxu0 0
    %2959 = vmatpush2.bf16.msra.mxu0 0
    %2960 = vmatprep.subr.bf16.mxu0 0
    %2961 = vmatpush2.bf16.msra.mxu0 0
    %2962 = vmatprep.subr.bf16.mxu0 0
    %2963 = vmatpush2.bf16.msra.mxu0 0
    %2964 = vmatprep.subr.bf16.mxu0 0
    %2965 = vmatpush2.bf16.msra.mxu0 0
    %2966 = vmatprep.subr.bf16.mxu0 0
    %2967 = vmatpush2.bf16.msra.mxu0 0
    %2968 = vmatprep.subr.bf16.mxu0 0
    %2969 = vmatpush2.bf16.msra.mxu0 0
    %2970 = vmatprep.subr.bf16.mxu0 0
    %2971 = vmatpush2.bf16.msra.mxu0 0
    %2972 = vmatprep.subr.bf16.mxu0 0
    %2973 = vmatpush2.bf16.msra.mxu0 0
    %2974 = vmatprep.mubr.bf16.mxu0 0
    %2975 = vmatmul.mubr.bf16.gmra.mxu0 %v2873
    %v2976 = vpop.f32.mrf.mxu0
    %v2977 = vadd.f32 0.0, %v2976
    %v2978 = vpop.f32.mrf.mxu0
    %v2979 = vpop.f32.mrf.mxu0
    %v2980 = vadd.f32 0.0, %v2979
    %v2981 = vpop.f32.mrf.mxu0
    %2982 = vmatprep.mubr.bf16.mxu0 0
    %2983 = vmatmul.mubr.bf16.gmra.mxu0 %v2874
    %v2984 = vpop.f32.mrf.mxu0
    %v2985 = vadd.f32 0.0, %v2984
    %v2986 = vpop.f32.mrf.mxu0
    %v2987 = vpop.f32.mrf.mxu0
    %v2988 = vadd.f32 0.0, %v2987
    %v2989 = vpop.f32.mrf.mxu0
    %2990 = vmatprep.mubr.bf16.mxu0 0
    %2991 = vmatmul.mubr.bf16.gmra.mxu0 %v2875
    %v2992 = vpop.f32.mrf.mxu0
    %v2993 = vadd.f32 0.0, %v2992
    %v2994 = vpop.f32.mrf.mxu0
    %v2995 = vpop.f32.mrf.mxu0
    %v2996 = vadd.f32 0.0, %v2995
    %v2997 = vpop.f32.mrf.mxu0
    %2998 = vmatprep.mubr.bf16.mxu0 0
    %2999 = vmatmul.mubr.bf16.gmra.mxu0 %v2876
    %v3000 = vpop.f32.mrf.mxu0
    %v3001 = vadd.f32 0.0, %v3000
    %v3002 = vpop.f32.mrf.mxu0
    %v3003 = vpop.f32.mrf.mxu0
    %v3004 = vpop.f32.mrf.mxu0
    %3005 = vdwg.mxu0
    %v3006 = vadd.f32 %v2749, %v2977
    %v3007 = vadd.f32 %v2750, %v2980
    %v3008 = vadd.f32 %v2751, %v2985
    %v3009 = vadd.f32 %v2752, %v2988
    %v3010 = vadd.f32 %v2753, %v2993
    %v3011 = vadd.f32 %v2754, %v2996
    %v3012 = vadd.f32 %v2755, %v3001
    %s3013 = scalar_lea.vmem %s2, 448
    %v3014 = vld [vmem:[%s3013] sm:$0xff]
    %v3015 = vld [vmem:[%s3013 + $0x8] sm:$0xff]
    %v3016 = vld [vmem:[%s3013 + $0x10] sm:$0xff]
    %v3017 = vld [vmem:[%s3013 + $0x18] sm:$0xff]
    %v3018 = vld [vmem:[%s3013 + $0x20] sm:$0xff]
    %v3019 = vld [vmem:[%s3013 + $0x28] sm:$0xff]
    %v3020 = vld [vmem:[%s3013 + $0x30] sm:$0x11]
    %v3028 = vunpack.c.l.b16 %v3014
    %v3029 = vunpack.c.h.b16 %v3014
    %v3030 = vunpack.c.l.b16 %v3015
    %v3031 = vunpack.c.h.b16 %v3015
    %v3032 = vunpack.c.l.b16 %v3016
    %v3033 = vunpack.c.h.b16 %v3016
    %v3034 = vunpack.c.l.b16 %v3017
    %v3035 = vunpack.c.h.b16 %v3017
    %v3036 = vunpack.c.l.b16 %v3018
    %v3037 = vunpack.c.h.b16 %v3018
    %v3038 = vunpack.c.l.b16 %v3019
    %v3039 = vunpack.c.h.b16 %v3019
    %v3040 = vunpack.c.l.b16 %v3020
    %v3041 = vunpack.c.h.b16 %v3020
    %v3042 = vpack.c.b16 %v3030, %v3028
    %v3043 = vpack.c.b16 %v3031, %v3029
    %v3044 = vpack.c.b16 %v3034, %v3032
    %v3045 = vpack.c.b16 %v3035, %v3033
    %v3046 = vpack.c.b16 %v3038, %v3036
    %v3047 = vpack.c.b16 %v3039, %v3037
    %v3048 = vpack.c.b16 %v3040, %v3040
    %v3049 = vpack.c.b16 %v3041, %v3041
    %v3055 = vsel %vm1008, %v3043, 0
    %v3058 = vsel %vm1008, %v3045, 0
    %v3061 = vsel %vm1008, %v3047, 0
    %v3064 = vsel %vm1008, %v3049, 0
    %3066 = vmatprep.subr.bf16.mxu0 0
    %3067 = vmatpush1.bf16.msra.mxu0 %v874
    %3068 = vmatprep.subr.bf16.mxu0 0
    %3069 = vmatpush1.bf16.msra.mxu0 %v873
    %3070 = vmatprep.subr.bf16.mxu0 0
    %3071 = vmatpush1.bf16.msra.mxu0 %v872
    %3072 = vmatprep.subr.bf16.mxu0 0
    %3073 = vmatpush1.bf16.msra.mxu0 %v871
    %3074 = vmatprep.subr.bf16.mxu0 0
    %3075 = vmatpush1.bf16.msra.mxu0 %v870
    %3076 = vmatprep.subr.bf16.mxu0 0
    %3077 = vmatpush1.bf16.msra.mxu0 %v869
    %3078 = vmatprep.subr.bf16.mxu0 0
    %3079 = vmatpush1.bf16.msra.mxu0 %v868
    %3080 = vmatprep.subr.bf16.mxu0 0
    %3081 = vmatpush1.bf16.msra.mxu0 %v867
    %3082 = vmatprep.subr.bf16.mxu0 0
    %3083 = vmatpush2.bf16.msra.mxu0 0
    %3084 = vmatprep.subr.bf16.mxu0 0
    %3085 = vmatpush2.bf16.msra.mxu0 0
    %3086 = vmatprep.subr.bf16.mxu0 0
    %3087 = vmatpush2.bf16.msra.mxu0 0
    %3088 = vmatprep.subr.bf16.mxu0 0
    %3089 = vmatpush2.bf16.msra.mxu0 %v1023
    %3090 = vmatprep.subr.bf16.mxu0 0
    %3091 = vmatpush2.bf16.msra.mxu0 %v878
    %3092 = vmatprep.subr.bf16.mxu0 0
    %3093 = vmatpush2.bf16.msra.mxu0 %v877
    %3094 = vmatprep.subr.bf16.mxu0 0
    %3095 = vmatpush2.bf16.msra.mxu0 %v876
    %3096 = vmatprep.subr.bf16.mxu0 0
    %3097 = vmatpush2.bf16.msra.mxu0 %v875
    %3098 = vmatprep.mubr.bf16.mxu0 %v3055
    %3099 = vmatmul.mubr.bf16.gmra.mxu0 %v3042
    %v3100 = vpop.f32.mrf.mxu0
    %v3101 = vadd.f32 0.0, %v3100
    %v3102 = vpop.f32.mrf.mxu0
    %v3103 = vpop.f32.mrf.mxu0
    %v3104 = vadd.f32 0.0, %v3103
    %v3105 = vpop.f32.mrf.mxu0
    %3106 = vmatprep.mubr.bf16.mxu0 %v3058
    %3107 = vmatmul.mubr.bf16.gmra.mxu0 %v3044
    %v3108 = vpop.f32.mrf.mxu0
    %v3109 = vadd.f32 0.0, %v3108
    %v3110 = vpop.f32.mrf.mxu0
    %v3111 = vpop.f32.mrf.mxu0
    %v3112 = vadd.f32 0.0, %v3111
    %v3113 = vpop.f32.mrf.mxu0
    %3114 = vmatprep.mubr.bf16.mxu0 %v3061
    %3115 = vmatmul.mubr.bf16.gmra.mxu0 %v3046
    %v3116 = vpop.f32.mrf.mxu0
    %v3117 = vadd.f32 0.0, %v3116
    %v3118 = vpop.f32.mrf.mxu0
    %v3119 = vpop.f32.mrf.mxu0
    %v3120 = vadd.f32 0.0, %v3119
    %v3121 = vpop.f32.mrf.mxu0
    %3122 = vmatprep.mubr.bf16.mxu0 %v3064
    %3123 = vmatmul.mubr.bf16.gmra.mxu0 %v3048
    %v3124 = vpop.f32.mrf.mxu0
    %v3125 = vadd.f32 0.0, %v3124
    %v3126 = vpop.f32.mrf.mxu0
    %v3127 = vpop.f32.mrf.mxu0
    %v3128 = vpop.f32.mrf.mxu0
    %3129 = vdwg.mxu0
    %v3130 = vpack.c.bf16 %v3104, %v3101
    %v3131 = vpack.c.bf16 %v3112, %v3109
    %v3132 = vpack.c.bf16 %v3120, %v3117
    %v3133 = vpack.c.bf16 %v3125, %v3125
    %s3134 = scalar_lea.vmem %s3, 512
    %v3135 = vld [vmem:[%s3134] sm:$0xf]
    %v3136 = vld [vmem:[%s3134 + $0x4] sm:$0xf]
    %v3137 = vld [vmem:[%s3134 + $0x8] sm:$0xf]
    %v3138 = vld [vmem:[%s3134 + $0xc] sm:$0xf]
    %v3139 = vld [vmem:[%s3134 + $0x10] sm:$0xf]
    %v3140 = vld [vmem:[%s3134 + $0x14] sm:$0xf]
    %v3141 = vld [vmem:[%s3134 + $0x18] sm:$0xf]
    %v3142 = vld [vmem:[%s3134 + $0x1c] sm:$0xf]
    %v3143 = vld [vmem:[%s3134 + $0x20] sm:$0xf]
    %v3144 = vld [vmem:[%s3134 + $0x24] sm:$0xf]
    %v3145 = vld [vmem:[%s3134 + $0x28] sm:$0xf]
    %v3146 = vld [vmem:[%s3134 + $0x2c] sm:$0xf]
    %v3147 = vld [vmem:[%s3134 + $0x30] sm:$0xf]
    %v3148 = vld [vmem:[%s3134 + $0x34] sm:$0xf]
    %v3149 = vld [vmem:[%s3134 + $0x38] sm:$0xf]
    %v3150 = vld [vmem:[%s3134 + $0x3c] sm:$0xf]
    %v3167 = vunpack.c.l.b16 %v3135
    %v3168 = vunpack.c.l.b16 %v3136
    %v3169 = vunpack.c.l.b16 %v3137
    %v3170 = vunpack.c.l.b16 %v3138
    %v3171 = vunpack.c.l.b16 %v3139
    %v3172 = vunpack.c.l.b16 %v3140
    %v3173 = vunpack.c.l.b16 %v3141
    %v3174 = vunpack.c.l.b16 %v3142
    %v3175 = vunpack.c.l.b16 %v3143
    %v3176 = vunpack.c.l.b16 %v3144
    %v3177 = vunpack.c.l.b16 %v3145
    %v3178 = vunpack.c.l.b16 %v3146
    %v3179 = vunpack.c.l.b16 %v3147
    %v3180 = vunpack.c.l.b16 %v3148
    %v3181 = vunpack.c.l.b16 %v3149
    %v3182 = vunpack.c.l.b16 %v3150
    %v3183 = vpack.c.b16 %v3168, %v3167
    %v3184 = vpack.c.b16 %v3170, %v3169
    %v3185 = vpack.c.b16 %v3172, %v3171
    %v3186 = vpack.c.b16 %v3174, %v3173
    %v3187 = vpack.c.b16 %v3176, %v3175
    %v3188 = vpack.c.b16 %v3178, %v3177
    %v3189 = vpack.c.b16 %v3180, %v3179
    %v3190 = vpack.c.b16 %v3182, %v3181
    %3199 = vmatprep.subr.bf16.mxu0 0
    %3200 = vmatpush1.bf16.msra.mxu0 %v3190
    %3201 = vmatprep.subr.bf16.mxu0 0
    %3202 = vmatpush1.bf16.msra.mxu0 %v3189
    %3203 = vmatprep.subr.bf16.mxu0 0
    %3204 = vmatpush1.bf16.msra.mxu0 %v3188
    %3205 = vmatprep.subr.bf16.mxu0 0
    %3206 = vmatpush1.bf16.msra.mxu0 %v3187
    %3207 = vmatprep.subr.bf16.mxu0 0
    %3208 = vmatpush1.bf16.msra.mxu0 %v3186
    %3209 = vmatprep.subr.bf16.mxu0 0
    %3210 = vmatpush1.bf16.msra.mxu0 %v3185
    %3211 = vmatprep.subr.bf16.mxu0 0
    %3212 = vmatpush1.bf16.msra.mxu0 %v3184
    %3213 = vmatprep.subr.bf16.mxu0 0
    %3214 = vmatpush1.bf16.msra.mxu0 %v3183
    %3215 = vmatprep.subr.bf16.mxu0 0
    %3216 = vmatpush2.bf16.msra.mxu0 0
    %3217 = vmatprep.subr.bf16.mxu0 0
    %3218 = vmatpush2.bf16.msra.mxu0 0
    %3219 = vmatprep.subr.bf16.mxu0 0
    %3220 = vmatpush2.bf16.msra.mxu0 0
    %3221 = vmatprep.subr.bf16.mxu0 0
    %3222 = vmatpush2.bf16.msra.mxu0 0
    %3223 = vmatprep.subr.bf16.mxu0 0
    %3224 = vmatpush2.bf16.msra.mxu0 0
    %3225 = vmatprep.subr.bf16.mxu0 0
    %3226 = vmatpush2.bf16.msra.mxu0 0
    %3227 = vmatprep.subr.bf16.mxu0 0
    %3228 = vmatpush2.bf16.msra.mxu0 0
    %3229 = vmatprep.subr.bf16.mxu0 0
    %3230 = vmatpush2.bf16.msra.mxu0 0
    %3231 = vmatprep.mubr.bf16.mxu0 0
    %3232 = vmatmul.mubr.bf16.gmra.mxu0 %v3130
    %v3233 = vpop.f32.mrf.mxu0
    %v3234 = vadd.f32 0.0, %v3233
    %v3235 = vpop.f32.mrf.mxu0
    %v3236 = vpop.f32.mrf.mxu0
    %v3237 = vadd.f32 0.0, %v3236
    %v3238 = vpop.f32.mrf.mxu0
    %3239 = vmatprep.mubr.bf16.mxu0 0
    %3240 = vmatmul.mubr.bf16.gmra.mxu0 %v3131
    %v3241 = vpop.f32.mrf.mxu0
    %v3242 = vadd.f32 0.0, %v3241
    %v3243 = vpop.f32.mrf.mxu0
    %v3244 = vpop.f32.mrf.mxu0
    %v3245 = vadd.f32 0.0, %v3244
    %v3246 = vpop.f32.mrf.mxu0
    %3247 = vmatprep.mubr.bf16.mxu0 0
    %3248 = vmatmul.mubr.bf16.gmra.mxu0 %v3132
    %v3249 = vpop.f32.mrf.mxu0
    %v3250 = vadd.f32 0.0, %v3249
    %v3251 = vpop.f32.mrf.mxu0
    %v3252 = vpop.f32.mrf.mxu0
    %v3253 = vadd.f32 0.0, %v3252
    %v3254 = vpop.f32.mrf.mxu0
    %3255 = vmatprep.mubr.bf16.mxu0 0
    %3256 = vmatmul.mubr.bf16.gmra.mxu0 %v3133
    %v3257 = vpop.f32.mrf.mxu0
    %v3258 = vadd.f32 0.0, %v3257
    %v3259 = vpop.f32.mrf.mxu0
    %v3260 = vpop.f32.mrf.mxu0
    %v3261 = vpop.f32.mrf.mxu0
    %3262 = vdwg.mxu0
    %v3263 = vadd.f32 %v3006, %v3234
    %v3264 = vadd.f32 %v3007, %v3237
    %v3265 = vadd.f32 %v3008, %v3242
    %v3266 = vadd.f32 %v3009, %v3245
    %v3267 = vadd.f32 %v3010, %v3250
    %v3268 = vadd.f32 %v3011, %v3253
    %v3269 = vadd.f32 %v3012, %v3258
    %v3271 = vsel %vm1021, %v967, 0
    %3273 = vmatprep.subr.bf16.mxu0 0
    %3274 = vmatpush1.bf16.msra.mxu0 %v962
    %3275 = vmatprep.subr.bf16.mxu0 0
    %3276 = vmatpush1.bf16.msra.mxu0 %v961
    %3277 = vmatprep.subr.bf16.mxu0 0
    %3278 = vmatpush1.bf16.msra.mxu0 %v960
    %3279 = vmatprep.subr.bf16.mxu0 0
    %3280 = vmatpush1.bf16.msra.mxu0 %v959
    %3281 = vmatprep.subr.bf16.mxu0 0
    %3282 = vmatpush1.bf16.msra.mxu0 %v958
    %3283 = vmatprep.subr.bf16.mxu0 0
    %3284 = vmatpush1.bf16.msra.mxu0 %v957
    %3285 = vmatprep.subr.bf16.mxu0 0
    %3286 = vmatpush1.bf16.msra.mxu0 %v956
    %3287 = vmatprep.subr.bf16.mxu0 0
    %3288 = vmatpush1.bf16.msra.mxu0 %v955
    %3289 = vmatprep.subr.bf16.mxu0 0
    %3290 = vmatpush2.bf16.msra.mxu0 0
    %3291 = vmatprep.subr.bf16.mxu0 0
    %3292 = vmatpush2.bf16.msra.mxu0 0
    %3293 = vmatprep.subr.bf16.mxu0 0
    %3294 = vmatpush2.bf16.msra.mxu0 0
    %3295 = vmatprep.subr.bf16.mxu0 0
    %3296 = vmatpush2.bf16.msra.mxu0 %v3271
    %3297 = vmatprep.subr.bf16.mxu0 0
    %3298 = vmatpush2.bf16.msra.mxu0 %v966
    %3299 = vmatprep.subr.bf16.mxu0 0
    %3300 = vmatpush2.bf16.msra.mxu0 %v965
    %3301 = vmatprep.subr.bf16.mxu0 0
    %3302 = vmatpush2.bf16.msra.mxu0 %v964
    %3303 = vmatprep.subr.bf16.mxu0 0
    %3304 = vmatpush2.bf16.msra.mxu0 %v963
    %3305 = vmatprep.mubr.bf16.mxu0 %v1010
    %3306 = vmatmul.mubr.bf16.gmra.mxu0 %v996
    %v3307 = vpop.f32.mrf.mxu0
    %v3308 = vadd.f32 0.0, %v3307
    %v3309 = vpop.f32.mrf.mxu0
    %v3310 = vpop.f32.mrf.mxu0
    %v3311 = vadd.f32 0.0, %v3310
    %v3312 = vpop.f32.mrf.mxu0
    %3313 = vmatprep.mubr.bf16.mxu0 %v1013
    %3314 = vmatmul.mubr.bf16.gmra.mxu0 %v998
    %v3315 = vpop.f32.mrf.mxu0
    %v3316 = vadd.f32 0.0, %v3315
    %v3317 = vpop.f32.mrf.mxu0
    %v3318 = vpop.f32.mrf.mxu0
    %v3319 = vadd.f32 0.0, %v3318
    %v3320 = vpop.f32.mrf.mxu0
    %3321 = vmatprep.mubr.bf16.mxu0 %v1016
    %3322 = vmatmul.mubr.bf16.gmra.mxu0 %v1000
    %v3323 = vpop.f32.mrf.mxu0
    %v3324 = vadd.f32 0.0, %v3323
    %v3325 = vpop.f32.mrf.mxu0
    %v3326 = vpop.f32.mrf.mxu0
    %v3327 = vadd.f32 0.0, %v3326
    %v3328 = vpop.f32.mrf.mxu0
    %3329 = vmatprep.mubr.bf16.mxu0 %v1019
    %3330 = vmatmul.mubr.bf16.gmra.mxu0 %v1002
    %v3331 = vpop.f32.mrf.mxu0
    %v3332 = vadd.f32 0.0, %v3331
    %v3333 = vpop.f32.mrf.mxu0
    %v3334 = vpop.f32.mrf.mxu0
    %v3335 = vpop.f32.mrf.mxu0
    %3336 = vdwg.mxu0
    %v3337 = vpack.c.bf16 %v3311, %v3308
    %v3338 = vpack.c.bf16 %v3319, %v3316
    %v3339 = vpack.c.bf16 %v3327, %v3324
    %v3340 = vpack.c.bf16 %v3332, %v3332
    %3341 = vmatprep.subr.bf16.mxu0 0
    %3342 = vmatpush1.bf16.msra.mxu0 %v962
    %3343 = vmatprep.subr.bf16.mxu0 0
    %3344 = vmatpush1.bf16.msra.mxu0 %v961
    %3345 = vmatprep.subr.bf16.mxu0 0
    %3346 = vmatpush1.bf16.msra.mxu0 %v960
    %3347 = vmatprep.subr.bf16.mxu0 0
    %3348 = vmatpush1.bf16.msra.mxu0 %v959
    %3349 = vmatprep.subr.bf16.mxu0 0
    %3350 = vmatpush1.bf16.msra.mxu0 %v958
    %3351 = vmatprep.subr.bf16.mxu0 0
    %3352 = vmatpush1.bf16.msra.mxu0 %v957
    %3353 = vmatprep.subr.bf16.mxu0 0
    %3354 = vmatpush1.bf16.msra.mxu0 %v956
    %3355 = vmatprep.subr.bf16.mxu0 0
    %3356 = vmatpush1.bf16.msra.mxu0 %v955
    %3357 = vmatprep.subr.bf16.mxu0 0
    %3358 = vmatpush2.bf16.msra.mxu0 0
    %3359 = vmatprep.subr.bf16.mxu0 0
    %3360 = vmatpush2.bf16.msra.mxu0 0
    %3361 = vmatprep.subr.bf16.mxu0 0
    %3362 = vmatpush2.bf16.msra.mxu0 0
    %3363 = vmatprep.subr.bf16.mxu0 0
    %3364 = vmatpush2.bf16.msra.mxu0 %v3271
    %3365 = vmatprep.subr.bf16.mxu0 0
    %3366 = vmatpush2.bf16.msra.mxu0 %v966
    %3367 = vmatprep.subr.bf16.mxu0 0
    %3368 = vmatpush2.bf16.msra.mxu0 %v965
    %3369 = vmatprep.subr.bf16.mxu0 0
    %3370 = vmatpush2.bf16.msra.mxu0 %v964
    %3371 = vmatprep.subr.bf16.mxu0 0
    %3372 = vmatpush2.bf16.msra.mxu0 %v963
    %3373 = vmatprep.mubr.bf16.mxu0 %v1151
    %3374 = vmatmul.mubr.bf16.gmra.mxu0 %v1138
    %v3375 = vpop.f32.mrf.mxu0
    %v3376 = vadd.f32 0.0, %v3375
    %v3377 = vpop.f32.mrf.mxu0
    %v3378 = vpop.f32.mrf.mxu0
    %v3379 = vadd.f32 0.0, %v3378
    %v3380 = vpop.f32.mrf.mxu0
    %3381 = vmatprep.mubr.bf16.mxu0 %v1154
    %3382 = vmatmul.mubr.bf16.gmra.mxu0 %v1140
    %v3383 = vpop.f32.mrf.mxu0
    %v3384 = vadd.f32 0.0, %v3383
    %v3385 = vpop.f32.mrf.mxu0
    %v3386 = vpop.f32.mrf.mxu0
    %v3387 = vadd.f32 0.0, %v3386
    %v3388 = vpop.f32.mrf.mxu0
    %3389 = vmatprep.mubr.bf16.mxu0 %v1157
    %3390 = vmatmul.mubr.bf16.gmra.mxu0 %v1142
    %v3391 = vpop.f32.mrf.mxu0
    %v3392 = vadd.f32 0.0, %v3391
    %v3393 = vpop.f32.mrf.mxu0
    %v3394 = vpop.f32.mrf.mxu0
    %v3395 = vadd.f32 0.0, %v3394
    %v3396 = vpop.f32.mrf.mxu0
    %3397 = vmatprep.mubr.bf16.mxu0 %v1160
    %3398 = vmatmul.mubr.bf16.gmra.mxu0 %v1144
    %v3399 = vpop.f32.mrf.mxu0
    %v3400 = vadd.f32 0.0, %v3399
    %v3401 = vpop.f32.mrf.mxu0
    %v3402 = vpop.f32.mrf.mxu0
    %v3403 = vpop.f32.mrf.mxu0
    %3404 = vdwg.mxu0
    %v3405 = vpack.c.bf16 %v3379, %v3376
    %v3406 = vpack.c.bf16 %v3387, %v3384
    %v3407 = vpack.c.bf16 %v3395, %v3392
    %v3408 = vpack.c.bf16 %v3400, %v3400
    %3409 = vmatprep.subr.bf16.mxu0 0
    %3410 = vmatpush1.bf16.msra.mxu0 %v1286
    %3411 = vmatprep.subr.bf16.mxu0 0
    %3412 = vmatpush1.bf16.msra.mxu0 %v1285
    %3413 = vmatprep.subr.bf16.mxu0 0
    %3414 = vmatpush1.bf16.msra.mxu0 %v1284
    %3415 = vmatprep.subr.bf16.mxu0 0
    %3416 = vmatpush1.bf16.msra.mxu0 %v1283
    %3417 = vmatprep.subr.bf16.mxu0 0
    %3418 = vmatpush1.bf16.msra.mxu0 %v1282
    %3419 = vmatprep.subr.bf16.mxu0 0
    %3420 = vmatpush1.bf16.msra.mxu0 %v1281
    %3421 = vmatprep.subr.bf16.mxu0 0
    %3422 = vmatpush1.bf16.msra.mxu0 %v1280
    %3423 = vmatprep.subr.bf16.mxu0 0
    %3424 = vmatpush1.bf16.msra.mxu0 %v1279
    %3425 = vmatprep.subr.bf16.mxu0 0
    %3426 = vmatpush2.bf16.msra.mxu0 0
    %3427 = vmatprep.subr.bf16.mxu0 0
    %3428 = vmatpush2.bf16.msra.mxu0 0
    %3429 = vmatprep.subr.bf16.mxu0 0
    %3430 = vmatpush2.bf16.msra.mxu0 0
    %3431 = vmatprep.subr.bf16.mxu0 0
    %3432 = vmatpush2.bf16.msra.mxu0 0
    %3433 = vmatprep.subr.bf16.mxu0 0
    %3434 = vmatpush2.bf16.msra.mxu0 0
    %3435 = vmatprep.subr.bf16.mxu0 0
    %3436 = vmatpush2.bf16.msra.mxu0 0
    %3437 = vmatprep.subr.bf16.mxu0 0
    %3438 = vmatpush2.bf16.msra.mxu0 0
    %3439 = vmatprep.subr.bf16.mxu0 0
    %3440 = vmatpush2.bf16.msra.mxu0 0
    %3441 = vmatprep.mubr.bf16.mxu0 0
    %3442 = vmatmul.mubr.bf16.gmra.mxu0 %v3405
    %v3443 = vpop.f32.mrf.mxu0
    %v3444 = vadd.f32 0.0, %v3443
    %v3445 = vpop.f32.mrf.mxu0
    %v3446 = vpop.f32.mrf.mxu0
    %v3447 = vadd.f32 0.0, %v3446
    %v3448 = vpop.f32.mrf.mxu0
    %3449 = vmatprep.mubr.bf16.mxu0 0
    %3450 = vmatmul.mubr.bf16.gmra.mxu0 %v3406
    %v3451 = vpop.f32.mrf.mxu0
    %v3452 = vadd.f32 0.0, %v3451
    %v3453 = vpop.f32.mrf.mxu0
    %v3454 = vpop.f32.mrf.mxu0
    %v3455 = vadd.f32 0.0, %v3454
    %v3456 = vpop.f32.mrf.mxu0
    %3457 = vmatprep.mubr.bf16.mxu0 0
    %3458 = vmatmul.mubr.bf16.gmra.mxu0 %v3407
    %v3459 = vpop.f32.mrf.mxu0
    %v3460 = vadd.f32 0.0, %v3459
    %v3461 = vpop.f32.mrf.mxu0
    %v3462 = vpop.f32.mrf.mxu0
    %v3463 = vadd.f32 0.0, %v3462
    %v3464 = vpop.f32.mrf.mxu0
    %3465 = vmatprep.mubr.bf16.mxu0 0
    %3466 = vmatmul.mubr.bf16.gmra.mxu0 %v3408
    %v3467 = vpop.f32.mrf.mxu0
    %v3468 = vadd.f32 0.0, %v3467
    %v3469 = vpop.f32.mrf.mxu0
    %v3470 = vpop.f32.mrf.mxu0
    %v3471 = vpop.f32.mrf.mxu0
    %3472 = vdwg.mxu0
    %3473 = vmatprep.subr.bf16.mxu0 0
    %3474 = vmatpush1.bf16.msra.mxu0 %v1398
    %3475 = vmatprep.subr.bf16.mxu0 0
    %3476 = vmatpush1.bf16.msra.mxu0 %v1397
    %3477 = vmatprep.subr.bf16.mxu0 0
    %3478 = vmatpush1.bf16.msra.mxu0 %v1396
    %3479 = vmatprep.subr.bf16.mxu0 0
    %3480 = vmatpush1.bf16.msra.mxu0 %v1395
    %3481 = vmatprep.subr.bf16.mxu0 0
    %3482 = vmatpush1.bf16.msra.mxu0 %v1394
    %3483 = vmatprep.subr.bf16.mxu0 0
    %3484 = vmatpush1.bf16.msra.mxu0 %v1393
    %3485 = vmatprep.subr.bf16.mxu0 0
    %3486 = vmatpush1.bf16.msra.mxu0 %v1392
    %3487 = vmatprep.subr.bf16.mxu0 0
    %3488 = vmatpush1.bf16.msra.mxu0 %v1391
    %3489 = vmatprep.subr.bf16.mxu0 0
    %3490 = vmatpush2.bf16.msra.mxu0 0
    %3491 = vmatprep.subr.bf16.mxu0 0
    %3492 = vmatpush2.bf16.msra.mxu0 0
    %3493 = vmatprep.subr.bf16.mxu0 0
    %3494 = vmatpush2.bf16.msra.mxu0 0
    %3495 = vmatprep.subr.bf16.mxu0 0
    %3496 = vmatpush2.bf16.msra.mxu0 0
    %3497 = vmatprep.subr.bf16.mxu0 0
    %3498 = vmatpush2.bf16.msra.mxu0 0
    %3499 = vmatprep.subr.bf16.mxu0 0
    %3500 = vmatpush2.bf16.msra.mxu0 0
    %3501 = vmatprep.subr.bf16.mxu0 0
    %3502 = vmatpush2.bf16.msra.mxu0 0
    %3503 = vmatprep.subr.bf16.mxu0 0
    %3504 = vmatpush2.bf16.msra.mxu0 0
    %3505 = vmatprep.mubr.bf16.mxu0 0
    %3506 = vmatmul.mubr.bf16.gmra.mxu0 %v3337
    %v3507 = vpop.f32.mrf.mxu0
    %v3508 = vadd.f32 %v3444, %v3507
    %v3509 = vpop.f32.mrf.mxu0
    %v3510 = vpop.f32.mrf.mxu0
    %v3511 = vadd.f32 %v3447, %v3510
    %v3512 = vpop.f32.mrf.mxu0
    %3513 = vmatprep.mubr.bf16.mxu0 0
    %3514 = vmatmul.mubr.bf16.gmra.mxu0 %v3338
    %v3515 = vpop.f32.mrf.mxu0
    %v3516 = vadd.f32 %v3452, %v3515
    %v3517 = vpop.f32.mrf.mxu0
    %v3518 = vpop.f32.mrf.mxu0
    %v3519 = vadd.f32 %v3455, %v3518
    %v3520 = vpop.f32.mrf.mxu0
    %3521 = vmatprep.mubr.bf16.mxu0 0
    %3522 = vmatmul.mubr.bf16.gmra.mxu0 %v3339
    %v3523 = vpop.f32.mrf.mxu0
    %v3524 = vadd.f32 %v3460, %v3523
    %v3525 = vpop.f32.mrf.mxu0
    %v3526 = vpop.f32.mrf.mxu0
    %v3527 = vadd.f32 %v3463, %v3526
    %v3528 = vpop.f32.mrf.mxu0
    %3529 = vmatprep.mubr.bf16.mxu0 0
    %3530 = vmatmul.mubr.bf16.gmra.mxu0 %v3340
    %v3531 = vpop.f32.mrf.mxu0
    %v3532 = vadd.f32 %v3468, %v3531
    %v3533 = vpop.f32.mrf.mxu0
    %v3534 = vpop.f32.mrf.mxu0
    %v3535 = vpop.f32.mrf.mxu0
    %3536 = vdwg.mxu0
    %3537 = vmatprep.subr.bf16.mxu0 0
    %3538 = vmatpush1.bf16.msra.mxu0 %v962
    %3539 = vmatprep.subr.bf16.mxu0 0
    %3540 = vmatpush1.bf16.msra.mxu0 %v961
    %3541 = vmatprep.subr.bf16.mxu0 0
    %3542 = vmatpush1.bf16.msra.mxu0 %v960
    %3543 = vmatprep.subr.bf16.mxu0 0
    %3544 = vmatpush1.bf16.msra.mxu0 %v959
    %3545 = vmatprep.subr.bf16.mxu0 0
    %3546 = vmatpush1.bf16.msra.mxu0 %v958
    %3547 = vmatprep.subr.bf16.mxu0 0
    %3548 = vmatpush1.bf16.msra.mxu0 %v957
    %3549 = vmatprep.subr.bf16.mxu0 0
    %3550 = vmatpush1.bf16.msra.mxu0 %v956
    %3551 = vmatprep.subr.bf16.mxu0 0
    %3552 = vmatpush1.bf16.msra.mxu0 %v955
    %3553 = vmatprep.subr.bf16.mxu0 0
    %3554 = vmatpush2.bf16.msra.mxu0 0
    %3555 = vmatprep.subr.bf16.mxu0 0
    %3556 = vmatpush2.bf16.msra.mxu0 0
    %3557 = vmatprep.subr.bf16.mxu0 0
    %3558 = vmatpush2.bf16.msra.mxu0 0
    %3559 = vmatprep.subr.bf16.mxu0 0
    %3560 = vmatpush2.bf16.msra.mxu0 %v3271
    %3561 = vmatprep.subr.bf16.mxu0 0
    %3562 = vmatpush2.bf16.msra.mxu0 %v966
    %3563 = vmatprep.subr.bf16.mxu0 0
    %3564 = vmatpush2.bf16.msra.mxu0 %v965
    %3565 = vmatprep.subr.bf16.mxu0 0
    %3566 = vmatpush2.bf16.msra.mxu0 %v964
    %3567 = vmatprep.subr.bf16.mxu0 0
    %3568 = vmatpush2.bf16.msra.mxu0 %v963
    %3569 = vmatprep.mubr.bf16.mxu0 %v1513
    %3570 = vmatmul.mubr.bf16.gmra.mxu0 %v1500
    %v3571 = vpop.f32.mrf.mxu0
    %v3572 = vadd.f32 0.0, %v3571
    %v3573 = vpop.f32.mrf.mxu0
    %v3574 = vpop.f32.mrf.mxu0
    %v3575 = vadd.f32 0.0, %v3574
    %v3576 = vpop.f32.mrf.mxu0
    %3577 = vmatprep.mubr.bf16.mxu0 %v1516
    %3578 = vmatmul.mubr.bf16.gmra.mxu0 %v1502
    %v3579 = vpop.f32.mrf.mxu0
    %v3580 = vadd.f32 0.0, %v3579
    %v3581 = vpop.f32.mrf.mxu0
    %v3582 = vpop.f32.mrf.mxu0
    %v3583 = vadd.f32 0.0, %v3582
    %v3584 = vpop.f32.mrf.mxu0
    %3585 = vmatprep.mubr.bf16.mxu0 %v1519
    %3586 = vmatmul.mubr.bf16.gmra.mxu0 %v1504
    %v3587 = vpop.f32.mrf.mxu0
    %v3588 = vadd.f32 0.0, %v3587
    %v3589 = vpop.f32.mrf.mxu0
    %v3590 = vpop.f32.mrf.mxu0
    %v3591 = vadd.f32 0.0, %v3590
    %v3592 = vpop.f32.mrf.mxu0
    %3593 = vmatprep.mubr.bf16.mxu0 %v1522
    %3594 = vmatmul.mubr.bf16.gmra.mxu0 %v1506
    %v3595 = vpop.f32.mrf.mxu0
    %v3596 = vadd.f32 0.0, %v3595
    %v3597 = vpop.f32.mrf.mxu0
    %v3598 = vpop.f32.mrf.mxu0
    %v3599 = vpop.f32.mrf.mxu0
    %3600 = vdwg.mxu0
    %v3601 = vpack.c.bf16 %v3575, %v3572
    %v3602 = vpack.c.bf16 %v3583, %v3580
    %v3603 = vpack.c.bf16 %v3591, %v3588
    %v3604 = vpack.c.bf16 %v3596, %v3596
    %3605 = vmatprep.subr.bf16.mxu0 0
    %3606 = vmatpush1.bf16.msra.mxu0 %v1648
    %3607 = vmatprep.subr.bf16.mxu0 0
    %3608 = vmatpush1.bf16.msra.mxu0 %v1647
    %3609 = vmatprep.subr.bf16.mxu0 0
    %3610 = vmatpush1.bf16.msra.mxu0 %v1646
    %3611 = vmatprep.subr.bf16.mxu0 0
    %3612 = vmatpush1.bf16.msra.mxu0 %v1645
    %3613 = vmatprep.subr.bf16.mxu0 0
    %3614 = vmatpush1.bf16.msra.mxu0 %v1644
    %3615 = vmatprep.subr.bf16.mxu0 0
    %3616 = vmatpush1.bf16.msra.mxu0 %v1643
    %3617 = vmatprep.subr.bf16.mxu0 0
    %3618 = vmatpush1.bf16.msra.mxu0 %v1642
    %3619 = vmatprep.subr.bf16.mxu0 0
    %3620 = vmatpush1.bf16.msra.mxu0 %v1641
    %3621 = vmatprep.subr.bf16.mxu0 0
    %3622 = vmatpush2.bf16.msra.mxu0 0
    %3623 = vmatprep.subr.bf16.mxu0 0
    %3624 = vmatpush2.bf16.msra.mxu0 0
    %3625 = vmatprep.subr.bf16.mxu0 0
    %3626 = vmatpush2.bf16.msra.mxu0 0
    %3627 = vmatprep.subr.bf16.mxu0 0
    %3628 = vmatpush2.bf16.msra.mxu0 0
    %3629 = vmatprep.subr.bf16.mxu0 0
    %3630 = vmatpush2.bf16.msra.mxu0 0
    %3631 = vmatprep.subr.bf16.mxu0 0
    %3632 = vmatpush2.bf16.msra.mxu0 0
    %3633 = vmatprep.subr.bf16.mxu0 0
    %3634 = vmatpush2.bf16.msra.mxu0 0
    %3635 = vmatprep.subr.bf16.mxu0 0
    %3636 = vmatpush2.bf16.msra.mxu0 0
    %3637 = vmatprep.mubr.bf16.mxu0 0
    %3638 = vmatmul.mubr.bf16.gmra.mxu0 %v3601
    %v3639 = vpop.f32.mrf.mxu0
    %v3640 = vadd.f32 0.0, %v3639
    %v3641 = vpop.f32.mrf.mxu0
    %v3642 = vpop.f32.mrf.mxu0
    %v3643 = vadd.f32 0.0, %v3642
    %v3644 = vpop.f32.mrf.mxu0
    %3645 = vmatprep.mubr.bf16.mxu0 0
    %3646 = vmatmul.mubr.bf16.gmra.mxu0 %v3602
    %v3647 = vpop.f32.mrf.mxu0
    %v3648 = vadd.f32 0.0, %v3647
    %v3649 = vpop.f32.mrf.mxu0
    %v3650 = vpop.f32.mrf.mxu0
    %v3651 = vadd.f32 0.0, %v3650
    %v3652 = vpop.f32.mrf.mxu0
    %3653 = vmatprep.mubr.bf16.mxu0 0
    %3654 = vmatmul.mubr.bf16.gmra.mxu0 %v3603
    %v3655 = vpop.f32.mrf.mxu0
    %v3656 = vadd.f32 0.0, %v3655
    %v3657 = vpop.f32.mrf.mxu0
    %v3658 = vpop.f32.mrf.mxu0
    %v3659 = vadd.f32 0.0, %v3658
    %v3660 = vpop.f32.mrf.mxu0
    %3661 = vmatprep.mubr.bf16.mxu0 0
    %3662 = vmatmul.mubr.bf16.gmra.mxu0 %v3604
    %v3663 = vpop.f32.mrf.mxu0
    %v3664 = vadd.f32 0.0, %v3663
    %v3665 = vpop.f32.mrf.mxu0
    %v3666 = vpop.f32.mrf.mxu0
    %v3667 = vpop.f32.mrf.mxu0
    %3668 = vdwg.mxu0
    %v3669 = vadd.f32 %v3508, %v3640
    %v3670 = vadd.f32 %v3511, %v3643
    %v3671 = vadd.f32 %v3516, %v3648
    %v3672 = vadd.f32 %v3519, %v3651
    %v3673 = vadd.f32 %v3524, %v3656
    %v3674 = vadd.f32 %v3527, %v3659
    %v3675 = vadd.f32 %v3532, %v3664
    %3676 = vmatprep.subr.bf16.mxu0 0
    %3677 = vmatpush1.bf16.msra.mxu0 %v962
    %3678 = vmatprep.subr.bf16.mxu0 0
    %3679 = vmatpush1.bf16.msra.mxu0 %v961
    %3680 = vmatprep.subr.bf16.mxu0 0
    %3681 = vmatpush1.bf16.msra.mxu0 %v960
    %3682 = vmatprep.subr.bf16.mxu0 0
    %3683 = vmatpush1.bf16.msra.mxu0 %v959
    %3684 = vmatprep.subr.bf16.mxu0 0
    %3685 = vmatpush1.bf16.msra.mxu0 %v958
    %3686 = vmatprep.subr.bf16.mxu0 0
    %3687 = vmatpush1.bf16.msra.mxu0 %v957
    %3688 = vmatprep.subr.bf16.mxu0 0
    %3689 = vmatpush1.bf16.msra.mxu0 %v956
    %3690 = vmatprep.subr.bf16.mxu0 0
    %3691 = vmatpush1.bf16.msra.mxu0 %v955
    %3692 = vmatprep.subr.bf16.mxu0 0
    %3693 = vmatpush2.bf16.msra.mxu0 0
    %3694 = vmatprep.subr.bf16.mxu0 0
    %3695 = vmatpush2.bf16.msra.mxu0 0
    %3696 = vmatprep.subr.bf16.mxu0 0
    %3697 = vmatpush2.bf16.msra.mxu0 0
    %3698 = vmatprep.subr.bf16.mxu0 0
    %3699 = vmatpush2.bf16.msra.mxu0 %v3271
    %3700 = vmatprep.subr.bf16.mxu0 0
    %3701 = vmatpush2.bf16.msra.mxu0 %v966
    %3702 = vmatprep.subr.bf16.mxu0 0
    %3703 = vmatpush2.bf16.msra.mxu0 %v965
    %3704 = vmatprep.subr.bf16.mxu0 0
    %3705 = vmatpush2.bf16.msra.mxu0 %v964
    %3706 = vmatprep.subr.bf16.mxu0 0
    %3707 = vmatpush2.bf16.msra.mxu0 %v963
    %3708 = vmatprep.mubr.bf16.mxu0 %v1770
    %3709 = vmatmul.mubr.bf16.gmra.mxu0 %v1757
    %v3710 = vpop.f32.mrf.mxu0
    %v3711 = vadd.f32 0.0, %v3710
    %v3712 = vpop.f32.mrf.mxu0
    %v3713 = vpop.f32.mrf.mxu0
    %v3714 = vadd.f32 0.0, %v3713
    %v3715 = vpop.f32.mrf.mxu0
    %3716 = vmatprep.mubr.bf16.mxu0 %v1773
    %3717 = vmatmul.mubr.bf16.gmra.mxu0 %v1759
    %v3718 = vpop.f32.mrf.mxu0
    %v3719 = vadd.f32 0.0, %v3718
    %v3720 = vpop.f32.mrf.mxu0
    %v3721 = vpop.f32.mrf.mxu0
    %v3722 = vadd.f32 0.0, %v3721
    %v3723 = vpop.f32.mrf.mxu0
    %3724 = vmatprep.mubr.bf16.mxu0 %v1776
    %3725 = vmatmul.mubr.bf16.gmra.mxu0 %v1761
    %v3726 = vpop.f32.mrf.mxu0
    %v3727 = vadd.f32 0.0, %v3726
    %v3728 = vpop.f32.mrf.mxu0
    %v3729 = vpop.f32.mrf.mxu0
    %v3730 = vadd.f32 0.0, %v3729
    %v3731 = vpop.f32.mrf.mxu0
    %3732 = vmatprep.mubr.bf16.mxu0 %v1779
    %3733 = vmatmul.mubr.bf16.gmra.mxu0 %v1763
    %v3734 = vpop.f32.mrf.mxu0
    %v3735 = vadd.f32 0.0, %v3734
    %v3736 = vpop.f32.mrf.mxu0
    %v3737 = vpop.f32.mrf.mxu0
    %v3738 = vpop.f32.mrf.mxu0
    %3739 = vdwg.mxu0
    %v3740 = vpack.c.bf16 %v3714, %v3711
    %v3741 = vpack.c.bf16 %v3722, %v3719
    %v3742 = vpack.c.bf16 %v3730, %v3727
    %v3743 = vpack.c.bf16 %v3735, %v3735
    %3744 = vmatprep.subr.bf16.mxu0 0
    %3745 = vmatpush1.bf16.msra.mxu0 %v1905
    %3746 = vmatprep.subr.bf16.mxu0 0
    %3747 = vmatpush1.bf16.msra.mxu0 %v1904
    %3748 = vmatprep.subr.bf16.mxu0 0
    %3749 = vmatpush1.bf16.msra.mxu0 %v1903
    %3750 = vmatprep.subr.bf16.mxu0 0
    %3751 = vmatpush1.bf16.msra.mxu0 %v1902
    %3752 = vmatprep.subr.bf16.mxu0 0
    %3753 = vmatpush1.bf16.msra.mxu0 %v1901
    %3754 = vmatprep.subr.bf16.mxu0 0
    %3755 = vmatpush1.bf16.msra.mxu0 %v1900
    %3756 = vmatprep.subr.bf16.mxu0 0
    %3757 = vmatpush1.bf16.msra.mxu0 %v1899
    %3758 = vmatprep.subr.bf16.mxu0 0
    %3759 = vmatpush1.bf16.msra.mxu0 %v1898
    %3760 = vmatprep.subr.bf16.mxu0 0
    %3761 = vmatpush2.bf16.msra.mxu0 0
    %3762 = vmatprep.subr.bf16.mxu0 0
    %3763 = vmatpush2.bf16.msra.mxu0 0
    %3764 = vmatprep.subr.bf16.mxu0 0
    %3765 = vmatpush2.bf16.msra.mxu0 0
    %3766 = vmatprep.subr.bf16.mxu0 0
    %3767 = vmatpush2.bf16.msra.mxu0 0
    %3768 = vmatprep.subr.bf16.mxu0 0
    %3769 = vmatpush2.bf16.msra.mxu0 0
    %3770 = vmatprep.subr.bf16.mxu0 0
    %3771 = vmatpush2.bf16.msra.mxu0 0
    %3772 = vmatprep.subr.bf16.mxu0 0
    %3773 = vmatpush2.bf16.msra.mxu0 0
    %3774 = vmatprep.subr.bf16.mxu0 0
    %3775 = vmatpush2.bf16.msra.mxu0 0
    %3776 = vmatprep.mubr.bf16.mxu0 0
    %3777 = vmatmul.mubr.bf16.gmra.mxu0 %v3740
    %v3778 = vpop.f32.mrf.mxu0
    %v3779 = vadd.f32 0.0, %v3778
    %v3780 = vpop.f32.mrf.mxu0
    %v3781 = vpop.f32.mrf.mxu0
    %v3782 = vadd.f32 0.0, %v3781
    %v3783 = vpop.f32.mrf.mxu0
    %3784 = vmatprep.mubr.bf16.mxu0 0
    %3785 = vmatmul.mubr.bf16.gmra.mxu0 %v3741
    %v3786 = vpop.f32.mrf.mxu0
    %v3787 = vadd.f32 0.0, %v3786
    %v3788 = vpop.f32.mrf.mxu0
    %v3789 = vpop.f32.mrf.mxu0
    %v3790 = vadd.f32 0.0, %v3789
    %v3791 = vpop.f32.mrf.mxu0
    %3792 = vmatprep.mubr.bf16.mxu0 0
    %3793 = vmatmul.mubr.bf16.gmra.mxu0 %v3742
    %v3794 = vpop.f32.mrf.mxu0
    %v3795 = vadd.f32 0.0, %v3794
    %v3796 = vpop.f32.mrf.mxu0
    %v3797 = vpop.f32.mrf.mxu0
    %v3798 = vadd.f32 0.0, %v3797
    %v3799 = vpop.f32.mrf.mxu0
    %3800 = vmatprep.mubr.bf16.mxu0 0
    %3801 = vmatmul.mubr.bf16.gmra.mxu0 %v3743
    %v3802 = vpop.f32.mrf.mxu0
    %v3803 = vadd.f32 0.0, %v3802
    %v3804 = vpop.f32.mrf.mxu0
    %v3805 = vpop.f32.mrf.mxu0
    %v3806 = vpop.f32.mrf.mxu0
    %3807 = vdwg.mxu0
    %v3808 = vadd.f32 %v3669, %v3779
    %v3809 = vadd.f32 %v3670, %v3782
    %v3810 = vadd.f32 %v3671, %v3787
    %v3811 = vadd.f32 %v3672, %v3790
    %v3812 = vadd.f32 %v3673, %v3795
    %v3813 = vadd.f32 %v3674, %v3798
    %v3814 = vadd.f32 %v3675, %v3803
    %3815 = vmatprep.subr.bf16.mxu0 0
    %3816 = vmatpush1.bf16.msra.mxu0 %v962
    %3817 = vmatprep.subr.bf16.mxu0 0
    %3818 = vmatpush1.bf16.msra.mxu0 %v961
    %3819 = vmatprep.subr.bf16.mxu0 0
    %3820 = vmatpush1.bf16.msra.mxu0 %v960
    %3821 = vmatprep.subr.bf16.mxu0 0
    %3822 = vmatpush1.bf16.msra.mxu0 %v959
    %3823 = vmatprep.subr.bf16.mxu0 0
    %3824 = vmatpush1.bf16.msra.mxu0 %v958
    %3825 = vmatprep.subr.bf16.mxu0 0
    %3826 = vmatpush1.bf16.msra.mxu0 %v957
    %3827 = vmatprep.subr.bf16.mxu0 0
    %3828 = vmatpush1.bf16.msra.mxu0 %v956
    %3829 = vmatprep.subr.bf16.mxu0 0
    %3830 = vmatpush1.bf16.msra.mxu0 %v955
    %3831 = vmatprep.subr.bf16.mxu0 0
    %3832 = vmatpush2.bf16.msra.mxu0 0
    %3833 = vmatprep.subr.bf16.mxu0 0
    %3834 = vmatpush2.bf16.msra.mxu0 0
    %3835 = vmatprep.subr.bf16.mxu0 0
    %3836 = vmatpush2.bf16.msra.mxu0 0
    %3837 = vmatprep.subr.bf16.mxu0 0
    %3838 = vmatpush2.bf16.msra.mxu0 %v3271
    %3839 = vmatprep.subr.bf16.mxu0 0
    %3840 = vmatpush2.bf16.msra.mxu0 %v966
    %3841 = vmatprep.subr.bf16.mxu0 0
    %3842 = vmatpush2.bf16.msra.mxu0 %v965
    %3843 = vmatprep.subr.bf16.mxu0 0
    %3844 = vmatpush2.bf16.msra.mxu0 %v964
    %3845 = vmatprep.subr.bf16.mxu0 0
    %3846 = vmatpush2.bf16.msra.mxu0 %v963
    %3847 = vmatprep.mubr.bf16.mxu0 %v2027
    %3848 = vmatmul.mubr.bf16.gmra.mxu0 %v2014
    %v3849 = vpop.f32.mrf.mxu0
    %v3850 = vadd.f32 0.0, %v3849
    %v3851 = vpop.f32.mrf.mxu0
    %v3852 = vpop.f32.mrf.mxu0
    %v3853 = vadd.f32 0.0, %v3852
    %v3854 = vpop.f32.mrf.mxu0
    %3855 = vmatprep.mubr.bf16.mxu0 %v2030
    %3856 = vmatmul.mubr.bf16.gmra.mxu0 %v2016
    %v3857 = vpop.f32.mrf.mxu0
    %v3858 = vadd.f32 0.0, %v3857
    %v3859 = vpop.f32.mrf.mxu0
    %v3860 = vpop.f32.mrf.mxu0
    %v3861 = vadd.f32 0.0, %v3860
    %v3862 = vpop.f32.mrf.mxu0
    %3863 = vmatprep.mubr.bf16.mxu0 %v2033
    %3864 = vmatmul.mubr.bf16.gmra.mxu0 %v2018
    %v3865 = vpop.f32.mrf.mxu0
    %v3866 = vadd.f32 0.0, %v3865
    %v3867 = vpop.f32.mrf.mxu0
    %v3868 = vpop.f32.mrf.mxu0
    %v3869 = vadd.f32 0.0, %v3868
    %v3870 = vpop.f32.mrf.mxu0
    %3871 = vmatprep.mubr.bf16.mxu0 %v2036
    %3872 = vmatmul.mubr.bf16.gmra.mxu0 %v2020
    %v3873 = vpop.f32.mrf.mxu0
    %v3874 = vadd.f32 0.0, %v3873
    %v3875 = vpop.f32.mrf.mxu0
    %v3876 = vpop.f32.mrf.mxu0
    %v3877 = vpop.f32.mrf.mxu0
    %3878 = vdwg.mxu0
    %v3879 = vpack.c.bf16 %v3853, %v3850
    %v3880 = vpack.c.bf16 %v3861, %v3858
    %v3881 = vpack.c.bf16 %v3869, %v3866
    %v3882 = vpack.c.bf16 %v3874, %v3874
    %3883 = vmatprep.subr.bf16.mxu0 0
    %3884 = vmatpush1.bf16.msra.mxu0 %v2162
    %3885 = vmatprep.subr.bf16.mxu0 0
    %3886 = vmatpush1.bf16.msra.mxu0 %v2161
    %3887 = vmatprep.subr.bf16.mxu0 0
    %3888 = vmatpush1.bf16.msra.mxu0 %v2160
    %3889 = vmatprep.subr.bf16.mxu0 0
    %3890 = vmatpush1.bf16.msra.mxu0 %v2159
    %3891 = vmatprep.subr.bf16.mxu0 0
    %3892 = vmatpush1.bf16.msra.mxu0 %v2158
    %3893 = vmatprep.subr.bf16.mxu0 0
    %3894 = vmatpush1.bf16.msra.mxu0 %v2157
    %3895 = vmatprep.subr.bf16.mxu0 0
    %3896 = vmatpush1.bf16.msra.mxu0 %v2156
    %3897 = vmatprep.subr.bf16.mxu0 0
    %3898 = vmatpush1.bf16.msra.mxu0 %v2155
    %3899 = vmatprep.subr.bf16.mxu0 0
    %3900 = vmatpush2.bf16.msra.mxu0 0
    %3901 = vmatprep.subr.bf16.mxu0 0
    %3902 = vmatpush2.bf16.msra.mxu0 0
    %3903 = vmatprep.subr.bf16.mxu0 0
    %3904 = vmatpush2.bf16.msra.mxu0 0
    %3905 = vmatprep.subr.bf16.mxu0 0
    %3906 = vmatpush2.bf16.msra.mxu0 0
    %3907 = vmatprep.subr.bf16.mxu0 0
    %3908 = vmatpush2.bf16.msra.mxu0 0
    %3909 = vmatprep.subr.bf16.mxu0 0
    %3910 = vmatpush2.bf16.msra.mxu0 0
    %3911 = vmatprep.subr.bf16.mxu0 0
    %3912 = vmatpush2.bf16.msra.mxu0 0
    %3913 = vmatprep.subr.bf16.mxu0 0
    %3914 = vmatpush2.bf16.msra.mxu0 0
    %3915 = vmatprep.mubr.bf16.mxu0 0
    %3916 = vmatmul.mubr.bf16.gmra.mxu0 %v3879
    %v3917 = vpop.f32.mrf.mxu0
    %v3918 = vadd.f32 0.0, %v3917
    %v3919 = vpop.f32.mrf.mxu0
    %v3920 = vpop.f32.mrf.mxu0
    %v3921 = vadd.f32 0.0, %v3920
    %v3922 = vpop.f32.mrf.mxu0
    %3923 = vmatprep.mubr.bf16.mxu0 0
    %3924 = vmatmul.mubr.bf16.gmra.mxu0 %v3880
    %v3925 = vpop.f32.mrf.mxu0
    %v3926 = vadd.f32 0.0, %v3925
    %v3927 = vpop.f32.mrf.mxu0
    %v3928 = vpop.f32.mrf.mxu0
    %v3929 = vadd.f32 0.0, %v3928
    %v3930 = vpop.f32.mrf.mxu0
    %3931 = vmatprep.mubr.bf16.mxu0 0
    %3932 = vmatmul.mubr.bf16.gmra.mxu0 %v3881
    %v3933 = vpop.f32.mrf.mxu0
    %v3934 = vadd.f32 0.0, %v3933
    %v3935 = vpop.f32.mrf.mxu0
    %v3936 = vpop.f32.mrf.mxu0
    %v3937 = vadd.f32 0.0, %v3936
    %v3938 = vpop.f32.mrf.mxu0
    %3939 = vmatprep.mubr.bf16.mxu0 0
    %3940 = vmatmul.mubr.bf16.gmra.mxu0 %v3882
    %v3941 = vpop.f32.mrf.mxu0
    %v3942 = vadd.f32 0.0, %v3941
    %v3943 = vpop.f32.mrf.mxu0
    %v3944 = vpop.f32.mrf.mxu0
    %v3945 = vpop.f32.mrf.mxu0
    %3946 = vdwg.mxu0
    %v3947 = vadd.f32 %v3808, %v3918
    %v3948 = vadd.f32 %v3809, %v3921
    %v3949 = vadd.f32 %v3810, %v3926
    %v3950 = vadd.f32 %v3811, %v3929
    %v3951 = vadd.f32 %v3812, %v3934
    %v3952 = vadd.f32 %v3813, %v3937
    %v3953 = vadd.f32 %v3814, %v3942
    %3954 = vmatprep.subr.bf16.mxu0 0
    %3955 = vmatpush1.bf16.msra.mxu0 %v962
    %3956 = vmatprep.subr.bf16.mxu0 0
    %3957 = vmatpush1.bf16.msra.mxu0 %v961
    %3958 = vmatprep.subr.bf16.mxu0 0
    %3959 = vmatpush1.bf16.msra.mxu0 %v960
    %3960 = vmatprep.subr.bf16.mxu0 0
    %3961 = vmatpush1.bf16.msra.mxu0 %v959
    %3962 = vmatprep.subr.bf16.mxu0 0
    %3963 = vmatpush1.bf16.msra.mxu0 %v958
    %3964 = vmatprep.subr.bf16.mxu0 0
    %3965 = vmatpush1.bf16.msra.mxu0 %v957
    %3966 = vmatprep.subr.bf16.mxu0 0
    %3967 = vmatpush1.bf16.msra.mxu0 %v956
    %3968 = vmatprep.subr.bf16.mxu0 0
    %3969 = vmatpush1.bf16.msra.mxu0 %v955
    %3970 = vmatprep.subr.bf16.mxu0 0
    %3971 = vmatpush2.bf16.msra.mxu0 0
    %3972 = vmatprep.subr.bf16.mxu0 0
    %3973 = vmatpush2.bf16.msra.mxu0 0
    %3974 = vmatprep.subr.bf16.mxu0 0
    %3975 = vmatpush2.bf16.msra.mxu0 0
    %3976 = vmatprep.subr.bf16.mxu0 0
    %3977 = vmatpush2.bf16.msra.mxu0 %v3271
    %3978 = vmatprep.subr.bf16.mxu0 0
    %3979 = vmatpush2.bf16.msra.mxu0 %v966
    %3980 = vmatprep.subr.bf16.mxu0 0
    %3981 = vmatpush2.bf16.msra.mxu0 %v965
    %3982 = vmatprep.subr.bf16.mxu0 0
    %3983 = vmatpush2.bf16.msra.mxu0 %v964
    %3984 = vmatprep.subr.bf16.mxu0 0
    %3985 = vmatpush2.bf16.msra.mxu0 %v963
    %3986 = vmatprep.mubr.bf16.mxu0 %v2284
    %3987 = vmatmul.mubr.bf16.gmra.mxu0 %v2271
    %v3988 = vpop.f32.mrf.mxu0
    %v3989 = vadd.f32 0.0, %v3988
    %v3990 = vpop.f32.mrf.mxu0
    %v3991 = vpop.f32.mrf.mxu0
    %v3992 = vadd.f32 0.0, %v3991
    %v3993 = vpop.f32.mrf.mxu0
    %3994 = vmatprep.mubr.bf16.mxu0 %v2287
    %3995 = vmatmul.mubr.bf16.gmra.mxu0 %v2273
    %v3996 = vpop.f32.mrf.mxu0
    %v3997 = vadd.f32 0.0, %v3996
    %v3998 = vpop.f32.mrf.mxu0
    %v3999 = vpop.f32.mrf.mxu0
    %v4000 = vadd.f32 0.0, %v3999
    %v4001 = vpop.f32.mrf.mxu0
    %4002 = vmatprep.mubr.bf16.mxu0 %v2290
    %4003 = vmatmul.mubr.bf16.gmra.mxu0 %v2275
    %v4004 = vpop.f32.mrf.mxu0
    %v4005 = vadd.f32 0.0, %v4004
    %v4006 = vpop.f32.mrf.mxu0
    %v4007 = vpop.f32.mrf.mxu0
    %v4008 = vadd.f32 0.0, %v4007
    %v4009 = vpop.f32.mrf.mxu0
    %4010 = vmatprep.mubr.bf16.mxu0 %v2293
    %4011 = vmatmul.mubr.bf16.gmra.mxu0 %v2277
    %v4012 = vpop.f32.mrf.mxu0
    %v4013 = vadd.f32 0.0, %v4012
    %v4014 = vpop.f32.mrf.mxu0
    %v4015 = vpop.f32.mrf.mxu0
    %v4016 = vpop.f32.mrf.mxu0
    %4017 = vdwg.mxu0
    %v4018 = vpack.c.bf16 %v3992, %v3989
    %v4019 = vpack.c.bf16 %v4000, %v3997
    %v4020 = vpack.c.bf16 %v4008, %v4005
    %v4021 = vpack.c.bf16 %v4013, %v4013
    %4022 = vmatprep.subr.bf16.mxu0 0
    %4023 = vmatpush1.bf16.msra.mxu0 %v2419
    %4024 = vmatprep.subr.bf16.mxu0 0
    %4025 = vmatpush1.bf16.msra.mxu0 %v2418
    %4026 = vmatprep.subr.bf16.mxu0 0
    %4027 = vmatpush1.bf16.msra.mxu0 %v2417
    %4028 = vmatprep.subr.bf16.mxu0 0
    %4029 = vmatpush1.bf16.msra.mxu0 %v2416
    %4030 = vmatprep.subr.bf16.mxu0 0
    %4031 = vmatpush1.bf16.msra.mxu0 %v2415
    %4032 = vmatprep.subr.bf16.mxu0 0
    %4033 = vmatpush1.bf16.msra.mxu0 %v2414
    %4034 = vmatprep.subr.bf16.mxu0 0
    %4035 = vmatpush1.bf16.msra.mxu0 %v2413
    %4036 = vmatprep.subr.bf16.mxu0 0
    %4037 = vmatpush1.bf16.msra.mxu0 %v2412
    %4038 = vmatprep.subr.bf16.mxu0 0
    %4039 = vmatpush2.bf16.msra.mxu0 0
    %4040 = vmatprep.subr.bf16.mxu0 0
    %4041 = vmatpush2.bf16.msra.mxu0 0
    %4042 = vmatprep.subr.bf16.mxu0 0
    %4043 = vmatpush2.bf16.msra.mxu0 0
    %4044 = vmatprep.subr.bf16.mxu0 0
    %4045 = vmatpush2.bf16.msra.mxu0 0
    %4046 = vmatprep.subr.bf16.mxu0 0
    %4047 = vmatpush2.bf16.msra.mxu0 0
    %4048 = vmatprep.subr.bf16.mxu0 0
    %4049 = vmatpush2.bf16.msra.mxu0 0
    %4050 = vmatprep.subr.bf16.mxu0 0
    %4051 = vmatpush2.bf16.msra.mxu0 0
    %4052 = vmatprep.subr.bf16.mxu0 0
    %4053 = vmatpush2.bf16.msra.mxu0 0
    %4054 = vmatprep.mubr.bf16.mxu0 0
    %4055 = vmatmul.mubr.bf16.gmra.mxu0 %v4018
    %v4056 = vpop.f32.mrf.mxu0
    %v4057 = vadd.f32 0.0, %v4056
    %v4058 = vpop.f32.mrf.mxu0
    %v4059 = vpop.f32.mrf.mxu0
    %v4060 = vadd.f32 0.0, %v4059
    %v4061 = vpop.f32.mrf.mxu0
    %4062 = vmatprep.mubr.bf16.mxu0 0
    %4063 = vmatmul.mubr.bf16.gmra.mxu0 %v4019
    %v4064 = vpop.f32.mrf.mxu0
    %v4065 = vadd.f32 0.0, %v4064
    %v4066 = vpop.f32.mrf.mxu0
    %v4067 = vpop.f32.mrf.mxu0
    %v4068 = vadd.f32 0.0, %v4067
    %v4069 = vpop.f32.mrf.mxu0
    %4070 = vmatprep.mubr.bf16.mxu0 0
    %4071 = vmatmul.mubr.bf16.gmra.mxu0 %v4020
    %v4072 = vpop.f32.mrf.mxu0
    %v4073 = vadd.f32 0.0, %v4072
    %v4074 = vpop.f32.mrf.mxu0
    %v4075 = vpop.f32.mrf.mxu0
    %v4076 = vadd.f32 0.0, %v4075
    %v4077 = vpop.f32.mrf.mxu0
    %4078 = vmatprep.mubr.bf16.mxu0 0
    %4079 = vmatmul.mubr.bf16.gmra.mxu0 %v4021
    %v4080 = vpop.f32.mrf.mxu0
    %v4081 = vadd.f32 0.0, %v4080
    %v4082 = vpop.f32.mrf.mxu0
    %v4083 = vpop.f32.mrf.mxu0
    %v4084 = vpop.f32.mrf.mxu0
    %4085 = vdwg.mxu0
    %v4086 = vadd.f32 %v3947, %v4057
    %v4087 = vadd.f32 %v3948, %v4060
    %v4088 = vadd.f32 %v3949, %v4065
    %v4089 = vadd.f32 %v3950, %v4068
    %v4090 = vadd.f32 %v3951, %v4073
    %v4091 = vadd.f32 %v3952, %v4076
    %v4092 = vadd.f32 %v3953, %v4081
    %4093 = vmatprep.subr.bf16.mxu0 0
    %4094 = vmatpush1.bf16.msra.mxu0 %v962
    %4095 = vmatprep.subr.bf16.mxu0 0
    %4096 = vmatpush1.bf16.msra.mxu0 %v961
    %4097 = vmatprep.subr.bf16.mxu0 0
    %4098 = vmatpush1.bf16.msra.mxu0 %v960
    %4099 = vmatprep.subr.bf16.mxu0 0
    %4100 = vmatpush1.bf16.msra.mxu0 %v959
    %4101 = vmatprep.subr.bf16.mxu0 0
    %4102 = vmatpush1.bf16.msra.mxu0 %v958
    %4103 = vmatprep.subr.bf16.mxu0 0
    %4104 = vmatpush1.bf16.msra.mxu0 %v957
    %4105 = vmatprep.subr.bf16.mxu0 0
    %4106 = vmatpush1.bf16.msra.mxu0 %v956
    %4107 = vmatprep.subr.bf16.mxu0 0
    %4108 = vmatpush1.bf16.msra.mxu0 %v955
    %4109 = vmatprep.subr.bf16.mxu0 0
    %4110 = vmatpush2.bf16.msra.mxu0 0
    %4111 = vmatprep.subr.bf16.mxu0 0
    %4112 = vmatpush2.bf16.msra.mxu0 0
    %4113 = vmatprep.subr.bf16.mxu0 0
    %4114 = vmatpush2.bf16.msra.mxu0 0
    %4115 = vmatprep.subr.bf16.mxu0 0
    %4116 = vmatpush2.bf16.msra.mxu0 %v3271
    %4117 = vmatprep.subr.bf16.mxu0 0
    %4118 = vmatpush2.bf16.msra.mxu0 %v966
    %4119 = vmatprep.subr.bf16.mxu0 0
    %4120 = vmatpush2.bf16.msra.mxu0 %v965
    %4121 = vmatprep.subr.bf16.mxu0 0
    %4122 = vmatpush2.bf16.msra.mxu0 %v964
    %4123 = vmatprep.subr.bf16.mxu0 0
    %4124 = vmatpush2.bf16.msra.mxu0 %v963
    %4125 = vmatprep.mubr.bf16.mxu0 %v2541
    %4126 = vmatmul.mubr.bf16.gmra.mxu0 %v2528
    %v4127 = vpop.f32.mrf.mxu0
    %v4128 = vadd.f32 0.0, %v4127
    %v4129 = vpop.f32.mrf.mxu0
    %v4130 = vpop.f32.mrf.mxu0
    %v4131 = vadd.f32 0.0, %v4130
    %v4132 = vpop.f32.mrf.mxu0
    %4133 = vmatprep.mubr.bf16.mxu0 %v2544
    %4134 = vmatmul.mubr.bf16.gmra.mxu0 %v2530
    %v4135 = vpop.f32.mrf.mxu0
    %v4136 = vadd.f32 0.0, %v4135
    %v4137 = vpop.f32.mrf.mxu0
    %v4138 = vpop.f32.mrf.mxu0
    %v4139 = vadd.f32 0.0, %v4138
    %v4140 = vpop.f32.mrf.mxu0
    %4141 = vmatprep.mubr.bf16.mxu0 %v2547
    %4142 = vmatmul.mubr.bf16.gmra.mxu0 %v2532
    %v4143 = vpop.f32.mrf.mxu0
    %v4144 = vadd.f32 0.0, %v4143
    %v4145 = vpop.f32.mrf.mxu0
    %v4146 = vpop.f32.mrf.mxu0
    %v4147 = vadd.f32 0.0, %v4146
    %v4148 = vpop.f32.mrf.mxu0
    %4149 = vmatprep.mubr.bf16.mxu0 %v2550
    %4150 = vmatmul.mubr.bf16.gmra.mxu0 %v2534
    %v4151 = vpop.f32.mrf.mxu0
    %v4152 = vadd.f32 0.0, %v4151
    %v4153 = vpop.f32.mrf.mxu0
    %v4154 = vpop.f32.mrf.mxu0
    %v4155 = vpop.f32.mrf.mxu0
    %4156 = vdwg.mxu0
    %v4157 = vpack.c.bf16 %v4131, %v4128
    %v4158 = vpack.c.bf16 %v4139, %v4136
    %v4159 = vpack.c.bf16 %v4147, %v4144
    %v4160 = vpack.c.bf16 %v4152, %v4152
    %4161 = vmatprep.subr.bf16.mxu0 0
    %4162 = vmatpush1.bf16.msra.mxu0 %v2676
    %4163 = vmatprep.subr.bf16.mxu0 0
    %4164 = vmatpush1.bf16.msra.mxu0 %v2675
    %4165 = vmatprep.subr.bf16.mxu0 0
    %4166 = vmatpush1.bf16.msra.mxu0 %v2674
    %4167 = vmatprep.subr.bf16.mxu0 0
    %4168 = vmatpush1.bf16.msra.mxu0 %v2673
    %4169 = vmatprep.subr.bf16.mxu0 0
    %4170 = vmatpush1.bf16.msra.mxu0 %v2672
    %4171 = vmatprep.subr.bf16.mxu0 0
    %4172 = vmatpush1.bf16.msra.mxu0 %v2671
    %4173 = vmatprep.subr.bf16.mxu0 0
    %4174 = vmatpush1.bf16.msra.mxu0 %v2670
    %4175 = vmatprep.subr.bf16.mxu0 0
    %4176 = vmatpush1.bf16.msra.mxu0 %v2669
    %4177 = vmatprep.subr.bf16.mxu0 0
    %4178 = vmatpush2.bf16.msra.mxu0 0
    %4179 = vmatprep.subr.bf16.mxu0 0
    %4180 = vmatpush2.bf16.msra.mxu0 0
    %4181 = vmatprep.subr.bf16.mxu0 0
    %4182 = vmatpush2.bf16.msra.mxu0 0
    %4183 = vmatprep.subr.bf16.mxu0 0
    %4184 = vmatpush2.bf16.msra.mxu0 0
    %4185 = vmatprep.subr.bf16.mxu0 0
    %4186 = vmatpush2.bf16.msra.mxu0 0
    %4187 = vmatprep.subr.bf16.mxu0 0
    %4188 = vmatpush2.bf16.msra.mxu0 0
    %4189 = vmatprep.subr.bf16.mxu0 0
    %4190 = vmatpush2.bf16.msra.mxu0 0
    %4191 = vmatprep.subr.bf16.mxu0 0
    %4192 = vmatpush2.bf16.msra.mxu0 0
    %4193 = vmatprep.mubr.bf16.mxu0 0
    %4194 = vmatmul.mubr.bf16.gmra.mxu0 %v4157
    %v4195 = vpop.f32.mrf.mxu0
    %v4196 = vadd.f32 0.0, %v4195
    %v4197 = vpop.f32.mrf.mxu0
    %v4198 = vpop.f32.mrf.mxu0
    %v4199 = vadd.f32 0.0, %v4198
    %v4200 = vpop.f32.mrf.mxu0
    %4201 = vmatprep.mubr.bf16.mxu0 0
    %4202 = vmatmul.mubr.bf16.gmra.mxu0 %v4158
    %v4203 = vpop.f32.mrf.mxu0
    %v4204 = vadd.f32 0.0, %v4203
    %v4205 = vpop.f32.mrf.mxu0
    %v4206 = vpop.f32.mrf.mxu0
    %v4207 = vadd.f32 0.0, %v4206
    %v4208 = vpop.f32.mrf.mxu0
    %4209 = vmatprep.mubr.bf16.mxu0 0
    %4210 = vmatmul.mubr.bf16.gmra.mxu0 %v4159
    %v4211 = vpop.f32.mrf.mxu0
    %v4212 = vadd.f32 0.0, %v4211
    %v4213 = vpop.f32.mrf.mxu0
    %v4214 = vpop.f32.mrf.mxu0
    %v4215 = vadd.f32 0.0, %v4214
    %v4216 = vpop.f32.mrf.mxu0
    %4217 = vmatprep.mubr.bf16.mxu0 0
    %4218 = vmatmul.mubr.bf16.gmra.mxu0 %v4160
    %v4219 = vpop.f32.mrf.mxu0
    %v4220 = vadd.f32 0.0, %v4219
    %v4221 = vpop.f32.mrf.mxu0
    %v4222 = vpop.f32.mrf.mxu0
    %v4223 = vpop.f32.mrf.mxu0
    %4224 = vdwg.mxu0
    %v4225 = vadd.f32 %v4086, %v4196
    %v4226 = vadd.f32 %v4087, %v4199
    %v4227 = vadd.f32 %v4088, %v4204
    %v4228 = vadd.f32 %v4089, %v4207
    %v4229 = vadd.f32 %v4090, %v4212
    %v4230 = vadd.f32 %v4091, %v4215
    %v4231 = vadd.f32 %v4092, %v4220
    %4232 = vmatprep.subr.bf16.mxu0 0
    %4233 = vmatpush1.bf16.msra.mxu0 %v962
    %4234 = vmatprep.subr.bf16.mxu0 0
    %4235 = vmatpush1.bf16.msra.mxu0 %v961
    %4236 = vmatprep.subr.bf16.mxu0 0
    %4237 = vmatpush1.bf16.msra.mxu0 %v960
    %4238 = vmatprep.subr.bf16.mxu0 0
    %4239 = vmatpush1.bf16.msra.mxu0 %v959
    %4240 = vmatprep.subr.bf16.mxu0 0
    %4241 = vmatpush1.bf16.msra.mxu0 %v958
    %4242 = vmatprep.subr.bf16.mxu0 0
    %4243 = vmatpush1.bf16.msra.mxu0 %v957
    %4244 = vmatprep.subr.bf16.mxu0 0
    %4245 = vmatpush1.bf16.msra.mxu0 %v956
    %4246 = vmatprep.subr.bf16.mxu0 0
    %4247 = vmatpush1.bf16.msra.mxu0 %v955
    %4248 = vmatprep.subr.bf16.mxu0 0
    %4249 = vmatpush2.bf16.msra.mxu0 0
    %4250 = vmatprep.subr.bf16.mxu0 0
    %4251 = vmatpush2.bf16.msra.mxu0 0
    %4252 = vmatprep.subr.bf16.mxu0 0
    %4253 = vmatpush2.bf16.msra.mxu0 0
    %4254 = vmatprep.subr.bf16.mxu0 0
    %4255 = vmatpush2.bf16.msra.mxu0 %v3271
    %4256 = vmatprep.subr.bf16.mxu0 0
    %4257 = vmatpush2.bf16.msra.mxu0 %v966
    %4258 = vmatprep.subr.bf16.mxu0 0
    %4259 = vmatpush2.bf16.msra.mxu0 %v965
    %4260 = vmatprep.subr.bf16.mxu0 0
    %4261 = vmatpush2.bf16.msra.mxu0 %v964
    %4262 = vmatprep.subr.bf16.mxu0 0
    %4263 = vmatpush2.bf16.msra.mxu0 %v963
    %4264 = vmatprep.mubr.bf16.mxu0 %v2798
    %4265 = vmatmul.mubr.bf16.gmra.mxu0 %v2785
    %v4266 = vpop.f32.mrf.mxu0
    %v4267 = vadd.f32 0.0, %v4266
    %v4268 = vpop.f32.mrf.mxu0
    %v4269 = vpop.f32.mrf.mxu0
    %v4270 = vadd.f32 0.0, %v4269
    %v4271 = vpop.f32.mrf.mxu0
    %4272 = vmatprep.mubr.bf16.mxu0 %v2801
    %4273 = vmatmul.mubr.bf16.gmra.mxu0 %v2787
    %v4274 = vpop.f32.mrf.mxu0
    %v4275 = vadd.f32 0.0, %v4274
    %v4276 = vpop.f32.mrf.mxu0
    %v4277 = vpop.f32.mrf.mxu0
    %v4278 = vadd.f32 0.0, %v4277
    %v4279 = vpop.f32.mrf.mxu0
    %4280 = vmatprep.mubr.bf16.mxu0 %v2804
    %4281 = vmatmul.mubr.bf16.gmra.mxu0 %v2789
    %v4282 = vpop.f32.mrf.mxu0
    %v4283 = vadd.f32 0.0, %v4282
    %v4284 = vpop.f32.mrf.mxu0
    %v4285 = vpop.f32.mrf.mxu0
    %v4286 = vadd.f32 0.0, %v4285
    %v4287 = vpop.f32.mrf.mxu0
    %4288 = vmatprep.mubr.bf16.mxu0 %v2807
    %4289 = vmatmul.mubr.bf16.gmra.mxu0 %v2791
    %v4290 = vpop.f32.mrf.mxu0
    %v4291 = vadd.f32 0.0, %v4290
    %v4292 = vpop.f32.mrf.mxu0
    %v4293 = vpop.f32.mrf.mxu0
    %v4294 = vpop.f32.mrf.mxu0
    %4295 = vdwg.mxu0
    %v4296 = vpack.c.bf16 %v4270, %v4267
    %v4297 = vpack.c.bf16 %v4278, %v4275
    %v4298 = vpack.c.bf16 %v4286, %v4283
    %v4299 = vpack.c.bf16 %v4291, %v4291
    %4300 = vmatprep.subr.bf16.mxu0 0
    %4301 = vmatpush1.bf16.msra.mxu0 %v2933
    %4302 = vmatprep.subr.bf16.mxu0 0
    %4303 = vmatpush1.bf16.msra.mxu0 %v2932
    %4304 = vmatprep.subr.bf16.mxu0 0
    %4305 = vmatpush1.bf16.msra.mxu0 %v2931
    %4306 = vmatprep.subr.bf16.mxu0 0
    %4307 = vmatpush1.bf16.msra.mxu0 %v2930
    %4308 = vmatprep.subr.bf16.mxu0 0
    %4309 = vmatpush1.bf16.msra.mxu0 %v2929
    %4310 = vmatprep.subr.bf16.mxu0 0
    %4311 = vmatpush1.bf16.msra.mxu0 %v2928
    %4312 = vmatprep.subr.bf16.mxu0 0
    %4313 = vmatpush1.bf16.msra.mxu0 %v2927
    %4314 = vmatprep.subr.bf16.mxu0 0
    %4315 = vmatpush1.bf16.msra.mxu0 %v2926
    %4316 = vmatprep.subr.bf16.mxu0 0
    %4317 = vmatpush2.bf16.msra.mxu0 0
    %4318 = vmatprep.subr.bf16.mxu0 0
    %4319 = vmatpush2.bf16.msra.mxu0 0
    %4320 = vmatprep.subr.bf16.mxu0 0
    %4321 = vmatpush2.bf16.msra.mxu0 0
    %4322 = vmatprep.subr.bf16.mxu0 0
    %4323 = vmatpush2.bf16.msra.mxu0 0
    %4324 = vmatprep.subr.bf16.mxu0 0
    %4325 = vmatpush2.bf16.msra.mxu0 0
    %4326 = vmatprep.subr.bf16.mxu0 0
    %4327 = vmatpush2.bf16.msra.mxu0 0
    %4328 = vmatprep.subr.bf16.mxu0 0
    %4329 = vmatpush2.bf16.msra.mxu0 0
    %4330 = vmatprep.subr.bf16.mxu0 0
    %4331 = vmatpush2.bf16.msra.mxu0 0
    %4332 = vmatprep.mubr.bf16.mxu0 0
    %4333 = vmatmul.mubr.bf16.gmra.mxu0 %v4296
    %v4334 = vpop.f32.mrf.mxu0
    %v4335 = vadd.f32 0.0, %v4334
    %v4336 = vpop.f32.mrf.mxu0
    %v4337 = vpop.f32.mrf.mxu0
    %v4338 = vadd.f32 0.0, %v4337
    %v4339 = vpop.f32.mrf.mxu0
    %4340 = vmatprep.mubr.bf16.mxu0 0
    %4341 = vmatmul.mubr.bf16.gmra.mxu0 %v4297
    %v4342 = vpop.f32.mrf.mxu0
    %v4343 = vadd.f32 0.0, %v4342
    %v4344 = vpop.f32.mrf.mxu0
    %v4345 = vpop.f32.mrf.mxu0
    %v4346 = vadd.f32 0.0, %v4345
    %v4347 = vpop.f32.mrf.mxu0
    %4348 = vmatprep.mubr.bf16.mxu0 0
    %4349 = vmatmul.mubr.bf16.gmra.mxu0 %v4298
    %v4350 = vpop.f32.mrf.mxu0
    %v4351 = vadd.f32 0.0, %v4350
    %v4352 = vpop.f32.mrf.mxu0
    %v4353 = vpop.f32.mrf.mxu0
    %v4354 = vadd.f32 0.0, %v4353
    %v4355 = vpop.f32.mrf.mxu0
    %4356 = vmatprep.mubr.bf16.mxu0 0
    %4357 = vmatmul.mubr.bf16.gmra.mxu0 %v4299
    %v4358 = vpop.f32.mrf.mxu0
    %v4359 = vadd.f32 0.0, %v4358
    %v4360 = vpop.f32.mrf.mxu0
    %v4361 = vpop.f32.mrf.mxu0
    %v4362 = vpop.f32.mrf.mxu0
    %4363 = vdwg.mxu0
    %v4364 = vadd.f32 %v4225, %v4335
    %v4365 = vadd.f32 %v4226, %v4338
    %v4366 = vadd.f32 %v4227, %v4343
    %v4367 = vadd.f32 %v4228, %v4346
    %v4368 = vadd.f32 %v4229, %v4351
    %v4369 = vadd.f32 %v4230, %v4354
    %v4370 = vadd.f32 %v4231, %v4359
    %4371 = vmatprep.subr.bf16.mxu0 0
    %4372 = vmatpush1.bf16.msra.mxu0 %v962
    %4373 = vmatprep.subr.bf16.mxu0 0
    %4374 = vmatpush1.bf16.msra.mxu0 %v961
    %4375 = vmatprep.subr.bf16.mxu0 0
    %4376 = vmatpush1.bf16.msra.mxu0 %v960
    %4377 = vmatprep.subr.bf16.mxu0 0
    %4378 = vmatpush1.bf16.msra.mxu0 %v959
    %4379 = vmatprep.subr.bf16.mxu0 0
    %4380 = vmatpush1.bf16.msra.mxu0 %v958
    %4381 = vmatprep.subr.bf16.mxu0 0
    %4382 = vmatpush1.bf16.msra.mxu0 %v957
    %4383 = vmatprep.subr.bf16.mxu0 0
    %4384 = vmatpush1.bf16.msra.mxu0 %v956
    %4385 = vmatprep.subr.bf16.mxu0 0
    %4386 = vmatpush1.bf16.msra.mxu0 %v955
    %4387 = vmatprep.subr.bf16.mxu0 0
    %4388 = vmatpush2.bf16.msra.mxu0 0
    %4389 = vmatprep.subr.bf16.mxu0 0
    %4390 = vmatpush2.bf16.msra.mxu0 0
    %4391 = vmatprep.subr.bf16.mxu0 0
    %4392 = vmatpush2.bf16.msra.mxu0 0
    %4393 = vmatprep.subr.bf16.mxu0 0
    %4394 = vmatpush2.bf16.msra.mxu0 %v3271
    %4395 = vmatprep.subr.bf16.mxu0 0
    %4396 = vmatpush2.bf16.msra.mxu0 %v966
    %4397 = vmatprep.subr.bf16.mxu0 0
    %4398 = vmatpush2.bf16.msra.mxu0 %v965
    %4399 = vmatprep.subr.bf16.mxu0 0
    %4400 = vmatpush2.bf16.msra.mxu0 %v964
    %4401 = vmatprep.subr.bf16.mxu0 0
    %4402 = vmatpush2.bf16.msra.mxu0 %v963
    %4403 = vmatprep.mubr.bf16.mxu0 %v3055
    %4404 = vmatmul.mubr.bf16.gmra.mxu0 %v3042
    %v4405 = vpop.f32.mrf.mxu0
    %v4406 = vadd.f32 0.0, %v4405
    %v4407 = vpop.f32.mrf.mxu0
    %v4408 = vpop.f32.mrf.mxu0
    %v4409 = vadd.f32 0.0, %v4408
    %v4410 = vpop.f32.mrf.mxu0
    %4411 = vmatprep.mubr.bf16.mxu0 %v3058
    %4412 = vmatmul.mubr.bf16.gmra.mxu0 %v3044
    %v4413 = vpop.f32.mrf.mxu0
    %v4414 = vadd.f32 0.0, %v4413
    %v4415 = vpop.f32.mrf.mxu0
    %v4416 = vpop.f32.mrf.mxu0
    %v4417 = vadd.f32 0.0, %v4416
    %v4418 = vpop.f32.mrf.mxu0
    %4419 = vmatprep.mubr.bf16.mxu0 %v3061
    %4420 = vmatmul.mubr.bf16.gmra.mxu0 %v3046
    %v4421 = vpop.f32.mrf.mxu0
    %v4422 = vadd.f32 0.0, %v4421
    %v4423 = vpop.f32.mrf.mxu0
    %v4424 = vpop.f32.mrf.mxu0
    %v4425 = vadd.f32 0.0, %v4424
    %v4426 = vpop.f32.mrf.mxu0
    %4427 = vmatprep.mubr.bf16.mxu0 %v3064
    %4428 = vmatmul.mubr.bf16.gmra.mxu0 %v3048
    %v4429 = vpop.f32.mrf.mxu0
    %v4430 = vadd.f32 0.0, %v4429
    %v4431 = vpop.f32.mrf.mxu0
    %v4432 = vpop.f32.mrf.mxu0
    %v4433 = vpop.f32.mrf.mxu0
    %4434 = vdwg.mxu0
    %v4435 = vpack.c.bf16 %v4409, %v4406
    %v4436 = vpack.c.bf16 %v4417, %v4414
    %v4437 = vpack.c.bf16 %v4425, %v4422
    %v4438 = vpack.c.bf16 %v4430, %v4430
    %4439 = vmatprep.subr.bf16.mxu0 0
    %4440 = vmatpush1.bf16.msra.mxu0 %v3190
    %4441 = vmatprep.subr.bf16.mxu0 0
    %4442 = vmatpush1.bf16.msra.mxu0 %v3189
    %4443 = vmatprep.subr.bf16.mxu0 0
    %4444 = vmatpush1.bf16.msra.mxu0 %v3188
    %4445 = vmatprep.subr.bf16.mxu0 0
    %4446 = vmatpush1.bf16.msra.mxu0 %v3187
    %4447 = vmatprep.subr.bf16.mxu0 0
    %4448 = vmatpush1.bf16.msra.mxu0 %v3186
    %4449 = vmatprep.subr.bf16.mxu0 0
    %4450 = vmatpush1.bf16.msra.mxu0 %v3185
    %4451 = vmatprep.subr.bf16.mxu0 0
    %4452 = vmatpush1.bf16.msra.mxu0 %v3184
    %4453 = vmatprep.subr.bf16.mxu0 0
    %4454 = vmatpush1.bf16.msra.mxu0 %v3183
    %4455 = vmatprep.subr.bf16.mxu0 0
    %4456 = vmatpush2.bf16.msra.mxu0 0
    %4457 = vmatprep.subr.bf16.mxu0 0
    %4458 = vmatpush2.bf16.msra.mxu0 0
    %4459 = vmatprep.subr.bf16.mxu0 0
    %4460 = vmatpush2.bf16.msra.mxu0 0
    %4461 = vmatprep.subr.bf16.mxu0 0
    %4462 = vmatpush2.bf16.msra.mxu0 0
    %4463 = vmatprep.subr.bf16.mxu0 0
    %4464 = vmatpush2.bf16.msra.mxu0 0
    %4465 = vmatprep.subr.bf16.mxu0 0
    %4466 = vmatpush2.bf16.msra.mxu0 0
    %4467 = vmatprep.subr.bf16.mxu0 0
    %4468 = vmatpush2.bf16.msra.mxu0 0
    %4469 = vmatprep.subr.bf16.mxu0 0
    %4470 = vmatpush2.bf16.msra.mxu0 0
    %4471 = vmatprep.mubr.bf16.mxu0 0
    %4472 = vmatmul.mubr.bf16.gmra.mxu0 %v4435
    %v4473 = vpop.f32.mrf.mxu0
    %v4474 = vadd.f32 0.0, %v4473
    %v4475 = vpop.f32.mrf.mxu0
    %v4476 = vpop.f32.mrf.mxu0
    %v4477 = vadd.f32 0.0, %v4476
    %v4478 = vpop.f32.mrf.mxu0
    %4479 = vmatprep.mubr.bf16.mxu0 0
    %4480 = vmatmul.mubr.bf16.gmra.mxu0 %v4436
    %v4481 = vpop.f32.mrf.mxu0
    %v4482 = vadd.f32 0.0, %v4481
    %v4483 = vpop.f32.mrf.mxu0
    %v4484 = vpop.f32.mrf.mxu0
    %v4485 = vadd.f32 0.0, %v4484
    %v4486 = vpop.f32.mrf.mxu0
    %4487 = vmatprep.mubr.bf16.mxu0 0
    %4488 = vmatmul.mubr.bf16.gmra.mxu0 %v4437
    %v4489 = vpop.f32.mrf.mxu0
    %v4490 = vadd.f32 0.0, %v4489
    %v4491 = vpop.f32.mrf.mxu0
    %v4492 = vpop.f32.mrf.mxu0
    %v4493 = vadd.f32 0.0, %v4492
    %v4494 = vpop.f32.mrf.mxu0
    %4495 = vmatprep.mubr.bf16.mxu0 0
    %4496 = vmatmul.mubr.bf16.gmra.mxu0 %v4438
    %v4497 = vpop.f32.mrf.mxu0
    %v4498 = vadd.f32 0.0, %v4497
    %v4499 = vpop.f32.mrf.mxu0
    %v4500 = vpop.f32.mrf.mxu0
    %v4501 = vpop.f32.mrf.mxu0
    %4502 = vdwg.mxu0
    %v4503 = vadd.f32 %v4364, %v4474
    %v4504 = vadd.f32 %v4365, %v4477
    %v4505 = vadd.f32 %v4366, %v4482
    %v4506 = vadd.f32 %v4367, %v4485
    %v4507 = vadd.f32 %v4368, %v4490
    %v4508 = vadd.f32 %v4369, %v4493
    %v4509 = vadd.f32 %v4370, %v4498
    %v4510 = vadd.f32 %v3263, %v3264
    %v4511 = vadd.f32 %v4510, %v3265
    %v4512 = vadd.f32 %v4511, %v3266
    %v4513 = vadd.f32 %v4512, %v3267
    %v4514 = vadd.f32 %v4513, %v3268
    %vm4515 = vcmask 1040384
    %v4516 = vsel %vm4515, %v3269, 0.0
    %v4517 = vadd.f32 %v4514, %v4516
    %v4518 = vrot.slane %v4517, 4
    %v4519 = vadd.f32 %v4517, %v4518
    %v4520 = vrot.slane %v4519, 2
    %v4521 = vadd.f32 %v4519, %v4520
    %v4522 = vrot.slane %v4521, 1
    %v4523 = vadd.f32 %v4521, %v4522
    %v4524 = vmul.f32 %v3263, %v3263
    %v4525 = vmul.f32 %v3264, %v3264
    %v4526 = vmul.f32 %v3265, %v3265
    %v4527 = vmul.f32 %v3266, %v3266
    %v4528 = vmul.f32 %v3267, %v3267
    %v4529 = vmul.f32 %v3268, %v3268
    %v4530 = vmul.f32 %v3269, %v3269
    %v4531 = vadd.f32 %v4524, %v4525
    %v4532 = vadd.f32 %v4531, %v4526
    %v4533 = vadd.f32 %v4532, %v4527
    %v4534 = vadd.f32 %v4533, %v4528
    %v4535 = vadd.f32 %v4534, %v4529
    %v4536 = vsel %vm4515, %v4530, 0.0
    %v4537 = vadd.f32 %v4535, %v4536
    %v4538 = vrot.slane %v4537, 4
    %v4539 = vadd.f32 %v4537, %v4538
    %v4540 = vrot.slane %v4539, 2
    %v4541 = vadd.f32 %v4539, %v4540
    %v4542 = vrot.slane %v4541, 1
    %v4543 = vadd.f32 %v4541, %v4542
    %v4544 = vadd.f32 %v4503, %v4504
    %v4545 = vadd.f32 %v4544, %v4505
    %v4546 = vadd.f32 %v4545, %v4506
    %v4547 = vadd.f32 %v4546, %v4507
    %v4548 = vadd.f32 %v4547, %v4508
    %v4549 = vsel %vm4515, %v4509, 0.0
    %v4550 = vadd.f32 %v4548, %v4549
    %v4551 = vrot.slane %v4550, 4
    %v4552 = vadd.f32 %v4550, %v4551
    %v4553 = vrot.slane %v4552, 2
    %v4554 = vadd.f32 %v4552, %v4553
    %v4555 = vrot.slane %v4554, 1
    %v4556 = vadd.f32 %v4554, %v4555
    %v4557 = vadd.f32 %v4523, %v4556
    %v4558 = vmul.f32 %v4503, %v4503
    %v4559 = vmul.f32 %v4504, %v4504
    %v4560 = vmul.f32 %v4505, %v4505
    %v4561 = vmul.f32 %v4506, %v4506
    %v4562 = vmul.f32 %v4507, %v4507
    %v4563 = vmul.f32 %v4508, %v4508
    %v4564 = vmul.f32 %v4509, %v4509
    %v4565 = vadd.f32 %v4558, %v4559
    %v4566 = vadd.f32 %v4565, %v4560
    %v4567 = vadd.f32 %v4566, %v4561
    %v4568 = vadd.f32 %v4567, %v4562
    %v4569 = vadd.f32 %v4568, %v4563
    %v4570 = vsel %vm4515, %v4564, 0.0
    %v4571 = vadd.f32 %v4569, %v4570
    %v4572 = vrot.slane %v4571, 4
    %v4573 = vadd.f32 %v4571, %v4572
    %v4574 = vrot.slane %v4573, 2
    %v4575 = vadd.f32 %v4573, %v4574
    %v4576 = vrot.slane %v4575, 1
    %v4577 = vadd.f32 %v4575, %v4576
    %v4578 = vadd.f32 %v4543, %v4577
    %v4579 = vmul.f32 %v4557, 0.010204081
    %v4580 = vmul.f32 %v4578, 0.010204081
    %v4581 = vmul.f32 %v4579, %v4579
    %v4582 = vsub.f32 %v4580, %v4581
    %v4583 = vmax.f32 %v4582, 0.0
    %s4584 = scalar_lea.vmem %s8, 1
    %v4585 = vld [vmem:[%s4584] sm:$0x1]
    %v4586 = vadd.f32 %v4583, 1e-05
    %v4587 = vrsqrt.pop %v4586
    %v4588 = vmul.f32 %v4585, %v4587
    %s4589 = scalar_lea.vmem %s9, 1
    %v4590 = vld [vmem:[%s4589] sm:$0x1]
    %v4591 = vmul.f32 %v4579, %v4588
    %v4592 = vsub.f32 %v4590, %v4591
    %v4594 = vlaneseq
    %v4595 = vshrl.u32 %v4594, 7
    %v4596 = vsub.s32 0, %v4595
    %v4597 = vrot.slane %v4588, %v4596
    %v4599 = vmul.f32 %v3263, %v4597
    %v4600 = vmul.f32 %v3264, %v4597
    %v4601 = vmul.f32 %v3265, %v4597
    %v4602 = vmul.f32 %v3266, %v4597
    %v4603 = vmul.f32 %v3267, %v4597
    %v4604 = vmul.f32 %v3268, %v4597
    %v4605 = vmul.f32 %v3269, %v4597
    %v4607 = vlaneseq
    %v4608 = vshrl.u32 %v4607, 7
    %v4609 = vsub.s32 0, %v4608
    %v4610 = vrot.slane %v4592, %v4609
    %v4612 = vadd.f32 %v4599, %v4610
    %v4613 = vadd.f32 %v4600, %v4610
    %v4614 = vadd.f32 %v4601, %v4610
    %v4615 = vadd.f32 %v4602, %v4610
    %v4616 = vadd.f32 %v4603, %v4610
    %v4617 = vadd.f32 %v4604, %v4610
    %v4618 = vadd.f32 %v4605, %v4610
    %v4619 = vmax.f32 %v4612, 0.0
    %v4620 = vmax.f32 %v4613, 0.0
    %v4621 = vmax.f32 %v4614, 0.0
    %v4622 = vmax.f32 %v4615, 0.0
    %v4623 = vmax.f32 %v4616, 0.0
    %v4624 = vmax.f32 %v4617, 0.0
    %v4625 = vmax.f32 %v4618, 0.0
    %v4626 = vpack.c.bf16 %v4620, %v4619
    %v4627 = vpack.c.bf16 %v4622, %v4621
    %v4628 = vpack.c.bf16 %v4624, %v4623
    %v4629 = vpack.c.bf16 %v4625, %v4625
    %v4630 = vmul.f32 %v4503, %v4597
    %v4631 = vmul.f32 %v4504, %v4597
    %v4632 = vmul.f32 %v4505, %v4597
    %v4633 = vmul.f32 %v4506, %v4597
    %v4634 = vmul.f32 %v4507, %v4597
    %v4635 = vmul.f32 %v4508, %v4597
    %v4636 = vmul.f32 %v4509, %v4597
    %v4637 = vadd.f32 %v4630, %v4610
    %v4638 = vadd.f32 %v4631, %v4610
    %v4639 = vadd.f32 %v4632, %v4610
    %v4640 = vadd.f32 %v4633, %v4610
    %v4641 = vadd.f32 %v4634, %v4610
    %v4642 = vadd.f32 %v4635, %v4610
    %v4643 = vadd.f32 %v4636, %v4610
    %v4644 = vmax.f32 %v4637, 0.0
    %v4645 = vmax.f32 %v4638, 0.0
    %v4646 = vmax.f32 %v4639, 0.0
    %v4647 = vmax.f32 %v4640, 0.0
    %v4648 = vmax.f32 %v4641, 0.0
    %v4649 = vmax.f32 %v4642, 0.0
    %v4650 = vmax.f32 %v4643, 0.0
    %v4651 = vpack.c.bf16 %v4645, %v4644
    %v4652 = vpack.c.bf16 %v4647, %v4646
    %v4653 = vpack.c.bf16 %v4649, %v4648
    %v4654 = vpack.c.bf16 %v4650, %v4650
    %v4655 = vld [vmem:[%s4] sm:$0xf]
    %v4656 = vld [vmem:[%s4 + $0x4] sm:$0xf]
    %v4659 = vunpack.c.l.b16 %v4655
    %v4660 = vunpack.c.l.b16 %v4656
    %v4661 = vpack.c.b16 %v4660, %v4659
    %vm4662 = vcmask 400384
    %v4664 = vsel %vm4662, %v4661, 0
    %v4666 = vsel 0, 4294967295, 65535
    %v4667 = vsel %vm4515, %v4666, 0
    %v4669 = vand.u32 %v4629, %v4667
    %4671 = vmatprep.subr.bf16.mxu0 0
    %4672 = vmatpush1.bf16.msra.mxu0 0
    %4673 = vmatprep.subr.bf16.mxu0 0
    %4674 = vmatpush1.bf16.msra.mxu0 0
    %4675 = vmatprep.subr.bf16.mxu0 0
    %4676 = vmatpush1.bf16.msra.mxu0 0
    %4677 = vmatprep.subr.bf16.mxu0 0
    %4678 = vmatpush1.bf16.msra.mxu0 0
    %4679 = vmatprep.subr.bf16.mxu0 0
    %4680 = vmatpush1.bf16.msra.mxu0 %v4669
    %4681 = vmatprep.subr.bf16.mxu0 0
    %4682 = vmatpush1.bf16.msra.mxu0 %v4628
    %4683 = vmatprep.subr.bf16.mxu0 0
    %4684 = vmatpush1.bf16.msra.mxu0 %v4627
    %4685 = vmatprep.subr.bf16.mxu0 0
    %4686 = vmatpush1.bf16.msra.mxu0 %v4626
    %4687 = vmatprep.subr.bf16.mxu0 0
    %4688 = vmatpush2.bf16.msra.mxu0 0
    %4689 = vmatprep.subr.bf16.mxu0 0
    %4690 = vmatpush2.bf16.msra.mxu0 0
    %4691 = vmatprep.subr.bf16.mxu0 0
    %4692 = vmatpush2.bf16.msra.mxu0 0
    %4693 = vmatprep.subr.bf16.mxu0 0
    %4694 = vmatpush2.bf16.msra.mxu0 0
    %4695 = vmatprep.subr.bf16.mxu0 0
    %4696 = vmatpush2.bf16.msra.mxu0 0
    %4697 = vmatprep.subr.bf16.mxu0 0
    %4698 = vmatpush2.bf16.msra.mxu0 0
    %4699 = vmatprep.subr.bf16.mxu0 0
    %4700 = vmatpush2.bf16.msra.mxu0 0
    %4701 = vmatprep.subr.bf16.mxu0 0
    %4702 = vmatpush2.bf16.msra.mxu0 0
    %4703 = vmatprep.mubr.bf16.mxu0 0
    %4704 = vmatmul.mubr.bf16.gmra.mxu0 %v4664
    %v4705 = vpop.f32.mrf.mxu0
    %v4706 = vadd.f32 0.0, %v4705
    %v4707 = vpop.f32.mrf.mxu0
    %v4708 = vpop.f32.mrf.mxu0
    %v4709 = vadd.f32 0.0, %v4708
    %v4710 = vpop.f32.mrf.mxu0
    %4711 = vdwg.mxu0
    %v4712 = vpack.c.bf16 %v4709, %v4706
    %v4713 = vld [vmem:[%s5] sm:$0xf]
    %v4714 = vld [vmem:[%s5 + $0x4] sm:$0xf]
    %v4715 = vld [vmem:[%s5 + $0x8] sm:$0xf]
    %v4716 = vld [vmem:[%s5 + $0xc] sm:$0xf]
    %v4717 = vld [vmem:[%s5 + $0x10] sm:$0xf]
    %v4718 = vld [vmem:[%s5 + $0x14] sm:$0xf]
    %v4719 = vld [vmem:[%s5 + $0x18] sm:$0xf]
    %v4720 = vld [vmem:[%s5 + $0x1c] sm:$0xf]
    %v4721 = vld [vmem:[%s5 + $0x20] sm:$0xf]
    %v4722 = vld [vmem:[%s5 + $0x24] sm:$0xf]
    %v4723 = vld [vmem:[%s5 + $0x28] sm:$0xf]
    %v4724 = vld [vmem:[%s5 + $0x2c] sm:$0xf]
    %v4725 = vld [vmem:[%s5 + $0x30] sm:$0xf]
    %v4726 = vld [vmem:[%s5 + $0x34] sm:$0xf]
    %v4727 = vld [vmem:[%s5 + $0x38] sm:$0xf]
    %v4728 = vld [vmem:[%s5 + $0x3c] sm:$0xf]
    %s4729 = scalar_lea.vmem %s4, 8
    %v4730 = vld [vmem:[%s4729] sm:$0xf]
    %v4731 = vld [vmem:[%s4729 + $0x4] sm:$0xf]
    %v4734 = vunpack.c.l.b16 %v4730
    %v4735 = vunpack.c.l.b16 %v4731
    %v4736 = vpack.c.b16 %v4735, %v4734
    %v4738 = vsel %vm4662, %v4736, 0
    %4740 = vmatprep.subr.bf16.mxu0 0
    %4741 = vmatpush1.bf16.msra.mxu0 0
    %4742 = vmatprep.subr.bf16.mxu0 0
    %4743 = vmatpush1.bf16.msra.mxu0 0
    %4744 = vmatprep.subr.bf16.mxu0 0
    %4745 = vmatpush1.bf16.msra.mxu0 0
    %4746 = vmatprep.subr.bf16.mxu0 0
    %4747 = vmatpush1.bf16.msra.mxu0 0
    %4748 = vmatprep.subr.bf16.mxu0 0
    %4749 = vmatpush1.bf16.msra.mxu0 %v4669
    %4750 = vmatprep.subr.bf16.mxu0 0
    %4751 = vmatpush1.bf16.msra.mxu0 %v4628
    %4752 = vmatprep.subr.bf16.mxu0 0
    %4753 = vmatpush1.bf16.msra.mxu0 %v4627
    %4754 = vmatprep.subr.bf16.mxu0 0
    %4755 = vmatpush1.bf16.msra.mxu0 %v4626
    %4756 = vmatprep.subr.bf16.mxu0 0
    %4757 = vmatpush2.bf16.msra.mxu0 0
    %4758 = vmatprep.subr.bf16.mxu0 0
    %4759 = vmatpush2.bf16.msra.mxu0 0
    %4760 = vmatprep.subr.bf16.mxu0 0
    %4761 = vmatpush2.bf16.msra.mxu0 0
    %4762 = vmatprep.subr.bf16.mxu0 0
    %4763 = vmatpush2.bf16.msra.mxu0 0
    %4764 = vmatprep.subr.bf16.mxu0 0
    %4765 = vmatpush2.bf16.msra.mxu0 0
    %4766 = vmatprep.subr.bf16.mxu0 0
    %4767 = vmatpush2.bf16.msra.mxu0 0
    %4768 = vmatprep.subr.bf16.mxu0 0
    %4769 = vmatpush2.bf16.msra.mxu0 0
    %4770 = vmatprep.subr.bf16.mxu0 0
    %4771 = vmatpush2.bf16.msra.mxu0 0
    %4772 = vmatprep.mubr.bf16.mxu0 0
    %4773 = vmatmul.mubr.bf16.gmra.mxu0 %v4738
    %v4774 = vpop.f32.mrf.mxu0
    %v4775 = vadd.f32 0.0, %v4774
    %v4776 = vpop.f32.mrf.mxu0
    %v4777 = vpop.f32.mrf.mxu0
    %v4778 = vadd.f32 0.0, %v4777
    %v4779 = vpop.f32.mrf.mxu0
    %4780 = vdwg.mxu0
    %v4781 = vpack.c.bf16 %v4778, %v4775
    %s4782 = scalar_lea.vmem %s5, 64
    %v4783 = vld [vmem:[%s4782] sm:$0xf]
    %v4784 = vld [vmem:[%s4782 + $0x4] sm:$0xf]
    %v4785 = vld [vmem:[%s4782 + $0x8] sm:$0xf]
    %v4786 = vld [vmem:[%s4782 + $0xc] sm:$0xf]
    %v4787 = vld [vmem:[%s4782 + $0x10] sm:$0xf]
    %v4788 = vld [vmem:[%s4782 + $0x14] sm:$0xf]
    %v4789 = vld [vmem:[%s4782 + $0x18] sm:$0xf]
    %v4790 = vld [vmem:[%s4782 + $0x1c] sm:$0xf]
    %v4791 = vld [vmem:[%s4782 + $0x20] sm:$0xf]
    %v4792 = vld [vmem:[%s4782 + $0x24] sm:$0xf]
    %v4793 = vld [vmem:[%s4782 + $0x28] sm:$0xf]
    %v4794 = vld [vmem:[%s4782 + $0x2c] sm:$0xf]
    %v4795 = vld [vmem:[%s4782 + $0x30] sm:$0xf]
    %v4796 = vld [vmem:[%s4782 + $0x34] sm:$0xf]
    %v4797 = vld [vmem:[%s4782 + $0x38] sm:$0xf]
    %v4798 = vld [vmem:[%s4782 + $0x3c] sm:$0xf]
    %v4815 = vunpack.c.l.b16 %v4783
    %v4816 = vunpack.c.l.b16 %v4784
    %v4817 = vunpack.c.l.b16 %v4785
    %v4818 = vunpack.c.l.b16 %v4786
    %v4819 = vunpack.c.l.b16 %v4787
    %v4820 = vunpack.c.l.b16 %v4788
    %v4821 = vunpack.c.l.b16 %v4789
    %v4822 = vunpack.c.l.b16 %v4790
    %v4823 = vunpack.c.l.b16 %v4791
    %v4824 = vunpack.c.l.b16 %v4792
    %v4825 = vunpack.c.l.b16 %v4793
    %v4826 = vunpack.c.l.b16 %v4794
    %v4827 = vunpack.c.l.b16 %v4795
    %v4828 = vunpack.c.l.b16 %v4796
    %v4829 = vunpack.c.l.b16 %v4797
    %v4830 = vunpack.c.l.b16 %v4798
    %v4831 = vpack.c.b16 %v4816, %v4815
    %v4832 = vpack.c.b16 %v4818, %v4817
    %v4833 = vpack.c.b16 %v4820, %v4819
    %v4834 = vpack.c.b16 %v4822, %v4821
    %v4835 = vpack.c.b16 %v4824, %v4823
    %v4836 = vpack.c.b16 %v4826, %v4825
    %v4837 = vpack.c.b16 %v4828, %v4827
    %v4838 = vpack.c.b16 %v4830, %v4829
    %4847 = vmatprep.subr.bf16.mxu0 0
    %4848 = vmatpush1.bf16.msra.mxu0 %v4838
    %4849 = vmatprep.subr.bf16.mxu0 0
    %4850 = vmatpush1.bf16.msra.mxu0 %v4837
    %4851 = vmatprep.subr.bf16.mxu0 0
    %4852 = vmatpush1.bf16.msra.mxu0 %v4836
    %4853 = vmatprep.subr.bf16.mxu0 0
    %4854 = vmatpush1.bf16.msra.mxu0 %v4835
    %4855 = vmatprep.subr.bf16.mxu0 0
    %4856 = vmatpush1.bf16.msra.mxu0 %v4834
    %4857 = vmatprep.subr.bf16.mxu0 0
    %4858 = vmatpush1.bf16.msra.mxu0 %v4833
    %4859 = vmatprep.subr.bf16.mxu0 0
    %4860 = vmatpush1.bf16.msra.mxu0 %v4832
    %4861 = vmatprep.subr.bf16.mxu0 0
    %4862 = vmatpush1.bf16.msra.mxu0 %v4831
    %4863 = vmatprep.subr.bf16.mxu0 0
    %4864 = vmatpush2.bf16.msra.mxu0 0
    %4865 = vmatprep.subr.bf16.mxu0 0
    %4866 = vmatpush2.bf16.msra.mxu0 0
    %4867 = vmatprep.subr.bf16.mxu0 0
    %4868 = vmatpush2.bf16.msra.mxu0 0
    %4869 = vmatprep.subr.bf16.mxu0 0
    %4870 = vmatpush2.bf16.msra.mxu0 0
    %4871 = vmatprep.subr.bf16.mxu0 0
    %4872 = vmatpush2.bf16.msra.mxu0 0
    %4873 = vmatprep.subr.bf16.mxu0 0
    %4874 = vmatpush2.bf16.msra.mxu0 0
    %4875 = vmatprep.subr.bf16.mxu0 0
    %4876 = vmatpush2.bf16.msra.mxu0 0
    %4877 = vmatprep.subr.bf16.mxu0 0
    %4878 = vmatpush2.bf16.msra.mxu0 0
    %4879 = vmatprep.mubr.bf16.mxu0 0
    %4880 = vmatmul.mubr.bf16.gmra.mxu0 %v4781
    %v4881 = vpop.f32.mrf.mxu0
    %v4882 = vadd.f32 0.0, %v4881
    %v4883 = vpop.f32.mrf.mxu0
    %v4884 = vpop.f32.mrf.mxu0
    %v4885 = vadd.f32 0.0, %v4884
    %v4886 = vpop.f32.mrf.mxu0
    %4887 = vdwg.mxu0
    %v4904 = vunpack.c.l.b16 %v4713
    %v4905 = vunpack.c.l.b16 %v4714
    %v4906 = vunpack.c.l.b16 %v4715
    %v4907 = vunpack.c.l.b16 %v4716
    %v4908 = vunpack.c.l.b16 %v4717
    %v4909 = vunpack.c.l.b16 %v4718
    %v4910 = vunpack.c.l.b16 %v4719
    %v4911 = vunpack.c.l.b16 %v4720
    %v4912 = vunpack.c.l.b16 %v4721
    %v4913 = vunpack.c.l.b16 %v4722
    %v4914 = vunpack.c.l.b16 %v4723
    %v4915 = vunpack.c.l.b16 %v4724
    %v4916 = vunpack.c.l.b16 %v4725
    %v4917 = vunpack.c.l.b16 %v4726
    %v4918 = vunpack.c.l.b16 %v4727
    %v4919 = vunpack.c.l.b16 %v4728
    %v4920 = vpack.c.b16 %v4905, %v4904
    %v4921 = vpack.c.b16 %v4907, %v4906
    %v4922 = vpack.c.b16 %v4909, %v4908
    %v4923 = vpack.c.b16 %v4911, %v4910
    %v4924 = vpack.c.b16 %v4913, %v4912
    %v4925 = vpack.c.b16 %v4915, %v4914
    %v4926 = vpack.c.b16 %v4917, %v4916
    %v4927 = vpack.c.b16 %v4919, %v4918
    %4936 = vmatprep.subr.bf16.mxu0 0
    %4937 = vmatpush1.bf16.msra.mxu0 %v4927
    %4938 = vmatprep.subr.bf16.mxu0 0
    %4939 = vmatpush1.bf16.msra.mxu0 %v4926
    %4940 = vmatprep.subr.bf16.mxu0 0
    %4941 = vmatpush1.bf16.msra.mxu0 %v4925
    %4942 = vmatprep.subr.bf16.mxu0 0
    %4943 = vmatpush1.bf16.msra.mxu0 %v4924
    %4944 = vmatprep.subr.bf16.mxu0 0
    %4945 = vmatpush1.bf16.msra.mxu0 %v4923
    %4946 = vmatprep.subr.bf16.mxu0 0
    %4947 = vmatpush1.bf16.msra.mxu0 %v4922
    %4948 = vmatprep.subr.bf16.mxu0 0
    %4949 = vmatpush1.bf16.msra.mxu0 %v4921
    %4950 = vmatprep.subr.bf16.mxu0 0
    %4951 = vmatpush1.bf16.msra.mxu0 %v4920
    %4952 = vmatprep.subr.bf16.mxu0 0
    %4953 = vmatpush2.bf16.msra.mxu0 0
    %4954 = vmatprep.subr.bf16.mxu0 0
    %4955 = vmatpush2.bf16.msra.mxu0 0
    %4956 = vmatprep.subr.bf16.mxu0 0
    %4957 = vmatpush2.bf16.msra.mxu0 0
    %4958 = vmatprep.subr.bf16.mxu0 0
    %4959 = vmatpush2.bf16.msra.mxu0 0
    %4960 = vmatprep.subr.bf16.mxu0 0
    %4961 = vmatpush2.bf16.msra.mxu0 0
    %4962 = vmatprep.subr.bf16.mxu0 0
    %4963 = vmatpush2.bf16.msra.mxu0 0
    %4964 = vmatprep.subr.bf16.mxu0 0
    %4965 = vmatpush2.bf16.msra.mxu0 0
    %4966 = vmatprep.subr.bf16.mxu0 0
    %4967 = vmatpush2.bf16.msra.mxu0 0
    %4968 = vmatprep.mubr.bf16.mxu0 0
    %4969 = vmatmul.mubr.bf16.gmra.mxu0 %v4712
    %v4970 = vpop.f32.mrf.mxu0
    %v4971 = vadd.f32 %v4882, %v4970
    %v4972 = vpop.f32.mrf.mxu0
    %v4973 = vpop.f32.mrf.mxu0
    %v4974 = vadd.f32 %v4885, %v4973
    %v4975 = vpop.f32.mrf.mxu0
    %4976 = vdwg.mxu0
    %s4977 = scalar_lea.vmem %s4, 16
    %v4978 = vld [vmem:[%s4977] sm:$0xf]
    %v4979 = vld [vmem:[%s4977 + $0x4] sm:$0xf]
    %v4982 = vunpack.c.l.b16 %v4978
    %v4983 = vunpack.c.l.b16 %v4979
    %v4984 = vpack.c.b16 %v4983, %v4982
    %v4986 = vsel %vm4662, %v4984, 0
    %4988 = vmatprep.subr.bf16.mxu0 0
    %4989 = vmatpush1.bf16.msra.mxu0 0
    %4990 = vmatprep.subr.bf16.mxu0 0
    %4991 = vmatpush1.bf16.msra.mxu0 0
    %4992 = vmatprep.subr.bf16.mxu0 0
    %4993 = vmatpush1.bf16.msra.mxu0 0
    %4994 = vmatprep.subr.bf16.mxu0 0
    %4995 = vmatpush1.bf16.msra.mxu0 0
    %4996 = vmatprep.subr.bf16.mxu0 0
    %4997 = vmatpush1.bf16.msra.mxu0 %v4669
    %4998 = vmatprep.subr.bf16.mxu0 0
    %4999 = vmatpush1.bf16.msra.mxu0 %v4628
    %5000 = vmatprep.subr.bf16.mxu0 0
    %5001 = vmatpush1.bf16.msra.mxu0 %v4627
    %5002 = vmatprep.subr.bf16.mxu0 0
    %5003 = vmatpush1.bf16.msra.mxu0 %v4626
    %5004 = vmatprep.subr.bf16.mxu0 0
    %5005 = vmatpush2.bf16.msra.mxu0 0
    %5006 = vmatprep.subr.bf16.mxu0 0
    %5007 = vmatpush2.bf16.msra.mxu0 0
    %5008 = vmatprep.subr.bf16.mxu0 0
    %5009 = vmatpush2.bf16.msra.mxu0 0
    %5010 = vmatprep.subr.bf16.mxu0 0
    %5011 = vmatpush2.bf16.msra.mxu0 0
    %5012 = vmatprep.subr.bf16.mxu0 0
    %5013 = vmatpush2.bf16.msra.mxu0 0
    %5014 = vmatprep.subr.bf16.mxu0 0
    %5015 = vmatpush2.bf16.msra.mxu0 0
    %5016 = vmatprep.subr.bf16.mxu0 0
    %5017 = vmatpush2.bf16.msra.mxu0 0
    %5018 = vmatprep.subr.bf16.mxu0 0
    %5019 = vmatpush2.bf16.msra.mxu0 0
    %5020 = vmatprep.mubr.bf16.mxu0 0
    %5021 = vmatmul.mubr.bf16.gmra.mxu0 %v4986
    %v5022 = vpop.f32.mrf.mxu0
    %v5023 = vadd.f32 0.0, %v5022
    %v5024 = vpop.f32.mrf.mxu0
    %v5025 = vpop.f32.mrf.mxu0
    %v5026 = vadd.f32 0.0, %v5025
    %v5027 = vpop.f32.mrf.mxu0
    %5028 = vdwg.mxu0
    %v5029 = vpack.c.bf16 %v5026, %v5023
    %s5030 = scalar_lea.vmem %s5, 128
    %v5031 = vld [vmem:[%s5030] sm:$0xf]
    %v5032 = vld [vmem:[%s5030 + $0x4] sm:$0xf]
    %v5033 = vld [vmem:[%s5030 + $0x8] sm:$0xf]
    %v5034 = vld [vmem:[%s5030 + $0xc] sm:$0xf]
    %v5035 = vld [vmem:[%s5030 + $0x10] sm:$0xf]
    %v5036 = vld [vmem:[%s5030 + $0x14] sm:$0xf]
    %v5037 = vld [vmem:[%s5030 + $0x18] sm:$0xf]
    %v5038 = vld [vmem:[%s5030 + $0x1c] sm:$0xf]
    %v5039 = vld [vmem:[%s5030 + $0x20] sm:$0xf]
    %v5040 = vld [vmem:[%s5030 + $0x24] sm:$0xf]
    %v5041 = vld [vmem:[%s5030 + $0x28] sm:$0xf]
    %v5042 = vld [vmem:[%s5030 + $0x2c] sm:$0xf]
    %v5043 = vld [vmem:[%s5030 + $0x30] sm:$0xf]
    %v5044 = vld [vmem:[%s5030 + $0x34] sm:$0xf]
    %v5045 = vld [vmem:[%s5030 + $0x38] sm:$0xf]
    %v5046 = vld [vmem:[%s5030 + $0x3c] sm:$0xf]
    %v5063 = vunpack.c.l.b16 %v5031
    %v5064 = vunpack.c.l.b16 %v5032
    %v5065 = vunpack.c.l.b16 %v5033
    %v5066 = vunpack.c.l.b16 %v5034
    %v5067 = vunpack.c.l.b16 %v5035
    %v5068 = vunpack.c.l.b16 %v5036
    %v5069 = vunpack.c.l.b16 %v5037
    %v5070 = vunpack.c.l.b16 %v5038
    %v5071 = vunpack.c.l.b16 %v5039
    %v5072 = vunpack.c.l.b16 %v5040
    %v5073 = vunpack.c.l.b16 %v5041
    %v5074 = vunpack.c.l.b16 %v5042
    %v5075 = vunpack.c.l.b16 %v5043
    %v5076 = vunpack.c.l.b16 %v5044
    %v5077 = vunpack.c.l.b16 %v5045
    %v5078 = vunpack.c.l.b16 %v5046
    %v5079 = vpack.c.b16 %v5064, %v5063
    %v5080 = vpack.c.b16 %v5066, %v5065
    %v5081 = vpack.c.b16 %v5068, %v5067
    %v5082 = vpack.c.b16 %v5070, %v5069
    %v5083 = vpack.c.b16 %v5072, %v5071
    %v5084 = vpack.c.b16 %v5074, %v5073
    %v5085 = vpack.c.b16 %v5076, %v5075
    %v5086 = vpack.c.b16 %v5078, %v5077
    %5095 = vmatprep.subr.bf16.mxu0 0
    %5096 = vmatpush1.bf16.msra.mxu0 %v5086
    %5097 = vmatprep.subr.bf16.mxu0 0
    %5098 = vmatpush1.bf16.msra.mxu0 %v5085
    %5099 = vmatprep.subr.bf16.mxu0 0
    %5100 = vmatpush1.bf16.msra.mxu0 %v5084
    %5101 = vmatprep.subr.bf16.mxu0 0
    %5102 = vmatpush1.bf16.msra.mxu0 %v5083
    %5103 = vmatprep.subr.bf16.mxu0 0
    %5104 = vmatpush1.bf16.msra.mxu0 %v5082
    %5105 = vmatprep.subr.bf16.mxu0 0
    %5106 = vmatpush1.bf16.msra.mxu0 %v5081
    %5107 = vmatprep.subr.bf16.mxu0 0
    %5108 = vmatpush1.bf16.msra.mxu0 %v5080
    %5109 = vmatprep.subr.bf16.mxu0 0
    %5110 = vmatpush1.bf16.msra.mxu0 %v5079
    %5111 = vmatprep.subr.bf16.mxu0 0
    %5112 = vmatpush2.bf16.msra.mxu0 0
    %5113 = vmatprep.subr.bf16.mxu0 0
    %5114 = vmatpush2.bf16.msra.mxu0 0
    %5115 = vmatprep.subr.bf16.mxu0 0
    %5116 = vmatpush2.bf16.msra.mxu0 0
    %5117 = vmatprep.subr.bf16.mxu0 0
    %5118 = vmatpush2.bf16.msra.mxu0 0
    %5119 = vmatprep.subr.bf16.mxu0 0
    %5120 = vmatpush2.bf16.msra.mxu0 0
    %5121 = vmatprep.subr.bf16.mxu0 0
    %5122 = vmatpush2.bf16.msra.mxu0 0
    %5123 = vmatprep.subr.bf16.mxu0 0
    %5124 = vmatpush2.bf16.msra.mxu0 0
    %5125 = vmatprep.subr.bf16.mxu0 0
    %5126 = vmatpush2.bf16.msra.mxu0 0
    %5127 = vmatprep.mubr.bf16.mxu0 0
    %5128 = vmatmul.mubr.bf16.gmra.mxu0 %v5029
    %v5129 = vpop.f32.mrf.mxu0
    %v5130 = vadd.f32 0.0, %v5129
    %v5131 = vpop.f32.mrf.mxu0
    %v5132 = vpop.f32.mrf.mxu0
    %v5133 = vadd.f32 0.0, %v5132
    %v5134 = vpop.f32.mrf.mxu0
    %5135 = vdwg.mxu0
    %v5136 = vadd.f32 %v4971, %v5130
    %v5137 = vadd.f32 %v4974, %v5133
    %s5138 = scalar_lea.vmem %s4, 24
    %v5139 = vld [vmem:[%s5138] sm:$0xf]
    %v5140 = vld [vmem:[%s5138 + $0x4] sm:$0xf]
    %v5143 = vunpack.c.l.b16 %v5139
    %v5144 = vunpack.c.l.b16 %v5140
    %v5145 = vpack.c.b16 %v5144, %v5143
    %v5147 = vsel %vm4662, %v5145, 0
    %5149 = vmatprep.subr.bf16.mxu0 0
    %5150 = vmatpush1.bf16.msra.mxu0 0
    %5151 = vmatprep.subr.bf16.mxu0 0
    %5152 = vmatpush1.bf16.msra.mxu0 0
    %5153 = vmatprep.subr.bf16.mxu0 0
    %5154 = vmatpush1.bf16.msra.mxu0 0
    %5155 = vmatprep.subr.bf16.mxu0 0
    %5156 = vmatpush1.bf16.msra.mxu0 0
    %5157 = vmatprep.subr.bf16.mxu0 0
    %5158 = vmatpush1.bf16.msra.mxu0 %v4669
    %5159 = vmatprep.subr.bf16.mxu0 0
    %5160 = vmatpush1.bf16.msra.mxu0 %v4628
    %5161 = vmatprep.subr.bf16.mxu0 0
    %5162 = vmatpush1.bf16.msra.mxu0 %v4627
    %5163 = vmatprep.subr.bf16.mxu0 0
    %5164 = vmatpush1.bf16.msra.mxu0 %v4626
    %5165 = vmatprep.subr.bf16.mxu0 0
    %5166 = vmatpush2.bf16.msra.mxu0 0
    %5167 = vmatprep.subr.bf16.mxu0 0
    %5168 = vmatpush2.bf16.msra.mxu0 0
    %5169 = vmatprep.subr.bf16.mxu0 0
    %5170 = vmatpush2.bf16.msra.mxu0 0
    %5171 = vmatprep.subr.bf16.mxu0 0
    %5172 = vmatpush2.bf16.msra.mxu0 0
    %5173 = vmatprep.subr.bf16.mxu0 0
    %5174 = vmatpush2.bf16.msra.mxu0 0
    %5175 = vmatprep.subr.bf16.mxu0 0
    %5176 = vmatpush2.bf16.msra.mxu0 0
    %5177 = vmatprep.subr.bf16.mxu0 0
    %5178 = vmatpush2.bf16.msra.mxu0 0
    %5179 = vmatprep.subr.bf16.mxu0 0
    %5180 = vmatpush2.bf16.msra.mxu0 0
    %5181 = vmatprep.mubr.bf16.mxu0 0
    %5182 = vmatmul.mubr.bf16.gmra.mxu0 %v5147
    %v5183 = vpop.f32.mrf.mxu0
    %v5184 = vadd.f32 0.0, %v5183
    %v5185 = vpop.f32.mrf.mxu0
    %v5186 = vpop.f32.mrf.mxu0
    %v5187 = vadd.f32 0.0, %v5186
    %v5188 = vpop.f32.mrf.mxu0
    %5189 = vdwg.mxu0
    %v5190 = vpack.c.bf16 %v5187, %v5184
    %s5191 = scalar_lea.vmem %s5, 192
    %v5192 = vld [vmem:[%s5191] sm:$0xf]
    %v5193 = vld [vmem:[%s5191 + $0x4] sm:$0xf]
    %v5194 = vld [vmem:[%s5191 + $0x8] sm:$0xf]
    %v5195 = vld [vmem:[%s5191 + $0xc] sm:$0xf]
    %v5196 = vld [vmem:[%s5191 + $0x10] sm:$0xf]
    %v5197 = vld [vmem:[%s5191 + $0x14] sm:$0xf]
    %v5198 = vld [vmem:[%s5191 + $0x18] sm:$0xf]
    %v5199 = vld [vmem:[%s5191 + $0x1c] sm:$0xf]
    %v5200 = vld [vmem:[%s5191 + $0x20] sm:$0xf]
    %v5201 = vld [vmem:[%s5191 + $0x24] sm:$0xf]
    %v5202 = vld [vmem:[%s5191 + $0x28] sm:$0xf]
    %v5203 = vld [vmem:[%s5191 + $0x2c] sm:$0xf]
    %v5204 = vld [vmem:[%s5191 + $0x30] sm:$0xf]
    %v5205 = vld [vmem:[%s5191 + $0x34] sm:$0xf]
    %v5206 = vld [vmem:[%s5191 + $0x38] sm:$0xf]
    %v5207 = vld [vmem:[%s5191 + $0x3c] sm:$0xf]
    %v5224 = vunpack.c.l.b16 %v5192
    %v5225 = vunpack.c.l.b16 %v5193
    %v5226 = vunpack.c.l.b16 %v5194
    %v5227 = vunpack.c.l.b16 %v5195
    %v5228 = vunpack.c.l.b16 %v5196
    %v5229 = vunpack.c.l.b16 %v5197
    %v5230 = vunpack.c.l.b16 %v5198
    %v5231 = vunpack.c.l.b16 %v5199
    %v5232 = vunpack.c.l.b16 %v5200
    %v5233 = vunpack.c.l.b16 %v5201
    %v5234 = vunpack.c.l.b16 %v5202
    %v5235 = vunpack.c.l.b16 %v5203
    %v5236 = vunpack.c.l.b16 %v5204
    %v5237 = vunpack.c.l.b16 %v5205
    %v5238 = vunpack.c.l.b16 %v5206
    %v5239 = vunpack.c.l.b16 %v5207
    %v5240 = vpack.c.b16 %v5225, %v5224
    %v5241 = vpack.c.b16 %v5227, %v5226
    %v5242 = vpack.c.b16 %v5229, %v5228
    %v5243 = vpack.c.b16 %v5231, %v5230
    %v5244 = vpack.c.b16 %v5233, %v5232
    %v5245 = vpack.c.b16 %v5235, %v5234
    %v5246 = vpack.c.b16 %v5237, %v5236
    %v5247 = vpack.c.b16 %v5239, %v5238
    %5256 = vmatprep.subr.bf16.mxu0 0
    %5257 = vmatpush1.bf16.msra.mxu0 %v5247
    %5258 = vmatprep.subr.bf16.mxu0 0
    %5259 = vmatpush1.bf16.msra.mxu0 %v5246
    %5260 = vmatprep.subr.bf16.mxu0 0
    %5261 = vmatpush1.bf16.msra.mxu0 %v5245
    %5262 = vmatprep.subr.bf16.mxu0 0
    %5263 = vmatpush1.bf16.msra.mxu0 %v5244
    %5264 = vmatprep.subr.bf16.mxu0 0
    %5265 = vmatpush1.bf16.msra.mxu0 %v5243
    %5266 = vmatprep.subr.bf16.mxu0 0
    %5267 = vmatpush1.bf16.msra.mxu0 %v5242
    %5268 = vmatprep.subr.bf16.mxu0 0
    %5269 = vmatpush1.bf16.msra.mxu0 %v5241
    %5270 = vmatprep.subr.bf16.mxu0 0
    %5271 = vmatpush1.bf16.msra.mxu0 %v5240
    %5272 = vmatprep.subr.bf16.mxu0 0
    %5273 = vmatpush2.bf16.msra.mxu0 0
    %5274 = vmatprep.subr.bf16.mxu0 0
    %5275 = vmatpush2.bf16.msra.mxu0 0
    %5276 = vmatprep.subr.bf16.mxu0 0
    %5277 = vmatpush2.bf16.msra.mxu0 0
    %5278 = vmatprep.subr.bf16.mxu0 0
    %5279 = vmatpush2.bf16.msra.mxu0 0
    %5280 = vmatprep.subr.bf16.mxu0 0
    %5281 = vmatpush2.bf16.msra.mxu0 0
    %5282 = vmatprep.subr.bf16.mxu0 0
    %5283 = vmatpush2.bf16.msra.mxu0 0
    %5284 = vmatprep.subr.bf16.mxu0 0
    %5285 = vmatpush2.bf16.msra.mxu0 0
    %5286 = vmatprep.subr.bf16.mxu0 0
    %5287 = vmatpush2.bf16.msra.mxu0 0
    %5288 = vmatprep.mubr.bf16.mxu0 0
    %5289 = vmatmul.mubr.bf16.gmra.mxu0 %v5190
    %v5290 = vpop.f32.mrf.mxu0
    %v5291 = vadd.f32 0.0, %v5290
    %v5292 = vpop.f32.mrf.mxu0
    %v5293 = vpop.f32.mrf.mxu0
    %v5294 = vadd.f32 0.0, %v5293
    %v5295 = vpop.f32.mrf.mxu0
    %5296 = vdwg.mxu0
    %v5297 = vadd.f32 %v5136, %v5291
    %v5298 = vadd.f32 %v5137, %v5294
    %s5299 = scalar_lea.vmem %s4, 32
    %v5300 = vld [vmem:[%s5299] sm:$0xf]
    %v5301 = vld [vmem:[%s5299 + $0x4] sm:$0xf]
    %v5304 = vunpack.c.l.b16 %v5300
    %v5305 = vunpack.c.l.b16 %v5301
    %v5306 = vpack.c.b16 %v5305, %v5304
    %v5308 = vsel %vm4662, %v5306, 0
    %5310 = vmatprep.subr.bf16.mxu0 0
    %5311 = vmatpush1.bf16.msra.mxu0 0
    %5312 = vmatprep.subr.bf16.mxu0 0
    %5313 = vmatpush1.bf16.msra.mxu0 0
    %5314 = vmatprep.subr.bf16.mxu0 0
    %5315 = vmatpush1.bf16.msra.mxu0 0
    %5316 = vmatprep.subr.bf16.mxu0 0
    %5317 = vmatpush1.bf16.msra.mxu0 0
    %5318 = vmatprep.subr.bf16.mxu0 0
    %5319 = vmatpush1.bf16.msra.mxu0 %v4669
    %5320 = vmatprep.subr.bf16.mxu0 0
    %5321 = vmatpush1.bf16.msra.mxu0 %v4628
    %5322 = vmatprep.subr.bf16.mxu0 0
    %5323 = vmatpush1.bf16.msra.mxu0 %v4627
    %5324 = vmatprep.subr.bf16.mxu0 0
    %5325 = vmatpush1.bf16.msra.mxu0 %v4626
    %5326 = vmatprep.subr.bf16.mxu0 0
    %5327 = vmatpush2.bf16.msra.mxu0 0
    %5328 = vmatprep.subr.bf16.mxu0 0
    %5329 = vmatpush2.bf16.msra.mxu0 0
    %5330 = vmatprep.subr.bf16.mxu0 0
    %5331 = vmatpush2.bf16.msra.mxu0 0
    %5332 = vmatprep.subr.bf16.mxu0 0
    %5333 = vmatpush2.bf16.msra.mxu0 0
    %5334 = vmatprep.subr.bf16.mxu0 0
    %5335 = vmatpush2.bf16.msra.mxu0 0
    %5336 = vmatprep.subr.bf16.mxu0 0
    %5337 = vmatpush2.bf16.msra.mxu0 0
    %5338 = vmatprep.subr.bf16.mxu0 0
    %5339 = vmatpush2.bf16.msra.mxu0 0
    %5340 = vmatprep.subr.bf16.mxu0 0
    %5341 = vmatpush2.bf16.msra.mxu0 0
    %5342 = vmatprep.mubr.bf16.mxu0 0
    %5343 = vmatmul.mubr.bf16.gmra.mxu0 %v5308
    %v5344 = vpop.f32.mrf.mxu0
    %v5345 = vadd.f32 0.0, %v5344
    %v5346 = vpop.f32.mrf.mxu0
    %v5347 = vpop.f32.mrf.mxu0
    %v5348 = vadd.f32 0.0, %v5347
    %v5349 = vpop.f32.mrf.mxu0
    %5350 = vdwg.mxu0
    %v5351 = vpack.c.bf16 %v5348, %v5345
    %s5352 = scalar_lea.vmem %s5, 256
    %v5353 = vld [vmem:[%s5352] sm:$0xf]
    %v5354 = vld [vmem:[%s5352 + $0x4] sm:$0xf]
    %v5355 = vld [vmem:[%s5352 + $0x8] sm:$0xf]
    %v5356 = vld [vmem:[%s5352 + $0xc] sm:$0xf]
    %v5357 = vld [vmem:[%s5352 + $0x10] sm:$0xf]
    %v5358 = vld [vmem:[%s5352 + $0x14] sm:$0xf]
    %v5359 = vld [vmem:[%s5352 + $0x18] sm:$0xf]
    %v5360 = vld [vmem:[%s5352 + $0x1c] sm:$0xf]
    %v5361 = vld [vmem:[%s5352 + $0x20] sm:$0xf]
    %v5362 = vld [vmem:[%s5352 + $0x24] sm:$0xf]
    %v5363 = vld [vmem:[%s5352 + $0x28] sm:$0xf]
    %v5364 = vld [vmem:[%s5352 + $0x2c] sm:$0xf]
    %v5365 = vld [vmem:[%s5352 + $0x30] sm:$0xf]
    %v5366 = vld [vmem:[%s5352 + $0x34] sm:$0xf]
    %v5367 = vld [vmem:[%s5352 + $0x38] sm:$0xf]
    %v5368 = vld [vmem:[%s5352 + $0x3c] sm:$0xf]
    %v5385 = vunpack.c.l.b16 %v5353
    %v5386 = vunpack.c.l.b16 %v5354
    %v5387 = vunpack.c.l.b16 %v5355
    %v5388 = vunpack.c.l.b16 %v5356
    %v5389 = vunpack.c.l.b16 %v5357
    %v5390 = vunpack.c.l.b16 %v5358
    %v5391 = vunpack.c.l.b16 %v5359
    %v5392 = vunpack.c.l.b16 %v5360
    %v5393 = vunpack.c.l.b16 %v5361
    %v5394 = vunpack.c.l.b16 %v5362
    %v5395 = vunpack.c.l.b16 %v5363
    %v5396 = vunpack.c.l.b16 %v5364
    %v5397 = vunpack.c.l.b16 %v5365
    %v5398 = vunpack.c.l.b16 %v5366
    %v5399 = vunpack.c.l.b16 %v5367
    %v5400 = vunpack.c.l.b16 %v5368
    %v5401 = vpack.c.b16 %v5386, %v5385
    %v5402 = vpack.c.b16 %v5388, %v5387
    %v5403 = vpack.c.b16 %v5390, %v5389
    %v5404 = vpack.c.b16 %v5392, %v5391
    %v5405 = vpack.c.b16 %v5394, %v5393
    %v5406 = vpack.c.b16 %v5396, %v5395
    %v5407 = vpack.c.b16 %v5398, %v5397
    %v5408 = vpack.c.b16 %v5400, %v5399
    %5417 = vmatprep.subr.bf16.mxu0 0
    %5418 = vmatpush1.bf16.msra.mxu0 %v5408
    %5419 = vmatprep.subr.bf16.mxu0 0
    %5420 = vmatpush1.bf16.msra.mxu0 %v5407
    %5421 = vmatprep.subr.bf16.mxu0 0
    %5422 = vmatpush1.bf16.msra.mxu0 %v5406
    %5423 = vmatprep.subr.bf16.mxu0 0
    %5424 = vmatpush1.bf16.msra.mxu0 %v5405
    %5425 = vmatprep.subr.bf16.mxu0 0
    %5426 = vmatpush1.bf16.msra.mxu0 %v5404
    %5427 = vmatprep.subr.bf16.mxu0 0
    %5428 = vmatpush1.bf16.msra.mxu0 %v5403
    %5429 = vmatprep.subr.bf16.mxu0 0
    %5430 = vmatpush1.bf16.msra.mxu0 %v5402
    %5431 = vmatprep.subr.bf16.mxu0 0
    %5432 = vmatpush1.bf16.msra.mxu0 %v5401
    %5433 = vmatprep.subr.bf16.mxu0 0
    %5434 = vmatpush2.bf16.msra.mxu0 0
    %5435 = vmatprep.subr.bf16.mxu0 0
    %5436 = vmatpush2.bf16.msra.mxu0 0
    %5437 = vmatprep.subr.bf16.mxu0 0
    %5438 = vmatpush2.bf16.msra.mxu0 0
    %5439 = vmatprep.subr.bf16.mxu0 0
    %5440 = vmatpush2.bf16.msra.mxu0 0
    %5441 = vmatprep.subr.bf16.mxu0 0
    %5442 = vmatpush2.bf16.msra.mxu0 0
    %5443 = vmatprep.subr.bf16.mxu0 0
    %5444 = vmatpush2.bf16.msra.mxu0 0
    %5445 = vmatprep.subr.bf16.mxu0 0
    %5446 = vmatpush2.bf16.msra.mxu0 0
    %5447 = vmatprep.subr.bf16.mxu0 0
    %5448 = vmatpush2.bf16.msra.mxu0 0
    %5449 = vmatprep.mubr.bf16.mxu0 0
    %5450 = vmatmul.mubr.bf16.gmra.mxu0 %v5351
    %v5451 = vpop.f32.mrf.mxu0
    %v5452 = vadd.f32 0.0, %v5451
    %v5453 = vpop.f32.mrf.mxu0
    %v5454 = vpop.f32.mrf.mxu0
    %v5455 = vadd.f32 0.0, %v5454
    %v5456 = vpop.f32.mrf.mxu0
    %5457 = vdwg.mxu0
    %v5458 = vadd.f32 %v5297, %v5452
    %v5459 = vadd.f32 %v5298, %v5455
    %s5460 = scalar_lea.vmem %s4, 40
    %v5461 = vld [vmem:[%s5460] sm:$0xf]
    %v5462 = vld [vmem:[%s5460 + $0x4] sm:$0xf]
    %v5465 = vunpack.c.l.b16 %v5461
    %v5466 = vunpack.c.l.b16 %v5462
    %v5467 = vpack.c.b16 %v5466, %v5465
    %v5469 = vsel %vm4662, %v5467, 0
    %5471 = vmatprep.subr.bf16.mxu0 0
    %5472 = vmatpush1.bf16.msra.mxu0 0
    %5473 = vmatprep.subr.bf16.mxu0 0
    %5474 = vmatpush1.bf16.msra.mxu0 0
    %5475 = vmatprep.subr.bf16.mxu0 0
    %5476 = vmatpush1.bf16.msra.mxu0 0
    %5477 = vmatprep.subr.bf16.mxu0 0
    %5478 = vmatpush1.bf16.msra.mxu0 0
    %5479 = vmatprep.subr.bf16.mxu0 0
    %5480 = vmatpush1.bf16.msra.mxu0 %v4669
    %5481 = vmatprep.subr.bf16.mxu0 0
    %5482 = vmatpush1.bf16.msra.mxu0 %v4628
    %5483 = vmatprep.subr.bf16.mxu0 0
    %5484 = vmatpush1.bf16.msra.mxu0 %v4627
    %5485 = vmatprep.subr.bf16.mxu0 0
    %5486 = vmatpush1.bf16.msra.mxu0 %v4626
    %5487 = vmatprep.subr.bf16.mxu0 0
    %5488 = vmatpush2.bf16.msra.mxu0 0
    %5489 = vmatprep.subr.bf16.mxu0 0
    %5490 = vmatpush2.bf16.msra.mxu0 0
    %5491 = vmatprep.subr.bf16.mxu0 0
    %5492 = vmatpush2.bf16.msra.mxu0 0
    %5493 = vmatprep.subr.bf16.mxu0 0
    %5494 = vmatpush2.bf16.msra.mxu0 0
    %5495 = vmatprep.subr.bf16.mxu0 0
    %5496 = vmatpush2.bf16.msra.mxu0 0
    %5497 = vmatprep.subr.bf16.mxu0 0
    %5498 = vmatpush2.bf16.msra.mxu0 0
    %5499 = vmatprep.subr.bf16.mxu0 0
    %5500 = vmatpush2.bf16.msra.mxu0 0
    %5501 = vmatprep.subr.bf16.mxu0 0
    %5502 = vmatpush2.bf16.msra.mxu0 0
    %5503 = vmatprep.mubr.bf16.mxu0 0
    %5504 = vmatmul.mubr.bf16.gmra.mxu0 %v5469
    %v5505 = vpop.f32.mrf.mxu0
    %v5506 = vadd.f32 0.0, %v5505
    %v5507 = vpop.f32.mrf.mxu0
    %v5508 = vpop.f32.mrf.mxu0
    %v5509 = vadd.f32 0.0, %v5508
    %v5510 = vpop.f32.mrf.mxu0
    %5511 = vdwg.mxu0
    %v5512 = vpack.c.bf16 %v5509, %v5506
    %s5513 = scalar_lea.vmem %s5, 320
    %v5514 = vld [vmem:[%s5513] sm:$0xf]
    %v5515 = vld [vmem:[%s5513 + $0x4] sm:$0xf]
    %v5516 = vld [vmem:[%s5513 + $0x8] sm:$0xf]
    %v5517 = vld [vmem:[%s5513 + $0xc] sm:$0xf]
    %v5518 = vld [vmem:[%s5513 + $0x10] sm:$0xf]
    %v5519 = vld [vmem:[%s5513 + $0x14] sm:$0xf]
    %v5520 = vld [vmem:[%s5513 + $0x18] sm:$0xf]
    %v5521 = vld [vmem:[%s5513 + $0x1c] sm:$0xf]
    %v5522 = vld [vmem:[%s5513 + $0x20] sm:$0xf]
    %v5523 = vld [vmem:[%s5513 + $0x24] sm:$0xf]
    %v5524 = vld [vmem:[%s5513 + $0x28] sm:$0xf]
    %v5525 = vld [vmem:[%s5513 + $0x2c] sm:$0xf]
    %v5526 = vld [vmem:[%s5513 + $0x30] sm:$0xf]
    %v5527 = vld [vmem:[%s5513 + $0x34] sm:$0xf]
    %v5528 = vld [vmem:[%s5513 + $0x38] sm:$0xf]
    %v5529 = vld [vmem:[%s5513 + $0x3c] sm:$0xf]
    %v5546 = vunpack.c.l.b16 %v5514
    %v5547 = vunpack.c.l.b16 %v5515
    %v5548 = vunpack.c.l.b16 %v5516
    %v5549 = vunpack.c.l.b16 %v5517
    %v5550 = vunpack.c.l.b16 %v5518
    %v5551 = vunpack.c.l.b16 %v5519
    %v5552 = vunpack.c.l.b16 %v5520
    %v5553 = vunpack.c.l.b16 %v5521
    %v5554 = vunpack.c.l.b16 %v5522
    %v5555 = vunpack.c.l.b16 %v5523
    %v5556 = vunpack.c.l.b16 %v5524
    %v5557 = vunpack.c.l.b16 %v5525
    %v5558 = vunpack.c.l.b16 %v5526
    %v5559 = vunpack.c.l.b16 %v5527
    %v5560 = vunpack.c.l.b16 %v5528
    %v5561 = vunpack.c.l.b16 %v5529
    %v5562 = vpack.c.b16 %v5547, %v5546
    %v5563 = vpack.c.b16 %v5549, %v5548
    %v5564 = vpack.c.b16 %v5551, %v5550
    %v5565 = vpack.c.b16 %v5553, %v5552
    %v5566 = vpack.c.b16 %v5555, %v5554
    %v5567 = vpack.c.b16 %v5557, %v5556
    %v5568 = vpack.c.b16 %v5559, %v5558
    %v5569 = vpack.c.b16 %v5561, %v5560
    %5578 = vmatprep.subr.bf16.mxu0 0
    %5579 = vmatpush1.bf16.msra.mxu0 %v5569
    %5580 = vmatprep.subr.bf16.mxu0 0
    %5581 = vmatpush1.bf16.msra.mxu0 %v5568
    %5582 = vmatprep.subr.bf16.mxu0 0
    %5583 = vmatpush1.bf16.msra.mxu0 %v5567
    %5584 = vmatprep.subr.bf16.mxu0 0
    %5585 = vmatpush1.bf16.msra.mxu0 %v5566
    %5586 = vmatprep.subr.bf16.mxu0 0
    %5587 = vmatpush1.bf16.msra.mxu0 %v5565
    %5588 = vmatprep.subr.bf16.mxu0 0
    %5589 = vmatpush1.bf16.msra.mxu0 %v5564
    %5590 = vmatprep.subr.bf16.mxu0 0
    %5591 = vmatpush1.bf16.msra.mxu0 %v5563
    %5592 = vmatprep.subr.bf16.mxu0 0
    %5593 = vmatpush1.bf16.msra.mxu0 %v5562
    %5594 = vmatprep.subr.bf16.mxu0 0
    %5595 = vmatpush2.bf16.msra.mxu0 0
    %5596 = vmatprep.subr.bf16.mxu0 0
    %5597 = vmatpush2.bf16.msra.mxu0 0
    %5598 = vmatprep.subr.bf16.mxu0 0
    %5599 = vmatpush2.bf16.msra.mxu0 0
    %5600 = vmatprep.subr.bf16.mxu0 0
    %5601 = vmatpush2.bf16.msra.mxu0 0
    %5602 = vmatprep.subr.bf16.mxu0 0
    %5603 = vmatpush2.bf16.msra.mxu0 0
    %5604 = vmatprep.subr.bf16.mxu0 0
    %5605 = vmatpush2.bf16.msra.mxu0 0
    %5606 = vmatprep.subr.bf16.mxu0 0
    %5607 = vmatpush2.bf16.msra.mxu0 0
    %5608 = vmatprep.subr.bf16.mxu0 0
    %5609 = vmatpush2.bf16.msra.mxu0 0
    %5610 = vmatprep.mubr.bf16.mxu0 0
    %5611 = vmatmul.mubr.bf16.gmra.mxu0 %v5512
    %v5612 = vpop.f32.mrf.mxu0
    %v5613 = vadd.f32 0.0, %v5612
    %v5614 = vpop.f32.mrf.mxu0
    %v5615 = vpop.f32.mrf.mxu0
    %v5616 = vadd.f32 0.0, %v5615
    %v5617 = vpop.f32.mrf.mxu0
    %5618 = vdwg.mxu0
    %v5619 = vadd.f32 %v5458, %v5613
    %v5620 = vadd.f32 %v5459, %v5616
    %s5621 = scalar_lea.vmem %s4, 48
    %v5622 = vld [vmem:[%s5621] sm:$0xf]
    %v5623 = vld [vmem:[%s5621 + $0x4] sm:$0xf]
    %v5626 = vunpack.c.l.b16 %v5622
    %v5627 = vunpack.c.l.b16 %v5623
    %v5628 = vpack.c.b16 %v5627, %v5626
    %v5630 = vsel %vm4662, %v5628, 0
    %5632 = vmatprep.subr.bf16.mxu0 0
    %5633 = vmatpush1.bf16.msra.mxu0 0
    %5634 = vmatprep.subr.bf16.mxu0 0
    %5635 = vmatpush1.bf16.msra.mxu0 0
    %5636 = vmatprep.subr.bf16.mxu0 0
    %5637 = vmatpush1.bf16.msra.mxu0 0
    %5638 = vmatprep.subr.bf16.mxu0 0
    %5639 = vmatpush1.bf16.msra.mxu0 0
    %5640 = vmatprep.subr.bf16.mxu0 0
    %5641 = vmatpush1.bf16.msra.mxu0 %v4669
    %5642 = vmatprep.subr.bf16.mxu0 0
    %5643 = vmatpush1.bf16.msra.mxu0 %v4628
    %5644 = vmatprep.subr.bf16.mxu0 0
    %5645 = vmatpush1.bf16.msra.mxu0 %v4627
    %5646 = vmatprep.subr.bf16.mxu0 0
    %5647 = vmatpush1.bf16.msra.mxu0 %v4626
    %5648 = vmatprep.subr.bf16.mxu0 0
    %5649 = vmatpush2.bf16.msra.mxu0 0
    %5650 = vmatprep.subr.bf16.mxu0 0
    %5651 = vmatpush2.bf16.msra.mxu0 0
    %5652 = vmatprep.subr.bf16.mxu0 0
    %5653 = vmatpush2.bf16.msra.mxu0 0
    %5654 = vmatprep.subr.bf16.mxu0 0
    %5655 = vmatpush2.bf16.msra.mxu0 0
    %5656 = vmatprep.subr.bf16.mxu0 0
    %5657 = vmatpush2.bf16.msra.mxu0 0
    %5658 = vmatprep.subr.bf16.mxu0 0
    %5659 = vmatpush2.bf16.msra.mxu0 0
    %5660 = vmatprep.subr.bf16.mxu0 0
    %5661 = vmatpush2.bf16.msra.mxu0 0
    %5662 = vmatprep.subr.bf16.mxu0 0
    %5663 = vmatpush2.bf16.msra.mxu0 0
    %5664 = vmatprep.mubr.bf16.mxu0 0
    %5665 = vmatmul.mubr.bf16.gmra.mxu0 %v5630
    %v5666 = vpop.f32.mrf.mxu0
    %v5667 = vadd.f32 0.0, %v5666
    %v5668 = vpop.f32.mrf.mxu0
    %v5669 = vpop.f32.mrf.mxu0
    %v5670 = vadd.f32 0.0, %v5669
    %v5671 = vpop.f32.mrf.mxu0
    %5672 = vdwg.mxu0
    %v5673 = vpack.c.bf16 %v5670, %v5667
    %s5674 = scalar_lea.vmem %s5, 384
    %v5675 = vld [vmem:[%s5674] sm:$0xf]
    %v5676 = vld [vmem:[%s5674 + $0x4] sm:$0xf]
    %v5677 = vld [vmem:[%s5674 + $0x8] sm:$0xf]
    %v5678 = vld [vmem:[%s5674 + $0xc] sm:$0xf]
    %v5679 = vld [vmem:[%s5674 + $0x10] sm:$0xf]
    %v5680 = vld [vmem:[%s5674 + $0x14] sm:$0xf]
    %v5681 = vld [vmem:[%s5674 + $0x18] sm:$0xf]
    %v5682 = vld [vmem:[%s5674 + $0x1c] sm:$0xf]
    %v5683 = vld [vmem:[%s5674 + $0x20] sm:$0xf]
    %v5684 = vld [vmem:[%s5674 + $0x24] sm:$0xf]
    %v5685 = vld [vmem:[%s5674 + $0x28] sm:$0xf]
    %v5686 = vld [vmem:[%s5674 + $0x2c] sm:$0xf]
    %v5687 = vld [vmem:[%s5674 + $0x30] sm:$0xf]
    %v5688 = vld [vmem:[%s5674 + $0x34] sm:$0xf]
    %v5689 = vld [vmem:[%s5674 + $0x38] sm:$0xf]
    %v5690 = vld [vmem:[%s5674 + $0x3c] sm:$0xf]
    %v5707 = vunpack.c.l.b16 %v5675
    %v5708 = vunpack.c.l.b16 %v5676
    %v5709 = vunpack.c.l.b16 %v5677
    %v5710 = vunpack.c.l.b16 %v5678
    %v5711 = vunpack.c.l.b16 %v5679
    %v5712 = vunpack.c.l.b16 %v5680
    %v5713 = vunpack.c.l.b16 %v5681
    %v5714 = vunpack.c.l.b16 %v5682
    %v5715 = vunpack.c.l.b16 %v5683
    %v5716 = vunpack.c.l.b16 %v5684
    %v5717 = vunpack.c.l.b16 %v5685
    %v5718 = vunpack.c.l.b16 %v5686
    %v5719 = vunpack.c.l.b16 %v5687
    %v5720 = vunpack.c.l.b16 %v5688
    %v5721 = vunpack.c.l.b16 %v5689
    %v5722 = vunpack.c.l.b16 %v5690
    %v5723 = vpack.c.b16 %v5708, %v5707
    %v5724 = vpack.c.b16 %v5710, %v5709
    %v5725 = vpack.c.b16 %v5712, %v5711
    %v5726 = vpack.c.b16 %v5714, %v5713
    %v5727 = vpack.c.b16 %v5716, %v5715
    %v5728 = vpack.c.b16 %v5718, %v5717
    %v5729 = vpack.c.b16 %v5720, %v5719
    %v5730 = vpack.c.b16 %v5722, %v5721
    %5739 = vmatprep.subr.bf16.mxu0 0
    %5740 = vmatpush1.bf16.msra.mxu0 %v5730
    %5741 = vmatprep.subr.bf16.mxu0 0
    %5742 = vmatpush1.bf16.msra.mxu0 %v5729
    %5743 = vmatprep.subr.bf16.mxu0 0
    %5744 = vmatpush1.bf16.msra.mxu0 %v5728
    %5745 = vmatprep.subr.bf16.mxu0 0
    %5746 = vmatpush1.bf16.msra.mxu0 %v5727
    %5747 = vmatprep.subr.bf16.mxu0 0
    %5748 = vmatpush1.bf16.msra.mxu0 %v5726
    %5749 = vmatprep.subr.bf16.mxu0 0
    %5750 = vmatpush1.bf16.msra.mxu0 %v5725
    %5751 = vmatprep.subr.bf16.mxu0 0
    %5752 = vmatpush1.bf16.msra.mxu0 %v5724
    %5753 = vmatprep.subr.bf16.mxu0 0
    %5754 = vmatpush1.bf16.msra.mxu0 %v5723
    %5755 = vmatprep.subr.bf16.mxu0 0
    %5756 = vmatpush2.bf16.msra.mxu0 0
    %5757 = vmatprep.subr.bf16.mxu0 0
    %5758 = vmatpush2.bf16.msra.mxu0 0
    %5759 = vmatprep.subr.bf16.mxu0 0
    %5760 = vmatpush2.bf16.msra.mxu0 0
    %5761 = vmatprep.subr.bf16.mxu0 0
    %5762 = vmatpush2.bf16.msra.mxu0 0
    %5763 = vmatprep.subr.bf16.mxu0 0
    %5764 = vmatpush2.bf16.msra.mxu0 0
    %5765 = vmatprep.subr.bf16.mxu0 0
    %5766 = vmatpush2.bf16.msra.mxu0 0
    %5767 = vmatprep.subr.bf16.mxu0 0
    %5768 = vmatpush2.bf16.msra.mxu0 0
    %5769 = vmatprep.subr.bf16.mxu0 0
    %5770 = vmatpush2.bf16.msra.mxu0 0
    %5771 = vmatprep.mubr.bf16.mxu0 0
    %5772 = vmatmul.mubr.bf16.gmra.mxu0 %v5673
    %v5773 = vpop.f32.mrf.mxu0
    %v5774 = vadd.f32 0.0, %v5773
    %v5775 = vpop.f32.mrf.mxu0
    %v5776 = vpop.f32.mrf.mxu0
    %v5777 = vadd.f32 0.0, %v5776
    %v5778 = vpop.f32.mrf.mxu0
    %5779 = vdwg.mxu0
    %v5780 = vadd.f32 %v5619, %v5774
    %v5781 = vadd.f32 %v5620, %v5777
    %s5782 = scalar_lea.vmem %s4, 56
    %v5783 = vld [vmem:[%s5782] sm:$0xf]
    %v5784 = vld [vmem:[%s5782 + $0x4] sm:$0xf]
    %v5787 = vunpack.c.l.b16 %v5783
    %v5788 = vunpack.c.l.b16 %v5784
    %v5789 = vpack.c.b16 %v5788, %v5787
    %v5791 = vsel %vm4662, %v5789, 0
    %5793 = vmatprep.subr.bf16.mxu0 0
    %5794 = vmatpush1.bf16.msra.mxu0 0
    %5795 = vmatprep.subr.bf16.mxu0 0
    %5796 = vmatpush1.bf16.msra.mxu0 0
    %5797 = vmatprep.subr.bf16.mxu0 0
    %5798 = vmatpush1.bf16.msra.mxu0 0
    %5799 = vmatprep.subr.bf16.mxu0 0
    %5800 = vmatpush1.bf16.msra.mxu0 0
    %5801 = vmatprep.subr.bf16.mxu0 0
    %5802 = vmatpush1.bf16.msra.mxu0 %v4669
    %5803 = vmatprep.subr.bf16.mxu0 0
    %5804 = vmatpush1.bf16.msra.mxu0 %v4628
    %5805 = vmatprep.subr.bf16.mxu0 0
    %5806 = vmatpush1.bf16.msra.mxu0 %v4627
    %5807 = vmatprep.subr.bf16.mxu0 0
    %5808 = vmatpush1.bf16.msra.mxu0 %v4626
    %5809 = vmatprep.subr.bf16.mxu0 0
    %5810 = vmatpush2.bf16.msra.mxu0 0
    %5811 = vmatprep.subr.bf16.mxu0 0
    %5812 = vmatpush2.bf16.msra.mxu0 0
    %5813 = vmatprep.subr.bf16.mxu0 0
    %5814 = vmatpush2.bf16.msra.mxu0 0
    %5815 = vmatprep.subr.bf16.mxu0 0
    %5816 = vmatpush2.bf16.msra.mxu0 0
    %5817 = vmatprep.subr.bf16.mxu0 0
    %5818 = vmatpush2.bf16.msra.mxu0 0
    %5819 = vmatprep.subr.bf16.mxu0 0
    %5820 = vmatpush2.bf16.msra.mxu0 0
    %5821 = vmatprep.subr.bf16.mxu0 0
    %5822 = vmatpush2.bf16.msra.mxu0 0
    %5823 = vmatprep.subr.bf16.mxu0 0
    %5824 = vmatpush2.bf16.msra.mxu0 0
    %5825 = vmatprep.mubr.bf16.mxu0 0
    %5826 = vmatmul.mubr.bf16.gmra.mxu0 %v5791
    %v5827 = vpop.f32.mrf.mxu0
    %v5828 = vadd.f32 0.0, %v5827
    %v5829 = vpop.f32.mrf.mxu0
    %v5830 = vpop.f32.mrf.mxu0
    %v5831 = vadd.f32 0.0, %v5830
    %v5832 = vpop.f32.mrf.mxu0
    %5833 = vdwg.mxu0
    %v5834 = vpack.c.bf16 %v5831, %v5828
    %s5835 = scalar_lea.vmem %s5, 448
    %v5836 = vld [vmem:[%s5835] sm:$0xf]
    %v5837 = vld [vmem:[%s5835 + $0x4] sm:$0xf]
    %v5838 = vld [vmem:[%s5835 + $0x8] sm:$0xf]
    %v5839 = vld [vmem:[%s5835 + $0xc] sm:$0xf]
    %v5840 = vld [vmem:[%s5835 + $0x10] sm:$0xf]
    %v5841 = vld [vmem:[%s5835 + $0x14] sm:$0xf]
    %v5842 = vld [vmem:[%s5835 + $0x18] sm:$0xf]
    %v5843 = vld [vmem:[%s5835 + $0x1c] sm:$0xf]
    %v5844 = vld [vmem:[%s5835 + $0x20] sm:$0xf]
    %v5845 = vld [vmem:[%s5835 + $0x24] sm:$0xf]
    %v5846 = vld [vmem:[%s5835 + $0x28] sm:$0xf]
    %v5847 = vld [vmem:[%s5835 + $0x2c] sm:$0xf]
    %v5848 = vld [vmem:[%s5835 + $0x30] sm:$0xf]
    %v5849 = vld [vmem:[%s5835 + $0x34] sm:$0xf]
    %v5850 = vld [vmem:[%s5835 + $0x38] sm:$0xf]
    %v5851 = vld [vmem:[%s5835 + $0x3c] sm:$0xf]
    %v5868 = vunpack.c.l.b16 %v5836
    %v5869 = vunpack.c.l.b16 %v5837
    %v5870 = vunpack.c.l.b16 %v5838
    %v5871 = vunpack.c.l.b16 %v5839
    %v5872 = vunpack.c.l.b16 %v5840
    %v5873 = vunpack.c.l.b16 %v5841
    %v5874 = vunpack.c.l.b16 %v5842
    %v5875 = vunpack.c.l.b16 %v5843
    %v5876 = vunpack.c.l.b16 %v5844
    %v5877 = vunpack.c.l.b16 %v5845
    %v5878 = vunpack.c.l.b16 %v5846
    %v5879 = vunpack.c.l.b16 %v5847
    %v5880 = vunpack.c.l.b16 %v5848
    %v5881 = vunpack.c.l.b16 %v5849
    %v5882 = vunpack.c.l.b16 %v5850
    %v5883 = vunpack.c.l.b16 %v5851
    %v5884 = vpack.c.b16 %v5869, %v5868
    %v5885 = vpack.c.b16 %v5871, %v5870
    %v5886 = vpack.c.b16 %v5873, %v5872
    %v5887 = vpack.c.b16 %v5875, %v5874
    %v5888 = vpack.c.b16 %v5877, %v5876
    %v5889 = vpack.c.b16 %v5879, %v5878
    %v5890 = vpack.c.b16 %v5881, %v5880
    %v5891 = vpack.c.b16 %v5883, %v5882
    %5900 = vmatprep.subr.bf16.mxu0 0
    %5901 = vmatpush1.bf16.msra.mxu0 %v5891
    %5902 = vmatprep.subr.bf16.mxu0 0
    %5903 = vmatpush1.bf16.msra.mxu0 %v5890
    %5904 = vmatprep.subr.bf16.mxu0 0
    %5905 = vmatpush1.bf16.msra.mxu0 %v5889
    %5906 = vmatprep.subr.bf16.mxu0 0
    %5907 = vmatpush1.bf16.msra.mxu0 %v5888
    %5908 = vmatprep.subr.bf16.mxu0 0
    %5909 = vmatpush1.bf16.msra.mxu0 %v5887
    %5910 = vmatprep.subr.bf16.mxu0 0
    %5911 = vmatpush1.bf16.msra.mxu0 %v5886
    %5912 = vmatprep.subr.bf16.mxu0 0
    %5913 = vmatpush1.bf16.msra.mxu0 %v5885
    %5914 = vmatprep.subr.bf16.mxu0 0
    %5915 = vmatpush1.bf16.msra.mxu0 %v5884
    %5916 = vmatprep.subr.bf16.mxu0 0
    %5917 = vmatpush2.bf16.msra.mxu0 0
    %5918 = vmatprep.subr.bf16.mxu0 0
    %5919 = vmatpush2.bf16.msra.mxu0 0
    %5920 = vmatprep.subr.bf16.mxu0 0
    %5921 = vmatpush2.bf16.msra.mxu0 0
    %5922 = vmatprep.subr.bf16.mxu0 0
    %5923 = vmatpush2.bf16.msra.mxu0 0
    %5924 = vmatprep.subr.bf16.mxu0 0
    %5925 = vmatpush2.bf16.msra.mxu0 0
    %5926 = vmatprep.subr.bf16.mxu0 0
    %5927 = vmatpush2.bf16.msra.mxu0 0
    %5928 = vmatprep.subr.bf16.mxu0 0
    %5929 = vmatpush2.bf16.msra.mxu0 0
    %5930 = vmatprep.subr.bf16.mxu0 0
    %5931 = vmatpush2.bf16.msra.mxu0 0
    %5932 = vmatprep.mubr.bf16.mxu0 0
    %5933 = vmatmul.mubr.bf16.gmra.mxu0 %v5834
    %v5934 = vpop.f32.mrf.mxu0
    %v5935 = vadd.f32 0.0, %v5934
    %v5936 = vpop.f32.mrf.mxu0
    %v5937 = vpop.f32.mrf.mxu0
    %v5938 = vadd.f32 0.0, %v5937
    %v5939 = vpop.f32.mrf.mxu0
    %5940 = vdwg.mxu0
    %v5941 = vadd.f32 %v5780, %v5935
    %v5942 = vadd.f32 %v5781, %v5938
    %s5943 = scalar_lea.vmem %s4, 64
    %v5944 = vld [vmem:[%s5943] sm:$0xf]
    %v5945 = vld [vmem:[%s5943 + $0x4] sm:$0xf]
    %v5948 = vunpack.c.l.b16 %v5944
    %v5949 = vunpack.c.l.b16 %v5945
    %v5950 = vpack.c.b16 %v5949, %v5948
    %v5952 = vsel %vm4662, %v5950, 0
    %5954 = vmatprep.subr.bf16.mxu0 0
    %5955 = vmatpush1.bf16.msra.mxu0 0
    %5956 = vmatprep.subr.bf16.mxu0 0
    %5957 = vmatpush1.bf16.msra.mxu0 0
    %5958 = vmatprep.subr.bf16.mxu0 0
    %5959 = vmatpush1.bf16.msra.mxu0 0
    %5960 = vmatprep.subr.bf16.mxu0 0
    %5961 = vmatpush1.bf16.msra.mxu0 0
    %5962 = vmatprep.subr.bf16.mxu0 0
    %5963 = vmatpush1.bf16.msra.mxu0 %v4669
    %5964 = vmatprep.subr.bf16.mxu0 0
    %5965 = vmatpush1.bf16.msra.mxu0 %v4628
    %5966 = vmatprep.subr.bf16.mxu0 0
    %5967 = vmatpush1.bf16.msra.mxu0 %v4627
    %5968 = vmatprep.subr.bf16.mxu0 0
    %5969 = vmatpush1.bf16.msra.mxu0 %v4626
    %5970 = vmatprep.subr.bf16.mxu0 0
    %5971 = vmatpush2.bf16.msra.mxu0 0
    %5972 = vmatprep.subr.bf16.mxu0 0
    %5973 = vmatpush2.bf16.msra.mxu0 0
    %5974 = vmatprep.subr.bf16.mxu0 0
    %5975 = vmatpush2.bf16.msra.mxu0 0
    %5976 = vmatprep.subr.bf16.mxu0 0
    %5977 = vmatpush2.bf16.msra.mxu0 0
    %5978 = vmatprep.subr.bf16.mxu0 0
    %5979 = vmatpush2.bf16.msra.mxu0 0
    %5980 = vmatprep.subr.bf16.mxu0 0
    %5981 = vmatpush2.bf16.msra.mxu0 0
    %5982 = vmatprep.subr.bf16.mxu0 0
    %5983 = vmatpush2.bf16.msra.mxu0 0
    %5984 = vmatprep.subr.bf16.mxu0 0
    %5985 = vmatpush2.bf16.msra.mxu0 0
    %5986 = vmatprep.mubr.bf16.mxu0 0
    %5987 = vmatmul.mubr.bf16.gmra.mxu0 %v5952
    %v5988 = vpop.f32.mrf.mxu0
    %v5989 = vadd.f32 0.0, %v5988
    %v5990 = vpop.f32.mrf.mxu0
    %v5991 = vpop.f32.mrf.mxu0
    %v5992 = vadd.f32 0.0, %v5991
    %v5993 = vpop.f32.mrf.mxu0
    %5994 = vdwg.mxu0
    %v5995 = vpack.c.bf16 %v5992, %v5989
    %s5996 = scalar_lea.vmem %s5, 512
    %v5997 = vld [vmem:[%s5996] sm:$0xf]
    %v5998 = vld [vmem:[%s5996 + $0x4] sm:$0xf]
    %v5999 = vld [vmem:[%s5996 + $0x8] sm:$0xf]
    %v6000 = vld [vmem:[%s5996 + $0xc] sm:$0xf]
    %v6001 = vld [vmem:[%s5996 + $0x10] sm:$0xf]
    %v6002 = vld [vmem:[%s5996 + $0x14] sm:$0xf]
    %v6003 = vld [vmem:[%s5996 + $0x18] sm:$0xf]
    %v6004 = vld [vmem:[%s5996 + $0x1c] sm:$0xf]
    %v6005 = vld [vmem:[%s5996 + $0x20] sm:$0xf]
    %v6006 = vld [vmem:[%s5996 + $0x24] sm:$0xf]
    %v6007 = vld [vmem:[%s5996 + $0x28] sm:$0xf]
    %v6008 = vld [vmem:[%s5996 + $0x2c] sm:$0xf]
    %v6009 = vld [vmem:[%s5996 + $0x30] sm:$0xf]
    %v6010 = vld [vmem:[%s5996 + $0x34] sm:$0xf]
    %v6011 = vld [vmem:[%s5996 + $0x38] sm:$0xf]
    %v6012 = vld [vmem:[%s5996 + $0x3c] sm:$0xf]
    %v6029 = vunpack.c.l.b16 %v5997
    %v6030 = vunpack.c.l.b16 %v5998
    %v6031 = vunpack.c.l.b16 %v5999
    %v6032 = vunpack.c.l.b16 %v6000
    %v6033 = vunpack.c.l.b16 %v6001
    %v6034 = vunpack.c.l.b16 %v6002
    %v6035 = vunpack.c.l.b16 %v6003
    %v6036 = vunpack.c.l.b16 %v6004
    %v6037 = vunpack.c.l.b16 %v6005
    %v6038 = vunpack.c.l.b16 %v6006
    %v6039 = vunpack.c.l.b16 %v6007
    %v6040 = vunpack.c.l.b16 %v6008
    %v6041 = vunpack.c.l.b16 %v6009
    %v6042 = vunpack.c.l.b16 %v6010
    %v6043 = vunpack.c.l.b16 %v6011
    %v6044 = vunpack.c.l.b16 %v6012
    %v6045 = vpack.c.b16 %v6030, %v6029
    %v6046 = vpack.c.b16 %v6032, %v6031
    %v6047 = vpack.c.b16 %v6034, %v6033
    %v6048 = vpack.c.b16 %v6036, %v6035
    %v6049 = vpack.c.b16 %v6038, %v6037
    %v6050 = vpack.c.b16 %v6040, %v6039
    %v6051 = vpack.c.b16 %v6042, %v6041
    %v6052 = vpack.c.b16 %v6044, %v6043
    %6061 = vmatprep.subr.bf16.mxu0 0
    %6062 = vmatpush1.bf16.msra.mxu0 %v6052
    %6063 = vmatprep.subr.bf16.mxu0 0
    %6064 = vmatpush1.bf16.msra.mxu0 %v6051
    %6065 = vmatprep.subr.bf16.mxu0 0
    %6066 = vmatpush1.bf16.msra.mxu0 %v6050
    %6067 = vmatprep.subr.bf16.mxu0 0
    %6068 = vmatpush1.bf16.msra.mxu0 %v6049
    %6069 = vmatprep.subr.bf16.mxu0 0
    %6070 = vmatpush1.bf16.msra.mxu0 %v6048
    %6071 = vmatprep.subr.bf16.mxu0 0
    %6072 = vmatpush1.bf16.msra.mxu0 %v6047
    %6073 = vmatprep.subr.bf16.mxu0 0
    %6074 = vmatpush1.bf16.msra.mxu0 %v6046
    %6075 = vmatprep.subr.bf16.mxu0 0
    %6076 = vmatpush1.bf16.msra.mxu0 %v6045
    %6077 = vmatprep.subr.bf16.mxu0 0
    %6078 = vmatpush2.bf16.msra.mxu0 0
    %6079 = vmatprep.subr.bf16.mxu0 0
    %6080 = vmatpush2.bf16.msra.mxu0 0
    %6081 = vmatprep.subr.bf16.mxu0 0
    %6082 = vmatpush2.bf16.msra.mxu0 0
    %6083 = vmatprep.subr.bf16.mxu0 0
    %6084 = vmatpush2.bf16.msra.mxu0 0
    %6085 = vmatprep.subr.bf16.mxu0 0
    %6086 = vmatpush2.bf16.msra.mxu0 0
    %6087 = vmatprep.subr.bf16.mxu0 0
    %6088 = vmatpush2.bf16.msra.mxu0 0
    %6089 = vmatprep.subr.bf16.mxu0 0
    %6090 = vmatpush2.bf16.msra.mxu0 0
    %6091 = vmatprep.subr.bf16.mxu0 0
    %6092 = vmatpush2.bf16.msra.mxu0 0
    %6093 = vmatprep.mubr.bf16.mxu0 0
    %6094 = vmatmul.mubr.bf16.gmra.mxu0 %v5995
    %v6095 = vpop.f32.mrf.mxu0
    %v6096 = vadd.f32 0.0, %v6095
    %v6097 = vpop.f32.mrf.mxu0
    %v6098 = vpop.f32.mrf.mxu0
    %v6099 = vadd.f32 0.0, %v6098
    %v6100 = vpop.f32.mrf.mxu0
    %6101 = vdwg.mxu0
    %v6102 = vadd.f32 %v5941, %v6096
    %v6103 = vadd.f32 %v5942, %v6099
    %v6105 = vand.u32 %v4654, %v4667
    %6107 = vmatprep.subr.bf16.mxu0 0
    %6108 = vmatpush1.bf16.msra.mxu0 0
    %6109 = vmatprep.subr.bf16.mxu0 0
    %6110 = vmatpush1.bf16.msra.mxu0 0
    %6111 = vmatprep.subr.bf16.mxu0 0
    %6112 = vmatpush1.bf16.msra.mxu0 0
    %6113 = vmatprep.subr.bf16.mxu0 0
    %6114 = vmatpush1.bf16.msra.mxu0 0
    %6115 = vmatprep.subr.bf16.mxu0 0
    %6116 = vmatpush1.bf16.msra.mxu0 %v6105
    %6117 = vmatprep.subr.bf16.mxu0 0
    %6118 = vmatpush1.bf16.msra.mxu0 %v4653
    %6119 = vmatprep.subr.bf16.mxu0 0
    %6120 = vmatpush1.bf16.msra.mxu0 %v4652
    %6121 = vmatprep.subr.bf16.mxu0 0
    %6122 = vmatpush1.bf16.msra.mxu0 %v4651
    %6123 = vmatprep.subr.bf16.mxu0 0
    %6124 = vmatpush2.bf16.msra.mxu0 0
    %6125 = vmatprep.subr.bf16.mxu0 0
    %6126 = vmatpush2.bf16.msra.mxu0 0
    %6127 = vmatprep.subr.bf16.mxu0 0
    %6128 = vmatpush2.bf16.msra.mxu0 0
    %6129 = vmatprep.subr.bf16.mxu0 0
    %6130 = vmatpush2.bf16.msra.mxu0 0
    %6131 = vmatprep.subr.bf16.mxu0 0
    %6132 = vmatpush2.bf16.msra.mxu0 0
    %6133 = vmatprep.subr.bf16.mxu0 0
    %6134 = vmatpush2.bf16.msra.mxu0 0
    %6135 = vmatprep.subr.bf16.mxu0 0
    %6136 = vmatpush2.bf16.msra.mxu0 0
    %6137 = vmatprep.subr.bf16.mxu0 0
    %6138 = vmatpush2.bf16.msra.mxu0 0
    %6139 = vmatprep.mubr.bf16.mxu0 0
    %6140 = vmatmul.mubr.bf16.gmra.mxu0 %v4664
    %v6141 = vpop.f32.mrf.mxu0
    %v6142 = vadd.f32 0.0, %v6141
    %v6143 = vpop.f32.mrf.mxu0
    %v6144 = vpop.f32.mrf.mxu0
    %v6145 = vadd.f32 0.0, %v6144
    %v6146 = vpop.f32.mrf.mxu0
    %6147 = vdwg.mxu0
    %v6148 = vpack.c.bf16 %v6145, %v6142
    %6149 = vmatprep.subr.bf16.mxu0 0
    %6150 = vmatpush1.bf16.msra.mxu0 0
    %6151 = vmatprep.subr.bf16.mxu0 0
    %6152 = vmatpush1.bf16.msra.mxu0 0
    %6153 = vmatprep.subr.bf16.mxu0 0
    %6154 = vmatpush1.bf16.msra.mxu0 0
    %6155 = vmatprep.subr.bf16.mxu0 0
    %6156 = vmatpush1.bf16.msra.mxu0 0
    %6157 = vmatprep.subr.bf16.mxu0 0
    %6158 = vmatpush1.bf16.msra.mxu0 %v6105
    %6159 = vmatprep.subr.bf16.mxu0 0
    %6160 = vmatpush1.bf16.msra.mxu0 %v4653
    %6161 = vmatprep.subr.bf16.mxu0 0
    %6162 = vmatpush1.bf16.msra.mxu0 %v4652
    %6163 = vmatprep.subr.bf16.mxu0 0
    %6164 = vmatpush1.bf16.msra.mxu0 %v4651
    %6165 = vmatprep.subr.bf16.mxu0 0
    %6166 = vmatpush2.bf16.msra.mxu0 0
    %6167 = vmatprep.subr.bf16.mxu0 0
    %6168 = vmatpush2.bf16.msra.mxu0 0
    %6169 = vmatprep.subr.bf16.mxu0 0
    %6170 = vmatpush2.bf16.msra.mxu0 0
    %6171 = vmatprep.subr.bf16.mxu0 0
    %6172 = vmatpush2.bf16.msra.mxu0 0
    %6173 = vmatprep.subr.bf16.mxu0 0
    %6174 = vmatpush2.bf16.msra.mxu0 0
    %6175 = vmatprep.subr.bf16.mxu0 0
    %6176 = vmatpush2.bf16.msra.mxu0 0
    %6177 = vmatprep.subr.bf16.mxu0 0
    %6178 = vmatpush2.bf16.msra.mxu0 0
    %6179 = vmatprep.subr.bf16.mxu0 0
    %6180 = vmatpush2.bf16.msra.mxu0 0
    %6181 = vmatprep.mubr.bf16.mxu0 0
    %6182 = vmatmul.mubr.bf16.gmra.mxu0 %v4738
    %v6183 = vpop.f32.mrf.mxu0
    %v6184 = vadd.f32 0.0, %v6183
    %v6185 = vpop.f32.mrf.mxu0
    %v6186 = vpop.f32.mrf.mxu0
    %v6187 = vadd.f32 0.0, %v6186
    %v6188 = vpop.f32.mrf.mxu0
    %6189 = vdwg.mxu0
    %v6190 = vpack.c.bf16 %v6187, %v6184
    %6191 = vmatprep.subr.bf16.mxu0 0
    %6192 = vmatpush1.bf16.msra.mxu0 %v4838
    %6193 = vmatprep.subr.bf16.mxu0 0
    %6194 = vmatpush1.bf16.msra.mxu0 %v4837
    %6195 = vmatprep.subr.bf16.mxu0 0
    %6196 = vmatpush1.bf16.msra.mxu0 %v4836
    %6197 = vmatprep.subr.bf16.mxu0 0
    %6198 = vmatpush1.bf16.msra.mxu0 %v4835
    %6199 = vmatprep.subr.bf16.mxu0 0
    %6200 = vmatpush1.bf16.msra.mxu0 %v4834
    %6201 = vmatprep.subr.bf16.mxu0 0
    %6202 = vmatpush1.bf16.msra.mxu0 %v4833
    %6203 = vmatprep.subr.bf16.mxu0 0
    %6204 = vmatpush1.bf16.msra.mxu0 %v4832
    %6205 = vmatprep.subr.bf16.mxu0 0
    %6206 = vmatpush1.bf16.msra.mxu0 %v4831
    %6207 = vmatprep.subr.bf16.mxu0 0
    %6208 = vmatpush2.bf16.msra.mxu0 0
    %6209 = vmatprep.subr.bf16.mxu0 0
    %6210 = vmatpush2.bf16.msra.mxu0 0
    %6211 = vmatprep.subr.bf16.mxu0 0
    %6212 = vmatpush2.bf16.msra.mxu0 0
    %6213 = vmatprep.subr.bf16.mxu0 0
    %6214 = vmatpush2.bf16.msra.mxu0 0
    %6215 = vmatprep.subr.bf16.mxu0 0
    %6216 = vmatpush2.bf16.msra.mxu0 0
    %6217 = vmatprep.subr.bf16.mxu0 0
    %6218 = vmatpush2.bf16.msra.mxu0 0
    %6219 = vmatprep.subr.bf16.mxu0 0
    %6220 = vmatpush2.bf16.msra.mxu0 0
    %6221 = vmatprep.subr.bf16.mxu0 0
    %6222 = vmatpush2.bf16.msra.mxu0 0
    %6223 = vmatprep.mubr.bf16.mxu0 0
    %6224 = vmatmul.mubr.bf16.gmra.mxu0 %v6190
    %v6225 = vpop.f32.mrf.mxu0
    %v6226 = vadd.f32 0.0, %v6225
    %v6227 = vpop.f32.mrf.mxu0
    %v6228 = vpop.f32.mrf.mxu0
    %v6229 = vadd.f32 0.0, %v6228
    %v6230 = vpop.f32.mrf.mxu0
    %6231 = vdwg.mxu0
    %6232 = vmatprep.subr.bf16.mxu0 0
    %6233 = vmatpush1.bf16.msra.mxu0 %v4927
    %6234 = vmatprep.subr.bf16.mxu0 0
    %6235 = vmatpush1.bf16.msra.mxu0 %v4926
    %6236 = vmatprep.subr.bf16.mxu0 0
    %6237 = vmatpush1.bf16.msra.mxu0 %v4925
    %6238 = vmatprep.subr.bf16.mxu0 0
    %6239 = vmatpush1.bf16.msra.mxu0 %v4924
    %6240 = vmatprep.subr.bf16.mxu0 0
    %6241 = vmatpush1.bf16.msra.mxu0 %v4923
    %6242 = vmatprep.subr.bf16.mxu0 0
    %6243 = vmatpush1.bf16.msra.mxu0 %v4922
    %6244 = vmatprep.subr.bf16.mxu0 0
    %6245 = vmatpush1.bf16.msra.mxu0 %v4921
    %6246 = vmatprep.subr.bf16.mxu0 0
    %6247 = vmatpush1.bf16.msra.mxu0 %v4920
    %6248 = vmatprep.subr.bf16.mxu0 0
    %6249 = vmatpush2.bf16.msra.mxu0 0
    %6250 = vmatprep.subr.bf16.mxu0 0
    %6251 = vmatpush2.bf16.msra.mxu0 0
    %6252 = vmatprep.subr.bf16.mxu0 0
    %6253 = vmatpush2.bf16.msra.mxu0 0
    %6254 = vmatprep.subr.bf16.mxu0 0
    %6255 = vmatpush2.bf16.msra.mxu0 0
    %6256 = vmatprep.subr.bf16.mxu0 0
    %6257 = vmatpush2.bf16.msra.mxu0 0
    %6258 = vmatprep.subr.bf16.mxu0 0
    %6259 = vmatpush2.bf16.msra.mxu0 0
    %6260 = vmatprep.subr.bf16.mxu0 0
    %6261 = vmatpush2.bf16.msra.mxu0 0
    %6262 = vmatprep.subr.bf16.mxu0 0
    %6263 = vmatpush2.bf16.msra.mxu0 0
    %6264 = vmatprep.mubr.bf16.mxu0 0
    %6265 = vmatmul.mubr.bf16.gmra.mxu0 %v6148
    %v6266 = vpop.f32.mrf.mxu0
    %v6267 = vadd.f32 %v6226, %v6266
    %v6268 = vpop.f32.mrf.mxu0
    %v6269 = vpop.f32.mrf.mxu0
    %v6270 = vadd.f32 %v6229, %v6269
    %v6271 = vpop.f32.mrf.mxu0
    %6272 = vdwg.mxu0
    %6273 = vmatprep.subr.bf16.mxu0 0
    %6274 = vmatpush1.bf16.msra.mxu0 0
    %6275 = vmatprep.subr.bf16.mxu0 0
    %6276 = vmatpush1.bf16.msra.mxu0 0
    %6277 = vmatprep.subr.bf16.mxu0 0
    %6278 = vmatpush1.bf16.msra.mxu0 0
    %6279 = vmatprep.subr.bf16.mxu0 0
    %6280 = vmatpush1.bf16.msra.mxu0 0
    %6281 = vmatprep.subr.bf16.mxu0 0
    %6282 = vmatpush1.bf16.msra.mxu0 %v6105
    %6283 = vmatprep.subr.bf16.mxu0 0
    %6284 = vmatpush1.bf16.msra.mxu0 %v4653
    %6285 = vmatprep.subr.bf16.mxu0 0
    %6286 = vmatpush1.bf16.msra.mxu0 %v4652
    %6287 = vmatprep.subr.bf16.mxu0 0
    %6288 = vmatpush1.bf16.msra.mxu0 %v4651
    %6289 = vmatprep.subr.bf16.mxu0 0
    %6290 = vmatpush2.bf16.msra.mxu0 0
    %6291 = vmatprep.subr.bf16.mxu0 0
    %6292 = vmatpush2.bf16.msra.mxu0 0
    %6293 = vmatprep.subr.bf16.mxu0 0
    %6294 = vmatpush2.bf16.msra.mxu0 0
    %6295 = vmatprep.subr.bf16.mxu0 0
    %6296 = vmatpush2.bf16.msra.mxu0 0
    %6297 = vmatprep.subr.bf16.mxu0 0
    %6298 = vmatpush2.bf16.msra.mxu0 0
    %6299 = vmatprep.subr.bf16.mxu0 0
    %6300 = vmatpush2.bf16.msra.mxu0 0
    %6301 = vmatprep.subr.bf16.mxu0 0
    %6302 = vmatpush2.bf16.msra.mxu0 0
    %6303 = vmatprep.subr.bf16.mxu0 0
    %6304 = vmatpush2.bf16.msra.mxu0 0
    %6305 = vmatprep.mubr.bf16.mxu0 0
    %6306 = vmatmul.mubr.bf16.gmra.mxu0 %v4986
    %v6307 = vpop.f32.mrf.mxu0
    %v6308 = vadd.f32 0.0, %v6307
    %v6309 = vpop.f32.mrf.mxu0
    %v6310 = vpop.f32.mrf.mxu0
    %v6311 = vadd.f32 0.0, %v6310
    %v6312 = vpop.f32.mrf.mxu0
    %6313 = vdwg.mxu0
    %v6314 = vpack.c.bf16 %v6311, %v6308
    %6315 = vmatprep.subr.bf16.mxu0 0
    %6316 = vmatpush1.bf16.msra.mxu0 %v5086
    %6317 = vmatprep.subr.bf16.mxu0 0
    %6318 = vmatpush1.bf16.msra.mxu0 %v5085
    %6319 = vmatprep.subr.bf16.mxu0 0
    %6320 = vmatpush1.bf16.msra.mxu0 %v5084
    %6321 = vmatprep.subr.bf16.mxu0 0
    %6322 = vmatpush1.bf16.msra.mxu0 %v5083
    %6323 = vmatprep.subr.bf16.mxu0 0
    %6324 = vmatpush1.bf16.msra.mxu0 %v5082
    %6325 = vmatprep.subr.bf16.mxu0 0
    %6326 = vmatpush1.bf16.msra.mxu0 %v5081
    %6327 = vmatprep.subr.bf16.mxu0 0
    %6328 = vmatpush1.bf16.msra.mxu0 %v5080
    %6329 = vmatprep.subr.bf16.mxu0 0
    %6330 = vmatpush1.bf16.msra.mxu0 %v5079
    %6331 = vmatprep.subr.bf16.mxu0 0
    %6332 = vmatpush2.bf16.msra.mxu0 0
    %6333 = vmatprep.subr.bf16.mxu0 0
    %6334 = vmatpush2.bf16.msra.mxu0 0
    %6335 = vmatprep.subr.bf16.mxu0 0
    %6336 = vmatpush2.bf16.msra.mxu0 0
    %6337 = vmatprep.subr.bf16.mxu0 0
    %6338 = vmatpush2.bf16.msra.mxu0 0
    %6339 = vmatprep.subr.bf16.mxu0 0
    %6340 = vmatpush2.bf16.msra.mxu0 0
    %6341 = vmatprep.subr.bf16.mxu0 0
    %6342 = vmatpush2.bf16.msra.mxu0 0
    %6343 = vmatprep.subr.bf16.mxu0 0
    %6344 = vmatpush2.bf16.msra.mxu0 0
    %6345 = vmatprep.subr.bf16.mxu0 0
    %6346 = vmatpush2.bf16.msra.mxu0 0
    %6347 = vmatprep.mubr.bf16.mxu0 0
    %6348 = vmatmul.mubr.bf16.gmra.mxu0 %v6314
    %v6349 = vpop.f32.mrf.mxu0
    %v6350 = vadd.f32 0.0, %v6349
    %v6351 = vpop.f32.mrf.mxu0
    %v6352 = vpop.f32.mrf.mxu0
    %v6353 = vadd.f32 0.0, %v6352
    %v6354 = vpop.f32.mrf.mxu0
    %6355 = vdwg.mxu0
    %v6356 = vadd.f32 %v6267, %v6350
    %v6357 = vadd.f32 %v6270, %v6353
    %6358 = vmatprep.subr.bf16.mxu0 0
    %6359 = vmatpush1.bf16.msra.mxu0 0
    %6360 = vmatprep.subr.bf16.mxu0 0
    %6361 = vmatpush1.bf16.msra.mxu0 0
    %6362 = vmatprep.subr.bf16.mxu0 0
    %6363 = vmatpush1.bf16.msra.mxu0 0
    %6364 = vmatprep.subr.bf16.mxu0 0
    %6365 = vmatpush1.bf16.msra.mxu0 0
    %6366 = vmatprep.subr.bf16.mxu0 0
    %6367 = vmatpush1.bf16.msra.mxu0 %v6105
    %6368 = vmatprep.subr.bf16.mxu0 0
    %6369 = vmatpush1.bf16.msra.mxu0 %v4653
    %6370 = vmatprep.subr.bf16.mxu0 0
    %6371 = vmatpush1.bf16.msra.mxu0 %v4652
    %6372 = vmatprep.subr.bf16.mxu0 0
    %6373 = vmatpush1.bf16.msra.mxu0 %v4651
    %6374 = vmatprep.subr.bf16.mxu0 0
    %6375 = vmatpush2.bf16.msra.mxu0 0
    %6376 = vmatprep.subr.bf16.mxu0 0
    %6377 = vmatpush2.bf16.msra.mxu0 0
    %6378 = vmatprep.subr.bf16.mxu0 0
    %6379 = vmatpush2.bf16.msra.mxu0 0
    %6380 = vmatprep.subr.bf16.mxu0 0
    %6381 = vmatpush2.bf16.msra.mxu0 0
    %6382 = vmatprep.subr.bf16.mxu0 0
    %6383 = vmatpush2.bf16.msra.mxu0 0
    %6384 = vmatprep.subr.bf16.mxu0 0
    %6385 = vmatpush2.bf16.msra.mxu0 0
    %6386 = vmatprep.subr.bf16.mxu0 0
    %6387 = vmatpush2.bf16.msra.mxu0 0
    %6388 = vmatprep.subr.bf16.mxu0 0
    %6389 = vmatpush2.bf16.msra.mxu0 0
    %6390 = vmatprep.mubr.bf16.mxu0 0
    %6391 = vmatmul.mubr.bf16.gmra.mxu0 %v5147
    %v6392 = vpop.f32.mrf.mxu0
    %v6393 = vadd.f32 0.0, %v6392
    %v6394 = vpop.f32.mrf.mxu0
    %v6395 = vpop.f32.mrf.mxu0
    %v6396 = vadd.f32 0.0, %v6395
    %v6397 = vpop.f32.mrf.mxu0
    %6398 = vdwg.mxu0
    %v6399 = vpack.c.bf16 %v6396, %v6393
    %6400 = vmatprep.subr.bf16.mxu0 0
    %6401 = vmatpush1.bf16.msra.mxu0 %v5247
    %6402 = vmatprep.subr.bf16.mxu0 0
    %6403 = vmatpush1.bf16.msra.mxu0 %v5246
    %6404 = vmatprep.subr.bf16.mxu0 0
    %6405 = vmatpush1.bf16.msra.mxu0 %v5245
    %6406 = vmatprep.subr.bf16.mxu0 0
    %6407 = vmatpush1.bf16.msra.mxu0 %v5244
    %6408 = vmatprep.subr.bf16.mxu0 0
    %6409 = vmatpush1.bf16.msra.mxu0 %v5243
    %6410 = vmatprep.subr.bf16.mxu0 0
    %6411 = vmatpush1.bf16.msra.mxu0 %v5242
    %6412 = vmatprep.subr.bf16.mxu0 0
    %6413 = vmatpush1.bf16.msra.mxu0 %v5241
    %6414 = vmatprep.subr.bf16.mxu0 0
    %6415 = vmatpush1.bf16.msra.mxu0 %v5240
    %6416 = vmatprep.subr.bf16.mxu0 0
    %6417 = vmatpush2.bf16.msra.mxu0 0
    %6418 = vmatprep.subr.bf16.mxu0 0
    %6419 = vmatpush2.bf16.msra.mxu0 0
    %6420 = vmatprep.subr.bf16.mxu0 0
    %6421 = vmatpush2.bf16.msra.mxu0 0
    %6422 = vmatprep.subr.bf16.mxu0 0
    %6423 = vmatpush2.bf16.msra.mxu0 0
    %6424 = vmatprep.subr.bf16.mxu0 0
    %6425 = vmatpush2.bf16.msra.mxu0 0
    %6426 = vmatprep.subr.bf16.mxu0 0
    %6427 = vmatpush2.bf16.msra.mxu0 0
    %6428 = vmatprep.subr.bf16.mxu0 0
    %6429 = vmatpush2.bf16.msra.mxu0 0
    %6430 = vmatprep.subr.bf16.mxu0 0
    %6431 = vmatpush2.bf16.msra.mxu0 0
    %6432 = vmatprep.mubr.bf16.mxu0 0
    %6433 = vmatmul.mubr.bf16.gmra.mxu0 %v6399
    %v6434 = vpop.f32.mrf.mxu0
    %v6435 = vadd.f32 0.0, %v6434
    %v6436 = vpop.f32.mrf.mxu0
    %v6437 = vpop.f32.mrf.mxu0
    %v6438 = vadd.f32 0.0, %v6437
    %v6439 = vpop.f32.mrf.mxu0
    %6440 = vdwg.mxu0
    %v6441 = vadd.f32 %v6356, %v6435
    %v6442 = vadd.f32 %v6357, %v6438
    %6443 = vmatprep.subr.bf16.mxu0 0
    %6444 = vmatpush1.bf16.msra.mxu0 0
    %6445 = vmatprep.subr.bf16.mxu0 0
    %6446 = vmatpush1.bf16.msra.mxu0 0
    %6447 = vmatprep.subr.bf16.mxu0 0
    %6448 = vmatpush1.bf16.msra.mxu0 0
    %6449 = vmatprep.subr.bf16.mxu0 0
    %6450 = vmatpush1.bf16.msra.mxu0 0
    %6451 = vmatprep.subr.bf16.mxu0 0
    %6452 = vmatpush1.bf16.msra.mxu0 %v6105
    %6453 = vmatprep.subr.bf16.mxu0 0
    %6454 = vmatpush1.bf16.msra.mxu0 %v4653
    %6455 = vmatprep.subr.bf16.mxu0 0
    %6456 = vmatpush1.bf16.msra.mxu0 %v4652
    %6457 = vmatprep.subr.bf16.mxu0 0
    %6458 = vmatpush1.bf16.msra.mxu0 %v4651
    %6459 = vmatprep.subr.bf16.mxu0 0
    %6460 = vmatpush2.bf16.msra.mxu0 0
    %6461 = vmatprep.subr.bf16.mxu0 0
    %6462 = vmatpush2.bf16.msra.mxu0 0
    %6463 = vmatprep.subr.bf16.mxu0 0
    %6464 = vmatpush2.bf16.msra.mxu0 0
    %6465 = vmatprep.subr.bf16.mxu0 0
    %6466 = vmatpush2.bf16.msra.mxu0 0
    %6467 = vmatprep.subr.bf16.mxu0 0
    %6468 = vmatpush2.bf16.msra.mxu0 0
    %6469 = vmatprep.subr.bf16.mxu0 0
    %6470 = vmatpush2.bf16.msra.mxu0 0
    %6471 = vmatprep.subr.bf16.mxu0 0
    %6472 = vmatpush2.bf16.msra.mxu0 0
    %6473 = vmatprep.subr.bf16.mxu0 0
    %6474 = vmatpush2.bf16.msra.mxu0 0
    %6475 = vmatprep.mubr.bf16.mxu0 0
    %6476 = vmatmul.mubr.bf16.gmra.mxu0 %v5308
    %v6477 = vpop.f32.mrf.mxu0
    %v6478 = vadd.f32 0.0, %v6477
    %v6479 = vpop.f32.mrf.mxu0
    %v6480 = vpop.f32.mrf.mxu0
    %v6481 = vadd.f32 0.0, %v6480
    %v6482 = vpop.f32.mrf.mxu0
    %6483 = vdwg.mxu0
    %v6484 = vpack.c.bf16 %v6481, %v6478
    %6485 = vmatprep.subr.bf16.mxu0 0
    %6486 = vmatpush1.bf16.msra.mxu0 %v5408
    %6487 = vmatprep.subr.bf16.mxu0 0
    %6488 = vmatpush1.bf16.msra.mxu0 %v5407
    %6489 = vmatprep.subr.bf16.mxu0 0
    %6490 = vmatpush1.bf16.msra.mxu0 %v5406
    %6491 = vmatprep.subr.bf16.mxu0 0
    %6492 = vmatpush1.bf16.msra.mxu0 %v5405
    %6493 = vmatprep.subr.bf16.mxu0 0
    %6494 = vmatpush1.bf16.msra.mxu0 %v5404
    %6495 = vmatprep.subr.bf16.mxu0 0
    %6496 = vmatpush1.bf16.msra.mxu0 %v5403
    %6497 = vmatprep.subr.bf16.mxu0 0
    %6498 = vmatpush1.bf16.msra.mxu0 %v5402
    %6499 = vmatprep.subr.bf16.mxu0 0
    %6500 = vmatpush1.bf16.msra.mxu0 %v5401
    %6501 = vmatprep.subr.bf16.mxu0 0
    %6502 = vmatpush2.bf16.msra.mxu0 0
    %6503 = vmatprep.subr.bf16.mxu0 0
    %6504 = vmatpush2.bf16.msra.mxu0 0
    %6505 = vmatprep.subr.bf16.mxu0 0
    %6506 = vmatpush2.bf16.msra.mxu0 0
    %6507 = vmatprep.subr.bf16.mxu0 0
    %6508 = vmatpush2.bf16.msra.mxu0 0
    %6509 = vmatprep.subr.bf16.mxu0 0
    %6510 = vmatpush2.bf16.msra.mxu0 0
    %6511 = vmatprep.subr.bf16.mxu0 0
    %6512 = vmatpush2.bf16.msra.mxu0 0
    %6513 = vmatprep.subr.bf16.mxu0 0
    %6514 = vmatpush2.bf16.msra.mxu0 0
    %6515 = vmatprep.subr.bf16.mxu0 0
    %6516 = vmatpush2.bf16.msra.mxu0 0
    %6517 = vmatprep.mubr.bf16.mxu0 0
    %6518 = vmatmul.mubr.bf16.gmra.mxu0 %v6484
    %v6519 = vpop.f32.mrf.mxu0
    %v6520 = vadd.f32 0.0, %v6519
    %v6521 = vpop.f32.mrf.mxu0
    %v6522 = vpop.f32.mrf.mxu0
    %v6523 = vadd.f32 0.0, %v6522
    %v6524 = vpop.f32.mrf.mxu0
    %6525 = vdwg.mxu0
    %v6526 = vadd.f32 %v6441, %v6520
    %v6527 = vadd.f32 %v6442, %v6523
    %6528 = vmatprep.subr.bf16.mxu0 0
    %6529 = vmatpush1.bf16.msra.mxu0 0
    %6530 = vmatprep.subr.bf16.mxu0 0
    %6531 = vmatpush1.bf16.msra.mxu0 0
    %6532 = vmatprep.subr.bf16.mxu0 0
    %6533 = vmatpush1.bf16.msra.mxu0 0
    %6534 = vmatprep.subr.bf16.mxu0 0
    %6535 = vmatpush1.bf16.msra.mxu0 0
    %6536 = vmatprep.subr.bf16.mxu0 0
    %6537 = vmatpush1.bf16.msra.mxu0 %v6105
    %6538 = vmatprep.subr.bf16.mxu0 0
    %6539 = vmatpush1.bf16.msra.mxu0 %v4653
    %6540 = vmatprep.subr.bf16.mxu0 0
    %6541 = vmatpush1.bf16.msra.mxu0 %v4652
    %6542 = vmatprep.subr.bf16.mxu0 0
    %6543 = vmatpush1.bf16.msra.mxu0 %v4651
    %6544 = vmatprep.subr.bf16.mxu0 0
    %6545 = vmatpush2.bf16.msra.mxu0 0
    %6546 = vmatprep.subr.bf16.mxu0 0
    %6547 = vmatpush2.bf16.msra.mxu0 0
    %6548 = vmatprep.subr.bf16.mxu0 0
    %6549 = vmatpush2.bf16.msra.mxu0 0
    %6550 = vmatprep.subr.bf16.mxu0 0
    %6551 = vmatpush2.bf16.msra.mxu0 0
    %6552 = vmatprep.subr.bf16.mxu0 0
    %6553 = vmatpush2.bf16.msra.mxu0 0
    %6554 = vmatprep.subr.bf16.mxu0 0
    %6555 = vmatpush2.bf16.msra.mxu0 0
    %6556 = vmatprep.subr.bf16.mxu0 0
    %6557 = vmatpush2.bf16.msra.mxu0 0
    %6558 = vmatprep.subr.bf16.mxu0 0
    %6559 = vmatpush2.bf16.msra.mxu0 0
    %6560 = vmatprep.mubr.bf16.mxu0 0
    %6561 = vmatmul.mubr.bf16.gmra.mxu0 %v5469
    %v6562 = vpop.f32.mrf.mxu0
    %v6563 = vadd.f32 0.0, %v6562
    %v6564 = vpop.f32.mrf.mxu0
    %v6565 = vpop.f32.mrf.mxu0
    %v6566 = vadd.f32 0.0, %v6565
    %v6567 = vpop.f32.mrf.mxu0
    %6568 = vdwg.mxu0
    %v6569 = vpack.c.bf16 %v6566, %v6563
    %6570 = vmatprep.subr.bf16.mxu0 0
    %6571 = vmatpush1.bf16.msra.mxu0 %v5569
    %6572 = vmatprep.subr.bf16.mxu0 0
    %6573 = vmatpush1.bf16.msra.mxu0 %v5568
    %6574 = vmatprep.subr.bf16.mxu0 0
    %6575 = vmatpush1.bf16.msra.mxu0 %v5567
    %6576 = vmatprep.subr.bf16.mxu0 0
    %6577 = vmatpush1.bf16.msra.mxu0 %v5566
    %6578 = vmatprep.subr.bf16.mxu0 0
    %6579 = vmatpush1.bf16.msra.mxu0 %v5565
    %6580 = vmatprep.subr.bf16.mxu0 0
    %6581 = vmatpush1.bf16.msra.mxu0 %v5564
    %6582 = vmatprep.subr.bf16.mxu0 0
    %6583 = vmatpush1.bf16.msra.mxu0 %v5563
    %6584 = vmatprep.subr.bf16.mxu0 0
    %6585 = vmatpush1.bf16.msra.mxu0 %v5562
    %6586 = vmatprep.subr.bf16.mxu0 0
    %6587 = vmatpush2.bf16.msra.mxu0 0
    %6588 = vmatprep.subr.bf16.mxu0 0
    %6589 = vmatpush2.bf16.msra.mxu0 0
    %6590 = vmatprep.subr.bf16.mxu0 0
    %6591 = vmatpush2.bf16.msra.mxu0 0
    %6592 = vmatprep.subr.bf16.mxu0 0
    %6593 = vmatpush2.bf16.msra.mxu0 0
    %6594 = vmatprep.subr.bf16.mxu0 0
    %6595 = vmatpush2.bf16.msra.mxu0 0
    %6596 = vmatprep.subr.bf16.mxu0 0
    %6597 = vmatpush2.bf16.msra.mxu0 0
    %6598 = vmatprep.subr.bf16.mxu0 0
    %6599 = vmatpush2.bf16.msra.mxu0 0
    %6600 = vmatprep.subr.bf16.mxu0 0
    %6601 = vmatpush2.bf16.msra.mxu0 0
    %6602 = vmatprep.mubr.bf16.mxu0 0
    %6603 = vmatmul.mubr.bf16.gmra.mxu0 %v6569
    %v6604 = vpop.f32.mrf.mxu0
    %v6605 = vadd.f32 0.0, %v6604
    %v6606 = vpop.f32.mrf.mxu0
    %v6607 = vpop.f32.mrf.mxu0
    %v6608 = vadd.f32 0.0, %v6607
    %v6609 = vpop.f32.mrf.mxu0
    %6610 = vdwg.mxu0
    %v6611 = vadd.f32 %v6526, %v6605
    %v6612 = vadd.f32 %v6527, %v6608
    %6613 = vmatprep.subr.bf16.mxu0 0
    %6614 = vmatpush1.bf16.msra.mxu0 0
    %6615 = vmatprep.subr.bf16.mxu0 0
    %6616 = vmatpush1.bf16.msra.mxu0 0
    %6617 = vmatprep.subr.bf16.mxu0 0
    %6618 = vmatpush1.bf16.msra.mxu0 0
    %6619 = vmatprep.subr.bf16.mxu0 0
    %6620 = vmatpush1.bf16.msra.mxu0 0
    %6621 = vmatprep.subr.bf16.mxu0 0
    %6622 = vmatpush1.bf16.msra.mxu0 %v6105
    %6623 = vmatprep.subr.bf16.mxu0 0
    %6624 = vmatpush1.bf16.msra.mxu0 %v4653
    %6625 = vmatprep.subr.bf16.mxu0 0
    %6626 = vmatpush1.bf16.msra.mxu0 %v4652
    %6627 = vmatprep.subr.bf16.mxu0 0
    %6628 = vmatpush1.bf16.msra.mxu0 %v4651
    %6629 = vmatprep.subr.bf16.mxu0 0
    %6630 = vmatpush2.bf16.msra.mxu0 0
    %6631 = vmatprep.subr.bf16.mxu0 0
    %6632 = vmatpush2.bf16.msra.mxu0 0
    %6633 = vmatprep.subr.bf16.mxu0 0
    %6634 = vmatpush2.bf16.msra.mxu0 0
    %6635 = vmatprep.subr.bf16.mxu0 0
    %6636 = vmatpush2.bf16.msra.mxu0 0
    %6637 = vmatprep.subr.bf16.mxu0 0
    %6638 = vmatpush2.bf16.msra.mxu0 0
    %6639 = vmatprep.subr.bf16.mxu0 0
    %6640 = vmatpush2.bf16.msra.mxu0 0
    %6641 = vmatprep.subr.bf16.mxu0 0
    %6642 = vmatpush2.bf16.msra.mxu0 0
    %6643 = vmatprep.subr.bf16.mxu0 0
    %6644 = vmatpush2.bf16.msra.mxu0 0
    %6645 = vmatprep.mubr.bf16.mxu0 0
    %6646 = vmatmul.mubr.bf16.gmra.mxu0 %v5630
    %v6647 = vpop.f32.mrf.mxu0
    %v6648 = vadd.f32 0.0, %v6647
    %v6649 = vpop.f32.mrf.mxu0
    %v6650 = vpop.f32.mrf.mxu0
    %v6651 = vadd.f32 0.0, %v6650
    %v6652 = vpop.f32.mrf.mxu0
    %6653 = vdwg.mxu0
    %v6654 = vpack.c.bf16 %v6651, %v6648
    %6655 = vmatprep.subr.bf16.mxu0 0
    %6656 = vmatpush1.bf16.msra.mxu0 %v5730
    %6657 = vmatprep.subr.bf16.mxu0 0
    %6658 = vmatpush1.bf16.msra.mxu0 %v5729
    %6659 = vmatprep.subr.bf16.mxu0 0
    %6660 = vmatpush1.bf16.msra.mxu0 %v5728
    %6661 = vmatprep.subr.bf16.mxu0 0
    %6662 = vmatpush1.bf16.msra.mxu0 %v5727
    %6663 = vmatprep.subr.bf16.mxu0 0
    %6664 = vmatpush1.bf16.msra.mxu0 %v5726
    %6665 = vmatprep.subr.bf16.mxu0 0
    %6666 = vmatpush1.bf16.msra.mxu0 %v5725
    %6667 = vmatprep.subr.bf16.mxu0 0
    %6668 = vmatpush1.bf16.msra.mxu0 %v5724
    %6669 = vmatprep.subr.bf16.mxu0 0
    %6670 = vmatpush1.bf16.msra.mxu0 %v5723
    %6671 = vmatprep.subr.bf16.mxu0 0
    %6672 = vmatpush2.bf16.msra.mxu0 0
    %6673 = vmatprep.subr.bf16.mxu0 0
    %6674 = vmatpush2.bf16.msra.mxu0 0
    %6675 = vmatprep.subr.bf16.mxu0 0
    %6676 = vmatpush2.bf16.msra.mxu0 0
    %6677 = vmatprep.subr.bf16.mxu0 0
    %6678 = vmatpush2.bf16.msra.mxu0 0
    %6679 = vmatprep.subr.bf16.mxu0 0
    %6680 = vmatpush2.bf16.msra.mxu0 0
    %6681 = vmatprep.subr.bf16.mxu0 0
    %6682 = vmatpush2.bf16.msra.mxu0 0
    %6683 = vmatprep.subr.bf16.mxu0 0
    %6684 = vmatpush2.bf16.msra.mxu0 0
    %6685 = vmatprep.subr.bf16.mxu0 0
    %6686 = vmatpush2.bf16.msra.mxu0 0
    %6687 = vmatprep.mubr.bf16.mxu0 0
    %6688 = vmatmul.mubr.bf16.gmra.mxu0 %v6654
    %v6689 = vpop.f32.mrf.mxu0
    %v6690 = vadd.f32 0.0, %v6689
    %v6691 = vpop.f32.mrf.mxu0
    %v6692 = vpop.f32.mrf.mxu0
    %v6693 = vadd.f32 0.0, %v6692
    %v6694 = vpop.f32.mrf.mxu0
    %6695 = vdwg.mxu0
    %v6696 = vadd.f32 %v6611, %v6690
    %v6697 = vadd.f32 %v6612, %v6693
    %6698 = vmatprep.subr.bf16.mxu0 0
    %6699 = vmatpush1.bf16.msra.mxu0 0
    %6700 = vmatprep.subr.bf16.mxu0 0
    %6701 = vmatpush1.bf16.msra.mxu0 0
    %6702 = vmatprep.subr.bf16.mxu0 0
    %6703 = vmatpush1.bf16.msra.mxu0 0
    %6704 = vmatprep.subr.bf16.mxu0 0
    %6705 = vmatpush1.bf16.msra.mxu0 0
    %6706 = vmatprep.subr.bf16.mxu0 0
    %6707 = vmatpush1.bf16.msra.mxu0 %v6105
    %6708 = vmatprep.subr.bf16.mxu0 0
    %6709 = vmatpush1.bf16.msra.mxu0 %v4653
    %6710 = vmatprep.subr.bf16.mxu0 0
    %6711 = vmatpush1.bf16.msra.mxu0 %v4652
    %6712 = vmatprep.subr.bf16.mxu0 0
    %6713 = vmatpush1.bf16.msra.mxu0 %v4651
    %6714 = vmatprep.subr.bf16.mxu0 0
    %6715 = vmatpush2.bf16.msra.mxu0 0
    %6716 = vmatprep.subr.bf16.mxu0 0
    %6717 = vmatpush2.bf16.msra.mxu0 0
    %6718 = vmatprep.subr.bf16.mxu0 0
    %6719 = vmatpush2.bf16.msra.mxu0 0
    %6720 = vmatprep.subr.bf16.mxu0 0
    %6721 = vmatpush2.bf16.msra.mxu0 0
    %6722 = vmatprep.subr.bf16.mxu0 0
    %6723 = vmatpush2.bf16.msra.mxu0 0
    %6724 = vmatprep.subr.bf16.mxu0 0
    %6725 = vmatpush2.bf16.msra.mxu0 0
    %6726 = vmatprep.subr.bf16.mxu0 0
    %6727 = vmatpush2.bf16.msra.mxu0 0
    %6728 = vmatprep.subr.bf16.mxu0 0
    %6729 = vmatpush2.bf16.msra.mxu0 0
    %6730 = vmatprep.mubr.bf16.mxu0 0
    %6731 = vmatmul.mubr.bf16.gmra.mxu0 %v5791
    %v6732 = vpop.f32.mrf.mxu0
    %v6733 = vadd.f32 0.0, %v6732
    %v6734 = vpop.f32.mrf.mxu0
    %v6735 = vpop.f32.mrf.mxu0
    %v6736 = vadd.f32 0.0, %v6735
    %v6737 = vpop.f32.mrf.mxu0
    %6738 = vdwg.mxu0
    %v6739 = vpack.c.bf16 %v6736, %v6733
    %6740 = vmatprep.subr.bf16.mxu0 0
    %6741 = vmatpush1.bf16.msra.mxu0 %v5891
    %6742 = vmatprep.subr.bf16.mxu0 0
    %6743 = vmatpush1.bf16.msra.mxu0 %v5890
    %6744 = vmatprep.subr.bf16.mxu0 0
    %6745 = vmatpush1.bf16.msra.mxu0 %v5889
    %6746 = vmatprep.subr.bf16.mxu0 0
    %6747 = vmatpush1.bf16.msra.mxu0 %v5888
    %6748 = vmatprep.subr.bf16.mxu0 0
    %6749 = vmatpush1.bf16.msra.mxu0 %v5887
    %6750 = vmatprep.subr.bf16.mxu0 0
    %6751 = vmatpush1.bf16.msra.mxu0 %v5886
    %6752 = vmatprep.subr.bf16.mxu0 0
    %6753 = vmatpush1.bf16.msra.mxu0 %v5885
    %6754 = vmatprep.subr.bf16.mxu0 0
    %6755 = vmatpush1.bf16.msra.mxu0 %v5884
    %6756 = vmatprep.subr.bf16.mxu0 0
    %6757 = vmatpush2.bf16.msra.mxu0 0
    %6758 = vmatprep.subr.bf16.mxu0 0
    %6759 = vmatpush2.bf16.msra.mxu0 0
    %6760 = vmatprep.subr.bf16.mxu0 0
    %6761 = vmatpush2.bf16.msra.mxu0 0
    %6762 = vmatprep.subr.bf16.mxu0 0
    %6763 = vmatpush2.bf16.msra.mxu0 0
    %6764 = vmatprep.subr.bf16.mxu0 0
    %6765 = vmatpush2.bf16.msra.mxu0 0
    %6766 = vmatprep.subr.bf16.mxu0 0
    %6767 = vmatpush2.bf16.msra.mxu0 0
    %6768 = vmatprep.subr.bf16.mxu0 0
    %6769 = vmatpush2.bf16.msra.mxu0 0
    %6770 = vmatprep.subr.bf16.mxu0 0
    %6771 = vmatpush2.bf16.msra.mxu0 0
    %6772 = vmatprep.mubr.bf16.mxu0 0
    %6773 = vmatmul.mubr.bf16.gmra.mxu0 %v6739
    %v6774 = vpop.f32.mrf.mxu0
    %v6775 = vadd.f32 0.0, %v6774
    %v6776 = vpop.f32.mrf.mxu0
    %v6777 = vpop.f32.mrf.mxu0
    %v6778 = vadd.f32 0.0, %v6777
    %v6779 = vpop.f32.mrf.mxu0
    %6780 = vdwg.mxu0
    %v6781 = vadd.f32 %v6696, %v6775
    %v6782 = vadd.f32 %v6697, %v6778
    %6783 = vmatprep.subr.bf16.mxu0 0
    %6784 = vmatpush1.bf16.msra.mxu0 0
    %6785 = vmatprep.subr.bf16.mxu0 0
    %6786 = vmatpush1.bf16.msra.mxu0 0
    %6787 = vmatprep.subr.bf16.mxu0 0
    %6788 = vmatpush1.bf16.msra.mxu0 0
    %6789 = vmatprep.subr.bf16.mxu0 0
    %6790 = vmatpush1.bf16.msra.mxu0 0
    %6791 = vmatprep.subr.bf16.mxu0 0
    %6792 = vmatpush1.bf16.msra.mxu0 %v6105
    %6793 = vmatprep.subr.bf16.mxu0 0
    %6794 = vmatpush1.bf16.msra.mxu0 %v4653
    %6795 = vmatprep.subr.bf16.mxu0 0
    %6796 = vmatpush1.bf16.msra.mxu0 %v4652
    %6797 = vmatprep.subr.bf16.mxu0 0
    %6798 = vmatpush1.bf16.msra.mxu0 %v4651
    %6799 = vmatprep.subr.bf16.mxu0 0
    %6800 = vmatpush2.bf16.msra.mxu0 0
    %6801 = vmatprep.subr.bf16.mxu0 0
    %6802 = vmatpush2.bf16.msra.mxu0 0
    %6803 = vmatprep.subr.bf16.mxu0 0
    %6804 = vmatpush2.bf16.msra.mxu0 0
    %6805 = vmatprep.subr.bf16.mxu0 0
    %6806 = vmatpush2.bf16.msra.mxu0 0
    %6807 = vmatprep.subr.bf16.mxu0 0
    %6808 = vmatpush2.bf16.msra.mxu0 0
    %6809 = vmatprep.subr.bf16.mxu0 0
    %6810 = vmatpush2.bf16.msra.mxu0 0
    %6811 = vmatprep.subr.bf16.mxu0 0
    %6812 = vmatpush2.bf16.msra.mxu0 0
    %6813 = vmatprep.subr.bf16.mxu0 0
    %6814 = vmatpush2.bf16.msra.mxu0 0
    %6815 = vmatprep.mubr.bf16.mxu0 0
    %6816 = vmatmul.mubr.bf16.gmra.mxu0 %v5952
    %v6817 = vpop.f32.mrf.mxu0
    %v6818 = vadd.f32 0.0, %v6817
    %v6819 = vpop.f32.mrf.mxu0
    %v6820 = vpop.f32.mrf.mxu0
    %v6821 = vadd.f32 0.0, %v6820
    %v6822 = vpop.f32.mrf.mxu0
    %6823 = vdwg.mxu0
    %v6824 = vpack.c.bf16 %v6821, %v6818
    %6825 = vmatprep.subr.bf16.mxu0 0
    %6826 = vmatpush1.bf16.msra.mxu0 %v6052
    %6827 = vmatprep.subr.bf16.mxu0 0
    %6828 = vmatpush1.bf16.msra.mxu0 %v6051
    %6829 = vmatprep.subr.bf16.mxu0 0
    %6830 = vmatpush1.bf16.msra.mxu0 %v6050
    %6831 = vmatprep.subr.bf16.mxu0 0
    %6832 = vmatpush1.bf16.msra.mxu0 %v6049
    %6833 = vmatprep.subr.bf16.mxu0 0
    %6834 = vmatpush1.bf16.msra.mxu0 %v6048
    %6835 = vmatprep.subr.bf16.mxu0 0
    %6836 = vmatpush1.bf16.msra.mxu0 %v6047
    %6837 = vmatprep.subr.bf16.mxu0 0
    %6838 = vmatpush1.bf16.msra.mxu0 %v6046
    %6839 = vmatprep.subr.bf16.mxu0 0
    %6840 = vmatpush1.bf16.msra.mxu0 %v6045
    %6841 = vmatprep.subr.bf16.mxu0 0
    %6842 = vmatpush2.bf16.msra.mxu0 0
    %6843 = vmatprep.subr.bf16.mxu0 0
    %6844 = vmatpush2.bf16.msra.mxu0 0
    %6845 = vmatprep.subr.bf16.mxu0 0
    %6846 = vmatpush2.bf16.msra.mxu0 0
    %6847 = vmatprep.subr.bf16.mxu0 0
    %6848 = vmatpush2.bf16.msra.mxu0 0
    %6849 = vmatprep.subr.bf16.mxu0 0
    %6850 = vmatpush2.bf16.msra.mxu0 0
    %6851 = vmatprep.subr.bf16.mxu0 0
    %6852 = vmatpush2.bf16.msra.mxu0 0
    %6853 = vmatprep.subr.bf16.mxu0 0
    %6854 = vmatpush2.bf16.msra.mxu0 0
    %6855 = vmatprep.subr.bf16.mxu0 0
    %6856 = vmatpush2.bf16.msra.mxu0 0
    %6857 = vmatprep.mubr.bf16.mxu0 0
    %6858 = vmatmul.mubr.bf16.gmra.mxu0 %v6824
    %v6859 = vpop.f32.mrf.mxu0
    %v6860 = vadd.f32 0.0, %v6859
    %v6861 = vpop.f32.mrf.mxu0
    %v6862 = vpop.f32.mrf.mxu0
    %v6863 = vadd.f32 0.0, %v6862
    %v6864 = vpop.f32.mrf.mxu0
    %6865 = vdwg.mxu0
    %v6866 = vadd.f32 %v6781, %v6860
    %v6867 = vadd.f32 %v6782, %v6863
    %v6868 = vadd.f32 %v6102, %v6103
    %v6869 = vrot.slane %v6868, 4
    %v6870 = vadd.f32 %v6868, %v6869
    %v6871 = vrot.slane %v6870, 2
    %v6872 = vadd.f32 %v6870, %v6871
    %v6873 = vrot.slane %v6872, 1
    %v6874 = vadd.f32 %v6872, %v6873
    %v6875 = vmul.f32 %v6102, %v6102
    %v6876 = vmul.f32 %v6103, %v6103
    %v6877 = vadd.f32 %v6875, %v6876
    %v6878 = vrot.slane %v6877, 4
    %v6879 = vadd.f32 %v6877, %v6878
    %v6880 = vrot.slane %v6879, 2
    %v6881 = vadd.f32 %v6879, %v6880
    %v6882 = vrot.slane %v6881, 1
    %v6883 = vadd.f32 %v6881, %v6882
    %v6884 = vadd.f32 %v6866, %v6867
    %v6885 = vrot.slane %v6884, 4
    %v6886 = vadd.f32 %v6884, %v6885
    %v6887 = vrot.slane %v6886, 2
    %v6888 = vadd.f32 %v6886, %v6887
    %v6889 = vrot.slane %v6888, 1
    %v6890 = vadd.f32 %v6888, %v6889
    %v6891 = vadd.f32 %v6874, %v6890
    %v6892 = vmul.f32 %v6866, %v6866
    %v6893 = vmul.f32 %v6867, %v6867
    %v6894 = vadd.f32 %v6892, %v6893
    %v6895 = vrot.slane %v6894, 4
    %v6896 = vadd.f32 %v6894, %v6895
    %v6897 = vrot.slane %v6896, 2
    %v6898 = vadd.f32 %v6896, %v6897
    %v6899 = vrot.slane %v6898, 1
    %v6900 = vadd.f32 %v6898, %v6899
    %v6901 = vadd.f32 %v6883, %v6900
    %v6902 = vmul.f32 %v6891, 0.03125
    %v6903 = vmul.f32 %v6901, 0.03125
    %v6904 = vmul.f32 %v6902, %v6902
    %v6905 = vsub.f32 %v6903, %v6904
    %v6906 = vmax.f32 %v6905, 0.0
    %s6907 = scalar_lea.vmem %s8, 2
    %v6908 = vld [vmem:[%s6907] sm:$0x1]
    %v6909 = vadd.f32 %v6906, 1e-05
    %v6910 = vrsqrt.pop %v6909
    %v6911 = vmul.f32 %v6908, %v6910
    %s6912 = scalar_lea.vmem %s9, 2
    %v6913 = vld [vmem:[%s6912] sm:$0x1]
    %v6914 = vmul.f32 %v6902, %v6911
    %v6915 = vsub.f32 %v6913, %v6914
    %v6917 = vlaneseq
    %v6918 = vshrl.u32 %v6917, 7
    %v6919 = vsub.s32 0, %v6918
    %v6920 = vrot.slane %v6911, %v6919
    %v6922 = vmul.f32 %v6102, %v6920
    %v6923 = vmul.f32 %v6103, %v6920
    %v6925 = vlaneseq
    %v6926 = vshrl.u32 %v6925, 7
    %v6927 = vsub.s32 0, %v6926
    %v6928 = vrot.slane %v6915, %v6927
    %v6930 = vadd.f32 %v6922, %v6928
    %v6931 = vadd.f32 %v6923, %v6928
    %v6932 = vmax.f32 %v6930, 0.0
    %v6933 = vmax.f32 %v6931, 0.0
    %v6934 = vpack.c.bf16 %v6933, %v6932
    %v6935 = vmul.f32 %v6866, %v6920
    %v6936 = vmul.f32 %v6867, %v6920
    %v6937 = vadd.f32 %v6935, %v6928
    %v6938 = vadd.f32 %v6936, %v6928
    %v6939 = vmax.f32 %v6937, 0.0
    %v6940 = vmax.f32 %v6938, 0.0
    %v6941 = vpack.c.bf16 %v6940, %v6939
    %v6942 = vld [vmem:[%s6] sm:$0x3]
    %vm6943 = vcmask 130048
    %v6945 = vsel %vm6943, %v6942, 0
    %6947 = vmatprep.subr.bf16.mxu0 0
    %6948 = vmatpush1.bf16.msra.mxu0 0
    %6949 = vmatprep.subr.bf16.mxu0 0
    %6950 = vmatpush1.bf16.msra.mxu0 0
    %6951 = vmatprep.subr.bf16.mxu0 0
    %6952 = vmatpush1.bf16.msra.mxu0 0
    %6953 = vmatprep.subr.bf16.mxu0 0
    %6954 = vmatpush1.bf16.msra.mxu0 0
    %6955 = vmatprep.subr.bf16.mxu0 0
    %6956 = vmatpush1.bf16.msra.mxu0 0
    %6957 = vmatprep.subr.bf16.mxu0 0
    %6958 = vmatpush1.bf16.msra.mxu0 0
    %6959 = vmatprep.subr.bf16.mxu0 0
    %6960 = vmatpush1.bf16.msra.mxu0 0
    %6961 = vmatprep.subr.bf16.mxu0 0
    %6962 = vmatpush1.bf16.msra.mxu0 %v6934
    %6963 = vmatprep.subr.bf16.mxu0 0
    %6964 = vmatpush2.bf16.msra.mxu0 0
    %6965 = vmatprep.subr.bf16.mxu0 0
    %6966 = vmatpush2.bf16.msra.mxu0 0
    %6967 = vmatprep.subr.bf16.mxu0 0
    %6968 = vmatpush2.bf16.msra.mxu0 0
    %6969 = vmatprep.subr.bf16.mxu0 0
    %6970 = vmatpush2.bf16.msra.mxu0 0
    %6971 = vmatprep.subr.bf16.mxu0 0
    %6972 = vmatpush2.bf16.msra.mxu0 0
    %6973 = vmatprep.subr.bf16.mxu0 0
    %6974 = vmatpush2.bf16.msra.mxu0 0
    %6975 = vmatprep.subr.bf16.mxu0 0
    %6976 = vmatpush2.bf16.msra.mxu0 0
    %6977 = vmatprep.subr.bf16.mxu0 0
    %6978 = vmatpush2.bf16.msra.mxu0 0
    %6979 = vmatprep.mubr.bf16.mxu0 0
    %6980 = vmatmul.mubr.bf16.gmra.mxu0 %v6945
    %v6981 = vpop.f32.mrf.mxu0
    %v6982 = vadd.f32 0.0, %v6981
    %v6983 = vpop.f32.mrf.mxu0
    %v6984 = vpop.f32.mrf.mxu0
    %v6985 = vpop.f32.mrf.mxu0
    %6986 = vdwg.mxu0
    %v6987 = vpack.c.bf16 %v6982, %v6982
    %v6988 = vld [vmem:[%s7] sm:$0xf]
    %v6989 = vld [vmem:[%s7 + $0x4] sm:$0xf]
    %v6990 = vld [vmem:[%s7 + $0x8] sm:$0xf]
    %v6991 = vld [vmem:[%s7 + $0xc] sm:$0xf]
    %v6992 = vld [vmem:[%s7 + $0x10] sm:$0xf]
    %v6993 = vld [vmem:[%s7 + $0x14] sm:$0xf]
    %v6994 = vld [vmem:[%s7 + $0x18] sm:$0xf]
    %v6995 = vld [vmem:[%s7 + $0x1c] sm:$0xf]
    %v6996 = vld [vmem:[%s7 + $0x20] sm:$0xf]
    %v6997 = vld [vmem:[%s7 + $0x24] sm:$0xf]
    %v6998 = vld [vmem:[%s7 + $0x28] sm:$0xf]
    %v6999 = vld [vmem:[%s7 + $0x2c] sm:$0xf]
    %v7000 = vld [vmem:[%s7 + $0x30] sm:$0xf]
    %v7001 = vld [vmem:[%s7 + $0x34] sm:$0xf]
    %v7002 = vld [vmem:[%s7 + $0x38] sm:$0xf]
    %v7003 = vld [vmem:[%s7 + $0x3c] sm:$0xf]
    %s7004 = scalar_lea.vmem %s6, 2
    %v7005 = vld [vmem:[%s7004] sm:$0x3]
    %v7007 = vsel %vm6943, %v7005, 0
    %7009 = vmatprep.subr.bf16.mxu0 0
    %7010 = vmatpush1.bf16.msra.mxu0 0
    %7011 = vmatprep.subr.bf16.mxu0 0
    %7012 = vmatpush1.bf16.msra.mxu0 0
    %7013 = vmatprep.subr.bf16.mxu0 0
    %7014 = vmatpush1.bf16.msra.mxu0 0
    %7015 = vmatprep.subr.bf16.mxu0 0
    %7016 = vmatpush1.bf16.msra.mxu0 0
    %7017 = vmatprep.subr.bf16.mxu0 0
    %7018 = vmatpush1.bf16.msra.mxu0 0
    %7019 = vmatprep.subr.bf16.mxu0 0
    %7020 = vmatpush1.bf16.msra.mxu0 0
    %7021 = vmatprep.subr.bf16.mxu0 0
    %7022 = vmatpush1.bf16.msra.mxu0 0
    %7023 = vmatprep.subr.bf16.mxu0 0
    %7024 = vmatpush1.bf16.msra.mxu0 %v6934
    %7025 = vmatprep.subr.bf16.mxu0 0
    %7026 = vmatpush2.bf16.msra.mxu0 0
    %7027 = vmatprep.subr.bf16.mxu0 0
    %7028 = vmatpush2.bf16.msra.mxu0 0
    %7029 = vmatprep.subr.bf16.mxu0 0
    %7030 = vmatpush2.bf16.msra.mxu0 0
    %7031 = vmatprep.subr.bf16.mxu0 0
    %7032 = vmatpush2.bf16.msra.mxu0 0
    %7033 = vmatprep.subr.bf16.mxu0 0
    %7034 = vmatpush2.bf16.msra.mxu0 0
    %7035 = vmatprep.subr.bf16.mxu0 0
    %7036 = vmatpush2.bf16.msra.mxu0 0
    %7037 = vmatprep.subr.bf16.mxu0 0
    %7038 = vmatpush2.bf16.msra.mxu0 0
    %7039 = vmatprep.subr.bf16.mxu0 0
    %7040 = vmatpush2.bf16.msra.mxu0 0
    %7041 = vmatprep.mubr.bf16.mxu0 0
    %7042 = vmatmul.mubr.bf16.gmra.mxu0 %v7007
    %v7043 = vpop.f32.mrf.mxu0
    %v7044 = vadd.f32 0.0, %v7043
    %v7045 = vpop.f32.mrf.mxu0
    %v7046 = vpop.f32.mrf.mxu0
    %v7047 = vpop.f32.mrf.mxu0
    %7048 = vdwg.mxu0
    %v7049 = vpack.c.bf16 %v7044, %v7044
    %s7050 = scalar_lea.vmem %s7, 64
    %v7051 = vld [vmem:[%s7050] sm:$0xf]
    %v7052 = vld [vmem:[%s7050 + $0x4] sm:$0xf]
    %v7053 = vld [vmem:[%s7050 + $0x8] sm:$0xf]
    %v7054 = vld [vmem:[%s7050 + $0xc] sm:$0xf]
    %v7055 = vld [vmem:[%s7050 + $0x10] sm:$0xf]
    %v7056 = vld [vmem:[%s7050 + $0x14] sm:$0xf]
    %v7057 = vld [vmem:[%s7050 + $0x18] sm:$0xf]
    %v7058 = vld [vmem:[%s7050 + $0x1c] sm:$0xf]
    %v7059 = vld [vmem:[%s7050 + $0x20] sm:$0xf]
    %v7060 = vld [vmem:[%s7050 + $0x24] sm:$0xf]
    %v7061 = vld [vmem:[%s7050 + $0x28] sm:$0xf]
    %v7062 = vld [vmem:[%s7050 + $0x2c] sm:$0xf]
    %v7063 = vld [vmem:[%s7050 + $0x30] sm:$0xf]
    %v7064 = vld [vmem:[%s7050 + $0x34] sm:$0xf]
    %v7065 = vld [vmem:[%s7050 + $0x38] sm:$0xf]
    %v7066 = vld [vmem:[%s7050 + $0x3c] sm:$0xf]
    %v7083 = vunpack.c.l.b16 %v7051
    %v7084 = vunpack.c.l.b16 %v7052
    %v7085 = vunpack.c.l.b16 %v7053
    %v7086 = vunpack.c.l.b16 %v7054
    %v7087 = vunpack.c.l.b16 %v7055
    %v7088 = vunpack.c.l.b16 %v7056
    %v7089 = vunpack.c.l.b16 %v7057
    %v7090 = vunpack.c.l.b16 %v7058
    %v7091 = vunpack.c.l.b16 %v7059
    %v7092 = vunpack.c.l.b16 %v7060
    %v7093 = vunpack.c.l.b16 %v7061
    %v7094 = vunpack.c.l.b16 %v7062
    %v7095 = vunpack.c.l.b16 %v7063
    %v7096 = vunpack.c.l.b16 %v7064
    %v7097 = vunpack.c.l.b16 %v7065
    %v7098 = vunpack.c.l.b16 %v7066
    %v7099 = vpack.c.b16 %v7084, %v7083
    %v7100 = vpack.c.b16 %v7086, %v7085
    %v7101 = vpack.c.b16 %v7088, %v7087
    %v7102 = vpack.c.b16 %v7090, %v7089
    %v7103 = vpack.c.b16 %v7092, %v7091
    %v7104 = vpack.c.b16 %v7094, %v7093
    %v7105 = vpack.c.b16 %v7096, %v7095
    %v7106 = vpack.c.b16 %v7098, %v7097
    %7115 = vmatprep.subr.bf16.mxu0 0
    %7116 = vmatpush1.bf16.msra.mxu0 %v7106
    %7117 = vmatprep.subr.bf16.mxu0 0
    %7118 = vmatpush1.bf16.msra.mxu0 %v7105
    %7119 = vmatprep.subr.bf16.mxu0 0
    %7120 = vmatpush1.bf16.msra.mxu0 %v7104
    %7121 = vmatprep.subr.bf16.mxu0 0
    %7122 = vmatpush1.bf16.msra.mxu0 %v7103
    %7123 = vmatprep.subr.bf16.mxu0 0
    %7124 = vmatpush1.bf16.msra.mxu0 %v7102
    %7125 = vmatprep.subr.bf16.mxu0 0
    %7126 = vmatpush1.bf16.msra.mxu0 %v7101
    %7127 = vmatprep.subr.bf16.mxu0 0
    %7128 = vmatpush1.bf16.msra.mxu0 %v7100
    %7129 = vmatprep.subr.bf16.mxu0 0
    %7130 = vmatpush1.bf16.msra.mxu0 %v7099
    %7131 = vmatprep.subr.bf16.mxu0 0
    %7132 = vmatpush2.bf16.msra.mxu0 0
    %7133 = vmatprep.subr.bf16.mxu0 0
    %7134 = vmatpush2.bf16.msra.mxu0 0
    %7135 = vmatprep.subr.bf16.mxu0 0
    %7136 = vmatpush2.bf16.msra.mxu0 0
    %7137 = vmatprep.subr.bf16.mxu0 0
    %7138 = vmatpush2.bf16.msra.mxu0 0
    %7139 = vmatprep.subr.bf16.mxu0 0
    %7140 = vmatpush2.bf16.msra.mxu0 0
    %7141 = vmatprep.subr.bf16.mxu0 0
    %7142 = vmatpush2.bf16.msra.mxu0 0
    %7143 = vmatprep.subr.bf16.mxu0 0
    %7144 = vmatpush2.bf16.msra.mxu0 0
    %7145 = vmatprep.subr.bf16.mxu0 0
    %7146 = vmatpush2.bf16.msra.mxu0 0
    %7147 = vmatprep.mubr.bf16.mxu0 0
    %7148 = vmatmul.mubr.bf16.gmra.mxu0 %v7049
    %v7149 = vpop.f32.mrf.mxu0
    %v7150 = vadd.f32 0.0, %v7149
    %v7151 = vpop.f32.mrf.mxu0
    %v7152 = vpop.f32.mrf.mxu0
    %v7153 = vpop.f32.mrf.mxu0
    %7154 = vdwg.mxu0
    %v7171 = vunpack.c.l.b16 %v6988
    %v7172 = vunpack.c.l.b16 %v6989
    %v7173 = vunpack.c.l.b16 %v6990
    %v7174 = vunpack.c.l.b16 %v6991
    %v7175 = vunpack.c.l.b16 %v6992
    %v7176 = vunpack.c.l.b16 %v6993
    %v7177 = vunpack.c.l.b16 %v6994
    %v7178 = vunpack.c.l.b16 %v6995
    %v7179 = vunpack.c.l.b16 %v6996
    %v7180 = vunpack.c.l.b16 %v6997
    %v7181 = vunpack.c.l.b16 %v6998
    %v7182 = vunpack.c.l.b16 %v6999
    %v7183 = vunpack.c.l.b16 %v7000
    %v7184 = vunpack.c.l.b16 %v7001
    %v7185 = vunpack.c.l.b16 %v7002
    %v7186 = vunpack.c.l.b16 %v7003
    %v7187 = vpack.c.b16 %v7172, %v7171
    %v7188 = vpack.c.b16 %v7174, %v7173
    %v7189 = vpack.c.b16 %v7176, %v7175
    %v7190 = vpack.c.b16 %v7178, %v7177
    %v7191 = vpack.c.b16 %v7180, %v7179
    %v7192 = vpack.c.b16 %v7182, %v7181
    %v7193 = vpack.c.b16 %v7184, %v7183
    %v7194 = vpack.c.b16 %v7186, %v7185
    %7203 = vmatprep.subr.bf16.mxu0 0
    %7204 = vmatpush1.bf16.msra.mxu0 %v7194
    %7205 = vmatprep.subr.bf16.mxu0 0
    %7206 = vmatpush1.bf16.msra.mxu0 %v7193
    %7207 = vmatprep.subr.bf16.mxu0 0
    %7208 = vmatpush1.bf16.msra.mxu0 %v7192
    %7209 = vmatprep.subr.bf16.mxu0 0
    %7210 = vmatpush1.bf16.msra.mxu0 %v7191
    %7211 = vmatprep.subr.bf16.mxu0 0
    %7212 = vmatpush1.bf16.msra.mxu0 %v7190
    %7213 = vmatprep.subr.bf16.mxu0 0
    %7214 = vmatpush1.bf16.msra.mxu0 %v7189
    %7215 = vmatprep.subr.bf16.mxu0 0
    %7216 = vmatpush1.bf16.msra.mxu0 %v7188
    %7217 = vmatprep.subr.bf16.mxu0 0
    %7218 = vmatpush1.bf16.msra.mxu0 %v7187
    %7219 = vmatprep.subr.bf16.mxu0 0
    %7220 = vmatpush2.bf16.msra.mxu0 0
    %7221 = vmatprep.subr.bf16.mxu0 0
    %7222 = vmatpush2.bf16.msra.mxu0 0
    %7223 = vmatprep.subr.bf16.mxu0 0
    %7224 = vmatpush2.bf16.msra.mxu0 0
    %7225 = vmatprep.subr.bf16.mxu0 0
    %7226 = vmatpush2.bf16.msra.mxu0 0
    %7227 = vmatprep.subr.bf16.mxu0 0
    %7228 = vmatpush2.bf16.msra.mxu0 0
    %7229 = vmatprep.subr.bf16.mxu0 0
    %7230 = vmatpush2.bf16.msra.mxu0 0
    %7231 = vmatprep.subr.bf16.mxu0 0
    %7232 = vmatpush2.bf16.msra.mxu0 0
    %7233 = vmatprep.subr.bf16.mxu0 0
    %7234 = vmatpush2.bf16.msra.mxu0 0
    %7235 = vmatprep.mubr.bf16.mxu0 0
    %7236 = vmatmul.mubr.bf16.gmra.mxu0 %v6987
    %v7237 = vpop.f32.mrf.mxu0
    %v7238 = vadd.f32 %v7150, %v7237
    %v7239 = vpop.f32.mrf.mxu0
    %v7240 = vpop.f32.mrf.mxu0
    %v7241 = vpop.f32.mrf.mxu0
    %7242 = vdwg.mxu0
    %s7243 = scalar_lea.vmem %s6, 4
    %v7244 = vld [vmem:[%s7243] sm:$0x3]
    %v7246 = vsel %vm6943, %v7244, 0
    %7248 = vmatprep.subr.bf16.mxu0 0
    %7249 = vmatpush1.bf16.msra.mxu0 0
    %7250 = vmatprep.subr.bf16.mxu0 0
    %7251 = vmatpush1.bf16.msra.mxu0 0
    %7252 = vmatprep.subr.bf16.mxu0 0
    %7253 = vmatpush1.bf16.msra.mxu0 0
    %7254 = vmatprep.subr.bf16.mxu0 0
    %7255 = vmatpush1.bf16.msra.mxu0 0
    %7256 = vmatprep.subr.bf16.mxu0 0
    %7257 = vmatpush1.bf16.msra.mxu0 0
    %7258 = vmatprep.subr.bf16.mxu0 0
    %7259 = vmatpush1.bf16.msra.mxu0 0
    %7260 = vmatprep.subr.bf16.mxu0 0
    %7261 = vmatpush1.bf16.msra.mxu0 0
    %7262 = vmatprep.subr.bf16.mxu0 0
    %7263 = vmatpush1.bf16.msra.mxu0 %v6934
    %7264 = vmatprep.subr.bf16.mxu0 0
    %7265 = vmatpush2.bf16.msra.mxu0 0
    %7266 = vmatprep.subr.bf16.mxu0 0
    %7267 = vmatpush2.bf16.msra.mxu0 0
    %7268 = vmatprep.subr.bf16.mxu0 0
    %7269 = vmatpush2.bf16.msra.mxu0 0
    %7270 = vmatprep.subr.bf16.mxu0 0
    %7271 = vmatpush2.bf16.msra.mxu0 0
    %7272 = vmatprep.subr.bf16.mxu0 0
    %7273 = vmatpush2.bf16.msra.mxu0 0
    %7274 = vmatprep.subr.bf16.mxu0 0
    %7275 = vmatpush2.bf16.msra.mxu0 0
    %7276 = vmatprep.subr.bf16.mxu0 0
    %7277 = vmatpush2.bf16.msra.mxu0 0
    %7278 = vmatprep.subr.bf16.mxu0 0
    %7279 = vmatpush2.bf16.msra.mxu0 0
    %7280 = vmatprep.mubr.bf16.mxu0 0
    %7281 = vmatmul.mubr.bf16.gmra.mxu0 %v7246
    %v7282 = vpop.f32.mrf.mxu0
    %v7283 = vadd.f32 0.0, %v7282
    %v7284 = vpop.f32.mrf.mxu0
    %v7285 = vpop.f32.mrf.mxu0
    %v7286 = vpop.f32.mrf.mxu0
    %7287 = vdwg.mxu0
    %v7288 = vpack.c.bf16 %v7283, %v7283
    %s7289 = scalar_lea.vmem %s7, 128
    %v7290 = vld [vmem:[%s7289] sm:$0xf]
    %v7291 = vld [vmem:[%s7289 + $0x4] sm:$0xf]
    %v7292 = vld [vmem:[%s7289 + $0x8] sm:$0xf]
    %v7293 = vld [vmem:[%s7289 + $0xc] sm:$0xf]
    %v7294 = vld [vmem:[%s7289 + $0x10] sm:$0xf]
    %v7295 = vld [vmem:[%s7289 + $0x14] sm:$0xf]
    %v7296 = vld [vmem:[%s7289 + $0x18] sm:$0xf]
    %v7297 = vld [vmem:[%s7289 + $0x1c] sm:$0xf]
    %v7298 = vld [vmem:[%s7289 + $0x20] sm:$0xf]
    %v7299 = vld [vmem:[%s7289 + $0x24] sm:$0xf]
    %v7300 = vld [vmem:[%s7289 + $0x28] sm:$0xf]
    %v7301 = vld [vmem:[%s7289 + $0x2c] sm:$0xf]
    %v7302 = vld [vmem:[%s7289 + $0x30] sm:$0xf]
    %v7303 = vld [vmem:[%s7289 + $0x34] sm:$0xf]
    %v7304 = vld [vmem:[%s7289 + $0x38] sm:$0xf]
    %v7305 = vld [vmem:[%s7289 + $0x3c] sm:$0xf]
    %v7322 = vunpack.c.l.b16 %v7290
    %v7323 = vunpack.c.l.b16 %v7291
    %v7324 = vunpack.c.l.b16 %v7292
    %v7325 = vunpack.c.l.b16 %v7293
    %v7326 = vunpack.c.l.b16 %v7294
    %v7327 = vunpack.c.l.b16 %v7295
    %v7328 = vunpack.c.l.b16 %v7296
    %v7329 = vunpack.c.l.b16 %v7297
    %v7330 = vunpack.c.l.b16 %v7298
    %v7331 = vunpack.c.l.b16 %v7299
    %v7332 = vunpack.c.l.b16 %v7300
    %v7333 = vunpack.c.l.b16 %v7301
    %v7334 = vunpack.c.l.b16 %v7302
    %v7335 = vunpack.c.l.b16 %v7303
    %v7336 = vunpack.c.l.b16 %v7304
    %v7337 = vunpack.c.l.b16 %v7305
    %v7338 = vpack.c.b16 %v7323, %v7322
    %v7339 = vpack.c.b16 %v7325, %v7324
    %v7340 = vpack.c.b16 %v7327, %v7326
    %v7341 = vpack.c.b16 %v7329, %v7328
    %v7342 = vpack.c.b16 %v7331, %v7330
    %v7343 = vpack.c.b16 %v7333, %v7332
    %v7344 = vpack.c.b16 %v7335, %v7334
    %v7345 = vpack.c.b16 %v7337, %v7336
    %7354 = vmatprep.subr.bf16.mxu0 0
    %7355 = vmatpush1.bf16.msra.mxu0 %v7345
    %7356 = vmatprep.subr.bf16.mxu0 0
    %7357 = vmatpush1.bf16.msra.mxu0 %v7344
    %7358 = vmatprep.subr.bf16.mxu0 0
    %7359 = vmatpush1.bf16.msra.mxu0 %v7343
    %7360 = vmatprep.subr.bf16.mxu0 0
    %7361 = vmatpush1.bf16.msra.mxu0 %v7342
    %7362 = vmatprep.subr.bf16.mxu0 0
    %7363 = vmatpush1.bf16.msra.mxu0 %v7341
    %7364 = vmatprep.subr.bf16.mxu0 0
    %7365 = vmatpush1.bf16.msra.mxu0 %v7340
    %7366 = vmatprep.subr.bf16.mxu0 0
    %7367 = vmatpush1.bf16.msra.mxu0 %v7339
    %7368 = vmatprep.subr.bf16.mxu0 0
    %7369 = vmatpush1.bf16.msra.mxu0 %v7338
    %7370 = vmatprep.subr.bf16.mxu0 0
    %7371 = vmatpush2.bf16.msra.mxu0 0
    %7372 = vmatprep.subr.bf16.mxu0 0
    %7373 = vmatpush2.bf16.msra.mxu0 0
    %7374 = vmatprep.subr.bf16.mxu0 0
    %7375 = vmatpush2.bf16.msra.mxu0 0
    %7376 = vmatprep.subr.bf16.mxu0 0
    %7377 = vmatpush2.bf16.msra.mxu0 0
    %7378 = vmatprep.subr.bf16.mxu0 0
    %7379 = vmatpush2.bf16.msra.mxu0 0
    %7380 = vmatprep.subr.bf16.mxu0 0
    %7381 = vmatpush2.bf16.msra.mxu0 0
    %7382 = vmatprep.subr.bf16.mxu0 0
    %7383 = vmatpush2.bf16.msra.mxu0 0
    %7384 = vmatprep.subr.bf16.mxu0 0
    %7385 = vmatpush2.bf16.msra.mxu0 0
    %7386 = vmatprep.mubr.bf16.mxu0 0
    %7387 = vmatmul.mubr.bf16.gmra.mxu0 %v7288
    %v7388 = vpop.f32.mrf.mxu0
    %v7389 = vadd.f32 0.0, %v7388
    %v7390 = vpop.f32.mrf.mxu0
    %v7391 = vpop.f32.mrf.mxu0
    %v7392 = vpop.f32.mrf.mxu0
    %7393 = vdwg.mxu0
    %v7394 = vadd.f32 %v7238, %v7389
    %s7395 = scalar_lea.vmem %s6, 6
    %v7396 = vld [vmem:[%s7395] sm:$0x3]
    %v7398 = vsel %vm6943, %v7396, 0
    %7400 = vmatprep.subr.bf16.mxu0 0
    %7401 = vmatpush1.bf16.msra.mxu0 0
    %7402 = vmatprep.subr.bf16.mxu0 0
    %7403 = vmatpush1.bf16.msra.mxu0 0
    %7404 = vmatprep.subr.bf16.mxu0 0
    %7405 = vmatpush1.bf16.msra.mxu0 0
    %7406 = vmatprep.subr.bf16.mxu0 0
    %7407 = vmatpush1.bf16.msra.mxu0 0
    %7408 = vmatprep.subr.bf16.mxu0 0
    %7409 = vmatpush1.bf16.msra.mxu0 0
    %7410 = vmatprep.subr.bf16.mxu0 0
    %7411 = vmatpush1.bf16.msra.mxu0 0
    %7412 = vmatprep.subr.bf16.mxu0 0
    %7413 = vmatpush1.bf16.msra.mxu0 0
    %7414 = vmatprep.subr.bf16.mxu0 0
    %7415 = vmatpush1.bf16.msra.mxu0 %v6934
    %7416 = vmatprep.subr.bf16.mxu0 0
    %7417 = vmatpush2.bf16.msra.mxu0 0
    %7418 = vmatprep.subr.bf16.mxu0 0
    %7419 = vmatpush2.bf16.msra.mxu0 0
    %7420 = vmatprep.subr.bf16.mxu0 0
    %7421 = vmatpush2.bf16.msra.mxu0 0
    %7422 = vmatprep.subr.bf16.mxu0 0
    %7423 = vmatpush2.bf16.msra.mxu0 0
    %7424 = vmatprep.subr.bf16.mxu0 0
    %7425 = vmatpush2.bf16.msra.mxu0 0
    %7426 = vmatprep.subr.bf16.mxu0 0
    %7427 = vmatpush2.bf16.msra.mxu0 0
    %7428 = vmatprep.subr.bf16.mxu0 0
    %7429 = vmatpush2.bf16.msra.mxu0 0
    %7430 = vmatprep.subr.bf16.mxu0 0
    %7431 = vmatpush2.bf16.msra.mxu0 0
    %7432 = vmatprep.mubr.bf16.mxu0 0
    %7433 = vmatmul.mubr.bf16.gmra.mxu0 %v7398
    %v7434 = vpop.f32.mrf.mxu0
    %v7435 = vadd.f32 0.0, %v7434
    %v7436 = vpop.f32.mrf.mxu0
    %v7437 = vpop.f32.mrf.mxu0
    %v7438 = vpop.f32.mrf.mxu0
    %7439 = vdwg.mxu0
    %v7440 = vpack.c.bf16 %v7435, %v7435
    %s7441 = scalar_lea.vmem %s7, 192
    %v7442 = vld [vmem:[%s7441] sm:$0xf]
    %v7443 = vld [vmem:[%s7441 + $0x4] sm:$0xf]
    %v7444 = vld [vmem:[%s7441 + $0x8] sm:$0xf]
    %v7445 = vld [vmem:[%s7441 + $0xc] sm:$0xf]
    %v7446 = vld [vmem:[%s7441 + $0x10] sm:$0xf]
    %v7447 = vld [vmem:[%s7441 + $0x14] sm:$0xf]
    %v7448 = vld [vmem:[%s7441 + $0x18] sm:$0xf]
    %v7449 = vld [vmem:[%s7441 + $0x1c] sm:$0xf]
    %v7450 = vld [vmem:[%s7441 + $0x20] sm:$0xf]
    %v7451 = vld [vmem:[%s7441 + $0x24] sm:$0xf]
    %v7452 = vld [vmem:[%s7441 + $0x28] sm:$0xf]
    %v7453 = vld [vmem:[%s7441 + $0x2c] sm:$0xf]
    %v7454 = vld [vmem:[%s7441 + $0x30] sm:$0xf]
    %v7455 = vld [vmem:[%s7441 + $0x34] sm:$0xf]
    %v7456 = vld [vmem:[%s7441 + $0x38] sm:$0xf]
    %v7457 = vld [vmem:[%s7441 + $0x3c] sm:$0xf]
    %v7474 = vunpack.c.l.b16 %v7442
    %v7475 = vunpack.c.l.b16 %v7443
    %v7476 = vunpack.c.l.b16 %v7444
    %v7477 = vunpack.c.l.b16 %v7445
    %v7478 = vunpack.c.l.b16 %v7446
    %v7479 = vunpack.c.l.b16 %v7447
    %v7480 = vunpack.c.l.b16 %v7448
    %v7481 = vunpack.c.l.b16 %v7449
    %v7482 = vunpack.c.l.b16 %v7450
    %v7483 = vunpack.c.l.b16 %v7451
    %v7484 = vunpack.c.l.b16 %v7452
    %v7485 = vunpack.c.l.b16 %v7453
    %v7486 = vunpack.c.l.b16 %v7454
    %v7487 = vunpack.c.l.b16 %v7455
    %v7488 = vunpack.c.l.b16 %v7456
    %v7489 = vunpack.c.l.b16 %v7457
    %v7490 = vpack.c.b16 %v7475, %v7474
    %v7491 = vpack.c.b16 %v7477, %v7476
    %v7492 = vpack.c.b16 %v7479, %v7478
    %v7493 = vpack.c.b16 %v7481, %v7480
    %v7494 = vpack.c.b16 %v7483, %v7482
    %v7495 = vpack.c.b16 %v7485, %v7484
    %v7496 = vpack.c.b16 %v7487, %v7486
    %v7497 = vpack.c.b16 %v7489, %v7488
    %7506 = vmatprep.subr.bf16.mxu0 0
    %7507 = vmatpush1.bf16.msra.mxu0 %v7497
    %7508 = vmatprep.subr.bf16.mxu0 0
    %7509 = vmatpush1.bf16.msra.mxu0 %v7496
    %7510 = vmatprep.subr.bf16.mxu0 0
    %7511 = vmatpush1.bf16.msra.mxu0 %v7495
    %7512 = vmatprep.subr.bf16.mxu0 0
    %7513 = vmatpush1.bf16.msra.mxu0 %v7494
    %7514 = vmatprep.subr.bf16.mxu0 0
    %7515 = vmatpush1.bf16.msra.mxu0 %v7493
    %7516 = vmatprep.subr.bf16.mxu0 0
    %7517 = vmatpush1.bf16.msra.mxu0 %v7492
    %7518 = vmatprep.subr.bf16.mxu0 0
    %7519 = vmatpush1.bf16.msra.mxu0 %v7491
    %7520 = vmatprep.subr.bf16.mxu0 0
    %7521 = vmatpush1.bf16.msra.mxu0 %v7490
    %7522 = vmatprep.subr.bf16.mxu0 0
    %7523 = vmatpush2.bf16.msra.mxu0 0
    %7524 = vmatprep.subr.bf16.mxu0 0
    %7525 = vmatpush2.bf16.msra.mxu0 0
    %7526 = vmatprep.subr.bf16.mxu0 0
    %7527 = vmatpush2.bf16.msra.mxu0 0
    %7528 = vmatprep.subr.bf16.mxu0 0
    %7529 = vmatpush2.bf16.msra.mxu0 0
    %7530 = vmatprep.subr.bf16.mxu0 0
    %7531 = vmatpush2.bf16.msra.mxu0 0
    %7532 = vmatprep.subr.bf16.mxu0 0
    %7533 = vmatpush2.bf16.msra.mxu0 0
    %7534 = vmatprep.subr.bf16.mxu0 0
    %7535 = vmatpush2.bf16.msra.mxu0 0
    %7536 = vmatprep.subr.bf16.mxu0 0
    %7537 = vmatpush2.bf16.msra.mxu0 0
    %7538 = vmatprep.mubr.bf16.mxu0 0
    %7539 = vmatmul.mubr.bf16.gmra.mxu0 %v7440
    %v7540 = vpop.f32.mrf.mxu0
    %v7541 = vadd.f32 0.0, %v7540
    %v7542 = vpop.f32.mrf.mxu0
    %v7543 = vpop.f32.mrf.mxu0
    %v7544 = vpop.f32.mrf.mxu0
    %7545 = vdwg.mxu0
    %v7546 = vadd.f32 %v7394, %v7541
    %7547 = vmatprep.subr.bf16.mxu0 0
    %7548 = vmatpush1.bf16.msra.mxu0 0
    %7549 = vmatprep.subr.bf16.mxu0 0
    %7550 = vmatpush1.bf16.msra.mxu0 0
    %7551 = vmatprep.subr.bf16.mxu0 0
    %7552 = vmatpush1.bf16.msra.mxu0 0
    %7553 = vmatprep.subr.bf16.mxu0 0
    %7554 = vmatpush1.bf16.msra.mxu0 0
    %7555 = vmatprep.subr.bf16.mxu0 0
    %7556 = vmatpush1.bf16.msra.mxu0 0
    %7557 = vmatprep.subr.bf16.mxu0 0
    %7558 = vmatpush1.bf16.msra.mxu0 0
    %7559 = vmatprep.subr.bf16.mxu0 0
    %7560 = vmatpush1.bf16.msra.mxu0 0
    %7561 = vmatprep.subr.bf16.mxu0 0
    %7562 = vmatpush1.bf16.msra.mxu0 %v6941
    %7563 = vmatprep.subr.bf16.mxu0 0
    %7564 = vmatpush2.bf16.msra.mxu0 0
    %7565 = vmatprep.subr.bf16.mxu0 0
    %7566 = vmatpush2.bf16.msra.mxu0 0
    %7567 = vmatprep.subr.bf16.mxu0 0
    %7568 = vmatpush2.bf16.msra.mxu0 0
    %7569 = vmatprep.subr.bf16.mxu0 0
    %7570 = vmatpush2.bf16.msra.mxu0 0
    %7571 = vmatprep.subr.bf16.mxu0 0
    %7572 = vmatpush2.bf16.msra.mxu0 0
    %7573 = vmatprep.subr.bf16.mxu0 0
    %7574 = vmatpush2.bf16.msra.mxu0 0
    %7575 = vmatprep.subr.bf16.mxu0 0
    %7576 = vmatpush2.bf16.msra.mxu0 0
    %7577 = vmatprep.subr.bf16.mxu0 0
    %7578 = vmatpush2.bf16.msra.mxu0 0
    %7579 = vmatprep.mubr.bf16.mxu0 0
    %7580 = vmatmul.mubr.bf16.gmra.mxu0 %v6945
    %v7581 = vpop.f32.mrf.mxu0
    %v7582 = vadd.f32 0.0, %v7581
    %v7583 = vpop.f32.mrf.mxu0
    %v7584 = vpop.f32.mrf.mxu0
    %v7585 = vpop.f32.mrf.mxu0
    %7586 = vdwg.mxu0
    %v7587 = vpack.c.bf16 %v7582, %v7582
    %7588 = vmatprep.subr.bf16.mxu0 0
    %7589 = vmatpush1.bf16.msra.mxu0 0
    %7590 = vmatprep.subr.bf16.mxu0 0
    %7591 = vmatpush1.bf16.msra.mxu0 0
    %7592 = vmatprep.subr.bf16.mxu0 0
    %7593 = vmatpush1.bf16.msra.mxu0 0
    %7594 = vmatprep.subr.bf16.mxu0 0
    %7595 = vmatpush1.bf16.msra.mxu0 0
    %7596 = vmatprep.subr.bf16.mxu0 0
    %7597 = vmatpush1.bf16.msra.mxu0 0
    %7598 = vmatprep.subr.bf16.mxu0 0
    %7599 = vmatpush1.bf16.msra.mxu0 0
    %7600 = vmatprep.subr.bf16.mxu0 0
    %7601 = vmatpush1.bf16.msra.mxu0 0
    %7602 = vmatprep.subr.bf16.mxu0 0
    %7603 = vmatpush1.bf16.msra.mxu0 %v6941
    %7604 = vmatprep.subr.bf16.mxu0 0
    %7605 = vmatpush2.bf16.msra.mxu0 0
    %7606 = vmatprep.subr.bf16.mxu0 0
    %7607 = vmatpush2.bf16.msra.mxu0 0
    %7608 = vmatprep.subr.bf16.mxu0 0
    %7609 = vmatpush2.bf16.msra.mxu0 0
    %7610 = vmatprep.subr.bf16.mxu0 0
    %7611 = vmatpush2.bf16.msra.mxu0 0
    %7612 = vmatprep.subr.bf16.mxu0 0
    %7613 = vmatpush2.bf16.msra.mxu0 0
    %7614 = vmatprep.subr.bf16.mxu0 0
    %7615 = vmatpush2.bf16.msra.mxu0 0
    %7616 = vmatprep.subr.bf16.mxu0 0
    %7617 = vmatpush2.bf16.msra.mxu0 0
    %7618 = vmatprep.subr.bf16.mxu0 0
    %7619 = vmatpush2.bf16.msra.mxu0 0
    %7620 = vmatprep.mubr.bf16.mxu0 0
    %7621 = vmatmul.mubr.bf16.gmra.mxu0 %v7007
    %v7622 = vpop.f32.mrf.mxu0
    %v7623 = vadd.f32 0.0, %v7622
    %v7624 = vpop.f32.mrf.mxu0
    %v7625 = vpop.f32.mrf.mxu0
    %v7626 = vpop.f32.mrf.mxu0
    %7627 = vdwg.mxu0
    %v7628 = vpack.c.bf16 %v7623, %v7623
    %7629 = vmatprep.subr.bf16.mxu0 0
    %7630 = vmatpush1.bf16.msra.mxu0 %v7106
    %7631 = vmatprep.subr.bf16.mxu0 0
    %7632 = vmatpush1.bf16.msra.mxu0 %v7105
    %7633 = vmatprep.subr.bf16.mxu0 0
    %7634 = vmatpush1.bf16.msra.mxu0 %v7104
    %7635 = vmatprep.subr.bf16.mxu0 0
    %7636 = vmatpush1.bf16.msra.mxu0 %v7103
    %7637 = vmatprep.subr.bf16.mxu0 0
    %7638 = vmatpush1.bf16.msra.mxu0 %v7102
    %7639 = vmatprep.subr.bf16.mxu0 0
    %7640 = vmatpush1.bf16.msra.mxu0 %v7101
    %7641 = vmatprep.subr.bf16.mxu0 0
    %7642 = vmatpush1.bf16.msra.mxu0 %v7100
    %7643 = vmatprep.subr.bf16.mxu0 0
    %7644 = vmatpush1.bf16.msra.mxu0 %v7099
    %7645 = vmatprep.subr.bf16.mxu0 0
    %7646 = vmatpush2.bf16.msra.mxu0 0
    %7647 = vmatprep.subr.bf16.mxu0 0
    %7648 = vmatpush2.bf16.msra.mxu0 0
    %7649 = vmatprep.subr.bf16.mxu0 0
    %7650 = vmatpush2.bf16.msra.mxu0 0
    %7651 = vmatprep.subr.bf16.mxu0 0
    %7652 = vmatpush2.bf16.msra.mxu0 0
    %7653 = vmatprep.subr.bf16.mxu0 0
    %7654 = vmatpush2.bf16.msra.mxu0 0
    %7655 = vmatprep.subr.bf16.mxu0 0
    %7656 = vmatpush2.bf16.msra.mxu0 0
    %7657 = vmatprep.subr.bf16.mxu0 0
    %7658 = vmatpush2.bf16.msra.mxu0 0
    %7659 = vmatprep.subr.bf16.mxu0 0
    %7660 = vmatpush2.bf16.msra.mxu0 0
    %7661 = vmatprep.mubr.bf16.mxu0 0
    %7662 = vmatmul.mubr.bf16.gmra.mxu0 %v7628
    %v7663 = vpop.f32.mrf.mxu0
    %v7664 = vadd.f32 0.0, %v7663
    %v7665 = vpop.f32.mrf.mxu0
    %v7666 = vpop.f32.mrf.mxu0
    %v7667 = vpop.f32.mrf.mxu0
    %7668 = vdwg.mxu0
    %7669 = vmatprep.subr.bf16.mxu0 0
    %7670 = vmatpush1.bf16.msra.mxu0 %v7194
    %7671 = vmatprep.subr.bf16.mxu0 0
    %7672 = vmatpush1.bf16.msra.mxu0 %v7193
    %7673 = vmatprep.subr.bf16.mxu0 0
    %7674 = vmatpush1.bf16.msra.mxu0 %v7192
    %7675 = vmatprep.subr.bf16.mxu0 0
    %7676 = vmatpush1.bf16.msra.mxu0 %v7191
    %7677 = vmatprep.subr.bf16.mxu0 0
    %7678 = vmatpush1.bf16.msra.mxu0 %v7190
    %7679 = vmatprep.subr.bf16.mxu0 0
    %7680 = vmatpush1.bf16.msra.mxu0 %v7189
    %7681 = vmatprep.subr.bf16.mxu0 0
    %7682 = vmatpush1.bf16.msra.mxu0 %v7188
    %7683 = vmatprep.subr.bf16.mxu0 0
    %7684 = vmatpush1.bf16.msra.mxu0 %v7187
    %7685 = vmatprep.subr.bf16.mxu0 0
    %7686 = vmatpush2.bf16.msra.mxu0 0
    %7687 = vmatprep.subr.bf16.mxu0 0
    %7688 = vmatpush2.bf16.msra.mxu0 0
    %7689 = vmatprep.subr.bf16.mxu0 0
    %7690 = vmatpush2.bf16.msra.mxu0 0
    %7691 = vmatprep.subr.bf16.mxu0 0
    %7692 = vmatpush2.bf16.msra.mxu0 0
    %7693 = vmatprep.subr.bf16.mxu0 0
    %7694 = vmatpush2.bf16.msra.mxu0 0
    %7695 = vmatprep.subr.bf16.mxu0 0
    %7696 = vmatpush2.bf16.msra.mxu0 0
    %7697 = vmatprep.subr.bf16.mxu0 0
    %7698 = vmatpush2.bf16.msra.mxu0 0
    %7699 = vmatprep.subr.bf16.mxu0 0
    %7700 = vmatpush2.bf16.msra.mxu0 0
    %7701 = vmatprep.mubr.bf16.mxu0 0
    %7702 = vmatmul.mubr.bf16.gmra.mxu0 %v7587
    %v7703 = vpop.f32.mrf.mxu0
    %v7704 = vadd.f32 %v7664, %v7703
    %v7705 = vpop.f32.mrf.mxu0
    %v7706 = vpop.f32.mrf.mxu0
    %v7707 = vpop.f32.mrf.mxu0
    %7708 = vdwg.mxu0
    %7709 = vmatprep.subr.bf16.mxu0 0
    %7710 = vmatpush1.bf16.msra.mxu0 0
    %7711 = vmatprep.subr.bf16.mxu0 0
    %7712 = vmatpush1.bf16.msra.mxu0 0
    %7713 = vmatprep.subr.bf16.mxu0 0
    %7714 = vmatpush1.bf16.msra.mxu0 0
    %7715 = vmatprep.subr.bf16.mxu0 0
    %7716 = vmatpush1.bf16.msra.mxu0 0
    %7717 = vmatprep.subr.bf16.mxu0 0
    %7718 = vmatpush1.bf16.msra.mxu0 0
    %7719 = vmatprep.subr.bf16.mxu0 0
    %7720 = vmatpush1.bf16.msra.mxu0 0
    %7721 = vmatprep.subr.bf16.mxu0 0
    %7722 = vmatpush1.bf16.msra.mxu0 0
    %7723 = vmatprep.subr.bf16.mxu0 0
    %7724 = vmatpush1.bf16.msra.mxu0 %v6941
    %7725 = vmatprep.subr.bf16.mxu0 0
    %7726 = vmatpush2.bf16.msra.mxu0 0
    %7727 = vmatprep.subr.bf16.mxu0 0
    %7728 = vmatpush2.bf16.msra.mxu0 0
    %7729 = vmatprep.subr.bf16.mxu0 0
    %7730 = vmatpush2.bf16.msra.mxu0 0
    %7731 = vmatprep.subr.bf16.mxu0 0
    %7732 = vmatpush2.bf16.msra.mxu0 0
    %7733 = vmatprep.subr.bf16.mxu0 0
    %7734 = vmatpush2.bf16.msra.mxu0 0
    %7735 = vmatprep.subr.bf16.mxu0 0
    %7736 = vmatpush2.bf16.msra.mxu0 0
    %7737 = vmatprep.subr.bf16.mxu0 0
    %7738 = vmatpush2.bf16.msra.mxu0 0
    %7739 = vmatprep.subr.bf16.mxu0 0
    %7740 = vmatpush2.bf16.msra.mxu0 0
    %7741 = vmatprep.mubr.bf16.mxu0 0
    %7742 = vmatmul.mubr.bf16.gmra.mxu0 %v7246
    %v7743 = vpop.f32.mrf.mxu0
    %v7744 = vadd.f32 0.0, %v7743
    %v7745 = vpop.f32.mrf.mxu0
    %v7746 = vpop.f32.mrf.mxu0
    %v7747 = vpop.f32.mrf.mxu0
    %7748 = vdwg.mxu0
    %v7749 = vpack.c.bf16 %v7744, %v7744
    %7750 = vmatprep.subr.bf16.mxu0 0
    %7751 = vmatpush1.bf16.msra.mxu0 %v7345
    %7752 = vmatprep.subr.bf16.mxu0 0
    %7753 = vmatpush1.bf16.msra.mxu0 %v7344
    %7754 = vmatprep.subr.bf16.mxu0 0
    %7755 = vmatpush1.bf16.msra.mxu0 %v7343
    %7756 = vmatprep.subr.bf16.mxu0 0
    %7757 = vmatpush1.bf16.msra.mxu0 %v7342
    %7758 = vmatprep.subr.bf16.mxu0 0
    %7759 = vmatpush1.bf16.msra.mxu0 %v7341
    %7760 = vmatprep.subr.bf16.mxu0 0
    %7761 = vmatpush1.bf16.msra.mxu0 %v7340
    %7762 = vmatprep.subr.bf16.mxu0 0
    %7763 = vmatpush1.bf16.msra.mxu0 %v7339
    %7764 = vmatprep.subr.bf16.mxu0 0
    %7765 = vmatpush1.bf16.msra.mxu0 %v7338
    %7766 = vmatprep.subr.bf16.mxu0 0
    %7767 = vmatpush2.bf16.msra.mxu0 0
    %7768 = vmatprep.subr.bf16.mxu0 0
    %7769 = vmatpush2.bf16.msra.mxu0 0
    %7770 = vmatprep.subr.bf16.mxu0 0
    %7771 = vmatpush2.bf16.msra.mxu0 0
    %7772 = vmatprep.subr.bf16.mxu0 0
    %7773 = vmatpush2.bf16.msra.mxu0 0
    %7774 = vmatprep.subr.bf16.mxu0 0
    %7775 = vmatpush2.bf16.msra.mxu0 0
    %7776 = vmatprep.subr.bf16.mxu0 0
    %7777 = vmatpush2.bf16.msra.mxu0 0
    %7778 = vmatprep.subr.bf16.mxu0 0
    %7779 = vmatpush2.bf16.msra.mxu0 0
    %7780 = vmatprep.subr.bf16.mxu0 0
    %7781 = vmatpush2.bf16.msra.mxu0 0
    %7782 = vmatprep.mubr.bf16.mxu0 0
    %7783 = vmatmul.mubr.bf16.gmra.mxu0 %v7749
    %v7784 = vpop.f32.mrf.mxu0
    %v7785 = vadd.f32 0.0, %v7784
    %v7786 = vpop.f32.mrf.mxu0
    %v7787 = vpop.f32.mrf.mxu0
    %v7788 = vpop.f32.mrf.mxu0
    %7789 = vdwg.mxu0
    %v7790 = vadd.f32 %v7704, %v7785
    %7791 = vmatprep.subr.bf16.mxu0 0
    %7792 = vmatpush1.bf16.msra.mxu0 0
    %7793 = vmatprep.subr.bf16.mxu0 0
    %7794 = vmatpush1.bf16.msra.mxu0 0
    %7795 = vmatprep.subr.bf16.mxu0 0
    %7796 = vmatpush1.bf16.msra.mxu0 0
    %7797 = vmatprep.subr.bf16.mxu0 0
    %7798 = vmatpush1.bf16.msra.mxu0 0
    %7799 = vmatprep.subr.bf16.mxu0 0
    %7800 = vmatpush1.bf16.msra.mxu0 0
    %7801 = vmatprep.subr.bf16.mxu0 0
    %7802 = vmatpush1.bf16.msra.mxu0 0
    %7803 = vmatprep.subr.bf16.mxu0 0
    %7804 = vmatpush1.bf16.msra.mxu0 0
    %7805 = vmatprep.subr.bf16.mxu0 0
    %7806 = vmatpush1.bf16.msra.mxu0 %v6941
    %7807 = vmatprep.subr.bf16.mxu0 0
    %7808 = vmatpush2.bf16.msra.mxu0 0
    %7809 = vmatprep.subr.bf16.mxu0 0
    %7810 = vmatpush2.bf16.msra.mxu0 0
    %7811 = vmatprep.subr.bf16.mxu0 0
    %7812 = vmatpush2.bf16.msra.mxu0 0
    %7813 = vmatprep.subr.bf16.mxu0 0
    %7814 = vmatpush2.bf16.msra.mxu0 0
    %7815 = vmatprep.subr.bf16.mxu0 0
    %7816 = vmatpush2.bf16.msra.mxu0 0
    %7817 = vmatprep.subr.bf16.mxu0 0
    %7818 = vmatpush2.bf16.msra.mxu0 0
    %7819 = vmatprep.subr.bf16.mxu0 0
    %7820 = vmatpush2.bf16.msra.mxu0 0
    %7821 = vmatprep.subr.bf16.mxu0 0
    %7822 = vmatpush2.bf16.msra.mxu0 0
    %7823 = vmatprep.mubr.bf16.mxu0 0
    %7824 = vmatmul.mubr.bf16.gmra.mxu0 %v7398
    %v7825 = vpop.f32.mrf.mxu0
    %v7826 = vadd.f32 0.0, %v7825
    %v7827 = vpop.f32.mrf.mxu0
    %v7828 = vpop.f32.mrf.mxu0
    %v7829 = vpop.f32.mrf.mxu0
    %7830 = vdwg.mxu0
    %v7831 = vpack.c.bf16 %v7826, %v7826
    %7832 = vmatprep.subr.bf16.mxu0 0
    %7833 = vmatpush1.bf16.msra.mxu0 %v7497
    %7834 = vmatprep.subr.bf16.mxu0 0
    %7835 = vmatpush1.bf16.msra.mxu0 %v7496
    %7836 = vmatprep.subr.bf16.mxu0 0
    %7837 = vmatpush1.bf16.msra.mxu0 %v7495
    %7838 = vmatprep.subr.bf16.mxu0 0
    %7839 = vmatpush1.bf16.msra.mxu0 %v7494
    %7840 = vmatprep.subr.bf16.mxu0 0
    %7841 = vmatpush1.bf16.msra.mxu0 %v7493
    %7842 = vmatprep.subr.bf16.mxu0 0
    %7843 = vmatpush1.bf16.msra.mxu0 %v7492
    %7844 = vmatprep.subr.bf16.mxu0 0
    %7845 = vmatpush1.bf16.msra.mxu0 %v7491
    %7846 = vmatprep.subr.bf16.mxu0 0
    %7847 = vmatpush1.bf16.msra.mxu0 %v7490
    %7848 = vmatprep.subr.bf16.mxu0 0
    %7849 = vmatpush2.bf16.msra.mxu0 0
    %7850 = vmatprep.subr.bf16.mxu0 0
    %7851 = vmatpush2.bf16.msra.mxu0 0
    %7852 = vmatprep.subr.bf16.mxu0 0
    %7853 = vmatpush2.bf16.msra.mxu0 0
    %7854 = vmatprep.subr.bf16.mxu0 0
    %7855 = vmatpush2.bf16.msra.mxu0 0
    %7856 = vmatprep.subr.bf16.mxu0 0
    %7857 = vmatpush2.bf16.msra.mxu0 0
    %7858 = vmatprep.subr.bf16.mxu0 0
    %7859 = vmatpush2.bf16.msra.mxu0 0
    %7860 = vmatprep.subr.bf16.mxu0 0
    %7861 = vmatpush2.bf16.msra.mxu0 0
    %7862 = vmatprep.subr.bf16.mxu0 0
    %7863 = vmatpush2.bf16.msra.mxu0 0
    %7864 = vmatprep.mubr.bf16.mxu0 0
    %7865 = vmatmul.mubr.bf16.gmra.mxu0 %v7831
    %v7866 = vpop.f32.mrf.mxu0
    %v7867 = vadd.f32 0.0, %v7866
    %v7868 = vpop.f32.mrf.mxu0
    %v7869 = vpop.f32.mrf.mxu0
    %v7870 = vpop.f32.mrf.mxu0
    %7871 = vdwg.mxu0
    %v7872 = vadd.f32 %v7790, %v7867
    %v7873 = vsel %vm614, %v7546, 0.0
    %v7874 = vrot.slane %v7873, 4
    %v7875 = vadd.f32 %v7873, %v7874
    %v7876 = vrot.slane %v7875, 2
    %v7877 = vadd.f32 %v7875, %v7876
    %v7878 = vrot.slane %v7877, 1
    %v7879 = vadd.f32 %v7877, %v7878
    %v7880 = vmul.f32 %v7546, %v7546
    %v7881 = vsel %vm614, %v7880, 0.0
    %v7882 = vrot.slane %v7881, 4
    %v7883 = vadd.f32 %v7881, %v7882
    %v7884 = vrot.slane %v7883, 2
    %v7885 = vadd.f32 %v7883, %v7884
    %v7886 = vrot.slane %v7885, 1
    %v7887 = vadd.f32 %v7885, %v7886
    %v7888 = vsel %vm614, %v7872, 0.0
    %v7889 = vrot.slane %v7888, 4
    %v7890 = vadd.f32 %v7888, %v7889
    %v7891 = vrot.slane %v7890, 2
    %v7892 = vadd.f32 %v7890, %v7891
    %v7893 = vrot.slane %v7892, 1
    %v7894 = vadd.f32 %v7892, %v7893
    %v7895 = vadd.f32 %v7879, %v7894
    %v7896 = vmul.f32 %v7872, %v7872
    %v7897 = vsel %vm614, %v7896, 0.0
    %v7898 = vrot.slane %v7897, 4
    %v7899 = vadd.f32 %v7897, %v7898
    %v7900 = vrot.slane %v7899, 2
    %v7901 = vadd.f32 %v7899, %v7900
    %v7902 = vrot.slane %v7901, 1
    %v7903 = vadd.f32 %v7901, %v7902
    %v7904 = vadd.f32 %v7887, %v7903
    %v7905 = vmul.f32 %v7895, 0.125
    %v7906 = vmul.f32 %v7904, 0.125
    %v7907 = vmul.f32 %v7905, %v7905
    %v7908 = vsub.f32 %v7906, %v7907
    %v7909 = vmax.f32 %v7908, 0.0
    %s7910 = scalar_lea.vmem %s8, 3
    %v7911 = vld [vmem:[%s7910] sm:$0x1]
    %v7912 = vadd.f32 %v7909, 1e-05
    %v7913 = vrsqrt.pop %v7912
    %v7914 = vmul.f32 %v7911, %v7913
    %s7915 = scalar_lea.vmem %s9, 3
    %v7916 = vld [vmem:[%s7915] sm:$0x1]
    %v7917 = vmul.f32 %v7905, %v7914
    %v7918 = vsub.f32 %v7916, %v7917
    %v7920 = vlaneseq
    %v7921 = vshrl.u32 %v7920, 7
    %v7922 = vsub.s32 0, %v7921
    %v7923 = vrot.slane %v7914, %v7922
    %v7925 = vmul.f32 %v7546, %v7923
    %v7927 = vlaneseq
    %v7928 = vshrl.u32 %v7927, 7
    %v7929 = vsub.s32 0, %v7928
    %v7930 = vrot.slane %v7918, %v7929
    %v7932 = vadd.f32 %v7925, %v7930
    %v7933 = vmax.f32 %v7932, 0.0
    %v7934 = vpack.c.bf16 %v7933, %v7933
    %v7935 = vmul.f32 %v7872, %v7923
    %v7936 = vadd.f32 %v7935, %v7930
    %v7937 = vmax.f32 %v7936, 0.0
    %v7938 = vpack.c.bf16 %v7937, %v7937
    %v7939 = vld [vmem:[%s10] sm:$0x1]
    %vm7940 = vcmask 31744
    %v7942 = vsel %vm7940, %v7939, 0
    %v7945 = vsel %vm1021, %v7934, 0
    %7947 = vmatprep.subr.bf16.mxu0 0
    %7948 = vmatpush1.bf16.msra.mxu0 0
    %7949 = vmatprep.subr.bf16.mxu0 0
    %7950 = vmatpush1.bf16.msra.mxu0 0
    %7951 = vmatprep.subr.bf16.mxu0 0
    %7952 = vmatpush1.bf16.msra.mxu0 0
    %7953 = vmatprep.subr.bf16.mxu0 0
    %7954 = vmatpush1.bf16.msra.mxu0 0
    %7955 = vmatprep.subr.bf16.mxu0 0
    %7956 = vmatpush1.bf16.msra.mxu0 0
    %7957 = vmatprep.subr.bf16.mxu0 0
    %7958 = vmatpush1.bf16.msra.mxu0 0
    %7959 = vmatprep.subr.bf16.mxu0 0
    %7960 = vmatpush1.bf16.msra.mxu0 0
    %7961 = vmatprep.subr.bf16.mxu0 0
    %7962 = vmatpush1.bf16.msra.mxu0 %v7945
    %7963 = vmatprep.subr.bf16.mxu0 0
    %7964 = vmatpush2.bf16.msra.mxu0 0
    %7965 = vmatprep.subr.bf16.mxu0 0
    %7966 = vmatpush2.bf16.msra.mxu0 0
    %7967 = vmatprep.subr.bf16.mxu0 0
    %7968 = vmatpush2.bf16.msra.mxu0 0
    %7969 = vmatprep.subr.bf16.mxu0 0
    %7970 = vmatpush2.bf16.msra.mxu0 0
    %7971 = vmatprep.subr.bf16.mxu0 0
    %7972 = vmatpush2.bf16.msra.mxu0 0
    %7973 = vmatprep.subr.bf16.mxu0 0
    %7974 = vmatpush2.bf16.msra.mxu0 0
    %7975 = vmatprep.subr.bf16.mxu0 0
    %7976 = vmatpush2.bf16.msra.mxu0 0
    %7977 = vmatprep.subr.bf16.mxu0 0
    %7978 = vmatpush2.bf16.msra.mxu0 0
    %7979 = vmatprep.mubr.bf16.mxu0 0
    %7980 = vmatmul.mubr.bf16.gmra.mxu0 %v7942
    %v7981 = vpop.f32.mrf.mxu0
    %v7982 = vadd.f32 0.0, %v7981
    %v7983 = vpop.f32.mrf.mxu0
    %v7984 = vpop.f32.mrf.mxu0
    %v7985 = vpop.f32.mrf.mxu0
    %7986 = vdwg.mxu0
    %v7987 = vpack.c.bf16 %v7982, %v7982
    %v7988 = vld [vmem:[%s11] sm:$0xf]
    %v7989 = vld [vmem:[%s11 + $0x4] sm:$0xf]
    %v7990 = vld [vmem:[%s11 + $0x8] sm:$0xf]
    %v7991 = vld [vmem:[%s11 + $0xc] sm:$0xf]
    %v7992 = vld [vmem:[%s11 + $0x10] sm:$0xf]
    %v7993 = vld [vmem:[%s11 + $0x14] sm:$0xf]
    %v7994 = vld [vmem:[%s11 + $0x18] sm:$0xf]
    %v7995 = vld [vmem:[%s11 + $0x1c] sm:$0xf]
    %v7996 = vld [vmem:[%s11 + $0x20] sm:$0xf]
    %v7997 = vld [vmem:[%s11 + $0x24] sm:$0xf]
    %v7998 = vld [vmem:[%s11 + $0x28] sm:$0xf]
    %v7999 = vld [vmem:[%s11 + $0x2c] sm:$0xf]
    %v8000 = vld [vmem:[%s11 + $0x30] sm:$0xf]
    %v8001 = vld [vmem:[%s11 + $0x34] sm:$0xf]
    %v8002 = vld [vmem:[%s11 + $0x38] sm:$0xf]
    %v8003 = vld [vmem:[%s11 + $0x3c] sm:$0xf]
    %s8004 = scalar_lea.vmem %s10, 1
    %v8005 = vld [vmem:[%s8004] sm:$0x1]
    %v8007 = vsel %vm7940, %v8005, 0
    %8009 = vmatprep.subr.bf16.mxu0 0
    %8010 = vmatpush1.bf16.msra.mxu0 0
    %8011 = vmatprep.subr.bf16.mxu0 0
    %8012 = vmatpush1.bf16.msra.mxu0 0
    %8013 = vmatprep.subr.bf16.mxu0 0
    %8014 = vmatpush1.bf16.msra.mxu0 0
    %8015 = vmatprep.subr.bf16.mxu0 0
    %8016 = vmatpush1.bf16.msra.mxu0 0
    %8017 = vmatprep.subr.bf16.mxu0 0
    %8018 = vmatpush1.bf16.msra.mxu0 0
    %8019 = vmatprep.subr.bf16.mxu0 0
    %8020 = vmatpush1.bf16.msra.mxu0 0
    %8021 = vmatprep.subr.bf16.mxu0 0
    %8022 = vmatpush1.bf16.msra.mxu0 0
    %8023 = vmatprep.subr.bf16.mxu0 0
    %8024 = vmatpush1.bf16.msra.mxu0 %v7945
    %8025 = vmatprep.subr.bf16.mxu0 0
    %8026 = vmatpush2.bf16.msra.mxu0 0
    %8027 = vmatprep.subr.bf16.mxu0 0
    %8028 = vmatpush2.bf16.msra.mxu0 0
    %8029 = vmatprep.subr.bf16.mxu0 0
    %8030 = vmatpush2.bf16.msra.mxu0 0
    %8031 = vmatprep.subr.bf16.mxu0 0
    %8032 = vmatpush2.bf16.msra.mxu0 0
    %8033 = vmatprep.subr.bf16.mxu0 0
    %8034 = vmatpush2.bf16.msra.mxu0 0
    %8035 = vmatprep.subr.bf16.mxu0 0
    %8036 = vmatpush2.bf16.msra.mxu0 0
    %8037 = vmatprep.subr.bf16.mxu0 0
    %8038 = vmatpush2.bf16.msra.mxu0 0
    %8039 = vmatprep.subr.bf16.mxu0 0
    %8040 = vmatpush2.bf16.msra.mxu0 0
    %8041 = vmatprep.mubr.bf16.mxu0 0
    %8042 = vmatmul.mubr.bf16.gmra.mxu0 %v8007
    %v8043 = vpop.f32.mrf.mxu0
    %v8044 = vadd.f32 0.0, %v8043
    %v8045 = vpop.f32.mrf.mxu0
    %v8046 = vpop.f32.mrf.mxu0
    %v8047 = vpop.f32.mrf.mxu0
    %8048 = vdwg.mxu0
    %v8049 = vpack.c.bf16 %v8044, %v8044
    %s8050 = scalar_lea.vmem %s11, 64
    %v8051 = vld [vmem:[%s8050] sm:$0xf]
    %v8052 = vld [vmem:[%s8050 + $0x4] sm:$0xf]
    %v8053 = vld [vmem:[%s8050 + $0x8] sm:$0xf]
    %v8054 = vld [vmem:[%s8050 + $0xc] sm:$0xf]
    %v8055 = vld [vmem:[%s8050 + $0x10] sm:$0xf]
    %v8056 = vld [vmem:[%s8050 + $0x14] sm:$0xf]
    %v8057 = vld [vmem:[%s8050 + $0x18] sm:$0xf]
    %v8058 = vld [vmem:[%s8050 + $0x1c] sm:$0xf]
    %v8059 = vld [vmem:[%s8050 + $0x20] sm:$0xf]
    %v8060 = vld [vmem:[%s8050 + $0x24] sm:$0xf]
    %v8061 = vld [vmem:[%s8050 + $0x28] sm:$0xf]
    %v8062 = vld [vmem:[%s8050 + $0x2c] sm:$0xf]
    %v8063 = vld [vmem:[%s8050 + $0x30] sm:$0xf]
    %v8064 = vld [vmem:[%s8050 + $0x34] sm:$0xf]
    %v8065 = vld [vmem:[%s8050 + $0x38] sm:$0xf]
    %v8066 = vld [vmem:[%s8050 + $0x3c] sm:$0xf]
    %v8083 = vunpack.c.l.b16 %v8051
    %v8084 = vunpack.c.l.b16 %v8052
    %v8085 = vunpack.c.l.b16 %v8053
    %v8086 = vunpack.c.l.b16 %v8054
    %v8087 = vunpack.c.l.b16 %v8055
    %v8088 = vunpack.c.l.b16 %v8056
    %v8089 = vunpack.c.l.b16 %v8057
    %v8090 = vunpack.c.l.b16 %v8058
    %v8091 = vunpack.c.l.b16 %v8059
    %v8092 = vunpack.c.l.b16 %v8060
    %v8093 = vunpack.c.l.b16 %v8061
    %v8094 = vunpack.c.l.b16 %v8062
    %v8095 = vunpack.c.l.b16 %v8063
    %v8096 = vunpack.c.l.b16 %v8064
    %v8097 = vunpack.c.l.b16 %v8065
    %v8098 = vunpack.c.l.b16 %v8066
    %v8099 = vpack.c.b16 %v8084, %v8083
    %v8100 = vpack.c.b16 %v8086, %v8085
    %v8101 = vpack.c.b16 %v8088, %v8087
    %v8102 = vpack.c.b16 %v8090, %v8089
    %v8103 = vpack.c.b16 %v8092, %v8091
    %v8104 = vpack.c.b16 %v8094, %v8093
    %v8105 = vpack.c.b16 %v8096, %v8095
    %v8106 = vpack.c.b16 %v8098, %v8097
    %8115 = vmatprep.subr.bf16.mxu0 0
    %8116 = vmatpush1.bf16.msra.mxu0 %v8106
    %8117 = vmatprep.subr.bf16.mxu0 0
    %8118 = vmatpush1.bf16.msra.mxu0 %v8105
    %8119 = vmatprep.subr.bf16.mxu0 0
    %8120 = vmatpush1.bf16.msra.mxu0 %v8104
    %8121 = vmatprep.subr.bf16.mxu0 0
    %8122 = vmatpush1.bf16.msra.mxu0 %v8103
    %8123 = vmatprep.subr.bf16.mxu0 0
    %8124 = vmatpush1.bf16.msra.mxu0 %v8102
    %8125 = vmatprep.subr.bf16.mxu0 0
    %8126 = vmatpush1.bf16.msra.mxu0 %v8101
    %8127 = vmatprep.subr.bf16.mxu0 0
    %8128 = vmatpush1.bf16.msra.mxu0 %v8100
    %8129 = vmatprep.subr.bf16.mxu0 0
    %8130 = vmatpush1.bf16.msra.mxu0 %v8099
    %8131 = vmatprep.subr.bf16.mxu0 0
    %8132 = vmatpush2.bf16.msra.mxu0 0
    %8133 = vmatprep.subr.bf16.mxu0 0
    %8134 = vmatpush2.bf16.msra.mxu0 0
    %8135 = vmatprep.subr.bf16.mxu0 0
    %8136 = vmatpush2.bf16.msra.mxu0 0
    %8137 = vmatprep.subr.bf16.mxu0 0
    %8138 = vmatpush2.bf16.msra.mxu0 0
    %8139 = vmatprep.subr.bf16.mxu0 0
    %8140 = vmatpush2.bf16.msra.mxu0 0
    %8141 = vmatprep.subr.bf16.mxu0 0
    %8142 = vmatpush2.bf16.msra.mxu0 0
    %8143 = vmatprep.subr.bf16.mxu0 0
    %8144 = vmatpush2.bf16.msra.mxu0 0
    %8145 = vmatprep.subr.bf16.mxu0 0
    %8146 = vmatpush2.bf16.msra.mxu0 0
    %8147 = vmatprep.mubr.bf16.mxu0 0
    %8148 = vmatmul.mubr.bf16.gmra.mxu0 %v8049
    %v8149 = vpop.f32.mrf.mxu0
    %v8150 = vadd.f32 0.0, %v8149
    %v8151 = vpop.f32.mrf.mxu0
    %v8152 = vpop.f32.mrf.mxu0
    %v8153 = vpop.f32.mrf.mxu0
    %8154 = vdwg.mxu0
    %v8171 = vunpack.c.l.b16 %v7988
    %v8172 = vunpack.c.l.b16 %v7989
    %v8173 = vunpack.c.l.b16 %v7990
    %v8174 = vunpack.c.l.b16 %v7991
    %v8175 = vunpack.c.l.b16 %v7992
    %v8176 = vunpack.c.l.b16 %v7993
    %v8177 = vunpack.c.l.b16 %v7994
    %v8178 = vunpack.c.l.b16 %v7995
    %v8179 = vunpack.c.l.b16 %v7996
    %v8180 = vunpack.c.l.b16 %v7997
    %v8181 = vunpack.c.l.b16 %v7998
    %v8182 = vunpack.c.l.b16 %v7999
    %v8183 = vunpack.c.l.b16 %v8000
    %v8184 = vunpack.c.l.b16 %v8001
    %v8185 = vunpack.c.l.b16 %v8002
    %v8186 = vunpack.c.l.b16 %v8003
    %v8187 = vpack.c.b16 %v8172, %v8171
    %v8188 = vpack.c.b16 %v8174, %v8173
    %v8189 = vpack.c.b16 %v8176, %v8175
    %v8190 = vpack.c.b16 %v8178, %v8177
    %v8191 = vpack.c.b16 %v8180, %v8179
    %v8192 = vpack.c.b16 %v8182, %v8181
    %v8193 = vpack.c.b16 %v8184, %v8183
    %v8194 = vpack.c.b16 %v8186, %v8185
    %8203 = vmatprep.subr.bf16.mxu0 0
    %8204 = vmatpush1.bf16.msra.mxu0 %v8194
    %8205 = vmatprep.subr.bf16.mxu0 0
    %8206 = vmatpush1.bf16.msra.mxu0 %v8193
    %8207 = vmatprep.subr.bf16.mxu0 0
    %8208 = vmatpush1.bf16.msra.mxu0 %v8192
    %8209 = vmatprep.subr.bf16.mxu0 0
    %8210 = vmatpush1.bf16.msra.mxu0 %v8191
    %8211 = vmatprep.subr.bf16.mxu0 0
    %8212 = vmatpush1.bf16.msra.mxu0 %v8190
    %8213 = vmatprep.subr.bf16.mxu0 0
    %8214 = vmatpush1.bf16.msra.mxu0 %v8189
    %8215 = vmatprep.subr.bf16.mxu0 0
    %8216 = vmatpush1.bf16.msra.mxu0 %v8188
    %8217 = vmatprep.subr.bf16.mxu0 0
    %8218 = vmatpush1.bf16.msra.mxu0 %v8187
    %8219 = vmatprep.subr.bf16.mxu0 0
    %8220 = vmatpush2.bf16.msra.mxu0 0
    %8221 = vmatprep.subr.bf16.mxu0 0
    %8222 = vmatpush2.bf16.msra.mxu0 0
    %8223 = vmatprep.subr.bf16.mxu0 0
    %8224 = vmatpush2.bf16.msra.mxu0 0
    %8225 = vmatprep.subr.bf16.mxu0 0
    %8226 = vmatpush2.bf16.msra.mxu0 0
    %8227 = vmatprep.subr.bf16.mxu0 0
    %8228 = vmatpush2.bf16.msra.mxu0 0
    %8229 = vmatprep.subr.bf16.mxu0 0
    %8230 = vmatpush2.bf16.msra.mxu0 0
    %8231 = vmatprep.subr.bf16.mxu0 0
    %8232 = vmatpush2.bf16.msra.mxu0 0
    %8233 = vmatprep.subr.bf16.mxu0 0
    %8234 = vmatpush2.bf16.msra.mxu0 0
    %8235 = vmatprep.mubr.bf16.mxu0 0
    %8236 = vmatmul.mubr.bf16.gmra.mxu0 %v7987
    %v8237 = vpop.f32.mrf.mxu0
    %v8238 = vadd.f32 %v8150, %v8237
    %v8239 = vpop.f32.mrf.mxu0
    %v8240 = vpop.f32.mrf.mxu0
    %v8241 = vpop.f32.mrf.mxu0
    %8242 = vdwg.mxu0
    %s8243 = scalar_lea.vmem %s10, 2
    %v8244 = vld [vmem:[%s8243] sm:$0x1]
    %v8246 = vsel %vm7940, %v8244, 0
    %8248 = vmatprep.subr.bf16.mxu0 0
    %8249 = vmatpush1.bf16.msra.mxu0 0
    %8250 = vmatprep.subr.bf16.mxu0 0
    %8251 = vmatpush1.bf16.msra.mxu0 0
    %8252 = vmatprep.subr.bf16.mxu0 0
    %8253 = vmatpush1.bf16.msra.mxu0 0
    %8254 = vmatprep.subr.bf16.mxu0 0
    %8255 = vmatpush1.bf16.msra.mxu0 0
    %8256 = vmatprep.subr.bf16.mxu0 0
    %8257 = vmatpush1.bf16.msra.mxu0 0
    %8258 = vmatprep.subr.bf16.mxu0 0
    %8259 = vmatpush1.bf16.msra.mxu0 0
    %8260 = vmatprep.subr.bf16.mxu0 0
    %8261 = vmatpush1.bf16.msra.mxu0 0
    %8262 = vmatprep.subr.bf16.mxu0 0
    %8263 = vmatpush1.bf16.msra.mxu0 %v7945
    %8264 = vmatprep.subr.bf16.mxu0 0
    %8265 = vmatpush2.bf16.msra.mxu0 0
    %8266 = vmatprep.subr.bf16.mxu0 0
    %8267 = vmatpush2.bf16.msra.mxu0 0
    %8268 = vmatprep.subr.bf16.mxu0 0
    %8269 = vmatpush2.bf16.msra.mxu0 0
    %8270 = vmatprep.subr.bf16.mxu0 0
    %8271 = vmatpush2.bf16.msra.mxu0 0
    %8272 = vmatprep.subr.bf16.mxu0 0
    %8273 = vmatpush2.bf16.msra.mxu0 0
    %8274 = vmatprep.subr.bf16.mxu0 0
    %8275 = vmatpush2.bf16.msra.mxu0 0
    %8276 = vmatprep.subr.bf16.mxu0 0
    %8277 = vmatpush2.bf16.msra.mxu0 0
    %8278 = vmatprep.subr.bf16.mxu0 0
    %8279 = vmatpush2.bf16.msra.mxu0 0
    %8280 = vmatprep.mubr.bf16.mxu0 0
    %8281 = vmatmul.mubr.bf16.gmra.mxu0 %v8246
    %v8282 = vpop.f32.mrf.mxu0
    %v8283 = vadd.f32 0.0, %v8282
    %v8284 = vpop.f32.mrf.mxu0
    %v8285 = vpop.f32.mrf.mxu0
    %v8286 = vpop.f32.mrf.mxu0
    %8287 = vdwg.mxu0
    %v8288 = vpack.c.bf16 %v8283, %v8283
    %s8289 = scalar_lea.vmem %s11, 128
    %v8290 = vld [vmem:[%s8289] sm:$0xf]
    %v8291 = vld [vmem:[%s8289 + $0x4] sm:$0xf]
    %v8292 = vld [vmem:[%s8289 + $0x8] sm:$0xf]
    %v8293 = vld [vmem:[%s8289 + $0xc] sm:$0xf]
    %v8294 = vld [vmem:[%s8289 + $0x10] sm:$0xf]
    %v8295 = vld [vmem:[%s8289 + $0x14] sm:$0xf]
    %v8296 = vld [vmem:[%s8289 + $0x18] sm:$0xf]
    %v8297 = vld [vmem:[%s8289 + $0x1c] sm:$0xf]
    %v8298 = vld [vmem:[%s8289 + $0x20] sm:$0xf]
    %v8299 = vld [vmem:[%s8289 + $0x24] sm:$0xf]
    %v8300 = vld [vmem:[%s8289 + $0x28] sm:$0xf]
    %v8301 = vld [vmem:[%s8289 + $0x2c] sm:$0xf]
    %v8302 = vld [vmem:[%s8289 + $0x30] sm:$0xf]
    %v8303 = vld [vmem:[%s8289 + $0x34] sm:$0xf]
    %v8304 = vld [vmem:[%s8289 + $0x38] sm:$0xf]
    %v8305 = vld [vmem:[%s8289 + $0x3c] sm:$0xf]
    %v8322 = vunpack.c.l.b16 %v8290
    %v8323 = vunpack.c.l.b16 %v8291
    %v8324 = vunpack.c.l.b16 %v8292
    %v8325 = vunpack.c.l.b16 %v8293
    %v8326 = vunpack.c.l.b16 %v8294
    %v8327 = vunpack.c.l.b16 %v8295
    %v8328 = vunpack.c.l.b16 %v8296
    %v8329 = vunpack.c.l.b16 %v8297
    %v8330 = vunpack.c.l.b16 %v8298
    %v8331 = vunpack.c.l.b16 %v8299
    %v8332 = vunpack.c.l.b16 %v8300
    %v8333 = vunpack.c.l.b16 %v8301
    %v8334 = vunpack.c.l.b16 %v8302
    %v8335 = vunpack.c.l.b16 %v8303
    %v8336 = vunpack.c.l.b16 %v8304
    %v8337 = vunpack.c.l.b16 %v8305
    %v8338 = vpack.c.b16 %v8323, %v8322
    %v8339 = vpack.c.b16 %v8325, %v8324
    %v8340 = vpack.c.b16 %v8327, %v8326
    %v8341 = vpack.c.b16 %v8329, %v8328
    %v8342 = vpack.c.b16 %v8331, %v8330
    %v8343 = vpack.c.b16 %v8333, %v8332
    %v8344 = vpack.c.b16 %v8335, %v8334
    %v8345 = vpack.c.b16 %v8337, %v8336
    %8354 = vmatprep.subr.bf16.mxu0 0
    %8355 = vmatpush1.bf16.msra.mxu0 %v8345
    %8356 = vmatprep.subr.bf16.mxu0 0
    %8357 = vmatpush1.bf16.msra.mxu0 %v8344
    %8358 = vmatprep.subr.bf16.mxu0 0
    %8359 = vmatpush1.bf16.msra.mxu0 %v8343
    %8360 = vmatprep.subr.bf16.mxu0 0
    %8361 = vmatpush1.bf16.msra.mxu0 %v8342
    %8362 = vmatprep.subr.bf16.mxu0 0
    %8363 = vmatpush1.bf16.msra.mxu0 %v8341
    %8364 = vmatprep.subr.bf16.mxu0 0
    %8365 = vmatpush1.bf16.msra.mxu0 %v8340
    %8366 = vmatprep.subr.bf16.mxu0 0
    %8367 = vmatpush1.bf16.msra.mxu0 %v8339
    %8368 = vmatprep.subr.bf16.mxu0 0
    %8369 = vmatpush1.bf16.msra.mxu0 %v8338
    %8370 = vmatprep.subr.bf16.mxu0 0
    %8371 = vmatpush2.bf16.msra.mxu0 0
    %8372 = vmatprep.subr.bf16.mxu0 0
    %8373 = vmatpush2.bf16.msra.mxu0 0
    %8374 = vmatprep.subr.bf16.mxu0 0
    %8375 = vmatpush2.bf16.msra.mxu0 0
    %8376 = vmatprep.subr.bf16.mxu0 0
    %8377 = vmatpush2.bf16.msra.mxu0 0
    %8378 = vmatprep.subr.bf16.mxu0 0
    %8379 = vmatpush2.bf16.msra.mxu0 0
    %8380 = vmatprep.subr.bf16.mxu0 0
    %8381 = vmatpush2.bf16.msra.mxu0 0
    %8382 = vmatprep.subr.bf16.mxu0 0
    %8383 = vmatpush2.bf16.msra.mxu0 0
    %8384 = vmatprep.subr.bf16.mxu0 0
    %8385 = vmatpush2.bf16.msra.mxu0 0
    %8386 = vmatprep.mubr.bf16.mxu0 0
    %8387 = vmatmul.mubr.bf16.gmra.mxu0 %v8288
    %v8388 = vpop.f32.mrf.mxu0
    %v8389 = vadd.f32 0.0, %v8388
    %v8390 = vpop.f32.mrf.mxu0
    %v8391 = vpop.f32.mrf.mxu0
    %v8392 = vpop.f32.mrf.mxu0
    %8393 = vdwg.mxu0
    %v8394 = vadd.f32 %v8238, %v8389
    %s8395 = scalar_lea.vmem %s10, 3
    %v8396 = vld [vmem:[%s8395] sm:$0x1]
    %v8398 = vsel %vm7940, %v8396, 0
    %8400 = vmatprep.subr.bf16.mxu0 0
    %8401 = vmatpush1.bf16.msra.mxu0 0
    %8402 = vmatprep.subr.bf16.mxu0 0
    %8403 = vmatpush1.bf16.msra.mxu0 0
    %8404 = vmatprep.subr.bf16.mxu0 0
    %8405 = vmatpush1.bf16.msra.mxu0 0
    %8406 = vmatprep.subr.bf16.mxu0 0
    %8407 = vmatpush1.bf16.msra.mxu0 0
    %8408 = vmatprep.subr.bf16.mxu0 0
    %8409 = vmatpush1.bf16.msra.mxu0 0
    %8410 = vmatprep.subr.bf16.mxu0 0
    %8411 = vmatpush1.bf16.msra.mxu0 0
    %8412 = vmatprep.subr.bf16.mxu0 0
    %8413 = vmatpush1.bf16.msra.mxu0 0
    %8414 = vmatprep.subr.bf16.mxu0 0
    %8415 = vmatpush1.bf16.msra.mxu0 %v7945
    %8416 = vmatprep.subr.bf16.mxu0 0
    %8417 = vmatpush2.bf16.msra.mxu0 0
    %8418 = vmatprep.subr.bf16.mxu0 0
    %8419 = vmatpush2.bf16.msra.mxu0 0
    %8420 = vmatprep.subr.bf16.mxu0 0
    %8421 = vmatpush2.bf16.msra.mxu0 0
    %8422 = vmatprep.subr.bf16.mxu0 0
    %8423 = vmatpush2.bf16.msra.mxu0 0
    %8424 = vmatprep.subr.bf16.mxu0 0
    %8425 = vmatpush2.bf16.msra.mxu0 0
    %8426 = vmatprep.subr.bf16.mxu0 0
    %8427 = vmatpush2.bf16.msra.mxu0 0
    %8428 = vmatprep.subr.bf16.mxu0 0
    %8429 = vmatpush2.bf16.msra.mxu0 0
    %8430 = vmatprep.subr.bf16.mxu0 0
    %8431 = vmatpush2.bf16.msra.mxu0 0
    %8432 = vmatprep.mubr.bf16.mxu0 0
    %8433 = vmatmul.mubr.bf16.gmra.mxu0 %v8398
    %v8434 = vpop.f32.mrf.mxu0
    %v8435 = vadd.f32 0.0, %v8434
    %v8436 = vpop.f32.mrf.mxu0
    %v8437 = vpop.f32.mrf.mxu0
    %v8438 = vpop.f32.mrf.mxu0
    %8439 = vdwg.mxu0
    %v8440 = vpack.c.bf16 %v8435, %v8435
    %s8441 = scalar_lea.vmem %s11, 192
    %v8442 = vld [vmem:[%s8441] sm:$0xf]
    %v8443 = vld [vmem:[%s8441 + $0x4] sm:$0xf]
    %v8444 = vld [vmem:[%s8441 + $0x8] sm:$0xf]
    %v8445 = vld [vmem:[%s8441 + $0xc] sm:$0xf]
    %v8446 = vld [vmem:[%s8441 + $0x10] sm:$0xf]
    %v8447 = vld [vmem:[%s8441 + $0x14] sm:$0xf]
    %v8448 = vld [vmem:[%s8441 + $0x18] sm:$0xf]
    %v8449 = vld [vmem:[%s8441 + $0x1c] sm:$0xf]
    %v8450 = vld [vmem:[%s8441 + $0x20] sm:$0xf]
    %v8451 = vld [vmem:[%s8441 + $0x24] sm:$0xf]
    %v8452 = vld [vmem:[%s8441 + $0x28] sm:$0xf]
    %v8453 = vld [vmem:[%s8441 + $0x2c] sm:$0xf]
    %v8454 = vld [vmem:[%s8441 + $0x30] sm:$0xf]
    %v8455 = vld [vmem:[%s8441 + $0x34] sm:$0xf]
    %v8456 = vld [vmem:[%s8441 + $0x38] sm:$0xf]
    %v8457 = vld [vmem:[%s8441 + $0x3c] sm:$0xf]
    %v8474 = vunpack.c.l.b16 %v8442
    %v8475 = vunpack.c.l.b16 %v8443
    %v8476 = vunpack.c.l.b16 %v8444
    %v8477 = vunpack.c.l.b16 %v8445
    %v8478 = vunpack.c.l.b16 %v8446
    %v8479 = vunpack.c.l.b16 %v8447
    %v8480 = vunpack.c.l.b16 %v8448
    %v8481 = vunpack.c.l.b16 %v8449
    %v8482 = vunpack.c.l.b16 %v8450
    %v8483 = vunpack.c.l.b16 %v8451
    %v8484 = vunpack.c.l.b16 %v8452
    %v8485 = vunpack.c.l.b16 %v8453
    %v8486 = vunpack.c.l.b16 %v8454
    %v8487 = vunpack.c.l.b16 %v8455
    %v8488 = vunpack.c.l.b16 %v8456
    %v8489 = vunpack.c.l.b16 %v8457
    %v8490 = vpack.c.b16 %v8475, %v8474
    %v8491 = vpack.c.b16 %v8477, %v8476
    %v8492 = vpack.c.b16 %v8479, %v8478
    %v8493 = vpack.c.b16 %v8481, %v8480
    %v8494 = vpack.c.b16 %v8483, %v8482
    %v8495 = vpack.c.b16 %v8485, %v8484
    %v8496 = vpack.c.b16 %v8487, %v8486
    %v8497 = vpack.c.b16 %v8489, %v8488
    %8506 = vmatprep.subr.bf16.mxu0 0
    %8507 = vmatpush1.bf16.msra.mxu0 %v8497
    %8508 = vmatprep.subr.bf16.mxu0 0
    %8509 = vmatpush1.bf16.msra.mxu0 %v8496
    %8510 = vmatprep.subr.bf16.mxu0 0
    %8511 = vmatpush1.bf16.msra.mxu0 %v8495
    %8512 = vmatprep.subr.bf16.mxu0 0
    %8513 = vmatpush1.bf16.msra.mxu0 %v8494
    %8514 = vmatprep.subr.bf16.mxu0 0
    %8515 = vmatpush1.bf16.msra.mxu0 %v8493
    %8516 = vmatprep.subr.bf16.mxu0 0
    %8517 = vmatpush1.bf16.msra.mxu0 %v8492
    %8518 = vmatprep.subr.bf16.mxu0 0
    %8519 = vmatpush1.bf16.msra.mxu0 %v8491
    %8520 = vmatprep.subr.bf16.mxu0 0
    %8521 = vmatpush1.bf16.msra.mxu0 %v8490
    %8522 = vmatprep.subr.bf16.mxu0 0
    %8523 = vmatpush2.bf16.msra.mxu0 0
    %8524 = vmatprep.subr.bf16.mxu0 0
    %8525 = vmatpush2.bf16.msra.mxu0 0
    %8526 = vmatprep.subr.bf16.mxu0 0
    %8527 = vmatpush2.bf16.msra.mxu0 0
    %8528 = vmatprep.subr.bf16.mxu0 0
    %8529 = vmatpush2.bf16.msra.mxu0 0
    %8530 = vmatprep.subr.bf16.mxu0 0
    %8531 = vmatpush2.bf16.msra.mxu0 0
    %8532 = vmatprep.subr.bf16.mxu0 0
    %8533 = vmatpush2.bf16.msra.mxu0 0
    %8534 = vmatprep.subr.bf16.mxu0 0
    %8535 = vmatpush2.bf16.msra.mxu0 0
    %8536 = vmatprep.subr.bf16.mxu0 0
    %8537 = vmatpush2.bf16.msra.mxu0 0
    %8538 = vmatprep.mubr.bf16.mxu0 0
    %8539 = vmatmul.mubr.bf16.gmra.mxu0 %v8440
    %v8540 = vpop.f32.mrf.mxu0
    %v8541 = vadd.f32 0.0, %v8540
    %v8542 = vpop.f32.mrf.mxu0
    %v8543 = vpop.f32.mrf.mxu0
    %v8544 = vpop.f32.mrf.mxu0
    %8545 = vdwg.mxu0
    %v8546 = vadd.f32 %v8394, %v8541
    %v8547 = vld [vmem:[%s12] sm:$0x1]
    %v8548 = vadd.f32 %v8546, %v8547
    %v8549 = vpack.c.bf16 %v8548, %v8548
    %v8550 = vld [vmem:[%s13] sm:$0xf]
    %v8551 = vld [vmem:[%s13 + $0x4] sm:$0xf]
    %v8552 = vld [vmem:[%s13 + $0x8] sm:$0xf]
    %v8553 = vld [vmem:[%s13 + $0xc] sm:$0xf]
    %v8554 = vld [vmem:[%s13 + $0x10] sm:$0xf]
    %v8555 = vld [vmem:[%s13 + $0x14] sm:$0xf]
    %v8556 = vld [vmem:[%s13 + $0x18] sm:$0xf]
    %v8557 = vld [vmem:[%s13 + $0x1c] sm:$0xf]
    %v8558 = vld [vmem:[%s13 + $0x20] sm:$0xf]
    %v8559 = vld [vmem:[%s13 + $0x24] sm:$0xf]
    %v8560 = vld [vmem:[%s13 + $0x28] sm:$0xf]
    %v8561 = vld [vmem:[%s13 + $0x2c] sm:$0xf]
    %v8562 = vld [vmem:[%s13 + $0x30] sm:$0xf]
    %v8563 = vld [vmem:[%s13 + $0x34] sm:$0xf]
    %v8564 = vld [vmem:[%s13 + $0x38] sm:$0xf]
    %v8565 = vld [vmem:[%s13 + $0x3c] sm:$0xf]
    %v8566 = vld [vmem:[%s14] sm:$0x1]
    %v8583 = vunpack.c.l.b16 %v8550
    %v8584 = vunpack.c.l.b16 %v8551
    %v8585 = vunpack.c.l.b16 %v8552
    %v8586 = vunpack.c.l.b16 %v8553
    %v8587 = vunpack.c.l.b16 %v8554
    %v8588 = vunpack.c.l.b16 %v8555
    %v8589 = vunpack.c.l.b16 %v8556
    %v8590 = vunpack.c.l.b16 %v8557
    %v8591 = vunpack.c.l.b16 %v8558
    %v8592 = vunpack.c.l.b16 %v8559
    %v8593 = vunpack.c.l.b16 %v8560
    %v8594 = vunpack.c.l.b16 %v8561
    %v8595 = vunpack.c.l.b16 %v8562
    %v8596 = vunpack.c.l.b16 %v8563
    %v8597 = vunpack.c.l.b16 %v8564
    %v8598 = vunpack.c.l.b16 %v8565
    %v8599 = vpack.c.b16 %v8584, %v8583
    %v8600 = vpack.c.b16 %v8586, %v8585
    %v8601 = vpack.c.b16 %v8588, %v8587
    %v8602 = vpack.c.b16 %v8590, %v8589
    %v8603 = vpack.c.b16 %v8592, %v8591
    %v8604 = vpack.c.b16 %v8594, %v8593
    %v8605 = vpack.c.b16 %v8596, %v8595
    %v8606 = vpack.c.b16 %v8598, %v8597
    %8615 = vmatprep.subr.bf16.mxu0 0
    %8616 = vmatpush1.bf16.msra.mxu0 %v8606
    %8617 = vmatprep.subr.bf16.mxu0 0
    %8618 = vmatpush1.bf16.msra.mxu0 %v8605
    %8619 = vmatprep.subr.bf16.mxu0 0
    %8620 = vmatpush1.bf16.msra.mxu0 %v8604
    %8621 = vmatprep.subr.bf16.mxu0 0
    %8622 = vmatpush1.bf16.msra.mxu0 %v8603
    %8623 = vmatprep.subr.bf16.mxu0 0
    %8624 = vmatpush1.bf16.msra.mxu0 %v8602
    %8625 = vmatprep.subr.bf16.mxu0 0
    %8626 = vmatpush1.bf16.msra.mxu0 %v8601
    %8627 = vmatprep.subr.bf16.mxu0 0
    %8628 = vmatpush1.bf16.msra.mxu0 %v8600
    %8629 = vmatprep.subr.bf16.mxu0 0
    %8630 = vmatpush1.bf16.msra.mxu0 %v8599
    %8631 = vmatprep.subr.bf16.mxu0 0
    %8632 = vmatpush2.bf16.msra.mxu0 0
    %8633 = vmatprep.subr.bf16.mxu0 0
    %8634 = vmatpush2.bf16.msra.mxu0 0
    %8635 = vmatprep.subr.bf16.mxu0 0
    %8636 = vmatpush2.bf16.msra.mxu0 0
    %8637 = vmatprep.subr.bf16.mxu0 0
    %8638 = vmatpush2.bf16.msra.mxu0 0
    %8639 = vmatprep.subr.bf16.mxu0 0
    %8640 = vmatpush2.bf16.msra.mxu0 0
    %8641 = vmatprep.subr.bf16.mxu0 0
    %8642 = vmatpush2.bf16.msra.mxu0 0
    %8643 = vmatprep.subr.bf16.mxu0 0
    %8644 = vmatpush2.bf16.msra.mxu0 0
    %8645 = vmatprep.subr.bf16.mxu0 0
    %8646 = vmatpush2.bf16.msra.mxu0 0
    %8647 = vmatprep.mubr.bf16.mxu0 0
    %8648 = vmatmul.mubr.bf16.gmra.mxu0 %v8549
    %v8649 = vpop.f32.mrf.mxu0
    %v8650 = vadd.f32 %v8566, %v8649
    %v8651 = vpop.f32.mrf.mxu0
    %v8652 = vpop.f32.mrf.mxu0
    %v8653 = vpop.f32.mrf.mxu0
    %8654 = vdwg.mxu0
    %v8656 = vsel %vm1021, %v7938, 0
    %8658 = vmatprep.subr.bf16.mxu0 0
    %8659 = vmatpush1.bf16.msra.mxu0 0
    %8660 = vmatprep.subr.bf16.mxu0 0
    %8661 = vmatpush1.bf16.msra.mxu0 0
    %8662 = vmatprep.subr.bf16.mxu0 0
    %8663 = vmatpush1.bf16.msra.mxu0 0
    %8664 = vmatprep.subr.bf16.mxu0 0
    %8665 = vmatpush1.bf16.msra.mxu0 0
    %8666 = vmatprep.subr.bf16.mxu0 0
    %8667 = vmatpush1.bf16.msra.mxu0 0
    %8668 = vmatprep.subr.bf16.mxu0 0
    %8669 = vmatpush1.bf16.msra.mxu0 0
    %8670 = vmatprep.subr.bf16.mxu0 0
    %8671 = vmatpush1.bf16.msra.mxu0 0
    %8672 = vmatprep.subr.bf16.mxu0 0
    %8673 = vmatpush1.bf16.msra.mxu0 %v8656
    %8674 = vmatprep.subr.bf16.mxu0 0
    %8675 = vmatpush2.bf16.msra.mxu0 0
    %8676 = vmatprep.subr.bf16.mxu0 0
    %8677 = vmatpush2.bf16.msra.mxu0 0
    %8678 = vmatprep.subr.bf16.mxu0 0
    %8679 = vmatpush2.bf16.msra.mxu0 0
    %8680 = vmatprep.subr.bf16.mxu0 0
    %8681 = vmatpush2.bf16.msra.mxu0 0
    %8682 = vmatprep.subr.bf16.mxu0 0
    %8683 = vmatpush2.bf16.msra.mxu0 0
    %8684 = vmatprep.subr.bf16.mxu0 0
    %8685 = vmatpush2.bf16.msra.mxu0 0
    %8686 = vmatprep.subr.bf16.mxu0 0
    %8687 = vmatpush2.bf16.msra.mxu0 0
    %8688 = vmatprep.subr.bf16.mxu0 0
    %8689 = vmatpush2.bf16.msra.mxu0 0
    %8690 = vmatprep.mubr.bf16.mxu0 0
    %8691 = vmatmul.mubr.bf16.gmra.mxu0 %v7942
    %v8692 = vpop.f32.mrf.mxu0
    %v8693 = vadd.f32 0.0, %v8692
    %v8694 = vpop.f32.mrf.mxu0
    %v8695 = vpop.f32.mrf.mxu0
    %v8696 = vpop.f32.mrf.mxu0
    %8697 = vdwg.mxu0
    %v8698 = vpack.c.bf16 %v8693, %v8693
    %8699 = vmatprep.subr.bf16.mxu0 0
    %8700 = vmatpush1.bf16.msra.mxu0 0
    %8701 = vmatprep.subr.bf16.mxu0 0
    %8702 = vmatpush1.bf16.msra.mxu0 0
    %8703 = vmatprep.subr.bf16.mxu0 0
    %8704 = vmatpush1.bf16.msra.mxu0 0
    %8705 = vmatprep.subr.bf16.mxu0 0
    %8706 = vmatpush1.bf16.msra.mxu0 0
    %8707 = vmatprep.subr.bf16.mxu0 0
    %8708 = vmatpush1.bf16.msra.mxu0 0
    %8709 = vmatprep.subr.bf16.mxu0 0
    %8710 = vmatpush1.bf16.msra.mxu0 0
    %8711 = vmatprep.subr.bf16.mxu0 0
    %8712 = vmatpush1.bf16.msra.mxu0 0
    %8713 = vmatprep.subr.bf16.mxu0 0
    %8714 = vmatpush1.bf16.msra.mxu0 %v8656
    %8715 = vmatprep.subr.bf16.mxu0 0
    %8716 = vmatpush2.bf16.msra.mxu0 0
    %8717 = vmatprep.subr.bf16.mxu0 0
    %8718 = vmatpush2.bf16.msra.mxu0 0
    %8719 = vmatprep.subr.bf16.mxu0 0
    %8720 = vmatpush2.bf16.msra.mxu0 0
    %8721 = vmatprep.subr.bf16.mxu0 0
    %8722 = vmatpush2.bf16.msra.mxu0 0
    %8723 = vmatprep.subr.bf16.mxu0 0
    %8724 = vmatpush2.bf16.msra.mxu0 0
    %8725 = vmatprep.subr.bf16.mxu0 0
    %8726 = vmatpush2.bf16.msra.mxu0 0
    %8727 = vmatprep.subr.bf16.mxu0 0
    %8728 = vmatpush2.bf16.msra.mxu0 0
    %8729 = vmatprep.subr.bf16.mxu0 0
    %8730 = vmatpush2.bf16.msra.mxu0 0
    %8731 = vmatprep.mubr.bf16.mxu0 0
    %8732 = vmatmul.mubr.bf16.gmra.mxu0 %v8007
    %v8733 = vpop.f32.mrf.mxu0
    %v8734 = vadd.f32 0.0, %v8733
    %v8735 = vpop.f32.mrf.mxu0
    %v8736 = vpop.f32.mrf.mxu0
    %v8737 = vpop.f32.mrf.mxu0
    %8738 = vdwg.mxu0
    %v8739 = vpack.c.bf16 %v8734, %v8734
    %8740 = vmatprep.subr.bf16.mxu0 0
    %8741 = vmatpush1.bf16.msra.mxu0 %v8106
    %8742 = vmatprep.subr.bf16.mxu0 0
    %8743 = vmatpush1.bf16.msra.mxu0 %v8105
    %8744 = vmatprep.subr.bf16.mxu0 0
    %8745 = vmatpush1.bf16.msra.mxu0 %v8104
    %8746 = vmatprep.subr.bf16.mxu0 0
    %8747 = vmatpush1.bf16.msra.mxu0 %v8103
    %8748 = vmatprep.subr.bf16.mxu0 0
    %8749 = vmatpush1.bf16.msra.mxu0 %v8102
    %8750 = vmatprep.subr.bf16.mxu0 0
    %8751 = vmatpush1.bf16.msra.mxu0 %v8101
    %8752 = vmatprep.subr.bf16.mxu0 0
    %8753 = vmatpush1.bf16.msra.mxu0 %v8100
    %8754 = vmatprep.subr.bf16.mxu0 0
    %8755 = vmatpush1.bf16.msra.mxu0 %v8099
    %8756 = vmatprep.subr.bf16.mxu0 0
    %8757 = vmatpush2.bf16.msra.mxu0 0
    %8758 = vmatprep.subr.bf16.mxu0 0
    %8759 = vmatpush2.bf16.msra.mxu0 0
    %8760 = vmatprep.subr.bf16.mxu0 0
    %8761 = vmatpush2.bf16.msra.mxu0 0
    %8762 = vmatprep.subr.bf16.mxu0 0
    %8763 = vmatpush2.bf16.msra.mxu0 0
    %8764 = vmatprep.subr.bf16.mxu0 0
    %8765 = vmatpush2.bf16.msra.mxu0 0
    %8766 = vmatprep.subr.bf16.mxu0 0
    %8767 = vmatpush2.bf16.msra.mxu0 0
    %8768 = vmatprep.subr.bf16.mxu0 0
    %8769 = vmatpush2.bf16.msra.mxu0 0
    %8770 = vmatprep.subr.bf16.mxu0 0
    %8771 = vmatpush2.bf16.msra.mxu0 0
    %8772 = vmatprep.mubr.bf16.mxu0 0
    %8773 = vmatmul.mubr.bf16.gmra.mxu0 %v8739
    %v8774 = vpop.f32.mrf.mxu0
    %v8775 = vadd.f32 0.0, %v8774
    %v8776 = vpop.f32.mrf.mxu0
    %v8777 = vpop.f32.mrf.mxu0
    %v8778 = vpop.f32.mrf.mxu0
    %8779 = vdwg.mxu0
    %8780 = vmatprep.subr.bf16.mxu0 0
    %8781 = vmatpush1.bf16.msra.mxu0 %v8194
    %8782 = vmatprep.subr.bf16.mxu0 0
    %8783 = vmatpush1.bf16.msra.mxu0 %v8193
    %8784 = vmatprep.subr.bf16.mxu0 0
    %8785 = vmatpush1.bf16.msra.mxu0 %v8192
    %8786 = vmatprep.subr.bf16.mxu0 0
    %8787 = vmatpush1.bf16.msra.mxu0 %v8191
    %8788 = vmatprep.subr.bf16.mxu0 0
    %8789 = vmatpush1.bf16.msra.mxu0 %v8190
    %8790 = vmatprep.subr.bf16.mxu0 0
    %8791 = vmatpush1.bf16.msra.mxu0 %v8189
    %8792 = vmatprep.subr.bf16.mxu0 0
    %8793 = vmatpush1.bf16.msra.mxu0 %v8188
    %8794 = vmatprep.subr.bf16.mxu0 0
    %8795 = vmatpush1.bf16.msra.mxu0 %v8187
    %8796 = vmatprep.subr.bf16.mxu0 0
    %8797 = vmatpush2.bf16.msra.mxu0 0
    %8798 = vmatprep.subr.bf16.mxu0 0
    %8799 = vmatpush2.bf16.msra.mxu0 0
    %8800 = vmatprep.subr.bf16.mxu0 0
    %8801 = vmatpush2.bf16.msra.mxu0 0
    %8802 = vmatprep.subr.bf16.mxu0 0
    %8803 = vmatpush2.bf16.msra.mxu0 0
    %8804 = vmatprep.subr.bf16.mxu0 0
    %8805 = vmatpush2.bf16.msra.mxu0 0
    %8806 = vmatprep.subr.bf16.mxu0 0
    %8807 = vmatpush2.bf16.msra.mxu0 0
    %8808 = vmatprep.subr.bf16.mxu0 0
    %8809 = vmatpush2.bf16.msra.mxu0 0
    %8810 = vmatprep.subr.bf16.mxu0 0
    %8811 = vmatpush2.bf16.msra.mxu0 0
    %8812 = vmatprep.mubr.bf16.mxu0 0
    %8813 = vmatmul.mubr.bf16.gmra.mxu0 %v8698
    %v8814 = vpop.f32.mrf.mxu0
    %v8815 = vadd.f32 %v8775, %v8814
    %v8816 = vpop.f32.mrf.mxu0
    %v8817 = vpop.f32.mrf.mxu0
    %v8818 = vpop.f32.mrf.mxu0
    %8819 = vdwg.mxu0
    %8820 = vmatprep.subr.bf16.mxu0 0
    %8821 = vmatpush1.bf16.msra.mxu0 0
    %8822 = vmatprep.subr.bf16.mxu0 0
    %8823 = vmatpush1.bf16.msra.mxu0 0
    %8824 = vmatprep.subr.bf16.mxu0 0
    %8825 = vmatpush1.bf16.msra.mxu0 0
    %8826 = vmatprep.subr.bf16.mxu0 0
    %8827 = vmatpush1.bf16.msra.mxu0 0
    %8828 = vmatprep.subr.bf16.mxu0 0
    %8829 = vmatpush1.bf16.msra.mxu0 0
    %8830 = vmatprep.subr.bf16.mxu0 0
    %8831 = vmatpush1.bf16.msra.mxu0 0
    %8832 = vmatprep.subr.bf16.mxu0 0
    %8833 = vmatpush1.bf16.msra.mxu0 0
    %8834 = vmatprep.subr.bf16.mxu0 0
    %8835 = vmatpush1.bf16.msra.mxu0 %v8656
    %8836 = vmatprep.subr.bf16.mxu0 0
    %8837 = vmatpush2.bf16.msra.mxu0 0
    %8838 = vmatprep.subr.bf16.mxu0 0
    %8839 = vmatpush2.bf16.msra.mxu0 0
    %8840 = vmatprep.subr.bf16.mxu0 0
    %8841 = vmatpush2.bf16.msra.mxu0 0
    %8842 = vmatprep.subr.bf16.mxu0 0
    %8843 = vmatpush2.bf16.msra.mxu0 0
    %8844 = vmatprep.subr.bf16.mxu0 0
    %8845 = vmatpush2.bf16.msra.mxu0 0
    %8846 = vmatprep.subr.bf16.mxu0 0
    %8847 = vmatpush2.bf16.msra.mxu0 0
    %8848 = vmatprep.subr.bf16.mxu0 0
    %8849 = vmatpush2.bf16.msra.mxu0 0
    %8850 = vmatprep.subr.bf16.mxu0 0
    %8851 = vmatpush2.bf16.msra.mxu0 0
    %8852 = vmatprep.mubr.bf16.mxu0 0
    %8853 = vmatmul.mubr.bf16.gmra.mxu0 %v8246
    %v8854 = vpop.f32.mrf.mxu0
    %v8855 = vadd.f32 0.0, %v8854
    %v8856 = vpop.f32.mrf.mxu0
    %v8857 = vpop.f32.mrf.mxu0
    %v8858 = vpop.f32.mrf.mxu0
    %8859 = vdwg.mxu0
    %v8860 = vpack.c.bf16 %v8855, %v8855
    %8861 = vmatprep.subr.bf16.mxu0 0
    %8862 = vmatpush1.bf16.msra.mxu0 %v8345
    %8863 = vmatprep.subr.bf16.mxu0 0
    %8864 = vmatpush1.bf16.msra.mxu0 %v8344
    %8865 = vmatprep.subr.bf16.mxu0 0
    %8866 = vmatpush1.bf16.msra.mxu0 %v8343
    %8867 = vmatprep.subr.bf16.mxu0 0
    %8868 = vmatpush1.bf16.msra.mxu0 %v8342
    %8869 = vmatprep.subr.bf16.mxu0 0
    %8870 = vmatpush1.bf16.msra.mxu0 %v8341
    %8871 = vmatprep.subr.bf16.mxu0 0
    %8872 = vmatpush1.bf16.msra.mxu0 %v8340
    %8873 = vmatprep.subr.bf16.mxu0 0
    %8874 = vmatpush1.bf16.msra.mxu0 %v8339
    %8875 = vmatprep.subr.bf16.mxu0 0
    %8876 = vmatpush1.bf16.msra.mxu0 %v8338
    %8877 = vmatprep.subr.bf16.mxu0 0
    %8878 = vmatpush2.bf16.msra.mxu0 0
    %8879 = vmatprep.subr.bf16.mxu0 0
    %8880 = vmatpush2.bf16.msra.mxu0 0
    %8881 = vmatprep.subr.bf16.mxu0 0
    %8882 = vmatpush2.bf16.msra.mxu0 0
    %8883 = vmatprep.subr.bf16.mxu0 0
    %8884 = vmatpush2.bf16.msra.mxu0 0
    %8885 = vmatprep.subr.bf16.mxu0 0
    %8886 = vmatpush2.bf16.msra.mxu0 0
    %8887 = vmatprep.subr.bf16.mxu0 0
    %8888 = vmatpush2.bf16.msra.mxu0 0
    %8889 = vmatprep.subr.bf16.mxu0 0
    %8890 = vmatpush2.bf16.msra.mxu0 0
    %8891 = vmatprep.subr.bf16.mxu0 0
    %8892 = vmatpush2.bf16.msra.mxu0 0
    %8893 = vmatprep.mubr.bf16.mxu0 0
    %8894 = vmatmul.mubr.bf16.gmra.mxu0 %v8860
    %v8895 = vpop.f32.mrf.mxu0
    %v8896 = vadd.f32 0.0, %v8895
    %v8897 = vpop.f32.mrf.mxu0
    %v8898 = vpop.f32.mrf.mxu0
    %v8899 = vpop.f32.mrf.mxu0
    %8900 = vdwg.mxu0
    %v8901 = vadd.f32 %v8815, %v8896
    %8902 = vmatprep.subr.bf16.mxu0 0
    %8903 = vmatpush1.bf16.msra.mxu0 0
    %8904 = vmatprep.subr.bf16.mxu0 0
    %8905 = vmatpush1.bf16.msra.mxu0 0
    %8906 = vmatprep.subr.bf16.mxu0 0
    %8907 = vmatpush1.bf16.msra.mxu0 0
    %8908 = vmatprep.subr.bf16.mxu0 0
    %8909 = vmatpush1.bf16.msra.mxu0 0
    %8910 = vmatprep.subr.bf16.mxu0 0
    %8911 = vmatpush1.bf16.msra.mxu0 0
    %8912 = vmatprep.subr.bf16.mxu0 0
    %8913 = vmatpush1.bf16.msra.mxu0 0
    %8914 = vmatprep.subr.bf16.mxu0 0
    %8915 = vmatpush1.bf16.msra.mxu0 0
    %8916 = vmatprep.subr.bf16.mxu0 0
    %8917 = vmatpush1.bf16.msra.mxu0 %v8656
    %8918 = vmatprep.subr.bf16.mxu0 0
    %8919 = vmatpush2.bf16.msra.mxu0 0
    %8920 = vmatprep.subr.bf16.mxu0 0
    %8921 = vmatpush2.bf16.msra.mxu0 0
    %8922 = vmatprep.subr.bf16.mxu0 0
    %8923 = vmatpush2.bf16.msra.mxu0 0
    %8924 = vmatprep.subr.bf16.mxu0 0
    %8925 = vmatpush2.bf16.msra.mxu0 0
    %8926 = vmatprep.subr.bf16.mxu0 0
    %8927 = vmatpush2.bf16.msra.mxu0 0
    %8928 = vmatprep.subr.bf16.mxu0 0
    %8929 = vmatpush2.bf16.msra.mxu0 0
    %8930 = vmatprep.subr.bf16.mxu0 0
    %8931 = vmatpush2.bf16.msra.mxu0 0
    %8932 = vmatprep.subr.bf16.mxu0 0
    %8933 = vmatpush2.bf16.msra.mxu0 0
    %8934 = vmatprep.mubr.bf16.mxu0 0
    %8935 = vmatmul.mubr.bf16.gmra.mxu0 %v8398
    %v8936 = vpop.f32.mrf.mxu0
    %v8937 = vadd.f32 0.0, %v8936
    %v8938 = vpop.f32.mrf.mxu0
    %v8939 = vpop.f32.mrf.mxu0
    %v8940 = vpop.f32.mrf.mxu0
    %8941 = vdwg.mxu0
    %v8942 = vpack.c.bf16 %v8937, %v8937
    %8943 = vmatprep.subr.bf16.mxu0 0
    %8944 = vmatpush1.bf16.msra.mxu0 %v8497
    %8945 = vmatprep.subr.bf16.mxu0 0
    %8946 = vmatpush1.bf16.msra.mxu0 %v8496
    %8947 = vmatprep.subr.bf16.mxu0 0
    %8948 = vmatpush1.bf16.msra.mxu0 %v8495
    %8949 = vmatprep.subr.bf16.mxu0 0
    %8950 = vmatpush1.bf16.msra.mxu0 %v8494
    %8951 = vmatprep.subr.bf16.mxu0 0
    %8952 = vmatpush1.bf16.msra.mxu0 %v8493
    %8953 = vmatprep.subr.bf16.mxu0 0
    %8954 = vmatpush1.bf16.msra.mxu0 %v8492
    %8955 = vmatprep.subr.bf16.mxu0 0
    %8956 = vmatpush1.bf16.msra.mxu0 %v8491
    %8957 = vmatprep.subr.bf16.mxu0 0
    %8958 = vmatpush1.bf16.msra.mxu0 %v8490
    %8959 = vmatprep.subr.bf16.mxu0 0
    %8960 = vmatpush2.bf16.msra.mxu0 0
    %8961 = vmatprep.subr.bf16.mxu0 0
    %8962 = vmatpush2.bf16.msra.mxu0 0
    %8963 = vmatprep.subr.bf16.mxu0 0
    %8964 = vmatpush2.bf16.msra.mxu0 0
    %8965 = vmatprep.subr.bf16.mxu0 0
    %8966 = vmatpush2.bf16.msra.mxu0 0
    %8967 = vmatprep.subr.bf16.mxu0 0
    %8968 = vmatpush2.bf16.msra.mxu0 0
    %8969 = vmatprep.subr.bf16.mxu0 0
    %8970 = vmatpush2.bf16.msra.mxu0 0
    %8971 = vmatprep.subr.bf16.mxu0 0
    %8972 = vmatpush2.bf16.msra.mxu0 0
    %8973 = vmatprep.subr.bf16.mxu0 0
    %8974 = vmatpush2.bf16.msra.mxu0 0
    %8975 = vmatprep.mubr.bf16.mxu0 0
    %8976 = vmatmul.mubr.bf16.gmra.mxu0 %v8942
    %v8977 = vpop.f32.mrf.mxu0
    %v8978 = vadd.f32 0.0, %v8977
    %v8979 = vpop.f32.mrf.mxu0
    %v8980 = vpop.f32.mrf.mxu0
    %v8981 = vpop.f32.mrf.mxu0
    %8982 = vdwg.mxu0
    %v8983 = vadd.f32 %v8901, %v8978
    %v8984 = vadd.f32 %v8983, %v8547
    %v8985 = vpack.c.bf16 %v8984, %v8984
    %8986 = vmatprep.subr.bf16.mxu0 0
    %8987 = vmatpush1.bf16.msra.mxu0 %v8606
    %8988 = vmatprep.subr.bf16.mxu0 0
    %8989 = vmatpush1.bf16.msra.mxu0 %v8605
    %8990 = vmatprep.subr.bf16.mxu0 0
    %8991 = vmatpush1.bf16.msra.mxu0 %v8604
    %8992 = vmatprep.subr.bf16.mxu0 0
    %8993 = vmatpush1.bf16.msra.mxu0 %v8603
    %8994 = vmatprep.subr.bf16.mxu0 0
    %8995 = vmatpush1.bf16.msra.mxu0 %v8602
    %8996 = vmatprep.subr.bf16.mxu0 0
    %8997 = vmatpush1.bf16.msra.mxu0 %v8601
    %8998 = vmatprep.subr.bf16.mxu0 0
    %8999 = vmatpush1.bf16.msra.mxu0 %v8600
    %9000 = vmatprep.subr.bf16.mxu0 0
    %9001 = vmatpush1.bf16.msra.mxu0 %v8599
    %9002 = vmatprep.subr.bf16.mxu0 0
    %9003 = vmatpush2.bf16.msra.mxu0 0
    %9004 = vmatprep.subr.bf16.mxu0 0
    %9005 = vmatpush2.bf16.msra.mxu0 0
    %9006 = vmatprep.subr.bf16.mxu0 0
    %9007 = vmatpush2.bf16.msra.mxu0 0
    %9008 = vmatprep.subr.bf16.mxu0 0
    %9009 = vmatpush2.bf16.msra.mxu0 0
    %9010 = vmatprep.subr.bf16.mxu0 0
    %9011 = vmatpush2.bf16.msra.mxu0 0
    %9012 = vmatprep.subr.bf16.mxu0 0
    %9013 = vmatpush2.bf16.msra.mxu0 0
    %9014 = vmatprep.subr.bf16.mxu0 0
    %9015 = vmatpush2.bf16.msra.mxu0 0
    %9016 = vmatprep.subr.bf16.mxu0 0
    %9017 = vmatpush2.bf16.msra.mxu0 0
    %9018 = vmatprep.mubr.bf16.mxu0 0
    %9019 = vmatmul.mubr.bf16.gmra.mxu0 %v8985
    %v9020 = vpop.f32.mrf.mxu0
    %v9021 = vadd.f32 %v8566, %v9020
    %v9022 = vpop.f32.mrf.mxu0
    %v9023 = vpop.f32.mrf.mxu0
    %v9024 = vpop.f32.mrf.mxu0
    %9025 = vdwg.mxu0
    %v9027 = vrot.slane %v9021, 7
    %v9029 = vsel %vm4515, %v8650, %v9027
    %9030 = vst [vmem:[#allocation2] sm:$0x3] %v9029
    // Predicated region
    $region62: #{cnnnet_forward.1} parent=1 // pred_check
      _
    $region63: #{cnnnet_forward.1} parent=1 // pred_check_branch
      %9032 = sbr.rel (0) target = $region65
    $region64: #{cnnnet_forward.1} parent=1 // pred_region
      %s9034 = ssub.s32 32, 32
      %9035 = vsyncadd [#allocation3], %s9034
      %s9037 = sshll.u32 [#allocation2], 4
      %s9038 = int_to_ptr.vmem [resolvable:$true] %s9037
      %9040 = dma.vmem_to_hbm [thread:$0]  %s9038, 32, %s15, [#allocation3]
    $region65: #{cnnnet_forward.1} parent=1 // pred_fallthru
      _
    // Predicated region
    $region66: #{cnnnet_forward.1} parent=1 // pred_check
      _
    $region67: #{cnnnet_forward.1} parent=1 // pred_check_branch
      %9042 = sbr.rel (0) target = $region69
    $region68: #{cnnnet_forward.1} parent=1 // pred_region
      %9043 = dma.done [#allocation3], 32
    $region69: #{cnnnet_forward.1} parent=1 // pred_fallthru
      _
    %9044 = vsyncpa [#allocation3], 1

</llo_original>
